<compile_context>
chip_gen: v6e
topology: v6e:2x2x1
jax: 0.10.0
libtpu: 0.0.40
codegen_flags: <defaults>
</compile_context>

<pallas_src>
import math

import jax
import jax.numpy as jnp
from jax import lax
from jax.experimental import pallas as pl
from jax.experimental.pallas import tpu as pltpu

N_EMBD = 128
N_HEAD = 4
HEAD_SIZE = N_EMBD // N_HEAD   # 32
HIDDEN = 4 * N_EMBD            # 512
LN_EPS = 1e-5


def _norm(h):
    """Mean/variance normalization only; LayerNorm affine is folded into the
    downstream matmul weights in prepare_params."""
    mu = jnp.mean(h, axis=-1, keepdims=True)
    var = jnp.mean((h - mu) ** 2, axis=-1, keepdims=True)
    return (h - mu) * lax.rsqrt(var + LN_EPS)


def block_kernel(x_ref,
                 wqkv_ref, bqkv_ref, wp_ref, bp_ref,
                 w1_ref, bf1_ref, w2_ref, bf2_ref,
                 o_ref):
    Bb, T, C = x_ref.shape
    D = HEAD_SIZE

    x = x_ref[...].reshape(Bb * T, C)                      # (Bb*T, C) f32

    # ---- self-attention branch: x + Wp(concat_h softmax(q k^T + mask) v) --
    h = _norm(x)
    # Fused QKV matmul; gamma folded into wqkv rows, beta into bqkv,
    # 1/sqrt(D) folded into the q columns. Single f32->bf16 cast of qkv.
    qkv = (jnp.dot(h.astype(jnp.bfloat16), wqkv_ref[...],
                   preferred_element_type=jnp.float32)
           + bqkv_ref[...]).astype(jnp.bfloat16)           # (Bb*T, 3C) bf16
    q3 = qkv[:, 0 * C:1 * C].reshape(Bb, T, C)
    k3 = qkv[:, 1 * C:2 * C].reshape(Bb, T, C)
    v3 = qkv[:, 2 * C:3 * C].reshape(Bb, T, C)

    # Causal additive bias (T, T); added with implicit broadcast over batch.
    # Finite large negative (not -inf): the diagonal is always unmasked so the
    # row max stays finite and exp() can never produce NaN.
    row = lax.broadcasted_iota(jnp.int32, (T, T), 0)
    col = lax.broadcasted_iota(jnp.int32, (T, T), 1)
    bias = jnp.where(row >= col, 0.0, -1e30).astype(jnp.float32)

    heads = []
    for hd in range(N_HEAD):
        lo, hi = hd * D, (hd + 1) * D
        qh = q3[:, :, lo:hi]                               # (Bb, T, D) bf16
        kh = k3[:, :, lo:hi]
        vh = v3[:, :, lo:hi]
        # scores: contract last dims directly (no kh transpose / relayout)
        s = jnp.einsum("bqd,bkd->bqk", qh, kh,
                       preferred_element_type=jnp.float32) + bias  # (Bb,T,T)
        s = s - jnp.max(s, axis=-1, keepdims=True)
        p = jnp.exp(s)
        p = p * pl.reciprocal(jnp.sum(p, axis=-1, keepdims=True), approx=True)
        oh = jnp.einsum("bqk,bkd->bqd", p.astype(jnp.bfloat16), vh,
                        preferred_element_type=jnp.float32)        # (Bb,T,D)
        heads.append(oh.astype(jnp.bfloat16))

    # One lane-concat of the heads, then a single K=128 output projection
    # (replaces four K=32 matmuls).
    attn = jnp.concatenate(heads, axis=-1).reshape(Bb * T, C)      # bf16
    sa = jnp.dot(attn, wp_ref[...], preferred_element_type=jnp.float32)

    x1 = x + sa + bp_ref[...]                              # residual 1 (f32)

    # ---- feed-forward branch: x1 + W2(relu(W1(ln2(x1)))) ------------------
    h2 = _norm(x1)
    f = jnp.dot(h2.astype(jnp.bfloat16), w1_ref[...],
                preferred_element_type=jnp.float32) + bf1_ref[...]
    f = jnp.maximum(f, 0.0)
    f = jnp.dot(f.astype(jnp.bfloat16), w2_ref[...],
                preferred_element_type=jnp.float32) + bf2_ref[...]

    o_ref[...] = (x1 + f).reshape(Bb, T, C)


def prepare_params(p):
    """One-time weight prep (call once, reuse across forward calls):
    fuse Q/K/V, fold 1/sqrt(D) into q columns, fold LayerNorm affines into the
    downstream weights/biases, cast matmul weights to bf16."""
    scale = 1.0 / math.sqrt(HEAD_SIZE)
    # Fused QKV weight with the attention scale folded into the q columns.
    wqkv = jnp.concatenate([p["wq"] * scale, p["wk"], p["wv"]], axis=1)  # (C,3C)
    # ln1(x) @ W = norm(x) @ (gamma ⊙_rows W) + beta @ W
    bqkv = p["be1"].reshape(1, -1) @ wqkv                                 # (1,3C)
    wqkv = (p["g1"].reshape(-1, 1) * wqkv).astype(jnp.bfloat16)

    bf1 = p["bf1"] + p["be2"].reshape(1, -1) @ p["w1"]                    # (1,4C)
    w1 = (p["g2"].reshape(-1, 1) * p["w1"]).astype(jnp.bfloat16)

    return {
        "wqkv": wqkv, "bqkv": bqkv,
        "wp": p["wp"].astype(jnp.bfloat16), "bp": p["bp"],
        "w1": w1, "bf1": bf1,
        "w2": p["w2"].astype(jnp.bfloat16), "bf2": p["bf2"],
    }


def _choose_block_b(B):
    # Largest slab that divides B, capped at 8: Bb*T up to 1024 rows amortizes
    # per-step overhead and feeds the MXU, while f32 intermediates stay well
    # inside default scoped VMEM on v5e/v6e/v7x.
    for bb in (8, 4, 2, 1):
        if B % bb == 0:
            return bb
    return 1


def transformer_block(x, prepped, *, block_b=None):
    """x: (B, T, C) float32. prepped: output of prepare_params."""
    B, T, C = x.shape
    assert C == N_EMBD

    Bb = block_b if block_b is not None else _choose_block_b(B)
    assert B % Bb == 0

    w_args = [
        prepped["wqkv"], prepped["bqkv"],
        prepped["wp"], prepped["bp"],
        prepped["w1"], prepped["bf1"],
        prepped["w2"], prepped["bf2"],
    ]
    full = lambda a: pl.BlockSpec(a.shape, lambda b: (0,) * a.ndim)

    return pl.pallas_call(
        block_kernel,
        out_shape=jax.ShapeDtypeStruct((B, T, C), jnp.float32),
        grid_spec=pltpu.PrefetchScalarGridSpec(
            num_scalar_prefetch=0,
            grid=(B // Bb,),
            in_specs=[pl.BlockSpec((Bb, T, C), lambda b: (b, 0, 0))]
                     + [full(a) for a in w_args],
            out_specs=pl.BlockSpec((Bb, T, C), lambda b: (b, 0, 0)),
        ),
        compiler_params=pltpu.CompilerParams(
            dimension_semantics=("parallel",)),
    )(x, *w_args)


def init_params(key):
    """Deterministic synthetic parameters (PyTorch Linear: y = x @ W.T + b,
    stored here pre-transposed as (in, out) so the kernel does x @ W).
    LayerNorm affines are made non-trivial to exercise the weight folding."""
    ks = jax.random.split(key, 13)
    s = 0.02
    return {
        "g1":  1.0 + 0.1 * jax.random.normal(ks[9], (1, N_EMBD), jnp.float32),
        "be1": s * jax.random.normal(ks[10], (1, N_EMBD), jnp.float32),
        "wq":  s * jax.random.normal(ks[0], (N_EMBD, N_EMBD), jnp.float32),
        "wk":  s * jax.random.normal(ks[1], (N_EMBD, N_EMBD), jnp.float32),
        "wv":  s * jax.random.normal(ks[2], (N_EMBD, N_EMBD), jnp.float32),
        "wp":  s * jax.random.normal(ks[3], (N_EMBD, N_EMBD), jnp.float32),
        "bp":  s * jax.random.normal(ks[4], (1, N_EMBD), jnp.float32),
        "g2":  1.0 + 0.1 * jax.random.normal(ks[11], (1, N_EMBD), jnp.float32),
        "be2": s * jax.random.normal(ks[12], (1, N_EMBD), jnp.float32),
        "w1":  s * jax.random.normal(ks[5], (N_EMBD, HIDDEN), jnp.float32),
        "bf1": s * jax.random.normal(ks[6], (1, HIDDEN), jnp.float32),
        "w2":  s * jax.random.normal(ks[7], (HIDDEN, N_EMBD), jnp.float32),
        "bf2": s * jax.random.normal(ks[8], (1, N_EMBD), jnp.float32),
    }


def reference_block(x, p):
    """Pure-JAX f32 reference (eval-mode, matches the PyTorch module)."""
    def ln(h, g, b):
        mu = jnp.mean(h, axis=-1, keepdims=True)
        var = jnp.mean((h - mu) ** 2, axis=-1, keepdims=True)
        return (h - mu) / jnp.sqrt(var + LN_EPS) * g + b

    B, T, C = x.shape
    h = ln(x, p["g1"], p["be1"])
    q = h @ p["wq"]; k = h @ p["wk"]; v = h @ p["wv"]
    q = q.reshape(B, T, N_HEAD, HEAD_SIZE).transpose(0, 2, 1, 3)
    k = k.reshape(B, T, N_HEAD, HEAD_SIZE).transpose(0, 2, 1, 3)
    v = v.reshape(B, T, N_HEAD, HEAD_SIZE).transpose(0, 2, 1, 3)
    s = jnp.einsum("bhqd,bhkd->bhqk", q, k) / math.sqrt(HEAD_SIZE)
    mask = jnp.tril(jnp.ones((T, T), bool))
    s = jnp.where(mask, s, -jnp.inf)
    w = jax.nn.softmax(s, axis=-1)
    o = jnp.einsum("bhqk,bhkd->bhqd", w, v).transpose(0, 2, 1, 3).reshape(B, T, C)
    x1 = x + (o @ p["wp"] + p["bp"])
    h2 = ln(x1, p["g2"], p["be2"])
    f = jnp.maximum(h2 @ p["w1"] + p["bf1"], 0.0) @ p["w2"] + p["bf2"]
    return x1 + f


if __name__ == "__main__":
    key = jax.random.PRNGKey(0)
    kx, kp = jax.random.split(key)

    B, T = 4, 128                      # T == block_size (128)
    x = jax.random.normal(kx, (B, T, N_EMBD), jnp.float32)
    params = init_params(kp)
    prepped = prepare_params(params)   # one-time weight prep

    out = transformer_block(x, prepped)
    out = jax.block_until_ready(out)

    ref = reference_block(x, params)
    assert out.shape == (B, T, N_EMBD)
    # bf16 matmul operands -> relaxed tolerance vs. the pure-f32 reference.
    assert jnp.allclose(out, ref, atol=3e-2, rtol=3e-2), (
        "mismatch vs reference, max abs err = "
        f"{float(jnp.max(jnp.abs(out - ref)))}")

    print("KERNEL_OK")
</pallas_src>

<mosaic_0001>
module attributes {stable_mosaic.version = 11 : i64} {
  func.func @block_kernel(%arg0: i32, %arg1: memref<4x128x128xf32, #tpu.memory_space<vmem>>, %arg2: memref<128x384xbf16, #tpu.memory_space<vmem>>, %arg3: memref<1x384xf32, #tpu.memory_space<vmem>>, %arg4: memref<128x128xbf16, #tpu.memory_space<vmem>>, %arg5: memref<1x128xf32, #tpu.memory_space<vmem>>, %arg6: memref<128x512xbf16, #tpu.memory_space<vmem>>, %arg7: memref<1x512xf32, #tpu.memory_space<vmem>>, %arg8: memref<512x128xbf16, #tpu.memory_space<vmem>>, %arg9: memref<1x128xf32, #tpu.memory_space<vmem>>, %arg10: memref<4x128x128xf32, #tpu.memory_space<vmem>>) attributes {dimension_semantics = [#tpu.dimension_semantics<parallel>], iteration_bounds = array<i64: 1>, scalar_prefetch = 0 : i64, scratch_operands = 0 : i64, tpu.core_type = #tpu.core_type<tc>, window_params = [{transform_indices = @transform_0, window_bounds = array<i64: 4, 128, 128>}, {pipeline_mode = #tpu.pipeline_mode<synchronous>, transform_indices = @transform_1, window_bounds = array<i64: 128, 384>}, {pipeline_mode = #tpu.pipeline_mode<synchronous>, transform_indices = @transform_2, window_bounds = array<i64: 1, 384>}, {pipeline_mode = #tpu.pipeline_mode<synchronous>, transform_indices = @transform_3, window_bounds = array<i64: 128, 128>}, {pipeline_mode = #tpu.pipeline_mode<synchronous>, transform_indices = @transform_4, window_bounds = array<i64: 1, 128>}, {pipeline_mode = #tpu.pipeline_mode<synchronous>, transform_indices = @transform_5, window_bounds = array<i64: 128, 512>}, {pipeline_mode = #tpu.pipeline_mode<synchronous>, transform_indices = @transform_6, window_bounds = array<i64: 1, 512>}, {pipeline_mode = #tpu.pipeline_mode<synchronous>, transform_indices = @transform_7, window_bounds = array<i64: 512, 128>}, {pipeline_mode = #tpu.pipeline_mode<synchronous>, transform_indices = @transform_8, window_bounds = array<i64: 1, 128>}, {transform_indices = @transform_9, window_bounds = array<i64: 4, 128, 128>}]} {
    %c0 = arith.constant 0 : index
    %c0_0 = arith.constant 0 : index
    %c0_1 = arith.constant 0 : index
    %0 = vector.load %arg1[%c0, %c0_0, %c0_1] : memref<4x128x128xf32, #tpu.memory_space<vmem>>, vector<4x128x128xf32>
    %1 = vector.shape_cast %0 : vector<4x128x128xf32> to vector<512x128xf32>
    %cst = arith.constant dense<0.000000e+00> : vector<512xf32>
    %2 = vector.multi_reduction <add>, %1, %cst [1] : vector<512x128xf32> to vector<512xf32>
    %3 = vector.shape_cast %2 : vector<512xf32> to vector<512x1xf32>
    %cst_2 = arith.constant 1.280000e+02 : f32
    %4 = vector.broadcast %cst_2 : f32 to vector<512x1xf32>
    %5 = arith.divf %3, %4 : vector<512x1xf32>
    %6 = vector.broadcast %5 : vector<512x1xf32> to vector<512x128xf32>
    %7 = arith.subf %1, %6 : vector<512x128xf32>
    %8 = arith.mulf %7, %7 : vector<512x128xf32>
    %cst_3 = arith.constant dense<0.000000e+00> : vector<512xf32>
    %9 = vector.multi_reduction <add>, %8, %cst_3 [1] : vector<512x128xf32> to vector<512xf32>
    %10 = vector.shape_cast %9 : vector<512xf32> to vector<512x1xf32>
    %cst_4 = arith.constant 1.280000e+02 : f32
    %11 = vector.broadcast %cst_4 : f32 to vector<512x1xf32>
    %12 = arith.divf %10, %11 : vector<512x1xf32>
    %13 = vector.broadcast %5 : vector<512x1xf32> to vector<512x128xf32>
    %14 = arith.subf %1, %13 : vector<512x128xf32>
    %cst_5 = arith.constant 9.99999974E-6 : f32
    %15 = vector.broadcast %cst_5 : f32 to vector<512x1xf32>
    %16 = arith.addf %12, %15 : vector<512x1xf32>
    %17 = math.rsqrt %16 : vector<512x1xf32>
    %18 = vector.broadcast %17 : vector<512x1xf32> to vector<512x128xf32>
    %19 = arith.mulf %14, %18 : vector<512x128xf32>
    %20 = arith.truncf %19 : vector<512x128xf32> to vector<512x128xbf16>
    %c0_6 = arith.constant 0 : index
    %c0_7 = arith.constant 0 : index
    %21 = vector.load %arg2[%c0_6, %c0_7] : memref<128x384xbf16, #tpu.memory_space<vmem>>, vector<128x384xbf16>
    %cst_8 = arith.constant dense<0.000000e+00> : vector<512x384xf32>
    %22 = tpu.matmul %20, %21, %cst_8 {dimension_numbers = #tpu.dot_dimension_numbers<[1], [0], [0], [1], [0, 0, 1, 1], [], []>} : vector<512x128xbf16>, vector<128x384xbf16>, vector<512x384xf32> -> vector<512x384xf32>
    %c0_9 = arith.constant 0 : index
    %c0_10 = arith.constant 0 : index
    %23 = vector.load %arg3[%c0_9, %c0_10] : memref<1x384xf32, #tpu.memory_space<vmem>>, vector<1x384xf32>
    %24 = vector.broadcast %23 : vector<1x384xf32> to vector<512x384xf32>
    %25 = arith.addf %22, %24 : vector<512x384xf32>
    %26 = arith.truncf %25 : vector<512x384xf32> to vector<512x384xbf16>
    %27 = vector.extract_strided_slice %26 {offsets = [0, 0], sizes = [512, 128], strides = [1, 1]} : vector<512x384xbf16> to vector<512x128xbf16>
    %28 = vector.shape_cast %27 : vector<512x128xbf16> to vector<4x128x128xbf16>
    %29 = vector.extract_strided_slice %26 {offsets = [0, 128], sizes = [512, 128], strides = [1, 1]} : vector<512x384xbf16> to vector<512x128xbf16>
    %30 = vector.shape_cast %29 : vector<512x128xbf16> to vector<4x128x128xbf16>
    %31 = vector.extract_strided_slice %26 {offsets = [0, 256], sizes = [512, 128], strides = [1, 1]} : vector<512x384xbf16> to vector<512x128xbf16>
    %32 = vector.shape_cast %31 : vector<512x128xbf16> to vector<4x128x128xbf16>
    %33 = tpu.iota {dimensions = array<i32: 0>} : vector<128x128xi32>
    %34 = tpu.iota {dimensions = array<i32: 1>} : vector<128x128xi32>
    %35 = arith.cmpi sge, %33, %34 : vector<128x128xi32>
    %cst_11 = arith.constant 0.000000e+00 : f32
    %cst_12 = arith.constant -1.000000e+30 : f32
    %36 = vector.broadcast %cst_11 : f32 to vector<128x128xf32>
    %37 = vector.broadcast %cst_12 : f32 to vector<128x128xf32>
    %38 = arith.select %35, %36, %37 : vector<128x128xi1>, vector<128x128xf32>
    %39 = vector.extract_strided_slice %28 {offsets = [0, 0, 0], sizes = [4, 128, 32], strides = [1, 1, 1]} : vector<4x128x128xbf16> to vector<4x128x32xbf16>
    %40 = vector.extract_strided_slice %30 {offsets = [0, 0, 0], sizes = [4, 128, 32], strides = [1, 1, 1]} : vector<4x128x128xbf16> to vector<4x128x32xbf16>
    %41 = vector.extract_strided_slice %32 {offsets = [0, 0, 0], sizes = [4, 128, 32], strides = [1, 1, 1]} : vector<4x128x128xbf16> to vector<4x128x32xbf16>
    "tpu.trace_start"() <{level = 10 : i32, message = "bqd,bkd->bqk"}> : () -> ()
    %cst_13 = arith.constant dense<0.000000e+00> : vector<4x128x128xf32>
    %42 = tpu.matmul %39, %40, %cst_13 {dimension_numbers = #tpu.dot_dimension_numbers<[2], [2], [1], [1], [0, 0, 0, 1, 1, 1], [0], [0]>} : vector<4x128x32xbf16>, vector<4x128x32xbf16>, vector<4x128x128xf32> -> vector<4x128x128xf32>
    "tpu.trace_stop"() : () -> ()
    %43 = vector.shape_cast %38 : vector<128x128xf32> to vector<1x128x128xf32>
    %44 = vector.broadcast %43 : vector<1x128x128xf32> to vector<4x128x128xf32>
    %45 = arith.addf %42, %44 : vector<4x128x128xf32>
    %cst_14 = arith.constant dense<0xFF800000> : vector<4x128xf32>
    %46 = vector.multi_reduction <maximumf>, %45, %cst_14 [2] : vector<4x128x128xf32> to vector<4x128xf32>
    %47 = vector.shape_cast %46 : vector<4x128xf32> to vector<4x128x1xf32>
    %48 = vector.broadcast %47 : vector<4x128x1xf32> to vector<4x128x128xf32>
    %49 = arith.subf %45, %48 : vector<4x128x128xf32>
    %50 = math.exp %49 : vector<4x128x128xf32>
    %cst_15 = arith.constant dense<0.000000e+00> : vector<4x128xf32>
    %51 = vector.multi_reduction <add>, %50, %cst_15 [2] : vector<4x128x128xf32> to vector<4x128xf32>
    %52 = vector.shape_cast %51 : vector<4x128xf32> to vector<4x128x1xf32>
    %53 = tpu.reciprocal %52 {approx = true} : vector<4x128x1xf32> -> vector<4x128x1xf32>
    %54 = vector.broadcast %53 : vector<4x128x1xf32> to vector<4x128x128xf32>
    %55 = arith.mulf %50, %54 : vector<4x128x128xf32>
    %56 = arith.truncf %55 : vector<4x128x128xf32> to vector<4x128x128xbf16>
    "tpu.trace_start"() <{level = 10 : i32, message = "bqk,bkd->bqd"}> : () -> ()
    %cst_16 = arith.constant dense<0.000000e+00> : vector<4x128x32xf32>
    %57 = tpu.matmul %56, %41, %cst_16 {dimension_numbers = #tpu.dot_dimension_numbers<[2], [1], [1], [2], [0, 0, 0, 1, 1, 2], [0], [0]>} : vector<4x128x128xbf16>, vector<4x128x32xbf16>, vector<4x128x32xf32> -> vector<4x128x32xf32>
    "tpu.trace_stop"() : () -> ()
    %58 = arith.truncf %57 : vector<4x128x32xf32> to vector<4x128x32xbf16>
    %59 = vector.extract_strided_slice %28 {offsets = [0, 0, 32], sizes = [4, 128, 32], strides = [1, 1, 1]} : vector<4x128x128xbf16> to vector<4x128x32xbf16>
    %60 = vector.extract_strided_slice %30 {offsets = [0, 0, 32], sizes = [4, 128, 32], strides = [1, 1, 1]} : vector<4x128x128xbf16> to vector<4x128x32xbf16>
    %61 = vector.extract_strided_slice %32 {offsets = [0, 0, 32], sizes = [4, 128, 32], strides = [1, 1, 1]} : vector<4x128x128xbf16> to vector<4x128x32xbf16>
    "tpu.trace_start"() <{level = 10 : i32, message = "bqd,bkd->bqk"}> : () -> ()
    %cst_17 = arith.constant dense<0.000000e+00> : vector<4x128x128xf32>
    %62 = tpu.matmul %59, %60, %cst_17 {dimension_numbers = #tpu.dot_dimension_numbers<[2], [2], [1], [1], [0, 0, 0, 1, 1, 1], [0], [0]>} : vector<4x128x32xbf16>, vector<4x128x32xbf16>, vector<4x128x128xf32> -> vector<4x128x128xf32>
    "tpu.trace_stop"() : () -> ()
    %63 = vector.shape_cast %38 : vector<128x128xf32> to vector<1x128x128xf32>
    %64 = vector.broadcast %63 : vector<1x128x128xf32> to vector<4x128x128xf32>
    %65 = arith.addf %62, %64 : vector<4x128x128xf32>
    %cst_18 = arith.constant dense<0xFF800000> : vector<4x128xf32>
    %66 = vector.multi_reduction <maximumf>, %65, %cst_18 [2] : vector<4x128x128xf32> to vector<4x128xf32>
    %67 = vector.shape_cast %66 : vector<4x128xf32> to vector<4x128x1xf32>
    %68 = vector.broadcast %67 : vector<4x128x1xf32> to vector<4x128x128xf32>
    %69 = arith.subf %65, %68 : vector<4x128x128xf32>
    %70 = math.exp %69 : vector<4x128x128xf32>
    %cst_19 = arith.constant dense<0.000000e+00> : vector<4x128xf32>
    %71 = vector.multi_reduction <add>, %70, %cst_19 [2] : vector<4x128x128xf32> to vector<4x128xf32>
    %72 = vector.shape_cast %71 : vector<4x128xf32> to vector<4x128x1xf32>
    %73 = tpu.reciprocal %72 {approx = true} : vector<4x128x1xf32> -> vector<4x128x1xf32>
    %74 = vector.broadcast %73 : vector<4x128x1xf32> to vector<4x128x128xf32>
    %75 = arith.mulf %70, %74 : vector<4x128x128xf32>
    %76 = arith.truncf %75 : vector<4x128x128xf32> to vector<4x128x128xbf16>
    "tpu.trace_start"() <{level = 10 : i32, message = "bqk,bkd->bqd"}> : () -> ()
    %cst_20 = arith.constant dense<0.000000e+00> : vector<4x128x32xf32>
    %77 = tpu.matmul %76, %61, %cst_20 {dimension_numbers = #tpu.dot_dimension_numbers<[2], [1], [1], [2], [0, 0, 0, 1, 1, 2], [0], [0]>} : vector<4x128x128xbf16>, vector<4x128x32xbf16>, vector<4x128x32xf32> -> vector<4x128x32xf32>
    "tpu.trace_stop"() : () -> ()
    %78 = arith.truncf %77 : vector<4x128x32xf32> to vector<4x128x32xbf16>
    %79 = vector.extract_strided_slice %28 {offsets = [0, 0, 64], sizes = [4, 128, 32], strides = [1, 1, 1]} : vector<4x128x128xbf16> to vector<4x128x32xbf16>
    %80 = vector.extract_strided_slice %30 {offsets = [0, 0, 64], sizes = [4, 128, 32], strides = [1, 1, 1]} : vector<4x128x128xbf16> to vector<4x128x32xbf16>
    %81 = vector.extract_strided_slice %32 {offsets = [0, 0, 64], sizes = [4, 128, 32], strides = [1, 1, 1]} : vector<4x128x128xbf16> to vector<4x128x32xbf16>
    "tpu.trace_start"() <{level = 10 : i32, message = "bqd,bkd->bqk"}> : () -> ()
    %cst_21 = arith.constant dense<0.000000e+00> : vector<4x128x128xf32>
    %82 = tpu.matmul %79, %80, %cst_21 {dimension_numbers = #tpu.dot_dimension_numbers<[2], [2], [1], [1], [0, 0, 0, 1, 1, 1], [0], [0]>} : vector<4x128x32xbf16>, vector<4x128x32xbf16>, vector<4x128x128xf32> -> vector<4x128x128xf32>
    "tpu.trace_stop"() : () -> ()
    %83 = vector.shape_cast %38 : vector<128x128xf32> to vector<1x128x128xf32>
    %84 = vector.broadcast %83 : vector<1x128x128xf32> to vector<4x128x128xf32>
    %85 = arith.addf %82, %84 : vector<4x128x128xf32>
    %cst_22 = arith.constant dense<0xFF800000> : vector<4x128xf32>
    %86 = vector.multi_reduction <maximumf>, %85, %cst_22 [2] : vector<4x128x128xf32> to vector<4x128xf32>
    %87 = vector.shape_cast %86 : vector<4x128xf32> to vector<4x128x1xf32>
    %88 = vector.broadcast %87 : vector<4x128x1xf32> to vector<4x128x128xf32>
    %89 = arith.subf %85, %88 : vector<4x128x128xf32>
    %90 = math.exp %89 : vector<4x128x128xf32>
    %cst_23 = arith.constant dense<0.000000e+00> : vector<4x128xf32>
    %91 = vector.multi_reduction <add>, %90, %cst_23 [2] : vector<4x128x128xf32> to vector<4x128xf32>
    %92 = vector.shape_cast %91 : vector<4x128xf32> to vector<4x128x1xf32>
    %93 = tpu.reciprocal %92 {approx = true} : vector<4x128x1xf32> -> vector<4x128x1xf32>
    %94 = vector.broadcast %93 : vector<4x128x1xf32> to vector<4x128x128xf32>
    %95 = arith.mulf %90, %94 : vector<4x128x128xf32>
    %96 = arith.truncf %95 : vector<4x128x128xf32> to vector<4x128x128xbf16>
    "tpu.trace_start"() <{level = 10 : i32, message = "bqk,bkd->bqd"}> : () -> ()
    %cst_24 = arith.constant dense<0.000000e+00> : vector<4x128x32xf32>
    %97 = tpu.matmul %96, %81, %cst_24 {dimension_numbers = #tpu.dot_dimension_numbers<[2], [1], [1], [2], [0, 0, 0, 1, 1, 2], [0], [0]>} : vector<4x128x128xbf16>, vector<4x128x32xbf16>, vector<4x128x32xf32> -> vector<4x128x32xf32>
    "tpu.trace_stop"() : () -> ()
    %98 = arith.truncf %97 : vector<4x128x32xf32> to vector<4x128x32xbf16>
    %99 = vector.extract_strided_slice %28 {offsets = [0, 0, 96], sizes = [4, 128, 32], strides = [1, 1, 1]} : vector<4x128x128xbf16> to vector<4x128x32xbf16>
    %100 = vector.extract_strided_slice %30 {offsets = [0, 0, 96], sizes = [4, 128, 32], strides = [1, 1, 1]} : vector<4x128x128xbf16> to vector<4x128x32xbf16>
    %101 = vector.extract_strided_slice %32 {offsets = [0, 0, 96], sizes = [4, 128, 32], strides = [1, 1, 1]} : vector<4x128x128xbf16> to vector<4x128x32xbf16>
    "tpu.trace_start"() <{level = 10 : i32, message = "bqd,bkd->bqk"}> : () -> ()
    %cst_25 = arith.constant dense<0.000000e+00> : vector<4x128x128xf32>
    %102 = tpu.matmul %99, %100, %cst_25 {dimension_numbers = #tpu.dot_dimension_numbers<[2], [2], [1], [1], [0, 0, 0, 1, 1, 1], [0], [0]>} : vector<4x128x32xbf16>, vector<4x128x32xbf16>, vector<4x128x128xf32> -> vector<4x128x128xf32>
    "tpu.trace_stop"() : () -> ()
    %103 = vector.shape_cast %38 : vector<128x128xf32> to vector<1x128x128xf32>
    %104 = vector.broadcast %103 : vector<1x128x128xf32> to vector<4x128x128xf32>
    %105 = arith.addf %102, %104 : vector<4x128x128xf32>
    %cst_26 = arith.constant dense<0xFF800000> : vector<4x128xf32>
    %106 = vector.multi_reduction <maximumf>, %105, %cst_26 [2] : vector<4x128x128xf32> to vector<4x128xf32>
    %107 = vector.shape_cast %106 : vector<4x128xf32> to vector<4x128x1xf32>
    %108 = vector.broadcast %107 : vector<4x128x1xf32> to vector<4x128x128xf32>
    %109 = arith.subf %105, %108 : vector<4x128x128xf32>
    %110 = math.exp %109 : vector<4x128x128xf32>
    %cst_27 = arith.constant dense<0.000000e+00> : vector<4x128xf32>
    %111 = vector.multi_reduction <add>, %110, %cst_27 [2] : vector<4x128x128xf32> to vector<4x128xf32>
    %112 = vector.shape_cast %111 : vector<4x128xf32> to vector<4x128x1xf32>
    %113 = tpu.reciprocal %112 {approx = true} : vector<4x128x1xf32> -> vector<4x128x1xf32>
    %114 = vector.broadcast %113 : vector<4x128x1xf32> to vector<4x128x128xf32>
    %115 = arith.mulf %110, %114 : vector<4x128x128xf32>
    %116 = arith.truncf %115 : vector<4x128x128xf32> to vector<4x128x128xbf16>
    "tpu.trace_start"() <{level = 10 : i32, message = "bqk,bkd->bqd"}> : () -> ()
    %cst_28 = arith.constant dense<0.000000e+00> : vector<4x128x32xf32>
    %117 = tpu.matmul %116, %101, %cst_28 {dimension_numbers = #tpu.dot_dimension_numbers<[2], [1], [1], [2], [0, 0, 0, 1, 1, 2], [0], [0]>} : vector<4x128x128xbf16>, vector<4x128x32xbf16>, vector<4x128x32xf32> -> vector<4x128x32xf32>
    "tpu.trace_stop"() : () -> ()
    %118 = arith.truncf %117 : vector<4x128x32xf32> to vector<4x128x32xbf16>
    %119 = tpu.concatenate %58, %78, %98, %118 in 2 : vector<4x128x32xbf16>, vector<4x128x32xbf16>, vector<4x128x32xbf16>, vector<4x128x32xbf16> -> vector<4x128x128xbf16>
    %120 = vector.shape_cast %119 : vector<4x128x128xbf16> to vector<512x128xbf16>
    %c0_29 = arith.constant 0 : index
    %c0_30 = arith.constant 0 : index
    %121 = vector.load %arg4[%c0_29, %c0_30] : memref<128x128xbf16, #tpu.memory_space<vmem>>, vector<128x128xbf16>
    %cst_31 = arith.constant dense<0.000000e+00> : vector<512x128xf32>
    %122 = tpu.matmul %120, %121, %cst_31 {dimension_numbers = #tpu.dot_dimension_numbers<[1], [0], [0], [1], [0, 0, 1, 1], [], []>} : vector<512x128xbf16>, vector<128x128xbf16>, vector<512x128xf32> -> vector<512x128xf32>
    %123 = arith.addf %1, %122 : vector<512x128xf32>
    %c0_32 = arith.constant 0 : index
    %c0_33 = arith.constant 0 : index
    %124 = vector.load %arg5[%c0_32, %c0_33] : memref<1x128xf32, #tpu.memory_space<vmem>>, vector<1x128xf32>
    %125 = vector.broadcast %124 : vector<1x128xf32> to vector<512x128xf32>
    %126 = arith.addf %123, %125 : vector<512x128xf32>
    %cst_34 = arith.constant dense<0.000000e+00> : vector<512xf32>
    %127 = vector.multi_reduction <add>, %126, %cst_34 [1] : vector<512x128xf32> to vector<512xf32>
    %128 = vector.shape_cast %127 : vector<512xf32> to vector<512x1xf32>
    %cst_35 = arith.constant 1.280000e+02 : f32
    %129 = vector.broadcast %cst_35 : f32 to vector<512x1xf32>
    %130 = arith.divf %128, %129 : vector<512x1xf32>
    %131 = vector.broadcast %130 : vector<512x1xf32> to vector<512x128xf32>
    %132 = arith.subf %126, %131 : vector<512x128xf32>
    %133 = arith.mulf %132, %132 : vector<512x128xf32>
    %cst_36 = arith.constant dense<0.000000e+00> : vector<512xf32>
    %134 = vector.multi_reduction <add>, %133, %cst_36 [1] : vector<512x128xf32> to vector<512xf32>
    %135 = vector.shape_cast %134 : vector<512xf32> to vector<512x1xf32>
    %cst_37 = arith.constant 1.280000e+02 : f32
    %136 = vector.broadcast %cst_37 : f32 to vector<512x1xf32>
    %137 = arith.divf %135, %136 : vector<512x1xf32>
    %138 = vector.broadcast %130 : vector<512x1xf32> to vector<512x128xf32>
    %139 = arith.subf %126, %138 : vector<512x128xf32>
    %cst_38 = arith.constant 9.99999974E-6 : f32
    %140 = vector.broadcast %cst_38 : f32 to vector<512x1xf32>
    %141 = arith.addf %137, %140 : vector<512x1xf32>
    %142 = math.rsqrt %141 : vector<512x1xf32>
    %143 = vector.broadcast %142 : vector<512x1xf32> to vector<512x128xf32>
    %144 = arith.mulf %139, %143 : vector<512x128xf32>
    %145 = arith.truncf %144 : vector<512x128xf32> to vector<512x128xbf16>
    %c0_39 = arith.constant 0 : index
    %c0_40 = arith.constant 0 : index
    %146 = vector.load %arg6[%c0_39, %c0_40] : memref<128x512xbf16, #tpu.memory_space<vmem>>, vector<128x512xbf16>
    %cst_41 = arith.constant dense<0.000000e+00> : vector<512x512xf32>
    %147 = tpu.matmul %145, %146, %cst_41 {dimension_numbers = #tpu.dot_dimension_numbers<[1], [0], [0], [1], [0, 0, 1, 1], [], []>} : vector<512x128xbf16>, vector<128x512xbf16>, vector<512x512xf32> -> vector<512x512xf32>
    %c0_42 = arith.constant 0 : index
    %c0_43 = arith.constant 0 : index
    %148 = vector.load %arg7[%c0_42, %c0_43] : memref<1x512xf32, #tpu.memory_space<vmem>>, vector<1x512xf32>
    %149 = vector.broadcast %148 : vector<1x512xf32> to vector<512x512xf32>
    %150 = arith.addf %147, %149 : vector<512x512xf32>
    %cst_44 = arith.constant 0.000000e+00 : f32
    %151 = vector.broadcast %cst_44 : f32 to vector<512x512xf32>
    %152 = arith.maximumf %150, %151 : vector<512x512xf32>
    %153 = arith.truncf %152 : vector<512x512xf32> to vector<512x512xbf16>
    %c0_45 = arith.constant 0 : index
    %c0_46 = arith.constant 0 : index
    %154 = vector.load %arg8[%c0_45, %c0_46] : memref<512x128xbf16, #tpu.memory_space<vmem>>, vector<512x128xbf16>
    %cst_47 = arith.constant dense<0.000000e+00> : vector<512x128xf32>
    %155 = tpu.matmul %153, %154, %cst_47 {dimension_numbers = #tpu.dot_dimension_numbers<[1], [0], [0], [1], [0, 0, 1, 1], [], []>} : vector<512x512xbf16>, vector<512x128xbf16>, vector<512x128xf32> -> vector<512x128xf32>
    %c0_48 = arith.constant 0 : index
    %c0_49 = arith.constant 0 : index
    %156 = vector.load %arg9[%c0_48, %c0_49] : memref<1x128xf32, #tpu.memory_space<vmem>>, vector<1x128xf32>
    %157 = vector.broadcast %156 : vector<1x128xf32> to vector<512x128xf32>
    %158 = arith.addf %155, %157 : vector<512x128xf32>
    %159 = arith.addf %126, %158 : vector<512x128xf32>
    %160 = vector.shape_cast %159 : vector<512x128xf32> to vector<4x128x128xf32>
    %c0_50 = arith.constant 0 : index
    %c0_51 = arith.constant 0 : index
    %c0_52 = arith.constant 0 : index
    %161 = vector.load %arg10[%c0_50, %c0_51, %c0_52] : memref<4x128x128xf32, #tpu.memory_space<vmem>>, vector<4x128x128xf32>
    tpu.vector_store %arg10[%c0_50, %c0_51, %c0_52], %160 {strides = array<i32>} : memref<4x128x128xf32, #tpu.memory_space<vmem>>, vector<4x128x128xf32>,
    return
  }
  func.func @transform_0(%arg0: i32) -> (i32, i32, i32) {
    %c0_i32 = arith.constant 0 : i32
    %c0_i32_0 = arith.constant 0 : i32
    %c0_i32_1 = arith.constant 0 : i32
    return %arg0, %c0_i32, %c0_i32_0 : i32, i32, i32
  }
  func.func @transform_1(%arg0: i32) -> (i32, i32) {
    %c0_i32 = arith.constant 0 : i32
    %c0_i32_0 = arith.constant 0 : i32
    %c0_i32_1 = arith.constant 0 : i32
    return %c0_i32, %c0_i32_0 : i32, i32
  }
  func.func @transform_2(%arg0: i32) -> (i32, i32) {
    %c0_i32 = arith.constant 0 : i32
    %c0_i32_0 = arith.constant 0 : i32
    %c0_i32_1 = arith.constant 0 : i32
    return %c0_i32, %c0_i32_0 : i32, i32
  }
  func.func @transform_3(%arg0: i32) -> (i32, i32) {
    %c0_i32 = arith.constant 0 : i32
    %c0_i32_0 = arith.constant 0 : i32
    %c0_i32_1 = arith.constant 0 : i32
    return %c0_i32, %c0_i32_0 : i32, i32
  }
  func.func @transform_4(%arg0: i32) -> (i32, i32) {
    %c0_i32 = arith.constant 0 : i32
    %c0_i32_0 = arith.constant 0 : i32
    %c0_i32_1 = arith.constant 0 : i32
    return %c0_i32, %c0_i32_0 : i32, i32
  }
  func.func @transform_5(%arg0: i32) -> (i32, i32) {
    %c0_i32 = arith.constant 0 : i32
    %c0_i32_0 = arith.constant 0 : i32
    %c0_i32_1 = arith.constant 0 : i32
    return %c0_i32, %c0_i32_0 : i32, i32
  }
  func.func @transform_6(%arg0: i32) -> (i32, i32) {
    %c0_i32 = arith.constant 0 : i32
    %c0_i32_0 = arith.constant 0 : i32
    %c0_i32_1 = arith.constant 0 : i32
    return %c0_i32, %c0_i32_0 : i32, i32
  }
  func.func @transform_7(%arg0: i32) -> (i32, i32) {
    %c0_i32 = arith.constant 0 : i32
    %c0_i32_0 = arith.constant 0 : i32
    %c0_i32_1 = arith.constant 0 : i32
    return %c0_i32, %c0_i32_0 : i32, i32
  }
  func.func @transform_8(%arg0: i32) -> (i32, i32) {
    %c0_i32 = arith.constant 0 : i32
    %c0_i32_0 = arith.constant 0 : i32
    %c0_i32_1 = arith.constant 0 : i32
    return %c0_i32, %c0_i32_0 : i32, i32
  }
  func.func @transform_9(%arg0: i32) -> (i32, i32, i32) {
    %c0_i32 = arith.constant 0 : i32
    %c0_i32_0 = arith.constant 0 : i32
    %c0_i32_1 = arith.constant 0 : i32
    return %arg0, %c0_i32, %c0_i32_0 : i32, i32, i32
  }
}

</mosaic_0001>

<llo_original>
// kernel: tpu_custom_call.1
$region0: #{tpu_custom_call.1}
  #allocation0 [shape = 'u32[]', space=smem, size = 0x4, offset = 0x4, fixed_abs, tag = 'smem constant byte address 0x4 - core index']
  #allocation1 [shape = 'u32[144,128]{1,0:T(1,128)}', space=vmem, size = 0x12000, scoped, tag = 'internal scratch']
  %s0 = inlined_call_operand.hbm [shape: f32[4,128,128], index: 0, kind: input, shape index: {}]
  %s1 = inlined_call_operand.hbm [shape: bf16[128,384], index: 1, kind: input, shape index: {}]
  %s2 = inlined_call_operand.vmem [shape: f32[1,384], index: 2, kind: input, shape index: {}]
  %s3 = inlined_call_operand.hbm [shape: bf16[128,128], index: 3, kind: input, shape index: {}]
  %s4 = inlined_call_operand.hbm [shape: f32[1,128], index: 4, kind: input, shape index: {}]
  %s5 = inlined_call_operand.hbm [shape: bf16[128,512], index: 5, kind: input, shape index: {}]
  %s6 = inlined_call_operand.vmem [shape: f32[1,512], index: 6, kind: input, shape index: {}]
  %s7 = inlined_call_operand.hbm [shape: bf16[512,128], index: 7, kind: input, shape index: {}]
  %s8 = inlined_call_operand.vmem [shape: f32[1,128], index: 8, kind: input, shape index: {}]
  %s9 = inlined_call_operand.hbm [shape: f32[4,128,128], index: 9, kind: output, shape index: {}]
  %s10 = sld [smem:[#allocation0]]
  $region70: #{tpu_custom_call.1} parent=0
    _
  %s12 = ssub.s32 1, %s10
  %s13 = scalar_select 0, %s12, %s10
  $region1: #{tpu_custom_call.1} parent=0
    #allocation2 [shape = 'u8[262144]{0}', space=vmem, size = 0x40000, scoped, tag = 'input window, operand 0, single buffered']
    #allocation3 [shape = 's32[1]{0}', space=sflag, size = 0x4, scoped, tag = 'scoped memory for tpu_custom_call.1']
    #allocation4 [shape = 's32[1]{0}', space=sflag, size = 0x4, scoped, tag = 'scoped memory for tpu_custom_call.1']
    #allocation5 [shape = 'u8[98304]{0}', space=vmem, size = 0x18000, scoped, tag = 'input window, operand 1, single buffered']
    #allocation6 [shape = 's32[1]{0}', space=sflag, size = 0x4, scoped, tag = 'scoped memory for tpu_custom_call.1']
    #allocation7 [shape = 'u8[32768]{0}', space=vmem, size = 0x8000, scoped, tag = 'input window, operand 3, single buffered']
    #allocation8 [shape = 'u8[512]{0}', space=vmem, size = 0x400, scoped, tag = 'input window, operand 4, single buffered']
    #allocation9 [shape = 's32[1]{0}', space=sflag, size = 0x4, scoped, tag = 'scoped memory for tpu_custom_call.1']
    #allocation10 [shape = 'u8[131072]{0}', space=vmem, size = 0x20000, scoped, tag = 'input window, operand 5, single buffered']
    #allocation11 [shape = 'u8[131072]{0}', space=vmem, size = 0x20000, scoped, tag = 'input window, operand 7, single buffered']
    #allocation12 [shape = 's32[1]{0}', space=sflag, size = 0x4, scoped, tag = 'scoped memory for tpu_custom_call.1']
    #allocation13 [shape = 'u8[262144]{0}', space=vmem, size = 0x40000, scoped, tag = 'output window, operand 0, single buffered']
    %14 = vsyncpa [#allocation3], 0
    %15 = vsyncpa [#allocation6], 0
    %16 = vsyncpa [#allocation9], 0
    %17 = vsyncpa [#allocation12], 0
    %18 = vsyncpa [#allocation4], 0
    // Predicated region
    $region2: #{tpu_custom_call.1} parent=1 // pred_check
      _
    $region3: #{tpu_custom_call.1} parent=1 // pred_check_branch
      %20 = sbr.rel (0) target = $region5
    $region4: #{tpu_custom_call.1} parent=1 // pred_region
      %s22 = ssub.s32 8192, 8192
      %23 = vsyncadd [#allocation3], %s22
      %s24 = sshll.u32 [#allocation2], 4
      %s25 = int_to_ptr.vmem [resolvable:$true] %s24
      %30 = dma.hbm_to_vmem [thread:$0]  %s0, 8192, %s25, [#allocation3], 128, 128, 8
    $region5: #{tpu_custom_call.1} parent=1 // pred_fallthru
      _
    // Predicated region
    $region6: #{tpu_custom_call.1} parent=1 // pred_check
      _
    $region7: #{tpu_custom_call.1} parent=1 // pred_check_branch
      %32 = sbr.rel (0) target = $region9
    $region8: #{tpu_custom_call.1} parent=1 // pred_region
      %s34 = ssub.s32 3072, 3072
      %35 = vsyncadd [#allocation6], %s34
      %s36 = sshll.u32 [#allocation5], 4
      %s37 = int_to_ptr.vmem [resolvable:$true] %s36
      %42 = dma.hbm_to_vmem [thread:$0]  %s1, 3072, %s37, [#allocation6], 192, 192, 12
    $region9: #{tpu_custom_call.1} parent=1 // pred_fallthru
      _
    // Predicated region
    $region10: #{tpu_custom_call.1} parent=1 // pred_check
      _
    $region11: #{tpu_custom_call.1} parent=1 // pred_check_branch
      %44 = sbr.rel (0) target = $region13
    $region12: #{tpu_custom_call.1} parent=1 // pred_region
      _
    $region13: #{tpu_custom_call.1} parent=1 // pred_fallthru
      _
    // Predicated region
    $region14: #{tpu_custom_call.1} parent=1 // pred_check
      _
    $region15: #{tpu_custom_call.1} parent=1 // pred_check_branch
      %46 = sbr.rel (0) target = $region17
    $region16: #{tpu_custom_call.1} parent=1 // pred_region
      %s48 = ssub.s32 1024, 1024
      %49 = vsyncadd [#allocation6], %s48
      %s50 = sshll.u32 [#allocation7], 4
      %s51 = int_to_ptr.vmem [resolvable:$true] %s50
      %56 = dma.hbm_to_vmem [thread:$0]  %s3, 1024, %s51, [#allocation6], 64, 64, 4
    $region17: #{tpu_custom_call.1} parent=1 // pred_fallthru
      _
    // Predicated region
    $region18: #{tpu_custom_call.1} parent=1 // pred_check
      _
    $region19: #{tpu_custom_call.1} parent=1 // pred_check_branch
      %58 = sbr.rel (0) target = $region21
    $region20: #{tpu_custom_call.1} parent=1 // pred_region
      %s60 = ssub.s32 16, 16
      %61 = vsyncadd [#allocation9], %s60
      %s63 = sshll.u32 [#allocation8], 4
      %s64 = int_to_ptr.vmem [resolvable:$true] %s63
      %66 = dma.hbm_to_vmem [thread:$0]  %s4, 16, %s64, [#allocation9]
    $region21: #{tpu_custom_call.1} parent=1 // pred_fallthru
      _
    // Predicated region
    $region22: #{tpu_custom_call.1} parent=1 // pred_check
      _
    $region23: #{tpu_custom_call.1} parent=1 // pred_check_branch
      %68 = sbr.rel (0) target = $region25
    $region24: #{tpu_custom_call.1} parent=1 // pred_region
      %s70 = ssub.s32 4096, 4096
      %71 = vsyncadd [#allocation9], %s70
      %s72 = sshll.u32 [#allocation10], 4
      %s73 = int_to_ptr.vmem [resolvable:$true] %s72
      %78 = dma.hbm_to_vmem [thread:$0]  %s5, 4096, %s73, [#allocation9], 256, 256, 16
    $region25: #{tpu_custom_call.1} parent=1 // pred_fallthru
      _
    // Predicated region
    $region26: #{tpu_custom_call.1} parent=1 // pred_check
      _
    $region27: #{tpu_custom_call.1} parent=1 // pred_check_branch
      %80 = sbr.rel (0) target = $region29
    $region28: #{tpu_custom_call.1} parent=1 // pred_region
      _
    $region29: #{tpu_custom_call.1} parent=1 // pred_fallthru
      _
    // Predicated region
    $region30: #{tpu_custom_call.1} parent=1 // pred_check
      _
    $region31: #{tpu_custom_call.1} parent=1 // pred_check_branch
      %82 = sbr.rel (0) target = $region33
    $region32: #{tpu_custom_call.1} parent=1 // pred_region
      %s84 = ssub.s32 4096, 4096
      %85 = vsyncadd [#allocation12], %s84
      %s86 = sshll.u32 [#allocation11], 4
      %s87 = int_to_ptr.vmem [resolvable:$true] %s86
      %92 = dma.hbm_to_vmem [thread:$0]  %s7, 4096, %s87, [#allocation12], 64, 64, 4
    $region33: #{tpu_custom_call.1} parent=1 // pred_fallthru
      _
    // Predicated region
    $region34: #{tpu_custom_call.1} parent=1 // pred_check
      _
    $region35: #{tpu_custom_call.1} parent=1 // pred_check_branch
      %94 = sbr.rel (0) target = $region37
    $region36: #{tpu_custom_call.1} parent=1 // pred_region
      _
    $region37: #{tpu_custom_call.1} parent=1 // pred_fallthru
      _
    // Predicated region
    $region38: #{tpu_custom_call.1} parent=1 // pred_check
      _
    $region39: #{tpu_custom_call.1} parent=1 // pred_check_branch
      %96 = sbr.rel (0) target = $region41
    $region40: #{tpu_custom_call.1} parent=1 // pred_region
      %97 = dma.done [#allocation3], 8192
    $region41: #{tpu_custom_call.1} parent=1 // pred_fallthru
      _
    // Predicated region
    $region42: #{tpu_custom_call.1} parent=1 // pred_check
      _
    $region43: #{tpu_custom_call.1} parent=1 // pred_check_branch
      %99 = sbr.rel (0) target = $region45
    $region44: #{tpu_custom_call.1} parent=1 // pred_region
      %100 = dma.done [#allocation6], 3072
    $region45: #{tpu_custom_call.1} parent=1 // pred_fallthru
      _
    // Predicated region
    $region46: #{tpu_custom_call.1} parent=1 // pred_check
      _
    $region47: #{tpu_custom_call.1} parent=1 // pred_check_branch
      %102 = sbr.rel (0) target = $region49
    $region48: #{tpu_custom_call.1} parent=1 // pred_region
      %103 = dma.done [#allocation6], 1024
    $region49: #{tpu_custom_call.1} parent=1 // pred_fallthru
      _
    // Predicated region
    $region50: #{tpu_custom_call.1} parent=1 // pred_check
      _
    $region51: #{tpu_custom_call.1} parent=1 // pred_check_branch
      %105 = sbr.rel (0) target = $region53
    $region52: #{tpu_custom_call.1} parent=1 // pred_region
      %106 = dma.done [#allocation9], 16
    $region53: #{tpu_custom_call.1} parent=1 // pred_fallthru
      _
    // Predicated region
    $region54: #{tpu_custom_call.1} parent=1 // pred_check
      _
    $region55: #{tpu_custom_call.1} parent=1 // pred_check_branch
      %108 = sbr.rel (0) target = $region57
    $region56: #{tpu_custom_call.1} parent=1 // pred_region
      %109 = dma.done [#allocation9], 4096
    $region57: #{tpu_custom_call.1} parent=1 // pred_fallthru
      _
    // Predicated region
    $region58: #{tpu_custom_call.1} parent=1 // pred_check
      _
    $region59: #{tpu_custom_call.1} parent=1 // pred_check_branch
      %111 = sbr.rel (0) target = $region61
    $region60: #{tpu_custom_call.1} parent=1 // pred_region
      %112 = dma.done [#allocation12], 4096
    $region61: #{tpu_custom_call.1} parent=1 // pred_fallthru
      _
    %v114 = vld [vmem:[#allocation2] sm:$0xff]
    %v115 = vld [vmem:[#allocation2 + $0x8] sm:$0xff]
    %v116 = vld [vmem:[#allocation2 + $0x10] sm:$0xff]
    %v117 = vld [vmem:[#allocation2 + $0x18] sm:$0xff]
    %v118 = vld [vmem:[#allocation2 + $0x20] sm:$0xff]
    %v119 = vld [vmem:[#allocation2 + $0x28] sm:$0xff]
    %v120 = vld [vmem:[#allocation2 + $0x30] sm:$0xff]
    %v121 = vld [vmem:[#allocation2 + $0x38] sm:$0xff]
    %v122 = vld [vmem:[#allocation2 + $0x40] sm:$0xff]
    %v123 = vld [vmem:[#allocation2 + $0x48] sm:$0xff]
    %v124 = vld [vmem:[#allocation2 + $0x50] sm:$0xff]
    %v125 = vld [vmem:[#allocation2 + $0x58] sm:$0xff]
    %v126 = vld [vmem:[#allocation2 + $0x60] sm:$0xff]
    %v127 = vld [vmem:[#allocation2 + $0x68] sm:$0xff]
    %v128 = vld [vmem:[#allocation2 + $0x70] sm:$0xff]
    %v129 = vld [vmem:[#allocation2 + $0x78] sm:$0xff]
    %v130 = vld [vmem:[#allocation2 + $0x80] sm:$0xff]
    %v131 = vld [vmem:[#allocation2 + $0x88] sm:$0xff]
    %v132 = vld [vmem:[#allocation2 + $0x90] sm:$0xff]
    %v133 = vld [vmem:[#allocation2 + $0x98] sm:$0xff]
    %v134 = vld [vmem:[#allocation2 + $0xa0] sm:$0xff]
    %v135 = vld [vmem:[#allocation2 + $0xa8] sm:$0xff]
    %v136 = vld [vmem:[#allocation2 + $0xb0] sm:$0xff]
    %v137 = vld [vmem:[#allocation2 + $0xb8] sm:$0xff]
    %v138 = vld [vmem:[#allocation2 + $0xc0] sm:$0xff]
    %v139 = vld [vmem:[#allocation2 + $0xc8] sm:$0xff]
    %v140 = vld [vmem:[#allocation2 + $0xd0] sm:$0xff]
    %v141 = vld [vmem:[#allocation2 + $0xd8] sm:$0xff]
    %v142 = vld [vmem:[#allocation2 + $0xe0] sm:$0xff]
    %v143 = vld [vmem:[#allocation2 + $0xe8] sm:$0xff]
    %v144 = vld [vmem:[#allocation2 + $0xf0] sm:$0xff]
    %v145 = vld [vmem:[#allocation2 + $0xf8] sm:$0xff]
    %v146 = vld [vmem:[#allocation2 + $0x100] sm:$0xff]
    %v147 = vld [vmem:[#allocation2 + $0x108] sm:$0xff]
    %v148 = vld [vmem:[#allocation2 + $0x110] sm:$0xff]
    %v149 = vld [vmem:[#allocation2 + $0x118] sm:$0xff]
    %v150 = vld [vmem:[#allocation2 + $0x120] sm:$0xff]
    %v151 = vld [vmem:[#allocation2 + $0x128] sm:$0xff]
    %v152 = vld [vmem:[#allocation2 + $0x130] sm:$0xff]
    %v153 = vld [vmem:[#allocation2 + $0x138] sm:$0xff]
    %v154 = vld [vmem:[#allocation2 + $0x140] sm:$0xff]
    %v155 = vld [vmem:[#allocation2 + $0x148] sm:$0xff]
    %v156 = vld [vmem:[#allocation2 + $0x150] sm:$0xff]
    %v157 = vld [vmem:[#allocation2 + $0x158] sm:$0xff]
    %v158 = vld [vmem:[#allocation2 + $0x160] sm:$0xff]
    %v159 = vld [vmem:[#allocation2 + $0x168] sm:$0xff]
    %v160 = vld [vmem:[#allocation2 + $0x170] sm:$0xff]
    %v161 = vld [vmem:[#allocation2 + $0x178] sm:$0xff]
    %v162 = vld [vmem:[#allocation2 + $0x180] sm:$0xff]
    %v163 = vld [vmem:[#allocation2 + $0x188] sm:$0xff]
    %v164 = vld [vmem:[#allocation2 + $0x190] sm:$0xff]
    %v165 = vld [vmem:[#allocation2 + $0x198] sm:$0xff]
    %v166 = vld [vmem:[#allocation2 + $0x1a0] sm:$0xff]
    %v167 = vld [vmem:[#allocation2 + $0x1a8] sm:$0xff]
    %v168 = vld [vmem:[#allocation2 + $0x1b0] sm:$0xff]
    %v169 = vld [vmem:[#allocation2 + $0x1b8] sm:$0xff]
    %v170 = vld [vmem:[#allocation2 + $0x1c0] sm:$0xff]
    %v171 = vld [vmem:[#allocation2 + $0x1c8] sm:$0xff]
    %v172 = vld [vmem:[#allocation2 + $0x1d0] sm:$0xff]
    %v173 = vld [vmem:[#allocation2 + $0x1d8] sm:$0xff]
    %v174 = vld [vmem:[#allocation2 + $0x1e0] sm:$0xff]
    %v175 = vld [vmem:[#allocation2 + $0x1e8] sm:$0xff]
    %v176 = vld [vmem:[#allocation2 + $0x1f0] sm:$0xff]
    %v177 = vld [vmem:[#allocation2 + $0x1f8] sm:$0xff]
    %178 = vadd.xlane.f32.xlu0 %v114
    %v179 = vpop.xlane.xlu0 %178
    %180 = vadd.xlane.f32.xlu0 %v115
    %v181 = vpop.xlane.xlu0 %180
    %182 = vadd.xlane.f32.xlu0 %v116
    %v183 = vpop.xlane.xlu0 %182
    %184 = vadd.xlane.f32.xlu0 %v117
    %v185 = vpop.xlane.xlu0 %184
    %186 = vadd.xlane.f32.xlu0 %v118
    %v187 = vpop.xlane.xlu0 %186
    %188 = vadd.xlane.f32.xlu0 %v119
    %v189 = vpop.xlane.xlu0 %188
    %190 = vadd.xlane.f32.xlu0 %v120
    %v191 = vpop.xlane.xlu0 %190
    %192 = vadd.xlane.f32.xlu0 %v121
    %v193 = vpop.xlane.xlu0 %192
    %194 = vadd.xlane.f32.xlu0 %v122
    %v195 = vpop.xlane.xlu0 %194
    %196 = vadd.xlane.f32.xlu0 %v123
    %v197 = vpop.xlane.xlu0 %196
    %198 = vadd.xlane.f32.xlu0 %v124
    %v199 = vpop.xlane.xlu0 %198
    %200 = vadd.xlane.f32.xlu0 %v125
    %v201 = vpop.xlane.xlu0 %200
    %202 = vadd.xlane.f32.xlu0 %v126
    %v203 = vpop.xlane.xlu0 %202
    %204 = vadd.xlane.f32.xlu0 %v127
    %v205 = vpop.xlane.xlu0 %204
    %206 = vadd.xlane.f32.xlu0 %v128
    %v207 = vpop.xlane.xlu0 %206
    %208 = vadd.xlane.f32.xlu0 %v129
    %v209 = vpop.xlane.xlu0 %208
    %210 = vadd.xlane.f32.xlu0 %v130
    %v211 = vpop.xlane.xlu0 %210
    %212 = vadd.xlane.f32.xlu0 %v131
    %v213 = vpop.xlane.xlu0 %212
    %214 = vadd.xlane.f32.xlu0 %v132
    %v215 = vpop.xlane.xlu0 %214
    %216 = vadd.xlane.f32.xlu0 %v133
    %v217 = vpop.xlane.xlu0 %216
    %218 = vadd.xlane.f32.xlu0 %v134
    %v219 = vpop.xlane.xlu0 %218
    %220 = vadd.xlane.f32.xlu0 %v135
    %v221 = vpop.xlane.xlu0 %220
    %222 = vadd.xlane.f32.xlu0 %v136
    %v223 = vpop.xlane.xlu0 %222
    %224 = vadd.xlane.f32.xlu0 %v137
    %v225 = vpop.xlane.xlu0 %224
    %226 = vadd.xlane.f32.xlu0 %v138
    %v227 = vpop.xlane.xlu0 %226
    %228 = vadd.xlane.f32.xlu0 %v139
    %v229 = vpop.xlane.xlu0 %228
    %230 = vadd.xlane.f32.xlu0 %v140
    %v231 = vpop.xlane.xlu0 %230
    %232 = vadd.xlane.f32.xlu0 %v141
    %v233 = vpop.xlane.xlu0 %232
    %234 = vadd.xlane.f32.xlu0 %v142
    %v235 = vpop.xlane.xlu0 %234
    %236 = vadd.xlane.f32.xlu0 %v143
    %v237 = vpop.xlane.xlu0 %236
    %238 = vadd.xlane.f32.xlu0 %v144
    %v239 = vpop.xlane.xlu0 %238
    %240 = vadd.xlane.f32.xlu0 %v145
    %v241 = vpop.xlane.xlu0 %240
    %242 = vadd.xlane.f32.xlu0 %v146
    %v243 = vpop.xlane.xlu0 %242
    %244 = vadd.xlane.f32.xlu0 %v147
    %v245 = vpop.xlane.xlu0 %244
    %246 = vadd.xlane.f32.xlu0 %v148
    %v247 = vpop.xlane.xlu0 %246
    %248 = vadd.xlane.f32.xlu0 %v149
    %v249 = vpop.xlane.xlu0 %248
    %250 = vadd.xlane.f32.xlu0 %v150
    %v251 = vpop.xlane.xlu0 %250
    %252 = vadd.xlane.f32.xlu0 %v151
    %v253 = vpop.xlane.xlu0 %252
    %254 = vadd.xlane.f32.xlu0 %v152
    %v255 = vpop.xlane.xlu0 %254
    %256 = vadd.xlane.f32.xlu0 %v153
    %v257 = vpop.xlane.xlu0 %256
    %258 = vadd.xlane.f32.xlu0 %v154
    %v259 = vpop.xlane.xlu0 %258
    %260 = vadd.xlane.f32.xlu0 %v155
    %v261 = vpop.xlane.xlu0 %260
    %262 = vadd.xlane.f32.xlu0 %v156
    %v263 = vpop.xlane.xlu0 %262
    %264 = vadd.xlane.f32.xlu0 %v157
    %v265 = vpop.xlane.xlu0 %264
    %266 = vadd.xlane.f32.xlu0 %v158
    %v267 = vpop.xlane.xlu0 %266
    %268 = vadd.xlane.f32.xlu0 %v159
    %v269 = vpop.xlane.xlu0 %268
    %270 = vadd.xlane.f32.xlu0 %v160
    %v271 = vpop.xlane.xlu0 %270
    %272 = vadd.xlane.f32.xlu0 %v161
    %v273 = vpop.xlane.xlu0 %272
    %274 = vadd.xlane.f32.xlu0 %v162
    %v275 = vpop.xlane.xlu0 %274
    %276 = vadd.xlane.f32.xlu0 %v163
    %v277 = vpop.xlane.xlu0 %276
    %278 = vadd.xlane.f32.xlu0 %v164
    %v279 = vpop.xlane.xlu0 %278
    %280 = vadd.xlane.f32.xlu0 %v165
    %v281 = vpop.xlane.xlu0 %280
    %282 = vadd.xlane.f32.xlu0 %v166
    %v283 = vpop.xlane.xlu0 %282
    %284 = vadd.xlane.f32.xlu0 %v167
    %v285 = vpop.xlane.xlu0 %284
    %286 = vadd.xlane.f32.xlu0 %v168
    %v287 = vpop.xlane.xlu0 %286
    %288 = vadd.xlane.f32.xlu0 %v169
    %v289 = vpop.xlane.xlu0 %288
    %290 = vadd.xlane.f32.xlu0 %v170
    %v291 = vpop.xlane.xlu0 %290
    %292 = vadd.xlane.f32.xlu0 %v171
    %v293 = vpop.xlane.xlu0 %292
    %294 = vadd.xlane.f32.xlu0 %v172
    %v295 = vpop.xlane.xlu0 %294
    %296 = vadd.xlane.f32.xlu0 %v173
    %v297 = vpop.xlane.xlu0 %296
    %298 = vadd.xlane.f32.xlu0 %v174
    %v299 = vpop.xlane.xlu0 %298
    %300 = vadd.xlane.f32.xlu0 %v175
    %v301 = vpop.xlane.xlu0 %300
    %302 = vadd.xlane.f32.xlu0 %v176
    %v303 = vpop.xlane.xlu0 %302
    %304 = vadd.xlane.f32.xlu0 %v177
    %v305 = vpop.xlane.xlu0 %304
    %v306 = vrcp.pop 128.0
    %v307 = vmul.f32 %v179, %v306
    %v308 = vmul.f32 %v181, %v306
    %v309 = vmul.f32 %v183, %v306
    %v310 = vmul.f32 %v185, %v306
    %v311 = vmul.f32 %v187, %v306
    %v312 = vmul.f32 %v189, %v306
    %v313 = vmul.f32 %v191, %v306
    %v314 = vmul.f32 %v193, %v306
    %v315 = vmul.f32 %v195, %v306
    %v316 = vmul.f32 %v197, %v306
    %v317 = vmul.f32 %v199, %v306
    %v318 = vmul.f32 %v201, %v306
    %v319 = vmul.f32 %v203, %v306
    %v320 = vmul.f32 %v205, %v306
    %v321 = vmul.f32 %v207, %v306
    %v322 = vmul.f32 %v209, %v306
    %v323 = vmul.f32 %v211, %v306
    %v324 = vmul.f32 %v213, %v306
    %v325 = vmul.f32 %v215, %v306
    %v326 = vmul.f32 %v217, %v306
    %v327 = vmul.f32 %v219, %v306
    %v328 = vmul.f32 %v221, %v306
    %v329 = vmul.f32 %v223, %v306
    %v330 = vmul.f32 %v225, %v306
    %v331 = vmul.f32 %v227, %v306
    %v332 = vmul.f32 %v229, %v306
    %v333 = vmul.f32 %v231, %v306
    %v334 = vmul.f32 %v233, %v306
    %v335 = vmul.f32 %v235, %v306
    %v336 = vmul.f32 %v237, %v306
    %v337 = vmul.f32 %v239, %v306
    %v338 = vmul.f32 %v241, %v306
    %v339 = vmul.f32 %v243, %v306
    %v340 = vmul.f32 %v245, %v306
    %v341 = vmul.f32 %v247, %v306
    %v342 = vmul.f32 %v249, %v306
    %v343 = vmul.f32 %v251, %v306
    %v344 = vmul.f32 %v253, %v306
    %v345 = vmul.f32 %v255, %v306
    %v346 = vmul.f32 %v257, %v306
    %v347 = vmul.f32 %v259, %v306
    %v348 = vmul.f32 %v261, %v306
    %v349 = vmul.f32 %v263, %v306
    %v350 = vmul.f32 %v265, %v306
    %v351 = vmul.f32 %v267, %v306
    %v352 = vmul.f32 %v269, %v306
    %v353 = vmul.f32 %v271, %v306
    %v354 = vmul.f32 %v273, %v306
    %v355 = vmul.f32 %v275, %v306
    %v356 = vmul.f32 %v277, %v306
    %v357 = vmul.f32 %v279, %v306
    %v358 = vmul.f32 %v281, %v306
    %v359 = vmul.f32 %v283, %v306
    %v360 = vmul.f32 %v285, %v306
    %v361 = vmul.f32 %v287, %v306
    %v362 = vmul.f32 %v289, %v306
    %v363 = vmul.f32 %v291, %v306
    %v364 = vmul.f32 %v293, %v306
    %v365 = vmul.f32 %v295, %v306
    %v366 = vmul.f32 %v297, %v306
    %v367 = vmul.f32 %v299, %v306
    %v368 = vmul.f32 %v301, %v306
    %v369 = vmul.f32 %v303, %v306
    %v370 = vmul.f32 %v305, %v306
    %v371 = vsub.f32 %v114, %v307
    %v372 = vsub.f32 %v115, %v308
    %v373 = vsub.f32 %v116, %v309
    %v374 = vsub.f32 %v117, %v310
    %v375 = vsub.f32 %v118, %v311
    %v376 = vsub.f32 %v119, %v312
    %v377 = vsub.f32 %v120, %v313
    %v378 = vsub.f32 %v121, %v314
    %v379 = vsub.f32 %v122, %v315
    %v380 = vsub.f32 %v123, %v316
    %v381 = vsub.f32 %v124, %v317
    %v382 = vsub.f32 %v125, %v318
    %v383 = vsub.f32 %v126, %v319
    %v384 = vsub.f32 %v127, %v320
    %v385 = vsub.f32 %v128, %v321
    %v386 = vsub.f32 %v129, %v322
    %v387 = vsub.f32 %v130, %v323
    %v388 = vsub.f32 %v131, %v324
    %v389 = vsub.f32 %v132, %v325
    %v390 = vsub.f32 %v133, %v326
    %v391 = vsub.f32 %v134, %v327
    %v392 = vsub.f32 %v135, %v328
    %v393 = vsub.f32 %v136, %v329
    %v394 = vsub.f32 %v137, %v330
    %v395 = vsub.f32 %v138, %v331
    %v396 = vsub.f32 %v139, %v332
    %v397 = vsub.f32 %v140, %v333
    %v398 = vsub.f32 %v141, %v334
    %v399 = vsub.f32 %v142, %v335
    %v400 = vsub.f32 %v143, %v336
    %v401 = vsub.f32 %v144, %v337
    %v402 = vsub.f32 %v145, %v338
    %v403 = vsub.f32 %v146, %v339
    %v404 = vsub.f32 %v147, %v340
    %v405 = vsub.f32 %v148, %v341
    %v406 = vsub.f32 %v149, %v342
    %v407 = vsub.f32 %v150, %v343
    %v408 = vsub.f32 %v151, %v344
    %v409 = vsub.f32 %v152, %v345
    %v410 = vsub.f32 %v153, %v346
    %v411 = vsub.f32 %v154, %v347
    %v412 = vsub.f32 %v155, %v348
    %v413 = vsub.f32 %v156, %v349
    %v414 = vsub.f32 %v157, %v350
    %v415 = vsub.f32 %v158, %v351
    %v416 = vsub.f32 %v159, %v352
    %v417 = vsub.f32 %v160, %v353
    %v418 = vsub.f32 %v161, %v354
    %v419 = vsub.f32 %v162, %v355
    %v420 = vsub.f32 %v163, %v356
    %v421 = vsub.f32 %v164, %v357
    %v422 = vsub.f32 %v165, %v358
    %v423 = vsub.f32 %v166, %v359
    %v424 = vsub.f32 %v167, %v360
    %v425 = vsub.f32 %v168, %v361
    %v426 = vsub.f32 %v169, %v362
    %v427 = vsub.f32 %v170, %v363
    %v428 = vsub.f32 %v171, %v364
    %v429 = vsub.f32 %v172, %v365
    %v430 = vsub.f32 %v173, %v366
    %v431 = vsub.f32 %v174, %v367
    %v432 = vsub.f32 %v175, %v368
    %v433 = vsub.f32 %v176, %v369
    %v434 = vsub.f32 %v177, %v370
    %v435 = vmul.f32 %v371, %v371
    %v436 = vmul.f32 %v372, %v372
    %v437 = vmul.f32 %v373, %v373
    %v438 = vmul.f32 %v374, %v374
    %v439 = vmul.f32 %v375, %v375
    %v440 = vmul.f32 %v376, %v376
    %v441 = vmul.f32 %v377, %v377
    %v442 = vmul.f32 %v378, %v378
    %v443 = vmul.f32 %v379, %v379
    %v444 = vmul.f32 %v380, %v380
    %v445 = vmul.f32 %v381, %v381
    %v446 = vmul.f32 %v382, %v382
    %v447 = vmul.f32 %v383, %v383
    %v448 = vmul.f32 %v384, %v384
    %v449 = vmul.f32 %v385, %v385
    %v450 = vmul.f32 %v386, %v386
    %v451 = vmul.f32 %v387, %v387
    %v452 = vmul.f32 %v388, %v388
    %v453 = vmul.f32 %v389, %v389
    %v454 = vmul.f32 %v390, %v390
    %v455 = vmul.f32 %v391, %v391
    %v456 = vmul.f32 %v392, %v392
    %v457 = vmul.f32 %v393, %v393
    %v458 = vmul.f32 %v394, %v394
    %v459 = vmul.f32 %v395, %v395
    %v460 = vmul.f32 %v396, %v396
    %v461 = vmul.f32 %v397, %v397
    %v462 = vmul.f32 %v398, %v398
    %v463 = vmul.f32 %v399, %v399
    %v464 = vmul.f32 %v400, %v400
    %v465 = vmul.f32 %v401, %v401
    %v466 = vmul.f32 %v402, %v402
    %v467 = vmul.f32 %v403, %v403
    %v468 = vmul.f32 %v404, %v404
    %v469 = vmul.f32 %v405, %v405
    %v470 = vmul.f32 %v406, %v406
    %v471 = vmul.f32 %v407, %v407
    %v472 = vmul.f32 %v408, %v408
    %v473 = vmul.f32 %v409, %v409
    %v474 = vmul.f32 %v410, %v410
    %v475 = vmul.f32 %v411, %v411
    %v476 = vmul.f32 %v412, %v412
    %v477 = vmul.f32 %v413, %v413
    %v478 = vmul.f32 %v414, %v414
    %v479 = vmul.f32 %v415, %v415
    %v480 = vmul.f32 %v416, %v416
    %v481 = vmul.f32 %v417, %v417
    %v482 = vmul.f32 %v418, %v418
    %v483 = vmul.f32 %v419, %v419
    %v484 = vmul.f32 %v420, %v420
    %v485 = vmul.f32 %v421, %v421
    %v486 = vmul.f32 %v422, %v422
    %v487 = vmul.f32 %v423, %v423
    %v488 = vmul.f32 %v424, %v424
    %v489 = vmul.f32 %v425, %v425
    %v490 = vmul.f32 %v426, %v426
    %v491 = vmul.f32 %v427, %v427
    %v492 = vmul.f32 %v428, %v428
    %v493 = vmul.f32 %v429, %v429
    %v494 = vmul.f32 %v430, %v430
    %v495 = vmul.f32 %v431, %v431
    %v496 = vmul.f32 %v432, %v432
    %v497 = vmul.f32 %v433, %v433
    %v498 = vmul.f32 %v434, %v434
    %499 = vadd.xlane.f32.xlu0 %v435
    %v500 = vpop.xlane.xlu0 %499
    %501 = vadd.xlane.f32.xlu0 %v436
    %v502 = vpop.xlane.xlu0 %501
    %503 = vadd.xlane.f32.xlu0 %v437
    %v504 = vpop.xlane.xlu0 %503
    %505 = vadd.xlane.f32.xlu0 %v438
    %v506 = vpop.xlane.xlu0 %505
    %507 = vadd.xlane.f32.xlu0 %v439
    %v508 = vpop.xlane.xlu0 %507
    %509 = vadd.xlane.f32.xlu0 %v440
    %v510 = vpop.xlane.xlu0 %509
    %511 = vadd.xlane.f32.xlu0 %v441
    %v512 = vpop.xlane.xlu0 %511
    %513 = vadd.xlane.f32.xlu0 %v442
    %v514 = vpop.xlane.xlu0 %513
    %515 = vadd.xlane.f32.xlu0 %v443
    %v516 = vpop.xlane.xlu0 %515
    %517 = vadd.xlane.f32.xlu0 %v444
    %v518 = vpop.xlane.xlu0 %517
    %519 = vadd.xlane.f32.xlu0 %v445
    %v520 = vpop.xlane.xlu0 %519
    %521 = vadd.xlane.f32.xlu0 %v446
    %v522 = vpop.xlane.xlu0 %521
    %523 = vadd.xlane.f32.xlu0 %v447
    %v524 = vpop.xlane.xlu0 %523
    %525 = vadd.xlane.f32.xlu0 %v448
    %v526 = vpop.xlane.xlu0 %525
    %527 = vadd.xlane.f32.xlu0 %v449
    %v528 = vpop.xlane.xlu0 %527
    %529 = vadd.xlane.f32.xlu0 %v450
    %v530 = vpop.xlane.xlu0 %529
    %531 = vadd.xlane.f32.xlu0 %v451
    %v532 = vpop.xlane.xlu0 %531
    %533 = vadd.xlane.f32.xlu0 %v452
    %v534 = vpop.xlane.xlu0 %533
    %535 = vadd.xlane.f32.xlu0 %v453
    %v536 = vpop.xlane.xlu0 %535
    %537 = vadd.xlane.f32.xlu0 %v454
    %v538 = vpop.xlane.xlu0 %537
    %539 = vadd.xlane.f32.xlu0 %v455
    %v540 = vpop.xlane.xlu0 %539
    %541 = vadd.xlane.f32.xlu0 %v456
    %v542 = vpop.xlane.xlu0 %541
    %543 = vadd.xlane.f32.xlu0 %v457
    %v544 = vpop.xlane.xlu0 %543
    %545 = vadd.xlane.f32.xlu0 %v458
    %v546 = vpop.xlane.xlu0 %545
    %547 = vadd.xlane.f32.xlu0 %v459
    %v548 = vpop.xlane.xlu0 %547
    %549 = vadd.xlane.f32.xlu0 %v460
    %v550 = vpop.xlane.xlu0 %549
    %551 = vadd.xlane.f32.xlu0 %v461
    %v552 = vpop.xlane.xlu0 %551
    %553 = vadd.xlane.f32.xlu0 %v462
    %v554 = vpop.xlane.xlu0 %553
    %555 = vadd.xlane.f32.xlu0 %v463
    %v556 = vpop.xlane.xlu0 %555
    %557 = vadd.xlane.f32.xlu0 %v464
    %v558 = vpop.xlane.xlu0 %557
    %559 = vadd.xlane.f32.xlu0 %v465
    %v560 = vpop.xlane.xlu0 %559
    %561 = vadd.xlane.f32.xlu0 %v466
    %v562 = vpop.xlane.xlu0 %561
    %563 = vadd.xlane.f32.xlu0 %v467
    %v564 = vpop.xlane.xlu0 %563
    %565 = vadd.xlane.f32.xlu0 %v468
    %v566 = vpop.xlane.xlu0 %565
    %567 = vadd.xlane.f32.xlu0 %v469
    %v568 = vpop.xlane.xlu0 %567
    %569 = vadd.xlane.f32.xlu0 %v470
    %v570 = vpop.xlane.xlu0 %569
    %571 = vadd.xlane.f32.xlu0 %v471
    %v572 = vpop.xlane.xlu0 %571
    %573 = vadd.xlane.f32.xlu0 %v472
    %v574 = vpop.xlane.xlu0 %573
    %575 = vadd.xlane.f32.xlu0 %v473
    %v576 = vpop.xlane.xlu0 %575
    %577 = vadd.xlane.f32.xlu0 %v474
    %v578 = vpop.xlane.xlu0 %577
    %579 = vadd.xlane.f32.xlu0 %v475
    %v580 = vpop.xlane.xlu0 %579
    %581 = vadd.xlane.f32.xlu0 %v476
    %v582 = vpop.xlane.xlu0 %581
    %583 = vadd.xlane.f32.xlu0 %v477
    %v584 = vpop.xlane.xlu0 %583
    %585 = vadd.xlane.f32.xlu0 %v478
    %v586 = vpop.xlane.xlu0 %585
    %587 = vadd.xlane.f32.xlu0 %v479
    %v588 = vpop.xlane.xlu0 %587
    %589 = vadd.xlane.f32.xlu0 %v480
    %v590 = vpop.xlane.xlu0 %589
    %591 = vadd.xlane.f32.xlu0 %v481
    %v592 = vpop.xlane.xlu0 %591
    %593 = vadd.xlane.f32.xlu0 %v482
    %v594 = vpop.xlane.xlu0 %593
    %595 = vadd.xlane.f32.xlu0 %v483
    %v596 = vpop.xlane.xlu0 %595
    %597 = vadd.xlane.f32.xlu0 %v484
    %v598 = vpop.xlane.xlu0 %597
    %599 = vadd.xlane.f32.xlu0 %v485
    %v600 = vpop.xlane.xlu0 %599
    %601 = vadd.xlane.f32.xlu0 %v486
    %v602 = vpop.xlane.xlu0 %601
    %603 = vadd.xlane.f32.xlu0 %v487
    %v604 = vpop.xlane.xlu0 %603
    %605 = vadd.xlane.f32.xlu0 %v488
    %v606 = vpop.xlane.xlu0 %605
    %607 = vadd.xlane.f32.xlu0 %v489
    %v608 = vpop.xlane.xlu0 %607
    %609 = vadd.xlane.f32.xlu0 %v490
    %v610 = vpop.xlane.xlu0 %609
    %611 = vadd.xlane.f32.xlu0 %v491
    %v612 = vpop.xlane.xlu0 %611
    %613 = vadd.xlane.f32.xlu0 %v492
    %v614 = vpop.xlane.xlu0 %613
    %615 = vadd.xlane.f32.xlu0 %v493
    %v616 = vpop.xlane.xlu0 %615
    %617 = vadd.xlane.f32.xlu0 %v494
    %v618 = vpop.xlane.xlu0 %617
    %619 = vadd.xlane.f32.xlu0 %v495
    %v620 = vpop.xlane.xlu0 %619
    %621 = vadd.xlane.f32.xlu0 %v496
    %v622 = vpop.xlane.xlu0 %621
    %623 = vadd.xlane.f32.xlu0 %v497
    %v624 = vpop.xlane.xlu0 %623
    %625 = vadd.xlane.f32.xlu0 %v498
    %v626 = vpop.xlane.xlu0 %625
    %v627 = vmul.f32 %v500, %v306
    %v628 = vmul.f32 %v502, %v306
    %v629 = vmul.f32 %v504, %v306
    %v630 = vmul.f32 %v506, %v306
    %v631 = vmul.f32 %v508, %v306
    %v632 = vmul.f32 %v510, %v306
    %v633 = vmul.f32 %v512, %v306
    %v634 = vmul.f32 %v514, %v306
    %v635 = vmul.f32 %v516, %v306
    %v636 = vmul.f32 %v518, %v306
    %v637 = vmul.f32 %v520, %v306
    %v638 = vmul.f32 %v522, %v306
    %v639 = vmul.f32 %v524, %v306
    %v640 = vmul.f32 %v526, %v306
    %v641 = vmul.f32 %v528, %v306
    %v642 = vmul.f32 %v530, %v306
    %v643 = vmul.f32 %v532, %v306
    %v644 = vmul.f32 %v534, %v306
    %v645 = vmul.f32 %v536, %v306
    %v646 = vmul.f32 %v538, %v306
    %v647 = vmul.f32 %v540, %v306
    %v648 = vmul.f32 %v542, %v306
    %v649 = vmul.f32 %v544, %v306
    %v650 = vmul.f32 %v546, %v306
    %v651 = vmul.f32 %v548, %v306
    %v652 = vmul.f32 %v550, %v306
    %v653 = vmul.f32 %v552, %v306
    %v654 = vmul.f32 %v554, %v306
    %v655 = vmul.f32 %v556, %v306
    %v656 = vmul.f32 %v558, %v306
    %v657 = vmul.f32 %v560, %v306
    %v658 = vmul.f32 %v562, %v306
    %v659 = vmul.f32 %v564, %v306
    %v660 = vmul.f32 %v566, %v306
    %v661 = vmul.f32 %v568, %v306
    %v662 = vmul.f32 %v570, %v306
    %v663 = vmul.f32 %v572, %v306
    %v664 = vmul.f32 %v574, %v306
    %v665 = vmul.f32 %v576, %v306
    %v666 = vmul.f32 %v578, %v306
    %v667 = vmul.f32 %v580, %v306
    %v668 = vmul.f32 %v582, %v306
    %v669 = vmul.f32 %v584, %v306
    %v670 = vmul.f32 %v586, %v306
    %v671 = vmul.f32 %v588, %v306
    %v672 = vmul.f32 %v590, %v306
    %v673 = vmul.f32 %v592, %v306
    %v674 = vmul.f32 %v594, %v306
    %v675 = vmul.f32 %v596, %v306
    %v676 = vmul.f32 %v598, %v306
    %v677 = vmul.f32 %v600, %v306
    %v678 = vmul.f32 %v602, %v306
    %v679 = vmul.f32 %v604, %v306
    %v680 = vmul.f32 %v606, %v306
    %v681 = vmul.f32 %v608, %v306
    %v682 = vmul.f32 %v610, %v306
    %v683 = vmul.f32 %v612, %v306
    %v684 = vmul.f32 %v614, %v306
    %v685 = vmul.f32 %v616, %v306
    %v686 = vmul.f32 %v618, %v306
    %v687 = vmul.f32 %v620, %v306
    %v688 = vmul.f32 %v622, %v306
    %v689 = vmul.f32 %v624, %v306
    %v690 = vmul.f32 %v626, %v306
    %v691 = vadd.f32 %v627, 1e-05
    %v692 = vadd.f32 %v628, 1e-05
    %v693 = vadd.f32 %v629, 1e-05
    %v694 = vadd.f32 %v630, 1e-05
    %v695 = vadd.f32 %v631, 1e-05
    %v696 = vadd.f32 %v632, 1e-05
    %v697 = vadd.f32 %v633, 1e-05
    %v698 = vadd.f32 %v634, 1e-05
    %v699 = vadd.f32 %v635, 1e-05
    %v700 = vadd.f32 %v636, 1e-05
    %v701 = vadd.f32 %v637, 1e-05
    %v702 = vadd.f32 %v638, 1e-05
    %v703 = vadd.f32 %v639, 1e-05
    %v704 = vadd.f32 %v640, 1e-05
    %v705 = vadd.f32 %v641, 1e-05
    %v706 = vadd.f32 %v642, 1e-05
    %v707 = vadd.f32 %v643, 1e-05
    %v708 = vadd.f32 %v644, 1e-05
    %v709 = vadd.f32 %v645, 1e-05
    %v710 = vadd.f32 %v646, 1e-05
    %v711 = vadd.f32 %v647, 1e-05
    %v712 = vadd.f32 %v648, 1e-05
    %v713 = vadd.f32 %v649, 1e-05
    %v714 = vadd.f32 %v650, 1e-05
    %v715 = vadd.f32 %v651, 1e-05
    %v716 = vadd.f32 %v652, 1e-05
    %v717 = vadd.f32 %v653, 1e-05
    %v718 = vadd.f32 %v654, 1e-05
    %v719 = vadd.f32 %v655, 1e-05
    %v720 = vadd.f32 %v656, 1e-05
    %v721 = vadd.f32 %v657, 1e-05
    %v722 = vadd.f32 %v658, 1e-05
    %v723 = vadd.f32 %v659, 1e-05
    %v724 = vadd.f32 %v660, 1e-05
    %v725 = vadd.f32 %v661, 1e-05
    %v726 = vadd.f32 %v662, 1e-05
    %v727 = vadd.f32 %v663, 1e-05
    %v728 = vadd.f32 %v664, 1e-05
    %v729 = vadd.f32 %v665, 1e-05
    %v730 = vadd.f32 %v666, 1e-05
    %v731 = vadd.f32 %v667, 1e-05
    %v732 = vadd.f32 %v668, 1e-05
    %v733 = vadd.f32 %v669, 1e-05
    %v734 = vadd.f32 %v670, 1e-05
    %v735 = vadd.f32 %v671, 1e-05
    %v736 = vadd.f32 %v672, 1e-05
    %v737 = vadd.f32 %v673, 1e-05
    %v738 = vadd.f32 %v674, 1e-05
    %v739 = vadd.f32 %v675, 1e-05
    %v740 = vadd.f32 %v676, 1e-05
    %v741 = vadd.f32 %v677, 1e-05
    %v742 = vadd.f32 %v678, 1e-05
    %v743 = vadd.f32 %v679, 1e-05
    %v744 = vadd.f32 %v680, 1e-05
    %v745 = vadd.f32 %v681, 1e-05
    %v746 = vadd.f32 %v682, 1e-05
    %v747 = vadd.f32 %v683, 1e-05
    %v748 = vadd.f32 %v684, 1e-05
    %v749 = vadd.f32 %v685, 1e-05
    %v750 = vadd.f32 %v686, 1e-05
    %v751 = vadd.f32 %v687, 1e-05
    %v752 = vadd.f32 %v688, 1e-05
    %v753 = vadd.f32 %v689, 1e-05
    %v754 = vadd.f32 %v690, 1e-05
    %v755 = vrsqrt.pop %v691
    %v756 = vrsqrt.pop %v692
    %v757 = vrsqrt.pop %v693
    %v758 = vrsqrt.pop %v694
    %v759 = vrsqrt.pop %v695
    %v760 = vrsqrt.pop %v696
    %v761 = vrsqrt.pop %v697
    %v762 = vrsqrt.pop %v698
    %v763 = vrsqrt.pop %v699
    %v764 = vrsqrt.pop %v700
    %v765 = vrsqrt.pop %v701
    %v766 = vrsqrt.pop %v702
    %v767 = vrsqrt.pop %v703
    %v768 = vrsqrt.pop %v704
    %v769 = vrsqrt.pop %v705
    %v770 = vrsqrt.pop %v706
    %v771 = vrsqrt.pop %v707
    %v772 = vrsqrt.pop %v708
    %v773 = vrsqrt.pop %v709
    %v774 = vrsqrt.pop %v710
    %v775 = vrsqrt.pop %v711
    %v776 = vrsqrt.pop %v712
    %v777 = vrsqrt.pop %v713
    %v778 = vrsqrt.pop %v714
    %v779 = vrsqrt.pop %v715
    %v780 = vrsqrt.pop %v716
    %v781 = vrsqrt.pop %v717
    %v782 = vrsqrt.pop %v718
    %v783 = vrsqrt.pop %v719
    %v784 = vrsqrt.pop %v720
    %v785 = vrsqrt.pop %v721
    %v786 = vrsqrt.pop %v722
    %v787 = vrsqrt.pop %v723
    %v788 = vrsqrt.pop %v724
    %v789 = vrsqrt.pop %v725
    %v790 = vrsqrt.pop %v726
    %v791 = vrsqrt.pop %v727
    %v792 = vrsqrt.pop %v728
    %v793 = vrsqrt.pop %v729
    %v794 = vrsqrt.pop %v730
    %v795 = vrsqrt.pop %v731
    %v796 = vrsqrt.pop %v732
    %v797 = vrsqrt.pop %v733
    %v798 = vrsqrt.pop %v734
    %v799 = vrsqrt.pop %v735
    %v800 = vrsqrt.pop %v736
    %v801 = vrsqrt.pop %v737
    %v802 = vrsqrt.pop %v738
    %v803 = vrsqrt.pop %v739
    %v804 = vrsqrt.pop %v740
    %v805 = vrsqrt.pop %v741
    %v806 = vrsqrt.pop %v742
    %v807 = vrsqrt.pop %v743
    %v808 = vrsqrt.pop %v744
    %v809 = vrsqrt.pop %v745
    %v810 = vrsqrt.pop %v746
    %v811 = vrsqrt.pop %v747
    %v812 = vrsqrt.pop %v748
    %v813 = vrsqrt.pop %v749
    %v814 = vrsqrt.pop %v750
    %v815 = vrsqrt.pop %v751
    %v816 = vrsqrt.pop %v752
    %v817 = vrsqrt.pop %v753
    %v818 = vrsqrt.pop %v754
    %v819 = vmul.f32 %v371, %v755
    %v820 = vmul.f32 %v372, %v756
    %v821 = vmul.f32 %v373, %v757
    %v822 = vmul.f32 %v374, %v758
    %v823 = vmul.f32 %v375, %v759
    %v824 = vmul.f32 %v376, %v760
    %v825 = vmul.f32 %v377, %v761
    %v826 = vmul.f32 %v378, %v762
    %v827 = vmul.f32 %v379, %v763
    %v828 = vmul.f32 %v380, %v764
    %v829 = vmul.f32 %v381, %v765
    %v830 = vmul.f32 %v382, %v766
    %v831 = vmul.f32 %v383, %v767
    %v832 = vmul.f32 %v384, %v768
    %v833 = vmul.f32 %v385, %v769
    %v834 = vmul.f32 %v386, %v770
    %v835 = vmul.f32 %v387, %v771
    %v836 = vmul.f32 %v388, %v772
    %v837 = vmul.f32 %v389, %v773
    %v838 = vmul.f32 %v390, %v774
    %v839 = vmul.f32 %v391, %v775
    %v840 = vmul.f32 %v392, %v776
    %v841 = vmul.f32 %v393, %v777
    %v842 = vmul.f32 %v394, %v778
    %v843 = vmul.f32 %v395, %v779
    %v844 = vmul.f32 %v396, %v780
    %v845 = vmul.f32 %v397, %v781
    %v846 = vmul.f32 %v398, %v782
    %v847 = vmul.f32 %v399, %v783
    %v848 = vmul.f32 %v400, %v784
    %v849 = vmul.f32 %v401, %v785
    %v850 = vmul.f32 %v402, %v786
    %v851 = vmul.f32 %v403, %v787
    %v852 = vmul.f32 %v404, %v788
    %v853 = vmul.f32 %v405, %v789
    %v854 = vmul.f32 %v406, %v790
    %v855 = vmul.f32 %v407, %v791
    %v856 = vmul.f32 %v408, %v792
    %v857 = vmul.f32 %v409, %v793
    %v858 = vmul.f32 %v410, %v794
    %v859 = vmul.f32 %v411, %v795
    %v860 = vmul.f32 %v412, %v796
    %v861 = vmul.f32 %v413, %v797
    %v862 = vmul.f32 %v414, %v798
    %v863 = vmul.f32 %v415, %v799
    %v864 = vmul.f32 %v416, %v800
    %v865 = vmul.f32 %v417, %v801
    %v866 = vmul.f32 %v418, %v802
    %v867 = vmul.f32 %v419, %v803
    %v868 = vmul.f32 %v420, %v804
    %v869 = vmul.f32 %v421, %v805
    %v870 = vmul.f32 %v422, %v806
    %v871 = vmul.f32 %v423, %v807
    %v872 = vmul.f32 %v424, %v808
    %v873 = vmul.f32 %v425, %v809
    %v874 = vmul.f32 %v426, %v810
    %v875 = vmul.f32 %v427, %v811
    %v876 = vmul.f32 %v428, %v812
    %v877 = vmul.f32 %v429, %v813
    %v878 = vmul.f32 %v430, %v814
    %v879 = vmul.f32 %v431, %v815
    %v880 = vmul.f32 %v432, %v816
    %v881 = vmul.f32 %v433, %v817
    %v882 = vmul.f32 %v434, %v818
    %v883 = vpack.c.bf16 %v820, %v819
    %v884 = vpack.c.bf16 %v822, %v821
    %v885 = vpack.c.bf16 %v824, %v823
    %v886 = vpack.c.bf16 %v826, %v825
    %v887 = vpack.c.bf16 %v828, %v827
    %v888 = vpack.c.bf16 %v830, %v829
    %v889 = vpack.c.bf16 %v832, %v831
    %v890 = vpack.c.bf16 %v834, %v833
    %v891 = vpack.c.bf16 %v836, %v835
    %v892 = vpack.c.bf16 %v838, %v837
    %v893 = vpack.c.bf16 %v840, %v839
    %v894 = vpack.c.bf16 %v842, %v841
    %v895 = vpack.c.bf16 %v844, %v843
    %v896 = vpack.c.bf16 %v846, %v845
    %v897 = vpack.c.bf16 %v848, %v847
    %v898 = vpack.c.bf16 %v850, %v849
    %v899 = vpack.c.bf16 %v852, %v851
    %v900 = vpack.c.bf16 %v854, %v853
    %v901 = vpack.c.bf16 %v856, %v855
    %v902 = vpack.c.bf16 %v858, %v857
    %v903 = vpack.c.bf16 %v860, %v859
    %v904 = vpack.c.bf16 %v862, %v861
    %v905 = vpack.c.bf16 %v864, %v863
    %v906 = vpack.c.bf16 %v866, %v865
    %v907 = vpack.c.bf16 %v868, %v867
    %v908 = vpack.c.bf16 %v870, %v869
    %v909 = vpack.c.bf16 %v872, %v871
    %v910 = vpack.c.bf16 %v874, %v873
    %v911 = vpack.c.bf16 %v876, %v875
    %v912 = vpack.c.bf16 %v878, %v877
    %v913 = vpack.c.bf16 %v880, %v879
    %v914 = vpack.c.bf16 %v882, %v881
    %v915 = vld [vmem:[#allocation5] sm:$0xff]
    %v916 = vld [vmem:[#allocation5 + $0x8] sm:$0xf]
    %v917 = vld [vmem:[#allocation5 + $0xc] sm:$0xff]
    %v918 = vld [vmem:[#allocation5 + $0x14] sm:$0xf]
    %v919 = vld [vmem:[#allocation5 + $0x18] sm:$0xff]
    %v920 = vld [vmem:[#allocation5 + $0x20] sm:$0xf]
    %v921 = vld [vmem:[#allocation5 + $0x24] sm:$0xff]
    %v922 = vld [vmem:[#allocation5 + $0x2c] sm:$0xf]
    %v923 = vld [vmem:[#allocation5 + $0x30] sm:$0xff]
    %v924 = vld [vmem:[#allocation5 + $0x38] sm:$0xf]
    %v925 = vld [vmem:[#allocation5 + $0x3c] sm:$0xff]
    %v926 = vld [vmem:[#allocation5 + $0x44] sm:$0xf]
    %v927 = vld [vmem:[#allocation5 + $0x48] sm:$0xff]
    %v928 = vld [vmem:[#allocation5 + $0x50] sm:$0xf]
    %v929 = vld [vmem:[#allocation5 + $0x54] sm:$0xff]
    %v930 = vld [vmem:[#allocation5 + $0x5c] sm:$0xf]
    %v931 = vld [vmem:[#allocation5 + $0x60] sm:$0xff]
    %v932 = vld [vmem:[#allocation5 + $0x68] sm:$0xf]
    %v933 = vld [vmem:[#allocation5 + $0x6c] sm:$0xff]
    %v934 = vld [vmem:[#allocation5 + $0x74] sm:$0xf]
    %v935 = vld [vmem:[#allocation5 + $0x78] sm:$0xff]
    %v936 = vld [vmem:[#allocation5 + $0x80] sm:$0xf]
    %v937 = vld [vmem:[#allocation5 + $0x84] sm:$0xff]
    %v938 = vld [vmem:[#allocation5 + $0x8c] sm:$0xf]
    %v939 = vld [vmem:[#allocation5 + $0x90] sm:$0xff]
    %v940 = vld [vmem:[#allocation5 + $0x98] sm:$0xf]
    %v941 = vld [vmem:[#allocation5 + $0x9c] sm:$0xff]
    %v942 = vld [vmem:[#allocation5 + $0xa4] sm:$0xf]
    %v943 = vld [vmem:[#allocation5 + $0xa8] sm:$0xff]
    %v944 = vld [vmem:[#allocation5 + $0xb0] sm:$0xf]
    %v945 = vld [vmem:[#allocation5 + $0xb4] sm:$0xff]
    %v946 = vld [vmem:[#allocation5 + $0xbc] sm:$0xf]
    %v947 = vld [vmem:[%s2] sm:$0x7]
    %v949 = vlaneseq
    %v950 = vshrl.u32 %v949, 7
    %v951 = vsub.s32 0, %v950
    %v952 = vrot.slane %v947, %v951
    %v953 = vlaneseq
    %v954 = vshrl.u32 %v953, 7
    %v955 = vsub.s32 1, %v954
    %v956 = vrot.slane %v947, %v955
    %v957 = vlaneseq
    %v958 = vshrl.u32 %v957, 7
    %v959 = vsub.s32 2, %v958
    %v960 = vrot.slane %v947, %v959
    %v996 = vunpack.c.l.b16 %v915
    %v997 = vunpack.c.h.b16 %v915
    %v998 = vunpack.c.l.b16 %v916
    %v999 = vunpack.c.l.b16 %v917
    %v1000 = vunpack.c.h.b16 %v917
    %v1001 = vunpack.c.l.b16 %v918
    %v1002 = vunpack.c.l.b16 %v919
    %v1003 = vunpack.c.h.b16 %v919
    %v1004 = vunpack.c.l.b16 %v920
    %v1005 = vunpack.c.l.b16 %v921
    %v1006 = vunpack.c.h.b16 %v921
    %v1007 = vunpack.c.l.b16 %v922
    %v1008 = vunpack.c.l.b16 %v923
    %v1009 = vunpack.c.h.b16 %v923
    %v1010 = vunpack.c.l.b16 %v924
    %v1011 = vunpack.c.l.b16 %v925
    %v1012 = vunpack.c.h.b16 %v925
    %v1013 = vunpack.c.l.b16 %v926
    %v1014 = vunpack.c.l.b16 %v927
    %v1015 = vunpack.c.h.b16 %v927
    %v1016 = vunpack.c.l.b16 %v928
    %v1017 = vunpack.c.l.b16 %v929
    %v1018 = vunpack.c.h.b16 %v929
    %v1019 = vunpack.c.l.b16 %v930
    %v1020 = vunpack.c.l.b16 %v931
    %v1021 = vunpack.c.h.b16 %v931
    %v1022 = vunpack.c.l.b16 %v932
    %v1023 = vunpack.c.l.b16 %v933
    %v1024 = vunpack.c.h.b16 %v933
    %v1025 = vunpack.c.l.b16 %v934
    %v1026 = vunpack.c.l.b16 %v935
    %v1027 = vunpack.c.h.b16 %v935
    %v1028 = vunpack.c.l.b16 %v936
    %v1029 = vunpack.c.l.b16 %v937
    %v1030 = vunpack.c.h.b16 %v937
    %v1031 = vunpack.c.l.b16 %v938
    %v1032 = vunpack.c.l.b16 %v939
    %v1033 = vunpack.c.h.b16 %v939
    %v1034 = vunpack.c.l.b16 %v940
    %v1035 = vunpack.c.l.b16 %v941
    %v1036 = vunpack.c.h.b16 %v941
    %v1037 = vunpack.c.l.b16 %v942
    %v1038 = vunpack.c.l.b16 %v943
    %v1039 = vunpack.c.h.b16 %v943
    %v1040 = vunpack.c.l.b16 %v944
    %v1041 = vunpack.c.l.b16 %v945
    %v1042 = vunpack.c.h.b16 %v945
    %v1043 = vunpack.c.l.b16 %v946
    %v1044 = vpack.c.b16 %v999, %v996
    %v1045 = vpack.c.b16 %v1000, %v997
    %v1046 = vpack.c.b16 %v1001, %v998
    %v1047 = vpack.c.b16 %v1005, %v1002
    %v1048 = vpack.c.b16 %v1006, %v1003
    %v1049 = vpack.c.b16 %v1007, %v1004
    %v1050 = vpack.c.b16 %v1011, %v1008
    %v1051 = vpack.c.b16 %v1012, %v1009
    %v1052 = vpack.c.b16 %v1013, %v1010
    %v1053 = vpack.c.b16 %v1017, %v1014
    %v1054 = vpack.c.b16 %v1018, %v1015
    %v1055 = vpack.c.b16 %v1019, %v1016
    %v1056 = vpack.c.b16 %v1023, %v1020
    %v1057 = vpack.c.b16 %v1024, %v1021
    %v1058 = vpack.c.b16 %v1025, %v1022
    %v1059 = vpack.c.b16 %v1029, %v1026
    %v1060 = vpack.c.b16 %v1030, %v1027
    %v1061 = vpack.c.b16 %v1031, %v1028
    %v1062 = vpack.c.b16 %v1035, %v1032
    %v1063 = vpack.c.b16 %v1036, %v1033
    %v1064 = vpack.c.b16 %v1037, %v1034
    %v1065 = vpack.c.b16 %v1041, %v1038
    %v1066 = vpack.c.b16 %v1042, %v1039
    %v1067 = vpack.c.b16 %v1043, %v1040
    %1092 = vmatprep.subr.bf16.mxu0 %v1066
    %1093 = vmatpush1.bf16.msra.mxu0 %v1065
    %1094 = vmatprep.subr.bf16.mxu0 %v1063
    %1095 = vmatpush1.bf16.msra.mxu0 %v1062
    %1096 = vmatprep.subr.bf16.mxu0 %v1060
    %1097 = vmatpush1.bf16.msra.mxu0 %v1059
    %1098 = vmatprep.subr.bf16.mxu0 %v1057
    %1099 = vmatpush1.bf16.msra.mxu0 %v1056
    %1100 = vmatprep.subr.bf16.mxu0 %v1054
    %1101 = vmatpush1.bf16.msra.mxu0 %v1053
    %1102 = vmatprep.subr.bf16.mxu0 %v1051
    %1103 = vmatpush1.bf16.msra.mxu0 %v1050
    %1104 = vmatprep.subr.bf16.mxu0 %v1048
    %1105 = vmatpush1.bf16.msra.mxu0 %v1047
    %1106 = vmatprep.subr.bf16.mxu0 %v1045
    %1107 = vmatpush1.bf16.msra.mxu0 %v1044
    %1108 = vmatprep.subr.bf16.mxu0 0
    %1109 = vmatpush2.bf16.msra.mxu0 0
    %1110 = vmatprep.subr.bf16.mxu0 0
    %1111 = vmatpush2.bf16.msra.mxu0 0
    %1112 = vmatprep.subr.bf16.mxu0 0
    %1113 = vmatpush2.bf16.msra.mxu0 0
    %1114 = vmatprep.subr.bf16.mxu0 0
    %1115 = vmatpush2.bf16.msra.mxu0 0
    %1116 = vmatprep.subr.bf16.mxu0 0
    %1117 = vmatpush2.bf16.msra.mxu0 0
    %1118 = vmatprep.subr.bf16.mxu0 0
    %1119 = vmatpush2.bf16.msra.mxu0 0
    %1120 = vmatprep.subr.bf16.mxu0 0
    %1121 = vmatpush2.bf16.msra.mxu0 0
    %1122 = vmatprep.subr.bf16.mxu0 0
    %1123 = vmatpush2.bf16.msra.mxu0 0
    %1124 = vmatprep.mubr.bf16.mxu0 0
    %1125 = vmatmul.mubr.bf16.gmra.mxu0 %v883
    %v1126 = vpop.f32.mrf.mxu0
    %v1127 = vadd.f32 %v952, %v1126
    %v1128 = vpop.f32.mrf.mxu0
    %v1129 = vadd.f32 %v956, %v1128
    %v1130 = vpop.f32.mrf.mxu0
    %v1131 = vadd.f32 %v952, %v1130
    %v1132 = vpop.f32.mrf.mxu0
    %v1133 = vadd.f32 %v956, %v1132
    %1134 = vmatprep.mubr.bf16.mxu0 0
    %1135 = vmatmul.mubr.bf16.gmra.mxu0 %v884
    %v1136 = vpop.f32.mrf.mxu0
    %v1137 = vadd.f32 %v952, %v1136
    %v1138 = vpop.f32.mrf.mxu0
    %v1139 = vadd.f32 %v956, %v1138
    %v1140 = vpop.f32.mrf.mxu0
    %v1141 = vadd.f32 %v952, %v1140
    %v1142 = vpop.f32.mrf.mxu0
    %v1143 = vadd.f32 %v956, %v1142
    %1144 = vmatprep.mubr.bf16.mxu0 0
    %1145 = vmatmul.mubr.bf16.gmra.mxu0 %v885
    %v1146 = vpop.f32.mrf.mxu0
    %v1147 = vadd.f32 %v952, %v1146
    %v1148 = vpop.f32.mrf.mxu0
    %v1149 = vadd.f32 %v956, %v1148
    %v1150 = vpop.f32.mrf.mxu0
    %v1151 = vadd.f32 %v952, %v1150
    %v1152 = vpop.f32.mrf.mxu0
    %v1153 = vadd.f32 %v956, %v1152
    %1154 = vmatprep.mubr.bf16.mxu0 0
    %1155 = vmatmul.mubr.bf16.gmra.mxu0 %v886
    %v1156 = vpop.f32.mrf.mxu0
    %v1157 = vadd.f32 %v952, %v1156
    %v1158 = vpop.f32.mrf.mxu0
    %v1159 = vadd.f32 %v956, %v1158
    %v1160 = vpop.f32.mrf.mxu0
    %v1161 = vadd.f32 %v952, %v1160
    %v1162 = vpop.f32.mrf.mxu0
    %v1163 = vadd.f32 %v956, %v1162
    %1164 = vmatprep.mubr.bf16.mxu0 0
    %1165 = vmatmul.mubr.bf16.gmra.mxu0 %v887
    %v1166 = vpop.f32.mrf.mxu0
    %v1167 = vadd.f32 %v952, %v1166
    %v1168 = vpop.f32.mrf.mxu0
    %v1169 = vadd.f32 %v956, %v1168
    %v1170 = vpop.f32.mrf.mxu0
    %v1171 = vadd.f32 %v952, %v1170
    %v1172 = vpop.f32.mrf.mxu0
    %v1173 = vadd.f32 %v956, %v1172
    %1174 = vmatprep.mubr.bf16.mxu0 0
    %1175 = vmatmul.mubr.bf16.gmra.mxu0 %v888
    %v1176 = vpop.f32.mrf.mxu0
    %v1177 = vadd.f32 %v952, %v1176
    %v1178 = vpop.f32.mrf.mxu0
    %v1179 = vadd.f32 %v956, %v1178
    %v1180 = vpop.f32.mrf.mxu0
    %v1181 = vadd.f32 %v952, %v1180
    %v1182 = vpop.f32.mrf.mxu0
    %v1183 = vadd.f32 %v956, %v1182
    %1184 = vmatprep.mubr.bf16.mxu0 0
    %1185 = vmatmul.mubr.bf16.gmra.mxu0 %v889
    %v1186 = vpop.f32.mrf.mxu0
    %v1187 = vadd.f32 %v952, %v1186
    %v1188 = vpop.f32.mrf.mxu0
    %v1189 = vadd.f32 %v956, %v1188
    %v1190 = vpop.f32.mrf.mxu0
    %v1191 = vadd.f32 %v952, %v1190
    %v1192 = vpop.f32.mrf.mxu0
    %v1193 = vadd.f32 %v956, %v1192
    %1194 = vmatprep.mubr.bf16.mxu0 0
    %1195 = vmatmul.mubr.bf16.gmra.mxu0 %v890
    %v1196 = vpop.f32.mrf.mxu0
    %v1197 = vadd.f32 %v952, %v1196
    %v1198 = vpop.f32.mrf.mxu0
    %v1199 = vadd.f32 %v956, %v1198
    %v1200 = vpop.f32.mrf.mxu0
    %v1201 = vadd.f32 %v952, %v1200
    %v1202 = vpop.f32.mrf.mxu0
    %v1203 = vadd.f32 %v956, %v1202
    %1204 = vmatprep.mubr.bf16.mxu0 0
    %1205 = vmatmul.mubr.bf16.gmra.mxu0 %v891
    %v1206 = vpop.f32.mrf.mxu0
    %v1207 = vadd.f32 %v952, %v1206
    %v1208 = vpop.f32.mrf.mxu0
    %v1209 = vadd.f32 %v956, %v1208
    %v1210 = vpop.f32.mrf.mxu0
    %v1211 = vadd.f32 %v952, %v1210
    %v1212 = vpop.f32.mrf.mxu0
    %v1213 = vadd.f32 %v956, %v1212
    %1214 = vmatprep.mubr.bf16.mxu0 0
    %1215 = vmatmul.mubr.bf16.gmra.mxu0 %v892
    %v1216 = vpop.f32.mrf.mxu0
    %v1217 = vadd.f32 %v952, %v1216
    %v1218 = vpop.f32.mrf.mxu0
    %v1219 = vadd.f32 %v956, %v1218
    %v1220 = vpop.f32.mrf.mxu0
    %v1221 = vadd.f32 %v952, %v1220
    %v1222 = vpop.f32.mrf.mxu0
    %v1223 = vadd.f32 %v956, %v1222
    %1224 = vmatprep.mubr.bf16.mxu0 0
    %1225 = vmatmul.mubr.bf16.gmra.mxu0 %v893
    %v1226 = vpop.f32.mrf.mxu0
    %v1227 = vadd.f32 %v952, %v1226
    %v1228 = vpop.f32.mrf.mxu0
    %v1229 = vadd.f32 %v956, %v1228
    %v1230 = vpop.f32.mrf.mxu0
    %v1231 = vadd.f32 %v952, %v1230
    %v1232 = vpop.f32.mrf.mxu0
    %v1233 = vadd.f32 %v956, %v1232
    %1234 = vmatprep.mubr.bf16.mxu0 0
    %1235 = vmatmul.mubr.bf16.gmra.mxu0 %v894
    %v1236 = vpop.f32.mrf.mxu0
    %v1237 = vadd.f32 %v952, %v1236
    %v1238 = vpop.f32.mrf.mxu0
    %v1239 = vadd.f32 %v956, %v1238
    %v1240 = vpop.f32.mrf.mxu0
    %v1241 = vadd.f32 %v952, %v1240
    %v1242 = vpop.f32.mrf.mxu0
    %v1243 = vadd.f32 %v956, %v1242
    %1244 = vmatprep.mubr.bf16.mxu0 0
    %1245 = vmatmul.mubr.bf16.gmra.mxu0 %v895
    %v1246 = vpop.f32.mrf.mxu0
    %v1247 = vadd.f32 %v952, %v1246
    %v1248 = vpop.f32.mrf.mxu0
    %v1249 = vadd.f32 %v956, %v1248
    %v1250 = vpop.f32.mrf.mxu0
    %v1251 = vadd.f32 %v952, %v1250
    %v1252 = vpop.f32.mrf.mxu0
    %v1253 = vadd.f32 %v956, %v1252
    %1254 = vmatprep.mubr.bf16.mxu0 0
    %1255 = vmatmul.mubr.bf16.gmra.mxu0 %v896
    %v1256 = vpop.f32.mrf.mxu0
    %v1257 = vadd.f32 %v952, %v1256
    %v1258 = vpop.f32.mrf.mxu0
    %v1259 = vadd.f32 %v956, %v1258
    %v1260 = vpop.f32.mrf.mxu0
    %v1261 = vadd.f32 %v952, %v1260
    %v1262 = vpop.f32.mrf.mxu0
    %v1263 = vadd.f32 %v956, %v1262
    %1264 = vmatprep.mubr.bf16.mxu0 0
    %1265 = vmatmul.mubr.bf16.gmra.mxu0 %v897
    %v1266 = vpop.f32.mrf.mxu0
    %v1267 = vadd.f32 %v952, %v1266
    %v1268 = vpop.f32.mrf.mxu0
    %v1269 = vadd.f32 %v956, %v1268
    %v1270 = vpop.f32.mrf.mxu0
    %v1271 = vadd.f32 %v952, %v1270
    %v1272 = vpop.f32.mrf.mxu0
    %v1273 = vadd.f32 %v956, %v1272
    %1274 = vmatprep.mubr.bf16.mxu0 0
    %1275 = vmatmul.mubr.bf16.gmra.mxu0 %v898
    %v1276 = vpop.f32.mrf.mxu0
    %v1277 = vadd.f32 %v952, %v1276
    %v1278 = vpop.f32.mrf.mxu0
    %v1279 = vadd.f32 %v956, %v1278
    %v1280 = vpop.f32.mrf.mxu0
    %v1281 = vadd.f32 %v952, %v1280
    %v1282 = vpop.f32.mrf.mxu0
    %v1283 = vadd.f32 %v956, %v1282
    %1284 = vmatprep.mubr.bf16.mxu0 0
    %1285 = vmatmul.mubr.bf16.gmra.mxu0 %v899
    %v1286 = vpop.f32.mrf.mxu0
    %v1287 = vadd.f32 %v952, %v1286
    %v1288 = vpop.f32.mrf.mxu0
    %v1289 = vadd.f32 %v956, %v1288
    %v1290 = vpop.f32.mrf.mxu0
    %v1291 = vadd.f32 %v952, %v1290
    %v1292 = vpop.f32.mrf.mxu0
    %v1293 = vadd.f32 %v956, %v1292
    %1294 = vmatprep.mubr.bf16.mxu0 0
    %1295 = vmatmul.mubr.bf16.gmra.mxu0 %v900
    %v1296 = vpop.f32.mrf.mxu0
    %v1297 = vadd.f32 %v952, %v1296
    %v1298 = vpop.f32.mrf.mxu0
    %v1299 = vadd.f32 %v956, %v1298
    %v1300 = vpop.f32.mrf.mxu0
    %v1301 = vadd.f32 %v952, %v1300
    %v1302 = vpop.f32.mrf.mxu0
    %v1303 = vadd.f32 %v956, %v1302
    %1304 = vmatprep.mubr.bf16.mxu0 0
    %1305 = vmatmul.mubr.bf16.gmra.mxu0 %v901
    %v1306 = vpop.f32.mrf.mxu0
    %v1307 = vadd.f32 %v952, %v1306
    %v1308 = vpop.f32.mrf.mxu0
    %v1309 = vadd.f32 %v956, %v1308
    %v1310 = vpop.f32.mrf.mxu0
    %v1311 = vadd.f32 %v952, %v1310
    %v1312 = vpop.f32.mrf.mxu0
    %v1313 = vadd.f32 %v956, %v1312
    %1314 = vmatprep.mubr.bf16.mxu0 0
    %1315 = vmatmul.mubr.bf16.gmra.mxu0 %v902
    %v1316 = vpop.f32.mrf.mxu0
    %v1317 = vadd.f32 %v952, %v1316
    %v1318 = vpop.f32.mrf.mxu0
    %v1319 = vadd.f32 %v956, %v1318
    %v1320 = vpop.f32.mrf.mxu0
    %v1321 = vadd.f32 %v952, %v1320
    %v1322 = vpop.f32.mrf.mxu0
    %v1323 = vadd.f32 %v956, %v1322
    %1324 = vmatprep.mubr.bf16.mxu0 0
    %1325 = vmatmul.mubr.bf16.gmra.mxu0 %v903
    %v1326 = vpop.f32.mrf.mxu0
    %v1327 = vadd.f32 %v952, %v1326
    %v1328 = vpop.f32.mrf.mxu0
    %v1329 = vadd.f32 %v956, %v1328
    %v1330 = vpop.f32.mrf.mxu0
    %v1331 = vadd.f32 %v952, %v1330
    %v1332 = vpop.f32.mrf.mxu0
    %v1333 = vadd.f32 %v956, %v1332
    %1334 = vmatprep.mubr.bf16.mxu0 0
    %1335 = vmatmul.mubr.bf16.gmra.mxu0 %v904
    %v1336 = vpop.f32.mrf.mxu0
    %v1337 = vadd.f32 %v952, %v1336
    %v1338 = vpop.f32.mrf.mxu0
    %v1339 = vadd.f32 %v956, %v1338
    %v1340 = vpop.f32.mrf.mxu0
    %v1341 = vadd.f32 %v952, %v1340
    %v1342 = vpop.f32.mrf.mxu0
    %v1343 = vadd.f32 %v956, %v1342
    %1344 = vmatprep.mubr.bf16.mxu0 0
    %1345 = vmatmul.mubr.bf16.gmra.mxu0 %v905
    %v1346 = vpop.f32.mrf.mxu0
    %v1347 = vadd.f32 %v952, %v1346
    %v1348 = vpop.f32.mrf.mxu0
    %v1349 = vadd.f32 %v956, %v1348
    %v1350 = vpop.f32.mrf.mxu0
    %v1351 = vadd.f32 %v952, %v1350
    %v1352 = vpop.f32.mrf.mxu0
    %v1353 = vadd.f32 %v956, %v1352
    %1354 = vmatprep.mubr.bf16.mxu0 0
    %1355 = vmatmul.mubr.bf16.gmra.mxu0 %v906
    %v1356 = vpop.f32.mrf.mxu0
    %v1357 = vadd.f32 %v952, %v1356
    %v1358 = vpop.f32.mrf.mxu0
    %v1359 = vadd.f32 %v956, %v1358
    %v1360 = vpop.f32.mrf.mxu0
    %v1361 = vadd.f32 %v952, %v1360
    %v1362 = vpop.f32.mrf.mxu0
    %v1363 = vadd.f32 %v956, %v1362
    %1364 = vmatprep.mubr.bf16.mxu0 0
    %1365 = vmatmul.mubr.bf16.gmra.mxu0 %v907
    %v1366 = vpop.f32.mrf.mxu0
    %v1367 = vadd.f32 %v952, %v1366
    %v1368 = vpop.f32.mrf.mxu0
    %v1369 = vadd.f32 %v956, %v1368
    %v1370 = vpop.f32.mrf.mxu0
    %v1371 = vadd.f32 %v952, %v1370
    %v1372 = vpop.f32.mrf.mxu0
    %v1373 = vadd.f32 %v956, %v1372
    %1374 = vmatprep.mubr.bf16.mxu0 0
    %1375 = vmatmul.mubr.bf16.gmra.mxu0 %v908
    %v1376 = vpop.f32.mrf.mxu0
    %v1377 = vadd.f32 %v952, %v1376
    %v1378 = vpop.f32.mrf.mxu0
    %v1379 = vadd.f32 %v956, %v1378
    %v1380 = vpop.f32.mrf.mxu0
    %v1381 = vadd.f32 %v952, %v1380
    %v1382 = vpop.f32.mrf.mxu0
    %v1383 = vadd.f32 %v956, %v1382
    %1384 = vmatprep.mubr.bf16.mxu0 0
    %1385 = vmatmul.mubr.bf16.gmra.mxu0 %v909
    %v1386 = vpop.f32.mrf.mxu0
    %v1387 = vadd.f32 %v952, %v1386
    %v1388 = vpop.f32.mrf.mxu0
    %v1389 = vadd.f32 %v956, %v1388
    %v1390 = vpop.f32.mrf.mxu0
    %v1391 = vadd.f32 %v952, %v1390
    %v1392 = vpop.f32.mrf.mxu0
    %v1393 = vadd.f32 %v956, %v1392
    %1394 = vmatprep.mubr.bf16.mxu0 0
    %1395 = vmatmul.mubr.bf16.gmra.mxu0 %v910
    %v1396 = vpop.f32.mrf.mxu0
    %v1397 = vadd.f32 %v952, %v1396
    %v1398 = vpop.f32.mrf.mxu0
    %v1399 = vadd.f32 %v956, %v1398
    %v1400 = vpop.f32.mrf.mxu0
    %v1401 = vadd.f32 %v952, %v1400
    %v1402 = vpop.f32.mrf.mxu0
    %v1403 = vadd.f32 %v956, %v1402
    %1404 = vmatprep.mubr.bf16.mxu0 0
    %1405 = vmatmul.mubr.bf16.gmra.mxu0 %v911
    %v1406 = vpop.f32.mrf.mxu0
    %v1407 = vadd.f32 %v952, %v1406
    %v1408 = vpop.f32.mrf.mxu0
    %v1409 = vadd.f32 %v956, %v1408
    %v1410 = vpop.f32.mrf.mxu0
    %v1411 = vadd.f32 %v952, %v1410
    %v1412 = vpop.f32.mrf.mxu0
    %v1413 = vadd.f32 %v956, %v1412
    %1414 = vmatprep.mubr.bf16.mxu0 0
    %1415 = vmatmul.mubr.bf16.gmra.mxu0 %v912
    %v1416 = vpop.f32.mrf.mxu0
    %v1417 = vadd.f32 %v952, %v1416
    %v1418 = vpop.f32.mrf.mxu0
    %v1419 = vadd.f32 %v956, %v1418
    %v1420 = vpop.f32.mrf.mxu0
    %v1421 = vadd.f32 %v952, %v1420
    %v1422 = vpop.f32.mrf.mxu0
    %v1423 = vadd.f32 %v956, %v1422
    %1424 = vmatprep.mubr.bf16.mxu0 0
    %1425 = vmatmul.mubr.bf16.gmra.mxu0 %v913
    %v1426 = vpop.f32.mrf.mxu0
    %v1427 = vadd.f32 %v952, %v1426
    %v1428 = vpop.f32.mrf.mxu0
    %v1429 = vadd.f32 %v956, %v1428
    %v1430 = vpop.f32.mrf.mxu0
    %v1431 = vadd.f32 %v952, %v1430
    %v1432 = vpop.f32.mrf.mxu0
    %v1433 = vadd.f32 %v956, %v1432
    %1434 = vmatprep.mubr.bf16.mxu0 0
    %1435 = vmatmul.mubr.bf16.gmra.mxu0 %v914
    %v1436 = vpop.f32.mrf.mxu0
    %v1437 = vadd.f32 %v952, %v1436
    %v1438 = vpop.f32.mrf.mxu0
    %v1439 = vadd.f32 %v956, %v1438
    %v1440 = vpop.f32.mrf.mxu0
    %v1441 = vadd.f32 %v952, %v1440
    %v1442 = vpop.f32.mrf.mxu0
    %v1443 = vadd.f32 %v956, %v1442
    %1444 = vdwg.mxu0
    %1445 = vmatprep.subr.bf16.mxu0 0
    %1446 = vmatpush1.bf16.msra.mxu0 %v1067
    %1447 = vmatprep.subr.bf16.mxu0 0
    %1448 = vmatpush1.bf16.msra.mxu0 %v1064
    %1449 = vmatprep.subr.bf16.mxu0 0
    %1450 = vmatpush1.bf16.msra.mxu0 %v1061
    %1451 = vmatprep.subr.bf16.mxu0 0
    %1452 = vmatpush1.bf16.msra.mxu0 %v1058
    %1453 = vmatprep.subr.bf16.mxu0 0
    %1454 = vmatpush1.bf16.msra.mxu0 %v1055
    %1455 = vmatprep.subr.bf16.mxu0 0
    %1456 = vmatpush1.bf16.msra.mxu0 %v1052
    %1457 = vmatprep.subr.bf16.mxu0 0
    %1458 = vmatpush1.bf16.msra.mxu0 %v1049
    %1459 = vmatprep.subr.bf16.mxu0 0
    %1460 = vmatpush1.bf16.msra.mxu0 %v1046
    %1461 = vmatprep.subr.bf16.mxu0 0
    %1462 = vmatpush2.bf16.msra.mxu0 0
    %1463 = vmatprep.subr.bf16.mxu0 0
    %1464 = vmatpush2.bf16.msra.mxu0 0
    %1465 = vmatprep.subr.bf16.mxu0 0
    %1466 = vmatpush2.bf16.msra.mxu0 0
    %1467 = vmatprep.subr.bf16.mxu0 0
    %1468 = vmatpush2.bf16.msra.mxu0 0
    %1469 = vmatprep.subr.bf16.mxu0 0
    %1470 = vmatpush2.bf16.msra.mxu0 0
    %1471 = vmatprep.subr.bf16.mxu0 0
    %1472 = vmatpush2.bf16.msra.mxu0 0
    %1473 = vmatprep.subr.bf16.mxu0 0
    %1474 = vmatpush2.bf16.msra.mxu0 0
    %1475 = vmatprep.subr.bf16.mxu0 0
    %1476 = vmatpush2.bf16.msra.mxu0 0
    %1477 = vmatprep.mubr.bf16.mxu0 0
    %1478 = vmatmul.mubr.bf16.gmra.mxu0 %v883
    %v1479 = vpop.f32.mrf.mxu0
    %v1480 = vadd.f32 %v960, %v1479
    %v1481 = vpop.f32.mrf.mxu0
    %v1482 = vpop.f32.mrf.mxu0
    %v1483 = vadd.f32 %v960, %v1482
    %v1484 = vpop.f32.mrf.mxu0
    %1485 = vmatprep.mubr.bf16.mxu0 0
    %1486 = vmatmul.mubr.bf16.gmra.mxu0 %v884
    %v1487 = vpop.f32.mrf.mxu0
    %v1488 = vadd.f32 %v960, %v1487
    %v1489 = vpop.f32.mrf.mxu0
    %v1490 = vpop.f32.mrf.mxu0
    %v1491 = vadd.f32 %v960, %v1490
    %v1492 = vpop.f32.mrf.mxu0
    %1493 = vmatprep.mubr.bf16.mxu0 0
    %1494 = vmatmul.mubr.bf16.gmra.mxu0 %v885
    %v1495 = vpop.f32.mrf.mxu0
    %v1496 = vadd.f32 %v960, %v1495
    %v1497 = vpop.f32.mrf.mxu0
    %v1498 = vpop.f32.mrf.mxu0
    %v1499 = vadd.f32 %v960, %v1498
    %v1500 = vpop.f32.mrf.mxu0
    %1501 = vmatprep.mubr.bf16.mxu0 0
    %1502 = vmatmul.mubr.bf16.gmra.mxu0 %v886
    %v1503 = vpop.f32.mrf.mxu0
    %v1504 = vadd.f32 %v960, %v1503
    %v1505 = vpop.f32.mrf.mxu0
    %v1506 = vpop.f32.mrf.mxu0
    %v1507 = vadd.f32 %v960, %v1506
    %v1508 = vpop.f32.mrf.mxu0
    %1509 = vmatprep.mubr.bf16.mxu0 0
    %1510 = vmatmul.mubr.bf16.gmra.mxu0 %v887
    %v1511 = vpop.f32.mrf.mxu0
    %v1512 = vadd.f32 %v960, %v1511
    %v1513 = vpop.f32.mrf.mxu0
    %v1514 = vpop.f32.mrf.mxu0
    %v1515 = vadd.f32 %v960, %v1514
    %v1516 = vpop.f32.mrf.mxu0
    %1517 = vmatprep.mubr.bf16.mxu0 0
    %1518 = vmatmul.mubr.bf16.gmra.mxu0 %v888
    %v1519 = vpop.f32.mrf.mxu0
    %v1520 = vadd.f32 %v960, %v1519
    %v1521 = vpop.f32.mrf.mxu0
    %v1522 = vpop.f32.mrf.mxu0
    %v1523 = vadd.f32 %v960, %v1522
    %v1524 = vpop.f32.mrf.mxu0
    %1525 = vmatprep.mubr.bf16.mxu0 0
    %1526 = vmatmul.mubr.bf16.gmra.mxu0 %v889
    %v1527 = vpop.f32.mrf.mxu0
    %v1528 = vadd.f32 %v960, %v1527
    %v1529 = vpop.f32.mrf.mxu0
    %v1530 = vpop.f32.mrf.mxu0
    %v1531 = vadd.f32 %v960, %v1530
    %v1532 = vpop.f32.mrf.mxu0
    %1533 = vmatprep.mubr.bf16.mxu0 0
    %1534 = vmatmul.mubr.bf16.gmra.mxu0 %v890
    %v1535 = vpop.f32.mrf.mxu0
    %v1536 = vadd.f32 %v960, %v1535
    %v1537 = vpop.f32.mrf.mxu0
    %v1538 = vpop.f32.mrf.mxu0
    %v1539 = vadd.f32 %v960, %v1538
    %v1540 = vpop.f32.mrf.mxu0
    %1541 = vmatprep.mubr.bf16.mxu0 0
    %1542 = vmatmul.mubr.bf16.gmra.mxu0 %v891
    %v1543 = vpop.f32.mrf.mxu0
    %v1544 = vadd.f32 %v960, %v1543
    %v1545 = vpop.f32.mrf.mxu0
    %v1546 = vpop.f32.mrf.mxu0
    %v1547 = vadd.f32 %v960, %v1546
    %v1548 = vpop.f32.mrf.mxu0
    %1549 = vmatprep.mubr.bf16.mxu0 0
    %1550 = vmatmul.mubr.bf16.gmra.mxu0 %v892
    %v1551 = vpop.f32.mrf.mxu0
    %v1552 = vadd.f32 %v960, %v1551
    %v1553 = vpop.f32.mrf.mxu0
    %v1554 = vpop.f32.mrf.mxu0
    %v1555 = vadd.f32 %v960, %v1554
    %v1556 = vpop.f32.mrf.mxu0
    %1557 = vmatprep.mubr.bf16.mxu0 0
    %1558 = vmatmul.mubr.bf16.gmra.mxu0 %v893
    %v1559 = vpop.f32.mrf.mxu0
    %v1560 = vadd.f32 %v960, %v1559
    %v1561 = vpop.f32.mrf.mxu0
    %v1562 = vpop.f32.mrf.mxu0
    %v1563 = vadd.f32 %v960, %v1562
    %v1564 = vpop.f32.mrf.mxu0
    %1565 = vmatprep.mubr.bf16.mxu0 0
    %1566 = vmatmul.mubr.bf16.gmra.mxu0 %v894
    %v1567 = vpop.f32.mrf.mxu0
    %v1568 = vadd.f32 %v960, %v1567
    %v1569 = vpop.f32.mrf.mxu0
    %v1570 = vpop.f32.mrf.mxu0
    %v1571 = vadd.f32 %v960, %v1570
    %v1572 = vpop.f32.mrf.mxu0
    %1573 = vmatprep.mubr.bf16.mxu0 0
    %1574 = vmatmul.mubr.bf16.gmra.mxu0 %v895
    %v1575 = vpop.f32.mrf.mxu0
    %v1576 = vadd.f32 %v960, %v1575
    %v1577 = vpop.f32.mrf.mxu0
    %v1578 = vpop.f32.mrf.mxu0
    %v1579 = vadd.f32 %v960, %v1578
    %v1580 = vpop.f32.mrf.mxu0
    %1581 = vmatprep.mubr.bf16.mxu0 0
    %1582 = vmatmul.mubr.bf16.gmra.mxu0 %v896
    %v1583 = vpop.f32.mrf.mxu0
    %v1584 = vadd.f32 %v960, %v1583
    %v1585 = vpop.f32.mrf.mxu0
    %v1586 = vpop.f32.mrf.mxu0
    %v1587 = vadd.f32 %v960, %v1586
    %v1588 = vpop.f32.mrf.mxu0
    %1589 = vmatprep.mubr.bf16.mxu0 0
    %1590 = vmatmul.mubr.bf16.gmra.mxu0 %v897
    %v1591 = vpop.f32.mrf.mxu0
    %v1592 = vadd.f32 %v960, %v1591
    %v1593 = vpop.f32.mrf.mxu0
    %v1594 = vpop.f32.mrf.mxu0
    %v1595 = vadd.f32 %v960, %v1594
    %v1596 = vpop.f32.mrf.mxu0
    %1597 = vmatprep.mubr.bf16.mxu0 0
    %1598 = vmatmul.mubr.bf16.gmra.mxu0 %v898
    %v1599 = vpop.f32.mrf.mxu0
    %v1600 = vadd.f32 %v960, %v1599
    %v1601 = vpop.f32.mrf.mxu0
    %v1602 = vpop.f32.mrf.mxu0
    %v1603 = vadd.f32 %v960, %v1602
    %v1604 = vpop.f32.mrf.mxu0
    %1605 = vmatprep.mubr.bf16.mxu0 0
    %1606 = vmatmul.mubr.bf16.gmra.mxu0 %v899
    %v1607 = vpop.f32.mrf.mxu0
    %v1608 = vadd.f32 %v960, %v1607
    %v1609 = vpop.f32.mrf.mxu0
    %v1610 = vpop.f32.mrf.mxu0
    %v1611 = vadd.f32 %v960, %v1610
    %v1612 = vpop.f32.mrf.mxu0
    %1613 = vmatprep.mubr.bf16.mxu0 0
    %1614 = vmatmul.mubr.bf16.gmra.mxu0 %v900
    %v1615 = vpop.f32.mrf.mxu0
    %v1616 = vadd.f32 %v960, %v1615
    %v1617 = vpop.f32.mrf.mxu0
    %v1618 = vpop.f32.mrf.mxu0
    %v1619 = vadd.f32 %v960, %v1618
    %v1620 = vpop.f32.mrf.mxu0
    %1621 = vmatprep.mubr.bf16.mxu0 0
    %1622 = vmatmul.mubr.bf16.gmra.mxu0 %v901
    %v1623 = vpop.f32.mrf.mxu0
    %v1624 = vadd.f32 %v960, %v1623
    %v1625 = vpop.f32.mrf.mxu0
    %v1626 = vpop.f32.mrf.mxu0
    %v1627 = vadd.f32 %v960, %v1626
    %v1628 = vpop.f32.mrf.mxu0
    %1629 = vmatprep.mubr.bf16.mxu0 0
    %1630 = vmatmul.mubr.bf16.gmra.mxu0 %v902
    %v1631 = vpop.f32.mrf.mxu0
    %v1632 = vadd.f32 %v960, %v1631
    %v1633 = vpop.f32.mrf.mxu0
    %v1634 = vpop.f32.mrf.mxu0
    %v1635 = vadd.f32 %v960, %v1634
    %v1636 = vpop.f32.mrf.mxu0
    %1637 = vmatprep.mubr.bf16.mxu0 0
    %1638 = vmatmul.mubr.bf16.gmra.mxu0 %v903
    %v1639 = vpop.f32.mrf.mxu0
    %v1640 = vadd.f32 %v960, %v1639
    %v1641 = vpop.f32.mrf.mxu0
    %v1642 = vpop.f32.mrf.mxu0
    %v1643 = vadd.f32 %v960, %v1642
    %v1644 = vpop.f32.mrf.mxu0
    %1645 = vmatprep.mubr.bf16.mxu0 0
    %1646 = vmatmul.mubr.bf16.gmra.mxu0 %v904
    %v1647 = vpop.f32.mrf.mxu0
    %v1648 = vadd.f32 %v960, %v1647
    %v1649 = vpop.f32.mrf.mxu0
    %v1650 = vpop.f32.mrf.mxu0
    %v1651 = vadd.f32 %v960, %v1650
    %v1652 = vpop.f32.mrf.mxu0
    %1653 = vmatprep.mubr.bf16.mxu0 0
    %1654 = vmatmul.mubr.bf16.gmra.mxu0 %v905
    %v1655 = vpop.f32.mrf.mxu0
    %v1656 = vadd.f32 %v960, %v1655
    %v1657 = vpop.f32.mrf.mxu0
    %v1658 = vpop.f32.mrf.mxu0
    %v1659 = vadd.f32 %v960, %v1658
    %v1660 = vpop.f32.mrf.mxu0
    %1661 = vmatprep.mubr.bf16.mxu0 0
    %1662 = vmatmul.mubr.bf16.gmra.mxu0 %v906
    %v1663 = vpop.f32.mrf.mxu0
    %v1664 = vadd.f32 %v960, %v1663
    %v1665 = vpop.f32.mrf.mxu0
    %v1666 = vpop.f32.mrf.mxu0
    %v1667 = vadd.f32 %v960, %v1666
    %v1668 = vpop.f32.mrf.mxu0
    %1669 = vmatprep.mubr.bf16.mxu0 0
    %1670 = vmatmul.mubr.bf16.gmra.mxu0 %v907
    %v1671 = vpop.f32.mrf.mxu0
    %v1672 = vadd.f32 %v960, %v1671
    %v1673 = vpop.f32.mrf.mxu0
    %v1674 = vpop.f32.mrf.mxu0
    %v1675 = vadd.f32 %v960, %v1674
    %v1676 = vpop.f32.mrf.mxu0
    %1677 = vmatprep.mubr.bf16.mxu0 0
    %1678 = vmatmul.mubr.bf16.gmra.mxu0 %v908
    %v1679 = vpop.f32.mrf.mxu0
    %v1680 = vadd.f32 %v960, %v1679
    %v1681 = vpop.f32.mrf.mxu0
    %v1682 = vpop.f32.mrf.mxu0
    %v1683 = vadd.f32 %v960, %v1682
    %v1684 = vpop.f32.mrf.mxu0
    %1685 = vmatprep.mubr.bf16.mxu0 0
    %1686 = vmatmul.mubr.bf16.gmra.mxu0 %v909
    %v1687 = vpop.f32.mrf.mxu0
    %v1688 = vadd.f32 %v960, %v1687
    %v1689 = vpop.f32.mrf.mxu0
    %v1690 = vpop.f32.mrf.mxu0
    %v1691 = vadd.f32 %v960, %v1690
    %v1692 = vpop.f32.mrf.mxu0
    %1693 = vmatprep.mubr.bf16.mxu0 0
    %1694 = vmatmul.mubr.bf16.gmra.mxu0 %v910
    %v1695 = vpop.f32.mrf.mxu0
    %v1696 = vadd.f32 %v960, %v1695
    %v1697 = vpop.f32.mrf.mxu0
    %v1698 = vpop.f32.mrf.mxu0
    %v1699 = vadd.f32 %v960, %v1698
    %v1700 = vpop.f32.mrf.mxu0
    %1701 = vmatprep.mubr.bf16.mxu0 0
    %1702 = vmatmul.mubr.bf16.gmra.mxu0 %v911
    %v1703 = vpop.f32.mrf.mxu0
    %v1704 = vadd.f32 %v960, %v1703
    %v1705 = vpop.f32.mrf.mxu0
    %v1706 = vpop.f32.mrf.mxu0
    %v1707 = vadd.f32 %v960, %v1706
    %v1708 = vpop.f32.mrf.mxu0
    %1709 = vmatprep.mubr.bf16.mxu0 0
    %1710 = vmatmul.mubr.bf16.gmra.mxu0 %v912
    %v1711 = vpop.f32.mrf.mxu0
    %v1712 = vadd.f32 %v960, %v1711
    %v1713 = vpop.f32.mrf.mxu0
    %v1714 = vpop.f32.mrf.mxu0
    %v1715 = vadd.f32 %v960, %v1714
    %v1716 = vpop.f32.mrf.mxu0
    %1717 = vmatprep.mubr.bf16.mxu0 0
    %1718 = vmatmul.mubr.bf16.gmra.mxu0 %v913
    %v1719 = vpop.f32.mrf.mxu0
    %v1720 = vadd.f32 %v960, %v1719
    %v1721 = vpop.f32.mrf.mxu0
    %v1722 = vpop.f32.mrf.mxu0
    %v1723 = vadd.f32 %v960, %v1722
    %v1724 = vpop.f32.mrf.mxu0
    %1725 = vmatprep.mubr.bf16.mxu0 0
    %1726 = vmatmul.mubr.bf16.gmra.mxu0 %v914
    %v1727 = vpop.f32.mrf.mxu0
    %v1728 = vadd.f32 %v960, %v1727
    %v1729 = vpop.f32.mrf.mxu0
    %v1730 = vpop.f32.mrf.mxu0
    %v1731 = vadd.f32 %v960, %v1730
    %v1732 = vpop.f32.mrf.mxu0
    %1733 = vdwg.mxu0
    %v1734 = vpack.c.bf16 %v1131, %v1127
    %v1735 = vpack.c.bf16 %v1133, %v1129
    %v1736 = vpack.c.bf16 %v1483, %v1480
    %v1737 = vpack.c.bf16 %v1141, %v1137
    %v1738 = vpack.c.bf16 %v1143, %v1139
    %v1739 = vpack.c.bf16 %v1491, %v1488
    %v1740 = vpack.c.bf16 %v1151, %v1147
    %v1741 = vpack.c.bf16 %v1153, %v1149
    %v1742 = vpack.c.bf16 %v1499, %v1496
    %v1743 = vpack.c.bf16 %v1161, %v1157
    %v1744 = vpack.c.bf16 %v1163, %v1159
    %v1745 = vpack.c.bf16 %v1507, %v1504
    %v1746 = vpack.c.bf16 %v1171, %v1167
    %v1747 = vpack.c.bf16 %v1173, %v1169
    %v1748 = vpack.c.bf16 %v1515, %v1512
    %v1749 = vpack.c.bf16 %v1181, %v1177
    %v1750 = vpack.c.bf16 %v1183, %v1179
    %v1751 = vpack.c.bf16 %v1523, %v1520
    %v1752 = vpack.c.bf16 %v1191, %v1187
    %v1753 = vpack.c.bf16 %v1193, %v1189
    %v1754 = vpack.c.bf16 %v1531, %v1528
    %v1755 = vpack.c.bf16 %v1201, %v1197
    %v1756 = vpack.c.bf16 %v1203, %v1199
    %v1757 = vpack.c.bf16 %v1539, %v1536
    %v1758 = vpack.c.bf16 %v1211, %v1207
    %v1759 = vpack.c.bf16 %v1213, %v1209
    %v1760 = vpack.c.bf16 %v1547, %v1544
    %v1761 = vpack.c.bf16 %v1221, %v1217
    %v1762 = vpack.c.bf16 %v1223, %v1219
    %v1763 = vpack.c.bf16 %v1555, %v1552
    %v1764 = vpack.c.bf16 %v1231, %v1227
    %v1765 = vpack.c.bf16 %v1233, %v1229
    %v1766 = vpack.c.bf16 %v1563, %v1560
    %v1767 = vpack.c.bf16 %v1241, %v1237
    %v1768 = vpack.c.bf16 %v1243, %v1239
    %v1769 = vpack.c.bf16 %v1571, %v1568
    %v1770 = vpack.c.bf16 %v1251, %v1247
    %v1771 = vpack.c.bf16 %v1253, %v1249
    %v1772 = vpack.c.bf16 %v1579, %v1576
    %v1773 = vpack.c.bf16 %v1261, %v1257
    %v1774 = vpack.c.bf16 %v1263, %v1259
    %v1775 = vpack.c.bf16 %v1587, %v1584
    %v1776 = vpack.c.bf16 %v1271, %v1267
    %v1777 = vpack.c.bf16 %v1273, %v1269
    %v1778 = vpack.c.bf16 %v1595, %v1592
    %v1779 = vpack.c.bf16 %v1281, %v1277
    %v1780 = vpack.c.bf16 %v1283, %v1279
    %v1781 = vpack.c.bf16 %v1603, %v1600
    %v1782 = vpack.c.bf16 %v1291, %v1287
    %v1783 = vpack.c.bf16 %v1293, %v1289
    %v1784 = vpack.c.bf16 %v1611, %v1608
    %v1785 = vpack.c.bf16 %v1301, %v1297
    %v1786 = vpack.c.bf16 %v1303, %v1299
    %v1787 = vpack.c.bf16 %v1619, %v1616
    %v1788 = vpack.c.bf16 %v1311, %v1307
    %v1789 = vpack.c.bf16 %v1313, %v1309
    %v1790 = vpack.c.bf16 %v1627, %v1624
    %v1791 = vpack.c.bf16 %v1321, %v1317
    %v1792 = vpack.c.bf16 %v1323, %v1319
    %v1793 = vpack.c.bf16 %v1635, %v1632
    %v1794 = vpack.c.bf16 %v1331, %v1327
    %v1795 = vpack.c.bf16 %v1333, %v1329
    %v1796 = vpack.c.bf16 %v1643, %v1640
    %v1797 = vpack.c.bf16 %v1341, %v1337
    %v1798 = vpack.c.bf16 %v1343, %v1339
    %v1799 = vpack.c.bf16 %v1651, %v1648
    %v1800 = vpack.c.bf16 %v1351, %v1347
    %v1801 = vpack.c.bf16 %v1353, %v1349
    %v1802 = vpack.c.bf16 %v1659, %v1656
    %v1803 = vpack.c.bf16 %v1361, %v1357
    %v1804 = vpack.c.bf16 %v1363, %v1359
    %v1805 = vpack.c.bf16 %v1667, %v1664
    %v1806 = vpack.c.bf16 %v1371, %v1367
    %v1807 = vpack.c.bf16 %v1373, %v1369
    %v1808 = vpack.c.bf16 %v1675, %v1672
    %v1809 = vpack.c.bf16 %v1381, %v1377
    %v1810 = vpack.c.bf16 %v1383, %v1379
    %v1811 = vpack.c.bf16 %v1683, %v1680
    %v1812 = vpack.c.bf16 %v1391, %v1387
    %v1813 = vpack.c.bf16 %v1393, %v1389
    %v1814 = vpack.c.bf16 %v1691, %v1688
    %v1815 = vpack.c.bf16 %v1401, %v1397
    %v1816 = vpack.c.bf16 %v1403, %v1399
    %v1817 = vpack.c.bf16 %v1699, %v1696
    %v1818 = vpack.c.bf16 %v1411, %v1407
    %v1819 = vpack.c.bf16 %v1413, %v1409
    %v1820 = vpack.c.bf16 %v1707, %v1704
    %v1821 = vpack.c.bf16 %v1421, %v1417
    %v1822 = vpack.c.bf16 %v1423, %v1419
    %v1823 = vpack.c.bf16 %v1715, %v1712
    %v1824 = vpack.c.bf16 %v1431, %v1427
    %v1825 = vpack.c.bf16 %v1433, %v1429
    %v1826 = vpack.c.bf16 %v1723, %v1720
    %v1827 = vpack.c.bf16 %v1441, %v1437
    %v1828 = vpack.c.bf16 %v1443, %v1439
    %v1829 = vpack.c.bf16 %v1731, %v1728
    %v1830 = vlaneseq
    %v1831 = vshrl.u32 %v1830, 7
    %v1832 = vadd.s32 %v1831, 8
    %v1833 = vadd.s32 %v1831, 16
    %v1834 = vadd.s32 %v1831, 24
    %v1835 = vadd.s32 %v1831, 32
    %v1836 = vadd.s32 %v1831, 40
    %v1837 = vadd.s32 %v1831, 48
    %v1838 = vadd.s32 %v1831, 56
    %v1839 = vadd.s32 %v1831, 64
    %v1840 = vadd.s32 %v1831, 72
    %v1841 = vadd.s32 %v1831, 80
    %v1842 = vadd.s32 %v1831, 88
    %v1843 = vadd.s32 %v1831, 96
    %v1844 = vadd.s32 %v1831, 104
    %v1845 = vadd.s32 %v1831, 112
    %v1846 = vadd.s32 %v1831, 120
    %v1847 = vlaneseq
    %v1848 = vand.u32 %v1847, 127
    %vm1849 = vcmp.ge.s32.totalorder %v1831, %v1848
    %vm1850 = vcmp.ge.s32.totalorder %v1832, %v1848
    %vm1851 = vcmp.ge.s32.totalorder %v1833, %v1848
    %vm1852 = vcmp.ge.s32.totalorder %v1834, %v1848
    %vm1853 = vcmp.ge.s32.totalorder %v1835, %v1848
    %vm1854 = vcmp.ge.s32.totalorder %v1836, %v1848
    %vm1855 = vcmp.ge.s32.totalorder %v1837, %v1848
    %vm1856 = vcmp.ge.s32.totalorder %v1838, %v1848
    %vm1857 = vcmp.ge.s32.totalorder %v1839, %v1848
    %vm1858 = vcmp.ge.s32.totalorder %v1840, %v1848
    %vm1859 = vcmp.ge.s32.totalorder %v1841, %v1848
    %vm1860 = vcmp.ge.s32.totalorder %v1842, %v1848
    %vm1861 = vcmp.ge.s32.totalorder %v1843, %v1848
    %vm1862 = vcmp.ge.s32.totalorder %v1844, %v1848
    %vm1863 = vcmp.ge.s32.totalorder %v1845, %v1848
    %vm1864 = vcmp.ge.s32.totalorder %v1846, %v1848
    %v1865 = vsel %vm1849, 0.0, -1e+30
    %v1866 = vsel %vm1850, 0.0, -1e+30
    %v1867 = vsel %vm1851, 0.0, -1e+30
    %v1868 = vsel %vm1852, 0.0, -1e+30
    %v1869 = vsel %vm1853, 0.0, -1e+30
    %v1870 = vsel %vm1854, 0.0, -1e+30
    %v1871 = vsel %vm1855, 0.0, -1e+30
    %v1872 = vsel %vm1856, 0.0, -1e+30
    %v1873 = vsel %vm1857, 0.0, -1e+30
    %v1874 = vsel %vm1858, 0.0, -1e+30
    %v1875 = vsel %vm1859, 0.0, -1e+30
    %v1876 = vsel %vm1860, 0.0, -1e+30
    %v1877 = vsel %vm1861, 0.0, -1e+30
    %v1878 = vsel %vm1862, 0.0, -1e+30
    %v1879 = vsel %vm1863, 0.0, -1e+30
    %v1880 = vsel %vm1864, 0.0, -1e+30
    %vm1881 = vcmask 261120
    %v1883 = vsel %vm1881, %v1734, 0
    %v1886 = vsel %vm1881, %v1737, 0
    %v1889 = vsel %vm1881, %v1740, 0
    %v1892 = vsel %vm1881, %v1743, 0
    %v1895 = vsel %vm1881, %v1746, 0
    %v1898 = vsel %vm1881, %v1749, 0
    %v1901 = vsel %vm1881, %v1752, 0
    %v1904 = vsel %vm1881, %v1755, 0
    %v1907 = vsel %vm1881, %v1735, 0
    %v1910 = vsel %vm1881, %v1738, 0
    %v1913 = vsel %vm1881, %v1741, 0
    %v1916 = vsel %vm1881, %v1744, 0
    %v1919 = vsel %vm1881, %v1747, 0
    %v1922 = vsel %vm1881, %v1750, 0
    %v1925 = vsel %vm1881, %v1753, 0
    %v1928 = vsel %vm1881, %v1756, 0
    %1930 = vmatprep.subr.bf16.mxu0 0
    %1931 = vmatpush1.bf16.xpose.msra.mxu0 %v1928
    %1932 = vmatprep.subr.bf16.mxu0 0
    %1933 = vmatpush1.bf16.xpose.msra.mxu0 %v1925
    %1934 = vmatprep.subr.bf16.mxu0 0
    %1935 = vmatpush1.bf16.xpose.msra.mxu0 %v1922
    %1936 = vmatprep.subr.bf16.mxu0 0
    %1937 = vmatpush1.bf16.xpose.msra.mxu0 %v1919
    %1938 = vmatprep.subr.bf16.mxu0 0
    %1939 = vmatpush1.bf16.xpose.msra.mxu0 %v1916
    %1940 = vmatprep.subr.bf16.mxu0 0
    %1941 = vmatpush1.bf16.xpose.msra.mxu0 %v1913
    %1942 = vmatprep.subr.bf16.mxu0 0
    %1943 = vmatpush1.bf16.xpose.msra.mxu0 %v1910
    %1944 = vmatprep.subr.bf16.mxu0 0
    %1945 = vmatpush1.bf16.xpose.msra.mxu0 %v1907
    %1946 = vmatprep.subr.bf16.mxu0 0
    %1947 = vmatpush2.bf16.xpose.msra.mxu0 0
    %1948 = vmatprep.subr.bf16.mxu0 0
    %1949 = vmatpush2.bf16.xpose.msra.mxu0 0
    %1950 = vmatprep.subr.bf16.mxu0 0
    %1951 = vmatpush2.bf16.xpose.msra.mxu0 0
    %1952 = vmatprep.subr.bf16.mxu0 0
    %1953 = vmatpush2.bf16.xpose.msra.mxu0 0
    %1954 = vmatprep.subr.bf16.mxu0 0
    %1955 = vmatpush2.bf16.xpose.msra.mxu0 0
    %1956 = vmatprep.subr.bf16.mxu0 0
    %1957 = vmatpush2.bf16.xpose.msra.mxu0 0
    %1958 = vmatprep.subr.bf16.mxu0 0
    %1959 = vmatpush2.bf16.xpose.msra.mxu0 0
    %1960 = vmatprep.subr.bf16.mxu0 0
    %1961 = vmatpush2.bf16.xpose.msra.mxu0 0
    %1962 = vmatprep.mubr.bf16.mxu0 0
    %1963 = vmatmul.mubr.bf16.gmra.mxu0 %v1883
    %v1964 = vpop.f32.mrf.mxu0
    %v1965 = vadd.f32 %v1865, %v1964
    %v1966 = vpop.f32.mrf.mxu0
    %v1967 = vpop.f32.mrf.mxu0
    %v1968 = vadd.f32 %v1866, %v1967
    %v1969 = vpop.f32.mrf.mxu0
    %1970 = vmatprep.mubr.bf16.mxu0 0
    %1971 = vmatmul.mubr.bf16.gmra.mxu0 %v1886
    %v1972 = vpop.f32.mrf.mxu0
    %v1973 = vadd.f32 %v1867, %v1972
    %v1974 = vpop.f32.mrf.mxu0
    %v1975 = vpop.f32.mrf.mxu0
    %v1976 = vadd.f32 %v1868, %v1975
    %v1977 = vpop.f32.mrf.mxu0
    %1978 = vmatprep.mubr.bf16.mxu0 0
    %1979 = vmatmul.mubr.bf16.gmra.mxu0 %v1889
    %v1980 = vpop.f32.mrf.mxu0
    %v1981 = vadd.f32 %v1869, %v1980
    %v1982 = vpop.f32.mrf.mxu0
    %v1983 = vpop.f32.mrf.mxu0
    %v1984 = vadd.f32 %v1870, %v1983
    %v1985 = vpop.f32.mrf.mxu0
    %1986 = vmatprep.mubr.bf16.mxu0 0
    %1987 = vmatmul.mubr.bf16.gmra.mxu0 %v1892
    %v1988 = vpop.f32.mrf.mxu0
    %v1989 = vadd.f32 %v1871, %v1988
    %v1990 = vpop.f32.mrf.mxu0
    %v1991 = vpop.f32.mrf.mxu0
    %v1992 = vadd.f32 %v1872, %v1991
    %v1993 = vpop.f32.mrf.mxu0
    %1994 = vmatprep.mubr.bf16.mxu0 0
    %1995 = vmatmul.mubr.bf16.gmra.mxu0 %v1895
    %v1996 = vpop.f32.mrf.mxu0
    %v1997 = vadd.f32 %v1873, %v1996
    %v1998 = vpop.f32.mrf.mxu0
    %v1999 = vpop.f32.mrf.mxu0
    %v2000 = vadd.f32 %v1874, %v1999
    %v2001 = vpop.f32.mrf.mxu0
    %2002 = vmatprep.mubr.bf16.mxu0 0
    %2003 = vmatmul.mubr.bf16.gmra.mxu0 %v1898
    %v2004 = vpop.f32.mrf.mxu0
    %v2005 = vadd.f32 %v1875, %v2004
    %v2006 = vpop.f32.mrf.mxu0
    %v2007 = vpop.f32.mrf.mxu0
    %v2008 = vadd.f32 %v1876, %v2007
    %v2009 = vpop.f32.mrf.mxu0
    %2010 = vmatprep.mubr.bf16.mxu0 0
    %2011 = vmatmul.mubr.bf16.gmra.mxu0 %v1901
    %v2012 = vpop.f32.mrf.mxu0
    %v2013 = vadd.f32 %v1877, %v2012
    %v2014 = vpop.f32.mrf.mxu0
    %v2015 = vpop.f32.mrf.mxu0
    %v2016 = vadd.f32 %v1878, %v2015
    %v2017 = vpop.f32.mrf.mxu0
    %2018 = vmatprep.mubr.bf16.mxu0 0
    %2019 = vmatmul.mubr.bf16.gmra.mxu0 %v1904
    %v2020 = vpop.f32.mrf.mxu0
    %v2021 = vadd.f32 %v1879, %v2020
    %v2022 = vpop.f32.mrf.mxu0
    %v2023 = vpop.f32.mrf.mxu0
    %v2024 = vadd.f32 %v1880, %v2023
    %v2025 = vpop.f32.mrf.mxu0
    %2026 = vdwg.mxu0
    %v2028 = vsel %vm1881, %v1758, 0
    %v2031 = vsel %vm1881, %v1761, 0
    %v2034 = vsel %vm1881, %v1764, 0
    %v2037 = vsel %vm1881, %v1767, 0
    %v2040 = vsel %vm1881, %v1770, 0
    %v2043 = vsel %vm1881, %v1773, 0
    %v2046 = vsel %vm1881, %v1776, 0
    %v2049 = vsel %vm1881, %v1779, 0
    %v2052 = vsel %vm1881, %v1759, 0
    %v2055 = vsel %vm1881, %v1762, 0
    %v2058 = vsel %vm1881, %v1765, 0
    %v2061 = vsel %vm1881, %v1768, 0
    %v2064 = vsel %vm1881, %v1771, 0
    %v2067 = vsel %vm1881, %v1774, 0
    %v2070 = vsel %vm1881, %v1777, 0
    %v2073 = vsel %vm1881, %v1780, 0
    %2075 = vmatprep.subr.bf16.mxu0 0
    %2076 = vmatpush1.bf16.xpose.msra.mxu0 %v2073
    %2077 = vmatprep.subr.bf16.mxu0 0
    %2078 = vmatpush1.bf16.xpose.msra.mxu0 %v2070
    %2079 = vmatprep.subr.bf16.mxu0 0
    %2080 = vmatpush1.bf16.xpose.msra.mxu0 %v2067
    %2081 = vmatprep.subr.bf16.mxu0 0
    %2082 = vmatpush1.bf16.xpose.msra.mxu0 %v2064
    %2083 = vmatprep.subr.bf16.mxu0 0
    %2084 = vmatpush1.bf16.xpose.msra.mxu0 %v2061
    %2085 = vmatprep.subr.bf16.mxu0 0
    %2086 = vmatpush1.bf16.xpose.msra.mxu0 %v2058
    %2087 = vmatprep.subr.bf16.mxu0 0
    %2088 = vmatpush1.bf16.xpose.msra.mxu0 %v2055
    %2089 = vmatprep.subr.bf16.mxu0 0
    %2090 = vmatpush1.bf16.xpose.msra.mxu0 %v2052
    %2091 = vmatprep.subr.bf16.mxu0 0
    %2092 = vmatpush2.bf16.xpose.msra.mxu0 0
    %2093 = vmatprep.subr.bf16.mxu0 0
    %2094 = vmatpush2.bf16.xpose.msra.mxu0 0
    %2095 = vmatprep.subr.bf16.mxu0 0
    %2096 = vmatpush2.bf16.xpose.msra.mxu0 0
    %2097 = vmatprep.subr.bf16.mxu0 0
    %2098 = vmatpush2.bf16.xpose.msra.mxu0 0
    %2099 = vmatprep.subr.bf16.mxu0 0
    %2100 = vmatpush2.bf16.xpose.msra.mxu0 0
    %2101 = vmatprep.subr.bf16.mxu0 0
    %2102 = vmatpush2.bf16.xpose.msra.mxu0 0
    %2103 = vmatprep.subr.bf16.mxu0 0
    %2104 = vmatpush2.bf16.xpose.msra.mxu0 0
    %2105 = vmatprep.subr.bf16.mxu0 0
    %2106 = vmatpush2.bf16.xpose.msra.mxu0 0
    %2107 = vmatprep.mubr.bf16.mxu0 0
    %2108 = vmatmul.mubr.bf16.gmra.mxu0 %v2028
    %v2109 = vpop.f32.mrf.mxu0
    %v2110 = vadd.f32 %v1865, %v2109
    %v2111 = vpop.f32.mrf.mxu0
    %v2112 = vpop.f32.mrf.mxu0
    %v2113 = vadd.f32 %v1866, %v2112
    %v2114 = vpop.f32.mrf.mxu0
    %2115 = vmatprep.mubr.bf16.mxu0 0
    %2116 = vmatmul.mubr.bf16.gmra.mxu0 %v2031
    %v2117 = vpop.f32.mrf.mxu0
    %v2118 = vadd.f32 %v1867, %v2117
    %v2119 = vpop.f32.mrf.mxu0
    %v2120 = vpop.f32.mrf.mxu0
    %v2121 = vadd.f32 %v1868, %v2120
    %v2122 = vpop.f32.mrf.mxu0
    %2123 = vmatprep.mubr.bf16.mxu0 0
    %2124 = vmatmul.mubr.bf16.gmra.mxu0 %v2034
    %v2125 = vpop.f32.mrf.mxu0
    %v2126 = vadd.f32 %v1869, %v2125
    %v2127 = vpop.f32.mrf.mxu0
    %v2128 = vpop.f32.mrf.mxu0
    %v2129 = vadd.f32 %v1870, %v2128
    %v2130 = vpop.f32.mrf.mxu0
    %2131 = vmatprep.mubr.bf16.mxu0 0
    %2132 = vmatmul.mubr.bf16.gmra.mxu0 %v2037
    %v2133 = vpop.f32.mrf.mxu0
    %v2134 = vadd.f32 %v1871, %v2133
    %v2135 = vpop.f32.mrf.mxu0
    %v2136 = vpop.f32.mrf.mxu0
    %v2137 = vadd.f32 %v1872, %v2136
    %v2138 = vpop.f32.mrf.mxu0
    %2139 = vmatprep.mubr.bf16.mxu0 0
    %2140 = vmatmul.mubr.bf16.gmra.mxu0 %v2040
    %v2141 = vpop.f32.mrf.mxu0
    %v2142 = vadd.f32 %v1873, %v2141
    %v2143 = vpop.f32.mrf.mxu0
    %v2144 = vpop.f32.mrf.mxu0
    %v2145 = vadd.f32 %v1874, %v2144
    %v2146 = vpop.f32.mrf.mxu0
    %2147 = vmatprep.mubr.bf16.mxu0 0
    %2148 = vmatmul.mubr.bf16.gmra.mxu0 %v2043
    %v2149 = vpop.f32.mrf.mxu0
    %v2150 = vadd.f32 %v1875, %v2149
    %v2151 = vpop.f32.mrf.mxu0
    %v2152 = vpop.f32.mrf.mxu0
    %v2153 = vadd.f32 %v1876, %v2152
    %v2154 = vpop.f32.mrf.mxu0
    %2155 = vmatprep.mubr.bf16.mxu0 0
    %2156 = vmatmul.mubr.bf16.gmra.mxu0 %v2046
    %v2157 = vpop.f32.mrf.mxu0
    %v2158 = vadd.f32 %v1877, %v2157
    %v2159 = vpop.f32.mrf.mxu0
    %v2160 = vpop.f32.mrf.mxu0
    %v2161 = vadd.f32 %v1878, %v2160
    %v2162 = vpop.f32.mrf.mxu0
    %2163 = vmatprep.mubr.bf16.mxu0 0
    %2164 = vmatmul.mubr.bf16.gmra.mxu0 %v2049
    %v2165 = vpop.f32.mrf.mxu0
    %v2166 = vadd.f32 %v1879, %v2165
    %v2167 = vpop.f32.mrf.mxu0
    %v2168 = vpop.f32.mrf.mxu0
    %v2169 = vadd.f32 %v1880, %v2168
    %v2170 = vpop.f32.mrf.mxu0
    %2171 = vdwg.mxu0
    %v2173 = vsel %vm1881, %v1782, 0
    %v2176 = vsel %vm1881, %v1785, 0
    %v2179 = vsel %vm1881, %v1788, 0
    %v2182 = vsel %vm1881, %v1791, 0
    %v2185 = vsel %vm1881, %v1794, 0
    %v2188 = vsel %vm1881, %v1797, 0
    %v2191 = vsel %vm1881, %v1800, 0
    %v2194 = vsel %vm1881, %v1803, 0
    %v2197 = vsel %vm1881, %v1783, 0
    %v2200 = vsel %vm1881, %v1786, 0
    %v2203 = vsel %vm1881, %v1789, 0
    %v2206 = vsel %vm1881, %v1792, 0
    %v2209 = vsel %vm1881, %v1795, 0
    %v2212 = vsel %vm1881, %v1798, 0
    %v2215 = vsel %vm1881, %v1801, 0
    %v2218 = vsel %vm1881, %v1804, 0
    %2220 = vmatprep.subr.bf16.mxu0 0
    %2221 = vmatpush1.bf16.xpose.msra.mxu0 %v2218
    %2222 = vmatprep.subr.bf16.mxu0 0
    %2223 = vmatpush1.bf16.xpose.msra.mxu0 %v2215
    %2224 = vmatprep.subr.bf16.mxu0 0
    %2225 = vmatpush1.bf16.xpose.msra.mxu0 %v2212
    %2226 = vmatprep.subr.bf16.mxu0 0
    %2227 = vmatpush1.bf16.xpose.msra.mxu0 %v2209
    %2228 = vmatprep.subr.bf16.mxu0 0
    %2229 = vmatpush1.bf16.xpose.msra.mxu0 %v2206
    %2230 = vmatprep.subr.bf16.mxu0 0
    %2231 = vmatpush1.bf16.xpose.msra.mxu0 %v2203
    %2232 = vmatprep.subr.bf16.mxu0 0
    %2233 = vmatpush1.bf16.xpose.msra.mxu0 %v2200
    %2234 = vmatprep.subr.bf16.mxu0 0
    %2235 = vmatpush1.bf16.xpose.msra.mxu0 %v2197
    %2236 = vmatprep.subr.bf16.mxu0 0
    %2237 = vmatpush2.bf16.xpose.msra.mxu0 0
    %2238 = vmatprep.subr.bf16.mxu0 0
    %2239 = vmatpush2.bf16.xpose.msra.mxu0 0
    %2240 = vmatprep.subr.bf16.mxu0 0
    %2241 = vmatpush2.bf16.xpose.msra.mxu0 0
    %2242 = vmatprep.subr.bf16.mxu0 0
    %2243 = vmatpush2.bf16.xpose.msra.mxu0 0
    %2244 = vmatprep.subr.bf16.mxu0 0
    %2245 = vmatpush2.bf16.xpose.msra.mxu0 0
    %2246 = vmatprep.subr.bf16.mxu0 0
    %2247 = vmatpush2.bf16.xpose.msra.mxu0 0
    %2248 = vmatprep.subr.bf16.mxu0 0
    %2249 = vmatpush2.bf16.xpose.msra.mxu0 0
    %2250 = vmatprep.subr.bf16.mxu0 0
    %2251 = vmatpush2.bf16.xpose.msra.mxu0 0
    %2252 = vmatprep.mubr.bf16.mxu0 0
    %2253 = vmatmul.mubr.bf16.gmra.mxu0 %v2173
    %v2254 = vpop.f32.mrf.mxu0
    %v2255 = vadd.f32 %v1865, %v2254
    %v2256 = vpop.f32.mrf.mxu0
    %v2257 = vpop.f32.mrf.mxu0
    %v2258 = vadd.f32 %v1866, %v2257
    %v2259 = vpop.f32.mrf.mxu0
    %2260 = vmatprep.mubr.bf16.mxu0 0
    %2261 = vmatmul.mubr.bf16.gmra.mxu0 %v2176
    %v2262 = vpop.f32.mrf.mxu0
    %v2263 = vadd.f32 %v1867, %v2262
    %v2264 = vpop.f32.mrf.mxu0
    %v2265 = vpop.f32.mrf.mxu0
    %v2266 = vadd.f32 %v1868, %v2265
    %v2267 = vpop.f32.mrf.mxu0
    %2268 = vmatprep.mubr.bf16.mxu0 0
    %2269 = vmatmul.mubr.bf16.gmra.mxu0 %v2179
    %v2270 = vpop.f32.mrf.mxu0
    %v2271 = vadd.f32 %v1869, %v2270
    %v2272 = vpop.f32.mrf.mxu0
    %v2273 = vpop.f32.mrf.mxu0
    %v2274 = vadd.f32 %v1870, %v2273
    %v2275 = vpop.f32.mrf.mxu0
    %2276 = vmatprep.mubr.bf16.mxu0 0
    %2277 = vmatmul.mubr.bf16.gmra.mxu0 %v2182
    %v2278 = vpop.f32.mrf.mxu0
    %v2279 = vadd.f32 %v1871, %v2278
    %v2280 = vpop.f32.mrf.mxu0
    %v2281 = vpop.f32.mrf.mxu0
    %v2282 = vadd.f32 %v1872, %v2281
    %v2283 = vpop.f32.mrf.mxu0
    %2284 = vmatprep.mubr.bf16.mxu0 0
    %2285 = vmatmul.mubr.bf16.gmra.mxu0 %v2185
    %v2286 = vpop.f32.mrf.mxu0
    %v2287 = vadd.f32 %v1873, %v2286
    %v2288 = vpop.f32.mrf.mxu0
    %v2289 = vpop.f32.mrf.mxu0
    %v2290 = vadd.f32 %v1874, %v2289
    %v2291 = vpop.f32.mrf.mxu0
    %2292 = vmatprep.mubr.bf16.mxu0 0
    %2293 = vmatmul.mubr.bf16.gmra.mxu0 %v2188
    %v2294 = vpop.f32.mrf.mxu0
    %v2295 = vadd.f32 %v1875, %v2294
    %v2296 = vpop.f32.mrf.mxu0
    %v2297 = vpop.f32.mrf.mxu0
    %v2298 = vadd.f32 %v1876, %v2297
    %v2299 = vpop.f32.mrf.mxu0
    %2300 = vmatprep.mubr.bf16.mxu0 0
    %2301 = vmatmul.mubr.bf16.gmra.mxu0 %v2191
    %v2302 = vpop.f32.mrf.mxu0
    %v2303 = vadd.f32 %v1877, %v2302
    %v2304 = vpop.f32.mrf.mxu0
    %v2305 = vpop.f32.mrf.mxu0
    %v2306 = vadd.f32 %v1878, %v2305
    %v2307 = vpop.f32.mrf.mxu0
    %2308 = vmatprep.mubr.bf16.mxu0 0
    %2309 = vmatmul.mubr.bf16.gmra.mxu0 %v2194
    %v2310 = vpop.f32.mrf.mxu0
    %v2311 = vadd.f32 %v1879, %v2310
    %v2312 = vpop.f32.mrf.mxu0
    %v2313 = vpop.f32.mrf.mxu0
    %v2314 = vadd.f32 %v1880, %v2313
    %v2315 = vpop.f32.mrf.mxu0
    %2316 = vdwg.mxu0
    %v2318 = vsel %vm1881, %v1806, 0
    %v2321 = vsel %vm1881, %v1809, 0
    %v2324 = vsel %vm1881, %v1812, 0
    %v2327 = vsel %vm1881, %v1815, 0
    %v2330 = vsel %vm1881, %v1818, 0
    %v2333 = vsel %vm1881, %v1821, 0
    %v2336 = vsel %vm1881, %v1824, 0
    %v2339 = vsel %vm1881, %v1827, 0
    %v2342 = vsel %vm1881, %v1807, 0
    %v2345 = vsel %vm1881, %v1810, 0
    %v2348 = vsel %vm1881, %v1813, 0
    %v2351 = vsel %vm1881, %v1816, 0
    %v2354 = vsel %vm1881, %v1819, 0
    %v2357 = vsel %vm1881, %v1822, 0
    %v2360 = vsel %vm1881, %v1825, 0
    %v2363 = vsel %vm1881, %v1828, 0
    %2365 = vmatprep.subr.bf16.mxu0 0
    %2366 = vmatpush1.bf16.xpose.msra.mxu0 %v2363
    %2367 = vmatprep.subr.bf16.mxu0 0
    %2368 = vmatpush1.bf16.xpose.msra.mxu0 %v2360
    %2369 = vmatprep.subr.bf16.mxu0 0
    %2370 = vmatpush1.bf16.xpose.msra.mxu0 %v2357
    %2371 = vmatprep.subr.bf16.mxu0 0
    %2372 = vmatpush1.bf16.xpose.msra.mxu0 %v2354
    %2373 = vmatprep.subr.bf16.mxu0 0
    %2374 = vmatpush1.bf16.xpose.msra.mxu0 %v2351
    %2375 = vmatprep.subr.bf16.mxu0 0
    %2376 = vmatpush1.bf16.xpose.msra.mxu0 %v2348
    %2377 = vmatprep.subr.bf16.mxu0 0
    %2378 = vmatpush1.bf16.xpose.msra.mxu0 %v2345
    %2379 = vmatprep.subr.bf16.mxu0 0
    %2380 = vmatpush1.bf16.xpose.msra.mxu0 %v2342
    %2381 = vmatprep.subr.bf16.mxu0 0
    %2382 = vmatpush2.bf16.xpose.msra.mxu0 0
    %2383 = vmatprep.subr.bf16.mxu0 0
    %2384 = vmatpush2.bf16.xpose.msra.mxu0 0
    %2385 = vmatprep.subr.bf16.mxu0 0
    %2386 = vmatpush2.bf16.xpose.msra.mxu0 0
    %2387 = vmatprep.subr.bf16.mxu0 0
    %2388 = vmatpush2.bf16.xpose.msra.mxu0 0
    %2389 = vmatprep.subr.bf16.mxu0 0
    %2390 = vmatpush2.bf16.xpose.msra.mxu0 0
    %2391 = vmatprep.subr.bf16.mxu0 0
    %2392 = vmatpush2.bf16.xpose.msra.mxu0 0
    %2393 = vmatprep.subr.bf16.mxu0 0
    %2394 = vmatpush2.bf16.xpose.msra.mxu0 0
    %2395 = vmatprep.subr.bf16.mxu0 0
    %2396 = vmatpush2.bf16.xpose.msra.mxu0 0
    %2397 = vmatprep.mubr.bf16.mxu0 0
    %2398 = vmatmul.mubr.bf16.gmra.mxu0 %v2318
    %v2399 = vpop.f32.mrf.mxu0
    %v2400 = vadd.f32 %v1865, %v2399
    %v2401 = vpop.f32.mrf.mxu0
    %v2402 = vpop.f32.mrf.mxu0
    %v2403 = vadd.f32 %v1866, %v2402
    %v2404 = vpop.f32.mrf.mxu0
    %2405 = vmatprep.mubr.bf16.mxu0 0
    %2406 = vmatmul.mubr.bf16.gmra.mxu0 %v2321
    %v2407 = vpop.f32.mrf.mxu0
    %v2408 = vadd.f32 %v1867, %v2407
    %v2409 = vpop.f32.mrf.mxu0
    %v2410 = vpop.f32.mrf.mxu0
    %v2411 = vadd.f32 %v1868, %v2410
    %v2412 = vpop.f32.mrf.mxu0
    %2413 = vmatprep.mubr.bf16.mxu0 0
    %2414 = vmatmul.mubr.bf16.gmra.mxu0 %v2324
    %v2415 = vpop.f32.mrf.mxu0
    %v2416 = vadd.f32 %v1869, %v2415
    %v2417 = vpop.f32.mrf.mxu0
    %v2418 = vpop.f32.mrf.mxu0
    %v2419 = vadd.f32 %v1870, %v2418
    %v2420 = vpop.f32.mrf.mxu0
    %2421 = vmatprep.mubr.bf16.mxu0 0
    %2422 = vmatmul.mubr.bf16.gmra.mxu0 %v2327
    %v2423 = vpop.f32.mrf.mxu0
    %v2424 = vadd.f32 %v1871, %v2423
    %v2425 = vpop.f32.mrf.mxu0
    %v2426 = vpop.f32.mrf.mxu0
    %v2427 = vadd.f32 %v1872, %v2426
    %v2428 = vpop.f32.mrf.mxu0
    %2429 = vmatprep.mubr.bf16.mxu0 0
    %2430 = vmatmul.mubr.bf16.gmra.mxu0 %v2330
    %v2431 = vpop.f32.mrf.mxu0
    %v2432 = vadd.f32 %v1873, %v2431
    %v2433 = vpop.f32.mrf.mxu0
    %v2434 = vpop.f32.mrf.mxu0
    %v2435 = vadd.f32 %v1874, %v2434
    %v2436 = vpop.f32.mrf.mxu0
    %2437 = vmatprep.mubr.bf16.mxu0 0
    %2438 = vmatmul.mubr.bf16.gmra.mxu0 %v2333
    %v2439 = vpop.f32.mrf.mxu0
    %v2440 = vadd.f32 %v1875, %v2439
    %v2441 = vpop.f32.mrf.mxu0
    %v2442 = vpop.f32.mrf.mxu0
    %v2443 = vadd.f32 %v1876, %v2442
    %v2444 = vpop.f32.mrf.mxu0
    %2445 = vmatprep.mubr.bf16.mxu0 0
    %2446 = vmatmul.mubr.bf16.gmra.mxu0 %v2336
    %v2447 = vpop.f32.mrf.mxu0
    %v2448 = vadd.f32 %v1877, %v2447
    %v2449 = vpop.f32.mrf.mxu0
    %v2450 = vpop.f32.mrf.mxu0
    %v2451 = vadd.f32 %v1878, %v2450
    %v2452 = vpop.f32.mrf.mxu0
    %2453 = vmatprep.mubr.bf16.mxu0 0
    %2454 = vmatmul.mubr.bf16.gmra.mxu0 %v2339
    %v2455 = vpop.f32.mrf.mxu0
    %v2456 = vadd.f32 %v1879, %v2455
    %v2457 = vpop.f32.mrf.mxu0
    %v2458 = vpop.f32.mrf.mxu0
    %v2459 = vadd.f32 %v1880, %v2458
    %v2460 = vpop.f32.mrf.mxu0
    %2461 = vdwg.mxu0
    %2462 = vmax.xlane.f32.xlu0 %v1965
    %v2463 = vpop.xlane.xlu0 %2462
    %2464 = vmax.xlane.f32.xlu0 %v1968
    %v2465 = vpop.xlane.xlu0 %2464
    %2466 = vmax.xlane.f32.xlu0 %v1973
    %v2467 = vpop.xlane.xlu0 %2466
    %2468 = vmax.xlane.f32.xlu0 %v1976
    %v2469 = vpop.xlane.xlu0 %2468
    %2470 = vmax.xlane.f32.xlu0 %v1981
    %v2471 = vpop.xlane.xlu0 %2470
    %2472 = vmax.xlane.f32.xlu0 %v1984
    %v2473 = vpop.xlane.xlu0 %2472
    %2474 = vmax.xlane.f32.xlu0 %v1989
    %v2475 = vpop.xlane.xlu0 %2474
    %2476 = vmax.xlane.f32.xlu0 %v1992
    %v2477 = vpop.xlane.xlu0 %2476
    %2478 = vmax.xlane.f32.xlu0 %v1997
    %v2479 = vpop.xlane.xlu0 %2478
    %2480 = vmax.xlane.f32.xlu0 %v2000
    %v2481 = vpop.xlane.xlu0 %2480
    %2482 = vmax.xlane.f32.xlu0 %v2005
    %v2483 = vpop.xlane.xlu0 %2482
    %2484 = vmax.xlane.f32.xlu0 %v2008
    %v2485 = vpop.xlane.xlu0 %2484
    %2486 = vmax.xlane.f32.xlu0 %v2013
    %v2487 = vpop.xlane.xlu0 %2486
    %2488 = vmax.xlane.f32.xlu0 %v2016
    %v2489 = vpop.xlane.xlu0 %2488
    %2490 = vmax.xlane.f32.xlu0 %v2021
    %v2491 = vpop.xlane.xlu0 %2490
    %2492 = vmax.xlane.f32.xlu0 %v2024
    %v2493 = vpop.xlane.xlu0 %2492
    %2494 = vmax.xlane.f32.xlu0 %v2110
    %v2495 = vpop.xlane.xlu0 %2494
    %2496 = vmax.xlane.f32.xlu0 %v2113
    %v2497 = vpop.xlane.xlu0 %2496
    %2498 = vmax.xlane.f32.xlu0 %v2118
    %v2499 = vpop.xlane.xlu0 %2498
    %2500 = vmax.xlane.f32.xlu0 %v2121
    %v2501 = vpop.xlane.xlu0 %2500
    %2502 = vmax.xlane.f32.xlu0 %v2126
    %v2503 = vpop.xlane.xlu0 %2502
    %2504 = vmax.xlane.f32.xlu0 %v2129
    %v2505 = vpop.xlane.xlu0 %2504
    %2506 = vmax.xlane.f32.xlu0 %v2134
    %v2507 = vpop.xlane.xlu0 %2506
    %2508 = vmax.xlane.f32.xlu0 %v2137
    %v2509 = vpop.xlane.xlu0 %2508
    %2510 = vmax.xlane.f32.xlu0 %v2142
    %v2511 = vpop.xlane.xlu0 %2510
    %2512 = vmax.xlane.f32.xlu0 %v2145
    %v2513 = vpop.xlane.xlu0 %2512
    %2514 = vmax.xlane.f32.xlu0 %v2150
    %v2515 = vpop.xlane.xlu0 %2514
    %2516 = vmax.xlane.f32.xlu0 %v2153
    %v2517 = vpop.xlane.xlu0 %2516
    %2518 = vmax.xlane.f32.xlu0 %v2158
    %v2519 = vpop.xlane.xlu0 %2518
    %2520 = vmax.xlane.f32.xlu0 %v2161
    %v2521 = vpop.xlane.xlu0 %2520
    %2522 = vmax.xlane.f32.xlu0 %v2166
    %v2523 = vpop.xlane.xlu0 %2522
    %2524 = vmax.xlane.f32.xlu0 %v2169
    %v2525 = vpop.xlane.xlu0 %2524
    %2526 = vmax.xlane.f32.xlu0 %v2255
    %v2527 = vpop.xlane.xlu0 %2526
    %2528 = vmax.xlane.f32.xlu0 %v2258
    %v2529 = vpop.xlane.xlu0 %2528
    %2530 = vmax.xlane.f32.xlu0 %v2263
    %v2531 = vpop.xlane.xlu0 %2530
    %2532 = vmax.xlane.f32.xlu0 %v2266
    %v2533 = vpop.xlane.xlu0 %2532
    %2534 = vmax.xlane.f32.xlu0 %v2271
    %v2535 = vpop.xlane.xlu0 %2534
    %2536 = vmax.xlane.f32.xlu0 %v2274
    %v2537 = vpop.xlane.xlu0 %2536
    %2538 = vmax.xlane.f32.xlu0 %v2279
    %v2539 = vpop.xlane.xlu0 %2538
    %2540 = vmax.xlane.f32.xlu0 %v2282
    %v2541 = vpop.xlane.xlu0 %2540
    %2542 = vmax.xlane.f32.xlu0 %v2287
    %v2543 = vpop.xlane.xlu0 %2542
    %2544 = vmax.xlane.f32.xlu0 %v2290
    %v2545 = vpop.xlane.xlu0 %2544
    %2546 = vmax.xlane.f32.xlu0 %v2295
    %v2547 = vpop.xlane.xlu0 %2546
    %2548 = vmax.xlane.f32.xlu0 %v2298
    %v2549 = vpop.xlane.xlu0 %2548
    %2550 = vmax.xlane.f32.xlu0 %v2303
    %v2551 = vpop.xlane.xlu0 %2550
    %2552 = vmax.xlane.f32.xlu0 %v2306
    %v2553 = vpop.xlane.xlu0 %2552
    %2554 = vmax.xlane.f32.xlu0 %v2311
    %v2555 = vpop.xlane.xlu0 %2554
    %2556 = vmax.xlane.f32.xlu0 %v2314
    %v2557 = vpop.xlane.xlu0 %2556
    %2558 = vmax.xlane.f32.xlu0 %v2400
    %v2559 = vpop.xlane.xlu0 %2558
    %2560 = vmax.xlane.f32.xlu0 %v2403
    %v2561 = vpop.xlane.xlu0 %2560
    %2562 = vmax.xlane.f32.xlu0 %v2408
    %v2563 = vpop.xlane.xlu0 %2562
    %2564 = vmax.xlane.f32.xlu0 %v2411
    %v2565 = vpop.xlane.xlu0 %2564
    %2566 = vmax.xlane.f32.xlu0 %v2416
    %v2567 = vpop.xlane.xlu0 %2566
    %2568 = vmax.xlane.f32.xlu0 %v2419
    %v2569 = vpop.xlane.xlu0 %2568
    %2570 = vmax.xlane.f32.xlu0 %v2424
    %v2571 = vpop.xlane.xlu0 %2570
    %2572 = vmax.xlane.f32.xlu0 %v2427
    %v2573 = vpop.xlane.xlu0 %2572
    %2574 = vmax.xlane.f32.xlu0 %v2432
    %v2575 = vpop.xlane.xlu0 %2574
    %2576 = vmax.xlane.f32.xlu0 %v2435
    %v2577 = vpop.xlane.xlu0 %2576
    %2578 = vmax.xlane.f32.xlu0 %v2440
    %v2579 = vpop.xlane.xlu0 %2578
    %2580 = vmax.xlane.f32.xlu0 %v2443
    %v2581 = vpop.xlane.xlu0 %2580
    %2582 = vmax.xlane.f32.xlu0 %v2448
    %v2583 = vpop.xlane.xlu0 %2582
    %2584 = vmax.xlane.f32.xlu0 %v2451
    %v2585 = vpop.xlane.xlu0 %2584
    %2586 = vmax.xlane.f32.xlu0 %v2456
    %v2587 = vpop.xlane.xlu0 %2586
    %2588 = vmax.xlane.f32.xlu0 %v2459
    %v2589 = vpop.xlane.xlu0 %2588
    %v2590 = vsub.f32 %v1965, %v2463
    %v2591 = vsub.f32 %v1968, %v2465
    %v2592 = vsub.f32 %v1973, %v2467
    %v2593 = vsub.f32 %v1976, %v2469
    %v2594 = vsub.f32 %v1981, %v2471
    %v2595 = vsub.f32 %v1984, %v2473
    %v2596 = vsub.f32 %v1989, %v2475
    %v2597 = vsub.f32 %v1992, %v2477
    %v2598 = vsub.f32 %v1997, %v2479
    %v2599 = vsub.f32 %v2000, %v2481
    %v2600 = vsub.f32 %v2005, %v2483
    %v2601 = vsub.f32 %v2008, %v2485
    %v2602 = vsub.f32 %v2013, %v2487
    %v2603 = vsub.f32 %v2016, %v2489
    %v2604 = vsub.f32 %v2021, %v2491
    %v2605 = vsub.f32 %v2024, %v2493
    %v2606 = vsub.f32 %v2110, %v2495
    %v2607 = vsub.f32 %v2113, %v2497
    %v2608 = vsub.f32 %v2118, %v2499
    %v2609 = vsub.f32 %v2121, %v2501
    %v2610 = vsub.f32 %v2126, %v2503
    %v2611 = vsub.f32 %v2129, %v2505
    %v2612 = vsub.f32 %v2134, %v2507
    %v2613 = vsub.f32 %v2137, %v2509
    %v2614 = vsub.f32 %v2142, %v2511
    %v2615 = vsub.f32 %v2145, %v2513
    %v2616 = vsub.f32 %v2150, %v2515
    %v2617 = vsub.f32 %v2153, %v2517
    %v2618 = vsub.f32 %v2158, %v2519
    %v2619 = vsub.f32 %v2161, %v2521
    %v2620 = vsub.f32 %v2166, %v2523
    %v2621 = vsub.f32 %v2169, %v2525
    %v2622 = vsub.f32 %v2255, %v2527
    %v2623 = vsub.f32 %v2258, %v2529
    %v2624 = vsub.f32 %v2263, %v2531
    %v2625 = vsub.f32 %v2266, %v2533
    %v2626 = vsub.f32 %v2271, %v2535
    %v2627 = vsub.f32 %v2274, %v2537
    %v2628 = vsub.f32 %v2279, %v2539
    %v2629 = vsub.f32 %v2282, %v2541
    %v2630 = vsub.f32 %v2287, %v2543
    %v2631 = vsub.f32 %v2290, %v2545
    %v2632 = vsub.f32 %v2295, %v2547
    %v2633 = vsub.f32 %v2298, %v2549
    %v2634 = vsub.f32 %v2303, %v2551
    %v2635 = vsub.f32 %v2306, %v2553
    %v2636 = vsub.f32 %v2311, %v2555
    %v2637 = vsub.f32 %v2314, %v2557
    %v2638 = vsub.f32 %v2400, %v2559
    %v2639 = vsub.f32 %v2403, %v2561
    %v2640 = vsub.f32 %v2408, %v2563
    %v2641 = vsub.f32 %v2411, %v2565
    %v2642 = vsub.f32 %v2416, %v2567
    %v2643 = vsub.f32 %v2419, %v2569
    %v2644 = vsub.f32 %v2424, %v2571
    %v2645 = vsub.f32 %v2427, %v2573
    %v2646 = vsub.f32 %v2432, %v2575
    %v2647 = vsub.f32 %v2435, %v2577
    %v2648 = vsub.f32 %v2440, %v2579
    %v2649 = vsub.f32 %v2443, %v2581
    %v2650 = vsub.f32 %v2448, %v2583
    %v2651 = vsub.f32 %v2451, %v2585
    %v2652 = vsub.f32 %v2456, %v2587
    %v2653 = vsub.f32 %v2459, %v2589
    %v2654 = vmul.f32 %v2590, 1.442695
    %v2655 = vpow.pop %v2654
    %v2656 = vmul.f32 %v2591, 1.442695
    %v2657 = vpow.pop %v2656
    %v2658 = vmul.f32 %v2592, 1.442695
    %v2659 = vpow.pop %v2658
    %v2660 = vmul.f32 %v2593, 1.442695
    %v2661 = vpow.pop %v2660
    %v2662 = vmul.f32 %v2594, 1.442695
    %v2663 = vpow.pop %v2662
    %v2664 = vmul.f32 %v2595, 1.442695
    %v2665 = vpow.pop %v2664
    %v2666 = vmul.f32 %v2596, 1.442695
    %v2667 = vpow.pop %v2666
    %v2668 = vmul.f32 %v2597, 1.442695
    %v2669 = vpow.pop %v2668
    %v2670 = vmul.f32 %v2598, 1.442695
    %v2671 = vpow.pop %v2670
    %v2672 = vmul.f32 %v2599, 1.442695
    %v2673 = vpow.pop %v2672
    %v2674 = vmul.f32 %v2600, 1.442695
    %v2675 = vpow.pop %v2674
    %v2676 = vmul.f32 %v2601, 1.442695
    %v2677 = vpow.pop %v2676
    %v2678 = vmul.f32 %v2602, 1.442695
    %v2679 = vpow.pop %v2678
    %v2680 = vmul.f32 %v2603, 1.442695
    %v2681 = vpow.pop %v2680
    %v2682 = vmul.f32 %v2604, 1.442695
    %v2683 = vpow.pop %v2682
    %v2684 = vmul.f32 %v2605, 1.442695
    %v2685 = vpow.pop %v2684
    %v2686 = vmul.f32 %v2606, 1.442695
    %v2687 = vpow.pop %v2686
    %v2688 = vmul.f32 %v2607, 1.442695
    %v2689 = vpow.pop %v2688
    %v2690 = vmul.f32 %v2608, 1.442695
    %v2691 = vpow.pop %v2690
    %v2692 = vmul.f32 %v2609, 1.442695
    %v2693 = vpow.pop %v2692
    %v2694 = vmul.f32 %v2610, 1.442695
    %v2695 = vpow.pop %v2694
    %v2696 = vmul.f32 %v2611, 1.442695
    %v2697 = vpow.pop %v2696
    %v2698 = vmul.f32 %v2612, 1.442695
    %v2699 = vpow.pop %v2698
    %v2700 = vmul.f32 %v2613, 1.442695
    %v2701 = vpow.pop %v2700
    %v2702 = vmul.f32 %v2614, 1.442695
    %v2703 = vpow.pop %v2702
    %v2704 = vmul.f32 %v2615, 1.442695
    %v2705 = vpow.pop %v2704
    %v2706 = vmul.f32 %v2616, 1.442695
    %v2707 = vpow.pop %v2706
    %v2708 = vmul.f32 %v2617, 1.442695
    %v2709 = vpow.pop %v2708
    %v2710 = vmul.f32 %v2618, 1.442695
    %v2711 = vpow.pop %v2710
    %v2712 = vmul.f32 %v2619, 1.442695
    %v2713 = vpow.pop %v2712
    %v2714 = vmul.f32 %v2620, 1.442695
    %v2715 = vpow.pop %v2714
    %v2716 = vmul.f32 %v2621, 1.442695
    %v2717 = vpow.pop %v2716
    %v2718 = vmul.f32 %v2622, 1.442695
    %v2719 = vpow.pop %v2718
    %v2720 = vmul.f32 %v2623, 1.442695
    %v2721 = vpow.pop %v2720
    %v2722 = vmul.f32 %v2624, 1.442695
    %v2723 = vpow.pop %v2722
    %v2724 = vmul.f32 %v2625, 1.442695
    %v2725 = vpow.pop %v2724
    %v2726 = vmul.f32 %v2626, 1.442695
    %v2727 = vpow.pop %v2726
    %v2728 = vmul.f32 %v2627, 1.442695
    %v2729 = vpow.pop %v2728
    %v2730 = vmul.f32 %v2628, 1.442695
    %v2731 = vpow.pop %v2730
    %v2732 = vmul.f32 %v2629, 1.442695
    %v2733 = vpow.pop %v2732
    %v2734 = vmul.f32 %v2630, 1.442695
    %v2735 = vpow.pop %v2734
    %v2736 = vmul.f32 %v2631, 1.442695
    %v2737 = vpow.pop %v2736
    %v2738 = vmul.f32 %v2632, 1.442695
    %v2739 = vpow.pop %v2738
    %v2740 = vmul.f32 %v2633, 1.442695
    %v2741 = vpow.pop %v2740
    %v2742 = vmul.f32 %v2634, 1.442695
    %v2743 = vpow.pop %v2742
    %v2744 = vmul.f32 %v2635, 1.442695
    %v2745 = vpow.pop %v2744
    %v2746 = vmul.f32 %v2636, 1.442695
    %v2747 = vpow.pop %v2746
    %v2748 = vmul.f32 %v2637, 1.442695
    %v2749 = vpow.pop %v2748
    %v2750 = vmul.f32 %v2638, 1.442695
    %v2751 = vpow.pop %v2750
    %v2752 = vmul.f32 %v2639, 1.442695
    %v2753 = vpow.pop %v2752
    %v2754 = vmul.f32 %v2640, 1.442695
    %v2755 = vpow.pop %v2754
    %v2756 = vmul.f32 %v2641, 1.442695
    %v2757 = vpow.pop %v2756
    %v2758 = vmul.f32 %v2642, 1.442695
    %v2759 = vpow.pop %v2758
    %v2760 = vmul.f32 %v2643, 1.442695
    %v2761 = vpow.pop %v2760
    %v2762 = vmul.f32 %v2644, 1.442695
    %v2763 = vpow.pop %v2762
    %v2764 = vmul.f32 %v2645, 1.442695
    %v2765 = vpow.pop %v2764
    %v2766 = vmul.f32 %v2646, 1.442695
    %v2767 = vpow.pop %v2766
    %v2768 = vmul.f32 %v2647, 1.442695
    %v2769 = vpow.pop %v2768
    %v2770 = vmul.f32 %v2648, 1.442695
    %v2771 = vpow.pop %v2770
    %v2772 = vmul.f32 %v2649, 1.442695
    %v2773 = vpow.pop %v2772
    %v2774 = vmul.f32 %v2650, 1.442695
    %v2775 = vpow.pop %v2774
    %v2776 = vmul.f32 %v2651, 1.442695
    %v2777 = vpow.pop %v2776
    %v2778 = vmul.f32 %v2652, 1.442695
    %v2779 = vpow.pop %v2778
    %v2780 = vmul.f32 %v2653, 1.442695
    %v2781 = vpow.pop %v2780
    %2782 = vadd.xlane.f32.xlu0 %v2655
    %v2783 = vpop.xlane.xlu0 %2782
    %2784 = vadd.xlane.f32.xlu0 %v2657
    %v2785 = vpop.xlane.xlu0 %2784
    %2786 = vadd.xlane.f32.xlu0 %v2659
    %v2787 = vpop.xlane.xlu0 %2786
    %2788 = vadd.xlane.f32.xlu0 %v2661
    %v2789 = vpop.xlane.xlu0 %2788
    %2790 = vadd.xlane.f32.xlu0 %v2663
    %v2791 = vpop.xlane.xlu0 %2790
    %2792 = vadd.xlane.f32.xlu0 %v2665
    %v2793 = vpop.xlane.xlu0 %2792
    %2794 = vadd.xlane.f32.xlu0 %v2667
    %v2795 = vpop.xlane.xlu0 %2794
    %2796 = vadd.xlane.f32.xlu0 %v2669
    %v2797 = vpop.xlane.xlu0 %2796
    %2798 = vadd.xlane.f32.xlu0 %v2671
    %v2799 = vpop.xlane.xlu0 %2798
    %2800 = vadd.xlane.f32.xlu0 %v2673
    %v2801 = vpop.xlane.xlu0 %2800
    %2802 = vadd.xlane.f32.xlu0 %v2675
    %v2803 = vpop.xlane.xlu0 %2802
    %2804 = vadd.xlane.f32.xlu0 %v2677
    %v2805 = vpop.xlane.xlu0 %2804
    %2806 = vadd.xlane.f32.xlu0 %v2679
    %v2807 = vpop.xlane.xlu0 %2806
    %2808 = vadd.xlane.f32.xlu0 %v2681
    %v2809 = vpop.xlane.xlu0 %2808
    %2810 = vadd.xlane.f32.xlu0 %v2683
    %v2811 = vpop.xlane.xlu0 %2810
    %2812 = vadd.xlane.f32.xlu0 %v2685
    %v2813 = vpop.xlane.xlu0 %2812
    %2814 = vadd.xlane.f32.xlu0 %v2687
    %v2815 = vpop.xlane.xlu0 %2814
    %2816 = vadd.xlane.f32.xlu0 %v2689
    %v2817 = vpop.xlane.xlu0 %2816
    %2818 = vadd.xlane.f32.xlu0 %v2691
    %v2819 = vpop.xlane.xlu0 %2818
    %2820 = vadd.xlane.f32.xlu0 %v2693
    %v2821 = vpop.xlane.xlu0 %2820
    %2822 = vadd.xlane.f32.xlu0 %v2695
    %v2823 = vpop.xlane.xlu0 %2822
    %2824 = vadd.xlane.f32.xlu0 %v2697
    %v2825 = vpop.xlane.xlu0 %2824
    %2826 = vadd.xlane.f32.xlu0 %v2699
    %v2827 = vpop.xlane.xlu0 %2826
    %2828 = vadd.xlane.f32.xlu0 %v2701
    %v2829 = vpop.xlane.xlu0 %2828
    %2830 = vadd.xlane.f32.xlu0 %v2703
    %v2831 = vpop.xlane.xlu0 %2830
    %2832 = vadd.xlane.f32.xlu0 %v2705
    %v2833 = vpop.xlane.xlu0 %2832
    %2834 = vadd.xlane.f32.xlu0 %v2707
    %v2835 = vpop.xlane.xlu0 %2834
    %2836 = vadd.xlane.f32.xlu0 %v2709
    %v2837 = vpop.xlane.xlu0 %2836
    %2838 = vadd.xlane.f32.xlu0 %v2711
    %v2839 = vpop.xlane.xlu0 %2838
    %2840 = vadd.xlane.f32.xlu0 %v2713
    %v2841 = vpop.xlane.xlu0 %2840
    %2842 = vadd.xlane.f32.xlu0 %v2715
    %v2843 = vpop.xlane.xlu0 %2842
    %2844 = vadd.xlane.f32.xlu0 %v2717
    %v2845 = vpop.xlane.xlu0 %2844
    %2846 = vadd.xlane.f32.xlu0 %v2719
    %v2847 = vpop.xlane.xlu0 %2846
    %2848 = vadd.xlane.f32.xlu0 %v2721
    %v2849 = vpop.xlane.xlu0 %2848
    %2850 = vadd.xlane.f32.xlu0 %v2723
    %v2851 = vpop.xlane.xlu0 %2850
    %2852 = vadd.xlane.f32.xlu0 %v2725
    %v2853 = vpop.xlane.xlu0 %2852
    %2854 = vadd.xlane.f32.xlu0 %v2727
    %v2855 = vpop.xlane.xlu0 %2854
    %2856 = vadd.xlane.f32.xlu0 %v2729
    %v2857 = vpop.xlane.xlu0 %2856
    %2858 = vadd.xlane.f32.xlu0 %v2731
    %v2859 = vpop.xlane.xlu0 %2858
    %2860 = vadd.xlane.f32.xlu0 %v2733
    %v2861 = vpop.xlane.xlu0 %2860
    %2862 = vadd.xlane.f32.xlu0 %v2735
    %v2863 = vpop.xlane.xlu0 %2862
    %2864 = vadd.xlane.f32.xlu0 %v2737
    %v2865 = vpop.xlane.xlu0 %2864
    %2866 = vadd.xlane.f32.xlu0 %v2739
    %v2867 = vpop.xlane.xlu0 %2866
    %2868 = vadd.xlane.f32.xlu0 %v2741
    %v2869 = vpop.xlane.xlu0 %2868
    %2870 = vadd.xlane.f32.xlu0 %v2743
    %v2871 = vpop.xlane.xlu0 %2870
    %2872 = vadd.xlane.f32.xlu0 %v2745
    %v2873 = vpop.xlane.xlu0 %2872
    %2874 = vadd.xlane.f32.xlu0 %v2747
    %v2875 = vpop.xlane.xlu0 %2874
    %2876 = vadd.xlane.f32.xlu0 %v2749
    %v2877 = vpop.xlane.xlu0 %2876
    %2878 = vadd.xlane.f32.xlu0 %v2751
    %v2879 = vpop.xlane.xlu0 %2878
    %2880 = vadd.xlane.f32.xlu0 %v2753
    %v2881 = vpop.xlane.xlu0 %2880
    %2882 = vadd.xlane.f32.xlu0 %v2755
    %v2883 = vpop.xlane.xlu0 %2882
    %2884 = vadd.xlane.f32.xlu0 %v2757
    %v2885 = vpop.xlane.xlu0 %2884
    %2886 = vadd.xlane.f32.xlu0 %v2759
    %v2887 = vpop.xlane.xlu0 %2886
    %2888 = vadd.xlane.f32.xlu0 %v2761
    %v2889 = vpop.xlane.xlu0 %2888
    %2890 = vadd.xlane.f32.xlu0 %v2763
    %v2891 = vpop.xlane.xlu0 %2890
    %2892 = vadd.xlane.f32.xlu0 %v2765
    %v2893 = vpop.xlane.xlu0 %2892
    %2894 = vadd.xlane.f32.xlu0 %v2767
    %v2895 = vpop.xlane.xlu0 %2894
    %2896 = vadd.xlane.f32.xlu0 %v2769
    %v2897 = vpop.xlane.xlu0 %2896
    %2898 = vadd.xlane.f32.xlu0 %v2771
    %v2899 = vpop.xlane.xlu0 %2898
    %2900 = vadd.xlane.f32.xlu0 %v2773
    %v2901 = vpop.xlane.xlu0 %2900
    %2902 = vadd.xlane.f32.xlu0 %v2775
    %v2903 = vpop.xlane.xlu0 %2902
    %2904 = vadd.xlane.f32.xlu0 %v2777
    %v2905 = vpop.xlane.xlu0 %2904
    %2906 = vadd.xlane.f32.xlu0 %v2779
    %v2907 = vpop.xlane.xlu0 %2906
    %2908 = vadd.xlane.f32.xlu0 %v2781
    %v2909 = vpop.xlane.xlu0 %2908
    %v2910 = vrcp.pop %v2783
    %v2911 = vrcp.pop %v2785
    %v2912 = vrcp.pop %v2787
    %v2913 = vrcp.pop %v2789
    %v2914 = vrcp.pop %v2791
    %v2915 = vrcp.pop %v2793
    %v2916 = vrcp.pop %v2795
    %v2917 = vrcp.pop %v2797
    %v2918 = vrcp.pop %v2799
    %v2919 = vrcp.pop %v2801
    %v2920 = vrcp.pop %v2803
    %v2921 = vrcp.pop %v2805
    %v2922 = vrcp.pop %v2807
    %v2923 = vrcp.pop %v2809
    %v2924 = vrcp.pop %v2811
    %v2925 = vrcp.pop %v2813
    %v2926 = vrcp.pop %v2815
    %v2927 = vrcp.pop %v2817
    %v2928 = vrcp.pop %v2819
    %v2929 = vrcp.pop %v2821
    %v2930 = vrcp.pop %v2823
    %v2931 = vrcp.pop %v2825
    %v2932 = vrcp.pop %v2827
    %v2933 = vrcp.pop %v2829
    %v2934 = vrcp.pop %v2831
    %v2935 = vrcp.pop %v2833
    %v2936 = vrcp.pop %v2835
    %v2937 = vrcp.pop %v2837
    %v2938 = vrcp.pop %v2839
    %v2939 = vrcp.pop %v2841
    %v2940 = vrcp.pop %v2843
    %v2941 = vrcp.pop %v2845
    %v2942 = vrcp.pop %v2847
    %v2943 = vrcp.pop %v2849
    %v2944 = vrcp.pop %v2851
    %v2945 = vrcp.pop %v2853
    %v2946 = vrcp.pop %v2855
    %v2947 = vrcp.pop %v2857
    %v2948 = vrcp.pop %v2859
    %v2949 = vrcp.pop %v2861
    %v2950 = vrcp.pop %v2863
    %v2951 = vrcp.pop %v2865
    %v2952 = vrcp.pop %v2867
    %v2953 = vrcp.pop %v2869
    %v2954 = vrcp.pop %v2871
    %v2955 = vrcp.pop %v2873
    %v2956 = vrcp.pop %v2875
    %v2957 = vrcp.pop %v2877
    %v2958 = vrcp.pop %v2879
    %v2959 = vrcp.pop %v2881
    %v2960 = vrcp.pop %v2883
    %v2961 = vrcp.pop %v2885
    %v2962 = vrcp.pop %v2887
    %v2963 = vrcp.pop %v2889
    %v2964 = vrcp.pop %v2891
    %v2965 = vrcp.pop %v2893
    %v2966 = vrcp.pop %v2895
    %v2967 = vrcp.pop %v2897
    %v2968 = vrcp.pop %v2899
    %v2969 = vrcp.pop %v2901
    %v2970 = vrcp.pop %v2903
    %v2971 = vrcp.pop %v2905
    %v2972 = vrcp.pop %v2907
    %v2973 = vrcp.pop %v2909
    %v2974 = vmul.f32 %v2655, %v2910
    %v2975 = vmul.f32 %v2657, %v2911
    %v2976 = vmul.f32 %v2659, %v2912
    %v2977 = vmul.f32 %v2661, %v2913
    %v2978 = vmul.f32 %v2663, %v2914
    %v2979 = vmul.f32 %v2665, %v2915
    %v2980 = vmul.f32 %v2667, %v2916
    %v2981 = vmul.f32 %v2669, %v2917
    %v2982 = vmul.f32 %v2671, %v2918
    %v2983 = vmul.f32 %v2673, %v2919
    %v2984 = vmul.f32 %v2675, %v2920
    %v2985 = vmul.f32 %v2677, %v2921
    %v2986 = vmul.f32 %v2679, %v2922
    %v2987 = vmul.f32 %v2681, %v2923
    %v2988 = vmul.f32 %v2683, %v2924
    %v2989 = vmul.f32 %v2685, %v2925
    %v2990 = vmul.f32 %v2687, %v2926
    %v2991 = vmul.f32 %v2689, %v2927
    %v2992 = vmul.f32 %v2691, %v2928
    %v2993 = vmul.f32 %v2693, %v2929
    %v2994 = vmul.f32 %v2695, %v2930
    %v2995 = vmul.f32 %v2697, %v2931
    %v2996 = vmul.f32 %v2699, %v2932
    %v2997 = vmul.f32 %v2701, %v2933
    %v2998 = vmul.f32 %v2703, %v2934
    %v2999 = vmul.f32 %v2705, %v2935
    %v3000 = vmul.f32 %v2707, %v2936
    %v3001 = vmul.f32 %v2709, %v2937
    %v3002 = vmul.f32 %v2711, %v2938
    %v3003 = vmul.f32 %v2713, %v2939
    %v3004 = vmul.f32 %v2715, %v2940
    %v3005 = vmul.f32 %v2717, %v2941
    %v3006 = vmul.f32 %v2719, %v2942
    %v3007 = vmul.f32 %v2721, %v2943
    %v3008 = vmul.f32 %v2723, %v2944
    %v3009 = vmul.f32 %v2725, %v2945
    %v3010 = vmul.f32 %v2727, %v2946
    %v3011 = vmul.f32 %v2729, %v2947
    %v3012 = vmul.f32 %v2731, %v2948
    %v3013 = vmul.f32 %v2733, %v2949
    %v3014 = vmul.f32 %v2735, %v2950
    %v3015 = vmul.f32 %v2737, %v2951
    %v3016 = vmul.f32 %v2739, %v2952
    %v3017 = vmul.f32 %v2741, %v2953
    %v3018 = vmul.f32 %v2743, %v2954
    %v3019 = vmul.f32 %v2745, %v2955
    %v3020 = vmul.f32 %v2747, %v2956
    %v3021 = vmul.f32 %v2749, %v2957
    %v3022 = vmul.f32 %v2751, %v2958
    %v3023 = vmul.f32 %v2753, %v2959
    %v3024 = vmul.f32 %v2755, %v2960
    %v3025 = vmul.f32 %v2757, %v2961
    %v3026 = vmul.f32 %v2759, %v2962
    %v3027 = vmul.f32 %v2761, %v2963
    %v3028 = vmul.f32 %v2763, %v2964
    %v3029 = vmul.f32 %v2765, %v2965
    %v3030 = vmul.f32 %v2767, %v2966
    %v3031 = vmul.f32 %v2769, %v2967
    %v3032 = vmul.f32 %v2771, %v2968
    %v3033 = vmul.f32 %v2773, %v2969
    %v3034 = vmul.f32 %v2775, %v2970
    %v3035 = vmul.f32 %v2777, %v2971
    %v3036 = vmul.f32 %v2779, %v2972
    %v3037 = vmul.f32 %v2781, %v2973
    %v3038 = vpack.c.bf16 %v2975, %v2974
    %v3039 = vpack.c.bf16 %v2977, %v2976
    %v3040 = vpack.c.bf16 %v2979, %v2978
    %v3041 = vpack.c.bf16 %v2981, %v2980
    %v3042 = vpack.c.bf16 %v2983, %v2982
    %v3043 = vpack.c.bf16 %v2985, %v2984
    %v3044 = vpack.c.bf16 %v2987, %v2986
    %v3045 = vpack.c.bf16 %v2989, %v2988
    %v3046 = vpack.c.bf16 %v2991, %v2990
    %v3047 = vpack.c.bf16 %v2993, %v2992
    %v3048 = vpack.c.bf16 %v2995, %v2994
    %v3049 = vpack.c.bf16 %v2997, %v2996
    %v3050 = vpack.c.bf16 %v2999, %v2998
    %v3051 = vpack.c.bf16 %v3001, %v3000
    %v3052 = vpack.c.bf16 %v3003, %v3002
    %v3053 = vpack.c.bf16 %v3005, %v3004
    %v3054 = vpack.c.bf16 %v3007, %v3006
    %v3055 = vpack.c.bf16 %v3009, %v3008
    %v3056 = vpack.c.bf16 %v3011, %v3010
    %v3057 = vpack.c.bf16 %v3013, %v3012
    %v3058 = vpack.c.bf16 %v3015, %v3014
    %v3059 = vpack.c.bf16 %v3017, %v3016
    %v3060 = vpack.c.bf16 %v3019, %v3018
    %v3061 = vpack.c.bf16 %v3021, %v3020
    %v3062 = vpack.c.bf16 %v3023, %v3022
    %v3063 = vpack.c.bf16 %v3025, %v3024
    %v3064 = vpack.c.bf16 %v3027, %v3026
    %v3065 = vpack.c.bf16 %v3029, %v3028
    %v3066 = vpack.c.bf16 %v3031, %v3030
    %v3067 = vpack.c.bf16 %v3033, %v3032
    %v3068 = vpack.c.bf16 %v3035, %v3034
    %v3069 = vpack.c.bf16 %v3037, %v3036
    %3070 = vmatprep.subr.bf16.mxu0 0
    %3071 = vmatpush1.bf16.msra.mxu0 %v1757
    %3072 = vmatprep.subr.bf16.mxu0 0
    %3073 = vmatpush1.bf16.msra.mxu0 %v1754
    %3074 = vmatprep.subr.bf16.mxu0 0
    %3075 = vmatpush1.bf16.msra.mxu0 %v1751
    %3076 = vmatprep.subr.bf16.mxu0 0
    %3077 = vmatpush1.bf16.msra.mxu0 %v1748
    %3078 = vmatprep.subr.bf16.mxu0 0
    %3079 = vmatpush1.bf16.msra.mxu0 %v1745
    %3080 = vmatprep.subr.bf16.mxu0 0
    %3081 = vmatpush1.bf16.msra.mxu0 %v1742
    %3082 = vmatprep.subr.bf16.mxu0 0
    %3083 = vmatpush1.bf16.msra.mxu0 %v1739
    %3084 = vmatprep.subr.bf16.mxu0 0
    %3085 = vmatpush1.bf16.msra.mxu0 %v1736
    %3086 = vmatprep.subr.bf16.mxu0 0
    %3087 = vmatpush2.bf16.msra.mxu0 0
    %3088 = vmatprep.subr.bf16.mxu0 0
    %3089 = vmatpush2.bf16.msra.mxu0 0
    %3090 = vmatprep.subr.bf16.mxu0 0
    %3091 = vmatpush2.bf16.msra.mxu0 0
    %3092 = vmatprep.subr.bf16.mxu0 0
    %3093 = vmatpush2.bf16.msra.mxu0 0
    %3094 = vmatprep.subr.bf16.mxu0 0
    %3095 = vmatpush2.bf16.msra.mxu0 0
    %3096 = vmatprep.subr.bf16.mxu0 0
    %3097 = vmatpush2.bf16.msra.mxu0 0
    %3098 = vmatprep.subr.bf16.mxu0 0
    %3099 = vmatpush2.bf16.msra.mxu0 0
    %3100 = vmatprep.subr.bf16.mxu0 0
    %3101 = vmatpush2.bf16.msra.mxu0 0
    %3102 = vmatprep.mubr.bf16.mxu0 0
    %3103 = vmatmul.mubr.bf16.gmra.mxu0 %v3038
    %v3104 = vpop.f32.mrf.mxu0
    %v3105 = vadd.f32 0.0, %v3104
    %v3106 = vpop.f32.mrf.mxu0
    %v3107 = vpop.f32.mrf.mxu0
    %v3108 = vadd.f32 0.0, %v3107
    %v3109 = vpop.f32.mrf.mxu0
    %3110 = vmatprep.mubr.bf16.mxu0 0
    %3111 = vmatmul.mubr.bf16.gmra.mxu0 %v3039
    %v3112 = vpop.f32.mrf.mxu0
    %v3113 = vadd.f32 0.0, %v3112
    %v3114 = vpop.f32.mrf.mxu0
    %v3115 = vpop.f32.mrf.mxu0
    %v3116 = vadd.f32 0.0, %v3115
    %v3117 = vpop.f32.mrf.mxu0
    %3118 = vmatprep.mubr.bf16.mxu0 0
    %3119 = vmatmul.mubr.bf16.gmra.mxu0 %v3040
    %v3120 = vpop.f32.mrf.mxu0
    %v3121 = vadd.f32 0.0, %v3120
    %v3122 = vpop.f32.mrf.mxu0
    %v3123 = vpop.f32.mrf.mxu0
    %v3124 = vadd.f32 0.0, %v3123
    %v3125 = vpop.f32.mrf.mxu0
    %3126 = vmatprep.mubr.bf16.mxu0 0
    %3127 = vmatmul.mubr.bf16.gmra.mxu0 %v3041
    %v3128 = vpop.f32.mrf.mxu0
    %v3129 = vadd.f32 0.0, %v3128
    %v3130 = vpop.f32.mrf.mxu0
    %v3131 = vpop.f32.mrf.mxu0
    %v3132 = vadd.f32 0.0, %v3131
    %v3133 = vpop.f32.mrf.mxu0
    %3134 = vmatprep.mubr.bf16.mxu0 0
    %3135 = vmatmul.mubr.bf16.gmra.mxu0 %v3042
    %v3136 = vpop.f32.mrf.mxu0
    %v3137 = vadd.f32 0.0, %v3136
    %v3138 = vpop.f32.mrf.mxu0
    %v3139 = vpop.f32.mrf.mxu0
    %v3140 = vadd.f32 0.0, %v3139
    %v3141 = vpop.f32.mrf.mxu0
    %3142 = vmatprep.mubr.bf16.mxu0 0
    %3143 = vmatmul.mubr.bf16.gmra.mxu0 %v3043
    %v3144 = vpop.f32.mrf.mxu0
    %v3145 = vadd.f32 0.0, %v3144
    %v3146 = vpop.f32.mrf.mxu0
    %v3147 = vpop.f32.mrf.mxu0
    %v3148 = vadd.f32 0.0, %v3147
    %v3149 = vpop.f32.mrf.mxu0
    %3150 = vmatprep.mubr.bf16.mxu0 0
    %3151 = vmatmul.mubr.bf16.gmra.mxu0 %v3044
    %v3152 = vpop.f32.mrf.mxu0
    %v3153 = vadd.f32 0.0, %v3152
    %v3154 = vpop.f32.mrf.mxu0
    %v3155 = vpop.f32.mrf.mxu0
    %v3156 = vadd.f32 0.0, %v3155
    %v3157 = vpop.f32.mrf.mxu0
    %3158 = vmatprep.mubr.bf16.mxu0 0
    %3159 = vmatmul.mubr.bf16.gmra.mxu0 %v3045
    %v3160 = vpop.f32.mrf.mxu0
    %v3161 = vadd.f32 0.0, %v3160
    %v3162 = vpop.f32.mrf.mxu0
    %v3163 = vpop.f32.mrf.mxu0
    %v3164 = vadd.f32 0.0, %v3163
    %v3165 = vpop.f32.mrf.mxu0
    %3166 = vdwg.mxu0
    %3167 = vmatprep.subr.bf16.mxu0 0
    %3168 = vmatpush1.bf16.msra.mxu0 %v1781
    %3169 = vmatprep.subr.bf16.mxu0 0
    %3170 = vmatpush1.bf16.msra.mxu0 %v1778
    %3171 = vmatprep.subr.bf16.mxu0 0
    %3172 = vmatpush1.bf16.msra.mxu0 %v1775
    %3173 = vmatprep.subr.bf16.mxu0 0
    %3174 = vmatpush1.bf16.msra.mxu0 %v1772
    %3175 = vmatprep.subr.bf16.mxu0 0
    %3176 = vmatpush1.bf16.msra.mxu0 %v1769
    %3177 = vmatprep.subr.bf16.mxu0 0
    %3178 = vmatpush1.bf16.msra.mxu0 %v1766
    %3179 = vmatprep.subr.bf16.mxu0 0
    %3180 = vmatpush1.bf16.msra.mxu0 %v1763
    %3181 = vmatprep.subr.bf16.mxu0 0
    %3182 = vmatpush1.bf16.msra.mxu0 %v1760
    %3183 = vmatprep.subr.bf16.mxu0 0
    %3184 = vmatpush2.bf16.msra.mxu0 0
    %3185 = vmatprep.subr.bf16.mxu0 0
    %3186 = vmatpush2.bf16.msra.mxu0 0
    %3187 = vmatprep.subr.bf16.mxu0 0
    %3188 = vmatpush2.bf16.msra.mxu0 0
    %3189 = vmatprep.subr.bf16.mxu0 0
    %3190 = vmatpush2.bf16.msra.mxu0 0
    %3191 = vmatprep.subr.bf16.mxu0 0
    %3192 = vmatpush2.bf16.msra.mxu0 0
    %3193 = vmatprep.subr.bf16.mxu0 0
    %3194 = vmatpush2.bf16.msra.mxu0 0
    %3195 = vmatprep.subr.bf16.mxu0 0
    %3196 = vmatpush2.bf16.msra.mxu0 0
    %3197 = vmatprep.subr.bf16.mxu0 0
    %3198 = vmatpush2.bf16.msra.mxu0 0
    %3199 = vmatprep.mubr.bf16.mxu0 0
    %3200 = vmatmul.mubr.bf16.gmra.mxu0 %v3046
    %v3201 = vpop.f32.mrf.mxu0
    %v3202 = vadd.f32 0.0, %v3201
    %v3203 = vpop.f32.mrf.mxu0
    %v3204 = vpop.f32.mrf.mxu0
    %v3205 = vadd.f32 0.0, %v3204
    %v3206 = vpop.f32.mrf.mxu0
    %3207 = vmatprep.mubr.bf16.mxu0 0
    %3208 = vmatmul.mubr.bf16.gmra.mxu0 %v3047
    %v3209 = vpop.f32.mrf.mxu0
    %v3210 = vadd.f32 0.0, %v3209
    %v3211 = vpop.f32.mrf.mxu0
    %v3212 = vpop.f32.mrf.mxu0
    %v3213 = vadd.f32 0.0, %v3212
    %v3214 = vpop.f32.mrf.mxu0
    %3215 = vmatprep.mubr.bf16.mxu0 0
    %3216 = vmatmul.mubr.bf16.gmra.mxu0 %v3048
    %v3217 = vpop.f32.mrf.mxu0
    %v3218 = vadd.f32 0.0, %v3217
    %v3219 = vpop.f32.mrf.mxu0
    %v3220 = vpop.f32.mrf.mxu0
    %v3221 = vadd.f32 0.0, %v3220
    %v3222 = vpop.f32.mrf.mxu0
    %3223 = vmatprep.mubr.bf16.mxu0 0
    %3224 = vmatmul.mubr.bf16.gmra.mxu0 %v3049
    %v3225 = vpop.f32.mrf.mxu0
    %v3226 = vadd.f32 0.0, %v3225
    %v3227 = vpop.f32.mrf.mxu0
    %v3228 = vpop.f32.mrf.mxu0
    %v3229 = vadd.f32 0.0, %v3228
    %v3230 = vpop.f32.mrf.mxu0
    %3231 = vmatprep.mubr.bf16.mxu0 0
    %3232 = vmatmul.mubr.bf16.gmra.mxu0 %v3050
    %v3233 = vpop.f32.mrf.mxu0
    %v3234 = vadd.f32 0.0, %v3233
    %v3235 = vpop.f32.mrf.mxu0
    %v3236 = vpop.f32.mrf.mxu0
    %v3237 = vadd.f32 0.0, %v3236
    %v3238 = vpop.f32.mrf.mxu0
    %3239 = vmatprep.mubr.bf16.mxu0 0
    %3240 = vmatmul.mubr.bf16.gmra.mxu0 %v3051
    %v3241 = vpop.f32.mrf.mxu0
    %v3242 = vadd.f32 0.0, %v3241
    %v3243 = vpop.f32.mrf.mxu0
    %v3244 = vpop.f32.mrf.mxu0
    %v3245 = vadd.f32 0.0, %v3244
    %v3246 = vpop.f32.mrf.mxu0
    %3247 = vmatprep.mubr.bf16.mxu0 0
    %3248 = vmatmul.mubr.bf16.gmra.mxu0 %v3052
    %v3249 = vpop.f32.mrf.mxu0
    %v3250 = vadd.f32 0.0, %v3249
    %v3251 = vpop.f32.mrf.mxu0
    %v3252 = vpop.f32.mrf.mxu0
    %v3253 = vadd.f32 0.0, %v3252
    %v3254 = vpop.f32.mrf.mxu0
    %3255 = vmatprep.mubr.bf16.mxu0 0
    %3256 = vmatmul.mubr.bf16.gmra.mxu0 %v3053
    %v3257 = vpop.f32.mrf.mxu0
    %v3258 = vadd.f32 0.0, %v3257
    %v3259 = vpop.f32.mrf.mxu0
    %v3260 = vpop.f32.mrf.mxu0
    %v3261 = vadd.f32 0.0, %v3260
    %v3262 = vpop.f32.mrf.mxu0
    %3263 = vdwg.mxu0
    %3264 = vmatprep.subr.bf16.mxu0 0
    %3265 = vmatpush1.bf16.msra.mxu0 %v1805
    %3266 = vmatprep.subr.bf16.mxu0 0
    %3267 = vmatpush1.bf16.msra.mxu0 %v1802
    %3268 = vmatprep.subr.bf16.mxu0 0
    %3269 = vmatpush1.bf16.msra.mxu0 %v1799
    %3270 = vmatprep.subr.bf16.mxu0 0
    %3271 = vmatpush1.bf16.msra.mxu0 %v1796
    %3272 = vmatprep.subr.bf16.mxu0 0
    %3273 = vmatpush1.bf16.msra.mxu0 %v1793
    %3274 = vmatprep.subr.bf16.mxu0 0
    %3275 = vmatpush1.bf16.msra.mxu0 %v1790
    %3276 = vmatprep.subr.bf16.mxu0 0
    %3277 = vmatpush1.bf16.msra.mxu0 %v1787
    %3278 = vmatprep.subr.bf16.mxu0 0
    %3279 = vmatpush1.bf16.msra.mxu0 %v1784
    %3280 = vmatprep.subr.bf16.mxu0 0
    %3281 = vmatpush2.bf16.msra.mxu0 0
    %3282 = vmatprep.subr.bf16.mxu0 0
    %3283 = vmatpush2.bf16.msra.mxu0 0
    %3284 = vmatprep.subr.bf16.mxu0 0
    %3285 = vmatpush2.bf16.msra.mxu0 0
    %3286 = vmatprep.subr.bf16.mxu0 0
    %3287 = vmatpush2.bf16.msra.mxu0 0
    %3288 = vmatprep.subr.bf16.mxu0 0
    %3289 = vmatpush2.bf16.msra.mxu0 0
    %3290 = vmatprep.subr.bf16.mxu0 0
    %3291 = vmatpush2.bf16.msra.mxu0 0
    %3292 = vmatprep.subr.bf16.mxu0 0
    %3293 = vmatpush2.bf16.msra.mxu0 0
    %3294 = vmatprep.subr.bf16.mxu0 0
    %3295 = vmatpush2.bf16.msra.mxu0 0
    %3296 = vmatprep.mubr.bf16.mxu0 0
    %3297 = vmatmul.mubr.bf16.gmra.mxu0 %v3054
    %v3298 = vpop.f32.mrf.mxu0
    %v3299 = vadd.f32 0.0, %v3298
    %v3300 = vpop.f32.mrf.mxu0
    %v3301 = vpop.f32.mrf.mxu0
    %v3302 = vadd.f32 0.0, %v3301
    %v3303 = vpop.f32.mrf.mxu0
    %3304 = vmatprep.mubr.bf16.mxu0 0
    %3305 = vmatmul.mubr.bf16.gmra.mxu0 %v3055
    %v3306 = vpop.f32.mrf.mxu0
    %v3307 = vadd.f32 0.0, %v3306
    %v3308 = vpop.f32.mrf.mxu0
    %v3309 = vpop.f32.mrf.mxu0
    %v3310 = vadd.f32 0.0, %v3309
    %v3311 = vpop.f32.mrf.mxu0
    %3312 = vmatprep.mubr.bf16.mxu0 0
    %3313 = vmatmul.mubr.bf16.gmra.mxu0 %v3056
    %v3314 = vpop.f32.mrf.mxu0
    %v3315 = vadd.f32 0.0, %v3314
    %v3316 = vpop.f32.mrf.mxu0
    %v3317 = vpop.f32.mrf.mxu0
    %v3318 = vadd.f32 0.0, %v3317
    %v3319 = vpop.f32.mrf.mxu0
    %3320 = vmatprep.mubr.bf16.mxu0 0
    %3321 = vmatmul.mubr.bf16.gmra.mxu0 %v3057
    %v3322 = vpop.f32.mrf.mxu0
    %v3323 = vadd.f32 0.0, %v3322
    %v3324 = vpop.f32.mrf.mxu0
    %v3325 = vpop.f32.mrf.mxu0
    %v3326 = vadd.f32 0.0, %v3325
    %v3327 = vpop.f32.mrf.mxu0
    %3328 = vmatprep.mubr.bf16.mxu0 0
    %3329 = vmatmul.mubr.bf16.gmra.mxu0 %v3058
    %v3330 = vpop.f32.mrf.mxu0
    %v3331 = vadd.f32 0.0, %v3330
    %v3332 = vpop.f32.mrf.mxu0
    %v3333 = vpop.f32.mrf.mxu0
    %v3334 = vadd.f32 0.0, %v3333
    %v3335 = vpop.f32.mrf.mxu0
    %3336 = vmatprep.mubr.bf16.mxu0 0
    %3337 = vmatmul.mubr.bf16.gmra.mxu0 %v3059
    %v3338 = vpop.f32.mrf.mxu0
    %v3339 = vadd.f32 0.0, %v3338
    %v3340 = vpop.f32.mrf.mxu0
    %v3341 = vpop.f32.mrf.mxu0
    %v3342 = vadd.f32 0.0, %v3341
    %v3343 = vpop.f32.mrf.mxu0
    %3344 = vmatprep.mubr.bf16.mxu0 0
    %3345 = vmatmul.mubr.bf16.gmra.mxu0 %v3060
    %v3346 = vpop.f32.mrf.mxu0
    %v3347 = vadd.f32 0.0, %v3346
    %v3348 = vpop.f32.mrf.mxu0
    %v3349 = vpop.f32.mrf.mxu0
    %v3350 = vadd.f32 0.0, %v3349
    %v3351 = vpop.f32.mrf.mxu0
    %3352 = vmatprep.mubr.bf16.mxu0 0
    %3353 = vmatmul.mubr.bf16.gmra.mxu0 %v3061
    %v3354 = vpop.f32.mrf.mxu0
    %v3355 = vadd.f32 0.0, %v3354
    %v3356 = vpop.f32.mrf.mxu0
    %v3357 = vpop.f32.mrf.mxu0
    %v3358 = vadd.f32 0.0, %v3357
    %v3359 = vpop.f32.mrf.mxu0
    %3360 = vdwg.mxu0
    %3361 = vmatprep.subr.bf16.mxu0 0
    %3362 = vmatpush1.bf16.msra.mxu0 %v1829
    %3363 = vmatprep.subr.bf16.mxu0 0
    %3364 = vmatpush1.bf16.msra.mxu0 %v1826
    %3365 = vmatprep.subr.bf16.mxu0 0
    %3366 = vmatpush1.bf16.msra.mxu0 %v1823
    %3367 = vmatprep.subr.bf16.mxu0 0
    %3368 = vmatpush1.bf16.msra.mxu0 %v1820
    %3369 = vmatprep.subr.bf16.mxu0 0
    %3370 = vmatpush1.bf16.msra.mxu0 %v1817
    %3371 = vmatprep.subr.bf16.mxu0 0
    %3372 = vmatpush1.bf16.msra.mxu0 %v1814
    %3373 = vmatprep.subr.bf16.mxu0 0
    %3374 = vmatpush1.bf16.msra.mxu0 %v1811
    %3375 = vmatprep.subr.bf16.mxu0 0
    %3376 = vmatpush1.bf16.msra.mxu0 %v1808
    %3377 = vmatprep.subr.bf16.mxu0 0
    %3378 = vmatpush2.bf16.msra.mxu0 0
    %3379 = vmatprep.subr.bf16.mxu0 0
    %3380 = vmatpush2.bf16.msra.mxu0 0
    %3381 = vmatprep.subr.bf16.mxu0 0
    %3382 = vmatpush2.bf16.msra.mxu0 0
    %3383 = vmatprep.subr.bf16.mxu0 0
    %3384 = vmatpush2.bf16.msra.mxu0 0
    %3385 = vmatprep.subr.bf16.mxu0 0
    %3386 = vmatpush2.bf16.msra.mxu0 0
    %3387 = vmatprep.subr.bf16.mxu0 0
    %3388 = vmatpush2.bf16.msra.mxu0 0
    %3389 = vmatprep.subr.bf16.mxu0 0
    %3390 = vmatpush2.bf16.msra.mxu0 0
    %3391 = vmatprep.subr.bf16.mxu0 0
    %3392 = vmatpush2.bf16.msra.mxu0 0
    %3393 = vmatprep.mubr.bf16.mxu0 0
    %3394 = vmatmul.mubr.bf16.gmra.mxu0 %v3062
    %v3395 = vpop.f32.mrf.mxu0
    %v3396 = vadd.f32 0.0, %v3395
    %v3397 = vpop.f32.mrf.mxu0
    %v3398 = vpop.f32.mrf.mxu0
    %v3399 = vadd.f32 0.0, %v3398
    %v3400 = vpop.f32.mrf.mxu0
    %3401 = vmatprep.mubr.bf16.mxu0 0
    %3402 = vmatmul.mubr.bf16.gmra.mxu0 %v3063
    %v3403 = vpop.f32.mrf.mxu0
    %v3404 = vadd.f32 0.0, %v3403
    %v3405 = vpop.f32.mrf.mxu0
    %v3406 = vpop.f32.mrf.mxu0
    %v3407 = vadd.f32 0.0, %v3406
    %v3408 = vpop.f32.mrf.mxu0
    %3409 = vmatprep.mubr.bf16.mxu0 0
    %3410 = vmatmul.mubr.bf16.gmra.mxu0 %v3064
    %v3411 = vpop.f32.mrf.mxu0
    %v3412 = vadd.f32 0.0, %v3411
    %v3413 = vpop.f32.mrf.mxu0
    %v3414 = vpop.f32.mrf.mxu0
    %v3415 = vadd.f32 0.0, %v3414
    %v3416 = vpop.f32.mrf.mxu0
    %3417 = vmatprep.mubr.bf16.mxu0 0
    %3418 = vmatmul.mubr.bf16.gmra.mxu0 %v3065
    %v3419 = vpop.f32.mrf.mxu0
    %v3420 = vadd.f32 0.0, %v3419
    %v3421 = vpop.f32.mrf.mxu0
    %v3422 = vpop.f32.mrf.mxu0
    %v3423 = vadd.f32 0.0, %v3422
    %v3424 = vpop.f32.mrf.mxu0
    %3425 = vmatprep.mubr.bf16.mxu0 0
    %3426 = vmatmul.mubr.bf16.gmra.mxu0 %v3066
    %v3427 = vpop.f32.mrf.mxu0
    %v3428 = vadd.f32 0.0, %v3427
    %v3429 = vpop.f32.mrf.mxu0
    %v3430 = vpop.f32.mrf.mxu0
    %v3431 = vadd.f32 0.0, %v3430
    %v3432 = vpop.f32.mrf.mxu0
    %3433 = vmatprep.mubr.bf16.mxu0 0
    %3434 = vmatmul.mubr.bf16.gmra.mxu0 %v3067
    %v3435 = vpop.f32.mrf.mxu0
    %v3436 = vadd.f32 0.0, %v3435
    %v3437 = vpop.f32.mrf.mxu0
    %v3438 = vpop.f32.mrf.mxu0
    %v3439 = vadd.f32 0.0, %v3438
    %v3440 = vpop.f32.mrf.mxu0
    %3441 = vmatprep.mubr.bf16.mxu0 0
    %3442 = vmatmul.mubr.bf16.gmra.mxu0 %v3068
    %v3443 = vpop.f32.mrf.mxu0
    %v3444 = vadd.f32 0.0, %v3443
    %v3445 = vpop.f32.mrf.mxu0
    %v3446 = vpop.f32.mrf.mxu0
    %v3447 = vadd.f32 0.0, %v3446
    %v3448 = vpop.f32.mrf.mxu0
    %3449 = vmatprep.mubr.bf16.mxu0 0
    %3450 = vmatmul.mubr.bf16.gmra.mxu0 %v3069
    %v3451 = vpop.f32.mrf.mxu0
    %v3452 = vadd.f32 0.0, %v3451
    %v3453 = vpop.f32.mrf.mxu0
    %v3454 = vpop.f32.mrf.mxu0
    %v3455 = vadd.f32 0.0, %v3454
    %v3456 = vpop.f32.mrf.mxu0
    %3457 = vdwg.mxu0
    %v3458 = vpack.c.bf16 %v3108, %v3105
    %v3459 = vpack.c.bf16 %v3116, %v3113
    %v3460 = vpack.c.bf16 %v3124, %v3121
    %v3461 = vpack.c.bf16 %v3132, %v3129
    %v3462 = vpack.c.bf16 %v3140, %v3137
    %v3463 = vpack.c.bf16 %v3148, %v3145
    %v3464 = vpack.c.bf16 %v3156, %v3153
    %v3465 = vpack.c.bf16 %v3164, %v3161
    %v3466 = vpack.c.bf16 %v3205, %v3202
    %v3467 = vpack.c.bf16 %v3213, %v3210
    %v3468 = vpack.c.bf16 %v3221, %v3218
    %v3469 = vpack.c.bf16 %v3229, %v3226
    %v3470 = vpack.c.bf16 %v3237, %v3234
    %v3471 = vpack.c.bf16 %v3245, %v3242
    %v3472 = vpack.c.bf16 %v3253, %v3250
    %v3473 = vpack.c.bf16 %v3261, %v3258
    %v3474 = vpack.c.bf16 %v3302, %v3299
    %v3475 = vpack.c.bf16 %v3310, %v3307
    %v3476 = vpack.c.bf16 %v3318, %v3315
    %v3477 = vpack.c.bf16 %v3326, %v3323
    %v3478 = vpack.c.bf16 %v3334, %v3331
    %v3479 = vpack.c.bf16 %v3342, %v3339
    %v3480 = vpack.c.bf16 %v3350, %v3347
    %v3481 = vpack.c.bf16 %v3358, %v3355
    %v3482 = vpack.c.bf16 %v3399, %v3396
    %v3483 = vpack.c.bf16 %v3407, %v3404
    %v3484 = vpack.c.bf16 %v3415, %v3412
    %v3485 = vpack.c.bf16 %v3423, %v3420
    %v3486 = vpack.c.bf16 %v3431, %v3428
    %v3487 = vpack.c.bf16 %v3439, %v3436
    %v3488 = vpack.c.bf16 %v3447, %v3444
    %v3489 = vpack.c.bf16 %v3455, %v3452
    %3498 = vrot.lane.b32.xlu0 %v1734, 96
    %v3499 = vpop.permute.xlu0 %3498
    %3500 = vrot.lane.b32.xlu0 %v1737, 96
    %v3501 = vpop.permute.xlu0 %3500
    %3502 = vrot.lane.b32.xlu0 %v1740, 96
    %v3503 = vpop.permute.xlu0 %3502
    %3504 = vrot.lane.b32.xlu0 %v1743, 96
    %v3505 = vpop.permute.xlu0 %3504
    %3506 = vrot.lane.b32.xlu0 %v1746, 96
    %v3507 = vpop.permute.xlu0 %3506
    %3508 = vrot.lane.b32.xlu0 %v1749, 96
    %v3509 = vpop.permute.xlu0 %3508
    %3510 = vrot.lane.b32.xlu0 %v1752, 96
    %v3511 = vpop.permute.xlu0 %3510
    %3512 = vrot.lane.b32.xlu0 %v1755, 96
    %v3513 = vpop.permute.xlu0 %3512
    %3522 = vrot.lane.b32.xlu0 %v1735, 96
    %v3523 = vpop.permute.xlu0 %3522
    %3524 = vrot.lane.b32.xlu0 %v1738, 96
    %v3525 = vpop.permute.xlu0 %3524
    %3526 = vrot.lane.b32.xlu0 %v1741, 96
    %v3527 = vpop.permute.xlu0 %3526
    %3528 = vrot.lane.b32.xlu0 %v1744, 96
    %v3529 = vpop.permute.xlu0 %3528
    %3530 = vrot.lane.b32.xlu0 %v1747, 96
    %v3531 = vpop.permute.xlu0 %3530
    %3532 = vrot.lane.b32.xlu0 %v1750, 96
    %v3533 = vpop.permute.xlu0 %3532
    %3534 = vrot.lane.b32.xlu0 %v1753, 96
    %v3535 = vpop.permute.xlu0 %3534
    %3536 = vrot.lane.b32.xlu0 %v1756, 96
    %v3537 = vpop.permute.xlu0 %3536
    %v3539 = vsel %vm1881, %v3499, 0
    %v3542 = vsel %vm1881, %v3501, 0
    %v3545 = vsel %vm1881, %v3503, 0
    %v3548 = vsel %vm1881, %v3505, 0
    %v3551 = vsel %vm1881, %v3507, 0
    %v3554 = vsel %vm1881, %v3509, 0
    %v3557 = vsel %vm1881, %v3511, 0
    %v3560 = vsel %vm1881, %v3513, 0
    %v3563 = vsel %vm1881, %v3523, 0
    %v3566 = vsel %vm1881, %v3525, 0
    %v3569 = vsel %vm1881, %v3527, 0
    %v3572 = vsel %vm1881, %v3529, 0
    %v3575 = vsel %vm1881, %v3531, 0
    %v3578 = vsel %vm1881, %v3533, 0
    %v3581 = vsel %vm1881, %v3535, 0
    %v3584 = vsel %vm1881, %v3537, 0
    %3586 = vmatprep.subr.bf16.mxu0 0
    %3587 = vmatpush1.bf16.xpose.msra.mxu0 %v3584
    %3588 = vmatprep.subr.bf16.mxu0 0
    %3589 = vmatpush1.bf16.xpose.msra.mxu0 %v3581
    %3590 = vmatprep.subr.bf16.mxu0 0
    %3591 = vmatpush1.bf16.xpose.msra.mxu0 %v3578
    %3592 = vmatprep.subr.bf16.mxu0 0
    %3593 = vmatpush1.bf16.xpose.msra.mxu0 %v3575
    %3594 = vmatprep.subr.bf16.mxu0 0
    %3595 = vmatpush1.bf16.xpose.msra.mxu0 %v3572
    %3596 = vmatprep.subr.bf16.mxu0 0
    %3597 = vmatpush1.bf16.xpose.msra.mxu0 %v3569
    %3598 = vmatprep.subr.bf16.mxu0 0
    %3599 = vmatpush1.bf16.xpose.msra.mxu0 %v3566
    %3600 = vmatprep.subr.bf16.mxu0 0
    %3601 = vmatpush1.bf16.xpose.msra.mxu0 %v3563
    %3602 = vmatprep.subr.bf16.mxu0 0
    %3603 = vmatpush2.bf16.xpose.msra.mxu0 0
    %3604 = vmatprep.subr.bf16.mxu0 0
    %3605 = vmatpush2.bf16.xpose.msra.mxu0 0
    %3606 = vmatprep.subr.bf16.mxu0 0
    %3607 = vmatpush2.bf16.xpose.msra.mxu0 0
    %3608 = vmatprep.subr.bf16.mxu0 0
    %3609 = vmatpush2.bf16.xpose.msra.mxu0 0
    %3610 = vmatprep.subr.bf16.mxu0 0
    %3611 = vmatpush2.bf16.xpose.msra.mxu0 0
    %3612 = vmatprep.subr.bf16.mxu0 0
    %3613 = vmatpush2.bf16.xpose.msra.mxu0 0
    %3614 = vmatprep.subr.bf16.mxu0 0
    %3615 = vmatpush2.bf16.xpose.msra.mxu0 0
    %3616 = vmatprep.subr.bf16.mxu0 0
    %3617 = vmatpush2.bf16.xpose.msra.mxu0 0
    %3618 = vmatprep.mubr.bf16.mxu0 0
    %3619 = vmatmul.mubr.bf16.gmra.mxu0 %v3539
    %v3620 = vpop.f32.mrf.mxu0
    %v3621 = vadd.f32 %v1865, %v3620
    %v3622 = vpop.f32.mrf.mxu0
    %v3623 = vpop.f32.mrf.mxu0
    %v3624 = vadd.f32 %v1866, %v3623
    %v3625 = vpop.f32.mrf.mxu0
    %3626 = vmatprep.mubr.bf16.mxu0 0
    %3627 = vmatmul.mubr.bf16.gmra.mxu0 %v3542
    %v3628 = vpop.f32.mrf.mxu0
    %v3629 = vadd.f32 %v1867, %v3628
    %v3630 = vpop.f32.mrf.mxu0
    %v3631 = vpop.f32.mrf.mxu0
    %v3632 = vadd.f32 %v1868, %v3631
    %v3633 = vpop.f32.mrf.mxu0
    %3634 = vmatprep.mubr.bf16.mxu0 0
    %3635 = vmatmul.mubr.bf16.gmra.mxu0 %v3545
    %v3636 = vpop.f32.mrf.mxu0
    %v3637 = vadd.f32 %v1869, %v3636
    %v3638 = vpop.f32.mrf.mxu0
    %v3639 = vpop.f32.mrf.mxu0
    %v3640 = vadd.f32 %v1870, %v3639
    %v3641 = vpop.f32.mrf.mxu0
    %3642 = vmatprep.mubr.bf16.mxu0 0
    %3643 = vmatmul.mubr.bf16.gmra.mxu0 %v3548
    %v3644 = vpop.f32.mrf.mxu0
    %v3645 = vadd.f32 %v1871, %v3644
    %v3646 = vpop.f32.mrf.mxu0
    %v3647 = vpop.f32.mrf.mxu0
    %v3648 = vadd.f32 %v1872, %v3647
    %v3649 = vpop.f32.mrf.mxu0
    %3650 = vmatprep.mubr.bf16.mxu0 0
    %3651 = vmatmul.mubr.bf16.gmra.mxu0 %v3551
    %v3652 = vpop.f32.mrf.mxu0
    %v3653 = vadd.f32 %v1873, %v3652
    %v3654 = vpop.f32.mrf.mxu0
    %v3655 = vpop.f32.mrf.mxu0
    %v3656 = vadd.f32 %v1874, %v3655
    %v3657 = vpop.f32.mrf.mxu0
    %3658 = vmatprep.mubr.bf16.mxu0 0
    %3659 = vmatmul.mubr.bf16.gmra.mxu0 %v3554
    %v3660 = vpop.f32.mrf.mxu0
    %v3661 = vadd.f32 %v1875, %v3660
    %v3662 = vpop.f32.mrf.mxu0
    %v3663 = vpop.f32.mrf.mxu0
    %v3664 = vadd.f32 %v1876, %v3663
    %v3665 = vpop.f32.mrf.mxu0
    %3666 = vmatprep.mubr.bf16.mxu0 0
    %3667 = vmatmul.mubr.bf16.gmra.mxu0 %v3557
    %v3668 = vpop.f32.mrf.mxu0
    %v3669 = vadd.f32 %v1877, %v3668
    %v3670 = vpop.f32.mrf.mxu0
    %v3671 = vpop.f32.mrf.mxu0
    %v3672 = vadd.f32 %v1878, %v3671
    %v3673 = vpop.f32.mrf.mxu0
    %3674 = vmatprep.mubr.bf16.mxu0 0
    %3675 = vmatmul.mubr.bf16.gmra.mxu0 %v3560
    %v3676 = vpop.f32.mrf.mxu0
    %v3677 = vadd.f32 %v1879, %v3676
    %v3678 = vpop.f32.mrf.mxu0
    %v3679 = vpop.f32.mrf.mxu0
    %v3680 = vadd.f32 %v1880, %v3679
    %v3681 = vpop.f32.mrf.mxu0
    %3682 = vdwg.mxu0
    %3691 = vrot.lane.b32.xlu0 %v1758, 96
    %v3692 = vpop.permute.xlu0 %3691
    %3693 = vrot.lane.b32.xlu0 %v1761, 96
    %v3694 = vpop.permute.xlu0 %3693
    %3695 = vrot.lane.b32.xlu0 %v1764, 96
    %v3696 = vpop.permute.xlu0 %3695
    %3697 = vrot.lane.b32.xlu0 %v1767, 96
    %v3698 = vpop.permute.xlu0 %3697
    %3699 = vrot.lane.b32.xlu0 %v1770, 96
    %v3700 = vpop.permute.xlu0 %3699
    %3701 = vrot.lane.b32.xlu0 %v1773, 96
    %v3702 = vpop.permute.xlu0 %3701
    %3703 = vrot.lane.b32.xlu0 %v1776, 96
    %v3704 = vpop.permute.xlu0 %3703
    %3705 = vrot.lane.b32.xlu0 %v1779, 96
    %v3706 = vpop.permute.xlu0 %3705
    %3715 = vrot.lane.b32.xlu0 %v1759, 96
    %v3716 = vpop.permute.xlu0 %3715
    %3717 = vrot.lane.b32.xlu0 %v1762, 96
    %v3718 = vpop.permute.xlu0 %3717
    %3719 = vrot.lane.b32.xlu0 %v1765, 96
    %v3720 = vpop.permute.xlu0 %3719
    %3721 = vrot.lane.b32.xlu0 %v1768, 96
    %v3722 = vpop.permute.xlu0 %3721
    %3723 = vrot.lane.b32.xlu0 %v1771, 96
    %v3724 = vpop.permute.xlu0 %3723
    %3725 = vrot.lane.b32.xlu0 %v1774, 96
    %v3726 = vpop.permute.xlu0 %3725
    %3727 = vrot.lane.b32.xlu0 %v1777, 96
    %v3728 = vpop.permute.xlu0 %3727
    %3729 = vrot.lane.b32.xlu0 %v1780, 96
    %v3730 = vpop.permute.xlu0 %3729
    %v3732 = vsel %vm1881, %v3692, 0
    %v3735 = vsel %vm1881, %v3694, 0
    %v3738 = vsel %vm1881, %v3696, 0
    %v3741 = vsel %vm1881, %v3698, 0
    %v3744 = vsel %vm1881, %v3700, 0
    %v3747 = vsel %vm1881, %v3702, 0
    %v3750 = vsel %vm1881, %v3704, 0
    %v3753 = vsel %vm1881, %v3706, 0
    %v3756 = vsel %vm1881, %v3716, 0
    %v3759 = vsel %vm1881, %v3718, 0
    %v3762 = vsel %vm1881, %v3720, 0
    %v3765 = vsel %vm1881, %v3722, 0
    %v3768 = vsel %vm1881, %v3724, 0
    %v3771 = vsel %vm1881, %v3726, 0
    %v3774 = vsel %vm1881, %v3728, 0
    %v3777 = vsel %vm1881, %v3730, 0
    %3779 = vmatprep.subr.bf16.mxu0 0
    %3780 = vmatpush1.bf16.xpose.msra.mxu0 %v3777
    %3781 = vmatprep.subr.bf16.mxu0 0
    %3782 = vmatpush1.bf16.xpose.msra.mxu0 %v3774
    %3783 = vmatprep.subr.bf16.mxu0 0
    %3784 = vmatpush1.bf16.xpose.msra.mxu0 %v3771
    %3785 = vmatprep.subr.bf16.mxu0 0
    %3786 = vmatpush1.bf16.xpose.msra.mxu0 %v3768
    %3787 = vmatprep.subr.bf16.mxu0 0
    %3788 = vmatpush1.bf16.xpose.msra.mxu0 %v3765
    %3789 = vmatprep.subr.bf16.mxu0 0
    %3790 = vmatpush1.bf16.xpose.msra.mxu0 %v3762
    %3791 = vmatprep.subr.bf16.mxu0 0
    %3792 = vmatpush1.bf16.xpose.msra.mxu0 %v3759
    %3793 = vmatprep.subr.bf16.mxu0 0
    %3794 = vmatpush1.bf16.xpose.msra.mxu0 %v3756
    %3795 = vmatprep.subr.bf16.mxu0 0
    %3796 = vmatpush2.bf16.xpose.msra.mxu0 0
    %3797 = vmatprep.subr.bf16.mxu0 0
    %3798 = vmatpush2.bf16.xpose.msra.mxu0 0
    %3799 = vmatprep.subr.bf16.mxu0 0
    %3800 = vmatpush2.bf16.xpose.msra.mxu0 0
    %3801 = vmatprep.subr.bf16.mxu0 0
    %3802 = vmatpush2.bf16.xpose.msra.mxu0 0
    %3803 = vmatprep.subr.bf16.mxu0 0
    %3804 = vmatpush2.bf16.xpose.msra.mxu0 0
    %3805 = vmatprep.subr.bf16.mxu0 0
    %3806 = vmatpush2.bf16.xpose.msra.mxu0 0
    %3807 = vmatprep.subr.bf16.mxu0 0
    %3808 = vmatpush2.bf16.xpose.msra.mxu0 0
    %3809 = vmatprep.subr.bf16.mxu0 0
    %3810 = vmatpush2.bf16.xpose.msra.mxu0 0
    %3811 = vmatprep.mubr.bf16.mxu0 0
    %3812 = vmatmul.mubr.bf16.gmra.mxu0 %v3732
    %v3813 = vpop.f32.mrf.mxu0
    %v3814 = vadd.f32 %v1865, %v3813
    %v3815 = vpop.f32.mrf.mxu0
    %v3816 = vpop.f32.mrf.mxu0
    %v3817 = vadd.f32 %v1866, %v3816
    %v3818 = vpop.f32.mrf.mxu0
    %3819 = vmatprep.mubr.bf16.mxu0 0
    %3820 = vmatmul.mubr.bf16.gmra.mxu0 %v3735
    %v3821 = vpop.f32.mrf.mxu0
    %v3822 = vadd.f32 %v1867, %v3821
    %v3823 = vpop.f32.mrf.mxu0
    %v3824 = vpop.f32.mrf.mxu0
    %v3825 = vadd.f32 %v1868, %v3824
    %v3826 = vpop.f32.mrf.mxu0
    %3827 = vmatprep.mubr.bf16.mxu0 0
    %3828 = vmatmul.mubr.bf16.gmra.mxu0 %v3738
    %v3829 = vpop.f32.mrf.mxu0
    %v3830 = vadd.f32 %v1869, %v3829
    %v3831 = vpop.f32.mrf.mxu0
    %v3832 = vpop.f32.mrf.mxu0
    %v3833 = vadd.f32 %v1870, %v3832
    %v3834 = vpop.f32.mrf.mxu0
    %3835 = vmatprep.mubr.bf16.mxu0 0
    %3836 = vmatmul.mubr.bf16.gmra.mxu0 %v3741
    %v3837 = vpop.f32.mrf.mxu0
    %v3838 = vadd.f32 %v1871, %v3837
    %v3839 = vpop.f32.mrf.mxu0
    %v3840 = vpop.f32.mrf.mxu0
    %v3841 = vadd.f32 %v1872, %v3840
    %v3842 = vpop.f32.mrf.mxu0
    %3843 = vmatprep.mubr.bf16.mxu0 0
    %3844 = vmatmul.mubr.bf16.gmra.mxu0 %v3744
    %v3845 = vpop.f32.mrf.mxu0
    %v3846 = vadd.f32 %v1873, %v3845
    %v3847 = vpop.f32.mrf.mxu0
    %v3848 = vpop.f32.mrf.mxu0
    %v3849 = vadd.f32 %v1874, %v3848
    %v3850 = vpop.f32.mrf.mxu0
    %3851 = vmatprep.mubr.bf16.mxu0 0
    %3852 = vmatmul.mubr.bf16.gmra.mxu0 %v3747
    %v3853 = vpop.f32.mrf.mxu0
    %v3854 = vadd.f32 %v1875, %v3853
    %v3855 = vpop.f32.mrf.mxu0
    %v3856 = vpop.f32.mrf.mxu0
    %v3857 = vadd.f32 %v1876, %v3856
    %v3858 = vpop.f32.mrf.mxu0
    %3859 = vmatprep.mubr.bf16.mxu0 0
    %3860 = vmatmul.mubr.bf16.gmra.mxu0 %v3750
    %v3861 = vpop.f32.mrf.mxu0
    %v3862 = vadd.f32 %v1877, %v3861
    %v3863 = vpop.f32.mrf.mxu0
    %v3864 = vpop.f32.mrf.mxu0
    %v3865 = vadd.f32 %v1878, %v3864
    %v3866 = vpop.f32.mrf.mxu0
    %3867 = vmatprep.mubr.bf16.mxu0 0
    %3868 = vmatmul.mubr.bf16.gmra.mxu0 %v3753
    %v3869 = vpop.f32.mrf.mxu0
    %v3870 = vadd.f32 %v1879, %v3869
    %v3871 = vpop.f32.mrf.mxu0
    %v3872 = vpop.f32.mrf.mxu0
    %v3873 = vadd.f32 %v1880, %v3872
    %v3874 = vpop.f32.mrf.mxu0
    %3875 = vdwg.mxu0
    %3884 = vrot.lane.b32.xlu0 %v1782, 96
    %v3885 = vpop.permute.xlu0 %3884
    %3886 = vrot.lane.b32.xlu0 %v1785, 96
    %v3887 = vpop.permute.xlu0 %3886
    %3888 = vrot.lane.b32.xlu0 %v1788, 96
    %v3889 = vpop.permute.xlu0 %3888
    %3890 = vrot.lane.b32.xlu0 %v1791, 96
    %v3891 = vpop.permute.xlu0 %3890
    %3892 = vrot.lane.b32.xlu0 %v1794, 96
    %v3893 = vpop.permute.xlu0 %3892
    %3894 = vrot.lane.b32.xlu0 %v1797, 96
    %v3895 = vpop.permute.xlu0 %3894
    %3896 = vrot.lane.b32.xlu0 %v1800, 96
    %v3897 = vpop.permute.xlu0 %3896
    %3898 = vrot.lane.b32.xlu0 %v1803, 96
    %v3899 = vpop.permute.xlu0 %3898
    %3908 = vrot.lane.b32.xlu0 %v1783, 96
    %v3909 = vpop.permute.xlu0 %3908
    %3910 = vrot.lane.b32.xlu0 %v1786, 96
    %v3911 = vpop.permute.xlu0 %3910
    %3912 = vrot.lane.b32.xlu0 %v1789, 96
    %v3913 = vpop.permute.xlu0 %3912
    %3914 = vrot.lane.b32.xlu0 %v1792, 96
    %v3915 = vpop.permute.xlu0 %3914
    %3916 = vrot.lane.b32.xlu0 %v1795, 96
    %v3917 = vpop.permute.xlu0 %3916
    %3918 = vrot.lane.b32.xlu0 %v1798, 96
    %v3919 = vpop.permute.xlu0 %3918
    %3920 = vrot.lane.b32.xlu0 %v1801, 96
    %v3921 = vpop.permute.xlu0 %3920
    %3922 = vrot.lane.b32.xlu0 %v1804, 96
    %v3923 = vpop.permute.xlu0 %3922
    %v3925 = vsel %vm1881, %v3885, 0
    %v3928 = vsel %vm1881, %v3887, 0
    %v3931 = vsel %vm1881, %v3889, 0
    %v3934 = vsel %vm1881, %v3891, 0
    %v3937 = vsel %vm1881, %v3893, 0
    %v3940 = vsel %vm1881, %v3895, 0
    %v3943 = vsel %vm1881, %v3897, 0
    %v3946 = vsel %vm1881, %v3899, 0
    %v3949 = vsel %vm1881, %v3909, 0
    %v3952 = vsel %vm1881, %v3911, 0
    %v3955 = vsel %vm1881, %v3913, 0
    %v3958 = vsel %vm1881, %v3915, 0
    %v3961 = vsel %vm1881, %v3917, 0
    %v3964 = vsel %vm1881, %v3919, 0
    %v3967 = vsel %vm1881, %v3921, 0
    %v3970 = vsel %vm1881, %v3923, 0
    %3972 = vmatprep.subr.bf16.mxu0 0
    %3973 = vmatpush1.bf16.xpose.msra.mxu0 %v3970
    %3974 = vmatprep.subr.bf16.mxu0 0
    %3975 = vmatpush1.bf16.xpose.msra.mxu0 %v3967
    %3976 = vmatprep.subr.bf16.mxu0 0
    %3977 = vmatpush1.bf16.xpose.msra.mxu0 %v3964
    %3978 = vmatprep.subr.bf16.mxu0 0
    %3979 = vmatpush1.bf16.xpose.msra.mxu0 %v3961
    %3980 = vmatprep.subr.bf16.mxu0 0
    %3981 = vmatpush1.bf16.xpose.msra.mxu0 %v3958
    %3982 = vmatprep.subr.bf16.mxu0 0
    %3983 = vmatpush1.bf16.xpose.msra.mxu0 %v3955
    %3984 = vmatprep.subr.bf16.mxu0 0
    %3985 = vmatpush1.bf16.xpose.msra.mxu0 %v3952
    %3986 = vmatprep.subr.bf16.mxu0 0
    %3987 = vmatpush1.bf16.xpose.msra.mxu0 %v3949
    %3988 = vmatprep.subr.bf16.mxu0 0
    %3989 = vmatpush2.bf16.xpose.msra.mxu0 0
    %3990 = vmatprep.subr.bf16.mxu0 0
    %3991 = vmatpush2.bf16.xpose.msra.mxu0 0
    %3992 = vmatprep.subr.bf16.mxu0 0
    %3993 = vmatpush2.bf16.xpose.msra.mxu0 0
    %3994 = vmatprep.subr.bf16.mxu0 0
    %3995 = vmatpush2.bf16.xpose.msra.mxu0 0
    %3996 = vmatprep.subr.bf16.mxu0 0
    %3997 = vmatpush2.bf16.xpose.msra.mxu0 0
    %3998 = vmatprep.subr.bf16.mxu0 0
    %3999 = vmatpush2.bf16.xpose.msra.mxu0 0
    %4000 = vmatprep.subr.bf16.mxu0 0
    %4001 = vmatpush2.bf16.xpose.msra.mxu0 0
    %4002 = vmatprep.subr.bf16.mxu0 0
    %4003 = vmatpush2.bf16.xpose.msra.mxu0 0
    %4004 = vmatprep.mubr.bf16.mxu0 0
    %4005 = vmatmul.mubr.bf16.gmra.mxu0 %v3925
    %v4006 = vpop.f32.mrf.mxu0
    %v4007 = vadd.f32 %v1865, %v4006
    %v4008 = vpop.f32.mrf.mxu0
    %v4009 = vpop.f32.mrf.mxu0
    %v4010 = vadd.f32 %v1866, %v4009
    %v4011 = vpop.f32.mrf.mxu0
    %4012 = vmatprep.mubr.bf16.mxu0 0
    %4013 = vmatmul.mubr.bf16.gmra.mxu0 %v3928
    %v4014 = vpop.f32.mrf.mxu0
    %v4015 = vadd.f32 %v1867, %v4014
    %v4016 = vpop.f32.mrf.mxu0
    %v4017 = vpop.f32.mrf.mxu0
    %v4018 = vadd.f32 %v1868, %v4017
    %v4019 = vpop.f32.mrf.mxu0
    %4020 = vmatprep.mubr.bf16.mxu0 0
    %4021 = vmatmul.mubr.bf16.gmra.mxu0 %v3931
    %v4022 = vpop.f32.mrf.mxu0
    %v4023 = vadd.f32 %v1869, %v4022
    %v4024 = vpop.f32.mrf.mxu0
    %v4025 = vpop.f32.mrf.mxu0
    %v4026 = vadd.f32 %v1870, %v4025
    %v4027 = vpop.f32.mrf.mxu0
    %4028 = vmatprep.mubr.bf16.mxu0 0
    %4029 = vmatmul.mubr.bf16.gmra.mxu0 %v3934
    %v4030 = vpop.f32.mrf.mxu0
    %v4031 = vadd.f32 %v1871, %v4030
    %v4032 = vpop.f32.mrf.mxu0
    %v4033 = vpop.f32.mrf.mxu0
    %v4034 = vadd.f32 %v1872, %v4033
    %v4035 = vpop.f32.mrf.mxu0
    %4036 = vmatprep.mubr.bf16.mxu0 0
    %4037 = vmatmul.mubr.bf16.gmra.mxu0 %v3937
    %v4038 = vpop.f32.mrf.mxu0
    %v4039 = vadd.f32 %v1873, %v4038
    %v4040 = vpop.f32.mrf.mxu0
    %v4041 = vpop.f32.mrf.mxu0
    %v4042 = vadd.f32 %v1874, %v4041
    %v4043 = vpop.f32.mrf.mxu0
    %4044 = vmatprep.mubr.bf16.mxu0 0
    %4045 = vmatmul.mubr.bf16.gmra.mxu0 %v3940
    %v4046 = vpop.f32.mrf.mxu0
    %v4047 = vadd.f32 %v1875, %v4046
    %v4048 = vpop.f32.mrf.mxu0
    %v4049 = vpop.f32.mrf.mxu0
    %v4050 = vadd.f32 %v1876, %v4049
    %v4051 = vpop.f32.mrf.mxu0
    %4052 = vmatprep.mubr.bf16.mxu0 0
    %4053 = vmatmul.mubr.bf16.gmra.mxu0 %v3943
    %v4054 = vpop.f32.mrf.mxu0
    %v4055 = vadd.f32 %v1877, %v4054
    %v4056 = vpop.f32.mrf.mxu0
    %v4057 = vpop.f32.mrf.mxu0
    %v4058 = vadd.f32 %v1878, %v4057
    %v4059 = vpop.f32.mrf.mxu0
    %4060 = vmatprep.mubr.bf16.mxu0 0
    %4061 = vmatmul.mubr.bf16.gmra.mxu0 %v3946
    %v4062 = vpop.f32.mrf.mxu0
    %v4063 = vadd.f32 %v1879, %v4062
    %v4064 = vpop.f32.mrf.mxu0
    %v4065 = vpop.f32.mrf.mxu0
    %v4066 = vadd.f32 %v1880, %v4065
    %v4067 = vpop.f32.mrf.mxu0
    %4068 = vdwg.mxu0
    %4077 = vrot.lane.b32.xlu0 %v1806, 96
    %v4078 = vpop.permute.xlu0 %4077
    %4079 = vrot.lane.b32.xlu0 %v1809, 96
    %v4080 = vpop.permute.xlu0 %4079
    %4081 = vrot.lane.b32.xlu0 %v1812, 96
    %v4082 = vpop.permute.xlu0 %4081
    %4083 = vrot.lane.b32.xlu0 %v1815, 96
    %v4084 = vpop.permute.xlu0 %4083
    %4085 = vrot.lane.b32.xlu0 %v1818, 96
    %v4086 = vpop.permute.xlu0 %4085
    %4087 = vrot.lane.b32.xlu0 %v1821, 96
    %v4088 = vpop.permute.xlu0 %4087
    %4089 = vrot.lane.b32.xlu0 %v1824, 96
    %v4090 = vpop.permute.xlu0 %4089
    %4091 = vrot.lane.b32.xlu0 %v1827, 96
    %v4092 = vpop.permute.xlu0 %4091
    %4101 = vrot.lane.b32.xlu0 %v1807, 96
    %v4102 = vpop.permute.xlu0 %4101
    %4103 = vrot.lane.b32.xlu0 %v1810, 96
    %v4104 = vpop.permute.xlu0 %4103
    %4105 = vrot.lane.b32.xlu0 %v1813, 96
    %v4106 = vpop.permute.xlu0 %4105
    %4107 = vrot.lane.b32.xlu0 %v1816, 96
    %v4108 = vpop.permute.xlu0 %4107
    %4109 = vrot.lane.b32.xlu0 %v1819, 96
    %v4110 = vpop.permute.xlu0 %4109
    %4111 = vrot.lane.b32.xlu0 %v1822, 96
    %v4112 = vpop.permute.xlu0 %4111
    %4113 = vrot.lane.b32.xlu0 %v1825, 96
    %v4114 = vpop.permute.xlu0 %4113
    %4115 = vrot.lane.b32.xlu0 %v1828, 96
    %v4116 = vpop.permute.xlu0 %4115
    %v4118 = vsel %vm1881, %v4078, 0
    %v4121 = vsel %vm1881, %v4080, 0
    %v4124 = vsel %vm1881, %v4082, 0
    %v4127 = vsel %vm1881, %v4084, 0
    %v4130 = vsel %vm1881, %v4086, 0
    %v4133 = vsel %vm1881, %v4088, 0
    %v4136 = vsel %vm1881, %v4090, 0
    %v4139 = vsel %vm1881, %v4092, 0
    %v4142 = vsel %vm1881, %v4102, 0
    %v4145 = vsel %vm1881, %v4104, 0
    %v4148 = vsel %vm1881, %v4106, 0
    %v4151 = vsel %vm1881, %v4108, 0
    %v4154 = vsel %vm1881, %v4110, 0
    %v4157 = vsel %vm1881, %v4112, 0
    %v4160 = vsel %vm1881, %v4114, 0
    %v4163 = vsel %vm1881, %v4116, 0
    %4165 = vmatprep.subr.bf16.mxu0 0
    %4166 = vmatpush1.bf16.xpose.msra.mxu0 %v4163
    %4167 = vmatprep.subr.bf16.mxu0 0
    %4168 = vmatpush1.bf16.xpose.msra.mxu0 %v4160
    %4169 = vmatprep.subr.bf16.mxu0 0
    %4170 = vmatpush1.bf16.xpose.msra.mxu0 %v4157
    %4171 = vmatprep.subr.bf16.mxu0 0
    %4172 = vmatpush1.bf16.xpose.msra.mxu0 %v4154
    %4173 = vmatprep.subr.bf16.mxu0 0
    %4174 = vmatpush1.bf16.xpose.msra.mxu0 %v4151
    %4175 = vmatprep.subr.bf16.mxu0 0
    %4176 = vmatpush1.bf16.xpose.msra.mxu0 %v4148
    %4177 = vmatprep.subr.bf16.mxu0 0
    %4178 = vmatpush1.bf16.xpose.msra.mxu0 %v4145
    %4179 = vmatprep.subr.bf16.mxu0 0
    %4180 = vmatpush1.bf16.xpose.msra.mxu0 %v4142
    %4181 = vmatprep.subr.bf16.mxu0 0
    %4182 = vmatpush2.bf16.xpose.msra.mxu0 0
    %4183 = vmatprep.subr.bf16.mxu0 0
    %4184 = vmatpush2.bf16.xpose.msra.mxu0 0
    %4185 = vmatprep.subr.bf16.mxu0 0
    %4186 = vmatpush2.bf16.xpose.msra.mxu0 0
    %4187 = vmatprep.subr.bf16.mxu0 0
    %4188 = vmatpush2.bf16.xpose.msra.mxu0 0
    %4189 = vmatprep.subr.bf16.mxu0 0
    %4190 = vmatpush2.bf16.xpose.msra.mxu0 0
    %4191 = vmatprep.subr.bf16.mxu0 0
    %4192 = vmatpush2.bf16.xpose.msra.mxu0 0
    %4193 = vmatprep.subr.bf16.mxu0 0
    %4194 = vmatpush2.bf16.xpose.msra.mxu0 0
    %4195 = vmatprep.subr.bf16.mxu0 0
    %4196 = vmatpush2.bf16.xpose.msra.mxu0 0
    %4197 = vmatprep.mubr.bf16.mxu0 0
    %4198 = vmatmul.mubr.bf16.gmra.mxu0 %v4118
    %v4199 = vpop.f32.mrf.mxu0
    %v4200 = vadd.f32 %v1865, %v4199
    %v4201 = vpop.f32.mrf.mxu0
    %v4202 = vpop.f32.mrf.mxu0
    %v4203 = vadd.f32 %v1866, %v4202
    %v4204 = vpop.f32.mrf.mxu0
    %4205 = vmatprep.mubr.bf16.mxu0 0
    %4206 = vmatmul.mubr.bf16.gmra.mxu0 %v4121
    %v4207 = vpop.f32.mrf.mxu0
    %v4208 = vadd.f32 %v1867, %v4207
    %v4209 = vpop.f32.mrf.mxu0
    %v4210 = vpop.f32.mrf.mxu0
    %v4211 = vadd.f32 %v1868, %v4210
    %v4212 = vpop.f32.mrf.mxu0
    %4213 = vmatprep.mubr.bf16.mxu0 0
    %4214 = vmatmul.mubr.bf16.gmra.mxu0 %v4124
    %v4215 = vpop.f32.mrf.mxu0
    %v4216 = vadd.f32 %v1869, %v4215
    %v4217 = vpop.f32.mrf.mxu0
    %v4218 = vpop.f32.mrf.mxu0
    %v4219 = vadd.f32 %v1870, %v4218
    %v4220 = vpop.f32.mrf.mxu0
    %4221 = vmatprep.mubr.bf16.mxu0 0
    %4222 = vmatmul.mubr.bf16.gmra.mxu0 %v4127
    %v4223 = vpop.f32.mrf.mxu0
    %v4224 = vadd.f32 %v1871, %v4223
    %v4225 = vpop.f32.mrf.mxu0
    %v4226 = vpop.f32.mrf.mxu0
    %v4227 = vadd.f32 %v1872, %v4226
    %v4228 = vpop.f32.mrf.mxu0
    %4229 = vmatprep.mubr.bf16.mxu0 0
    %4230 = vmatmul.mubr.bf16.gmra.mxu0 %v4130
    %v4231 = vpop.f32.mrf.mxu0
    %v4232 = vadd.f32 %v1873, %v4231
    %v4233 = vpop.f32.mrf.mxu0
    %v4234 = vpop.f32.mrf.mxu0
    %v4235 = vadd.f32 %v1874, %v4234
    %v4236 = vpop.f32.mrf.mxu0
    %4237 = vmatprep.mubr.bf16.mxu0 0
    %4238 = vmatmul.mubr.bf16.gmra.mxu0 %v4133
    %v4239 = vpop.f32.mrf.mxu0
    %v4240 = vadd.f32 %v1875, %v4239
    %v4241 = vpop.f32.mrf.mxu0
    %v4242 = vpop.f32.mrf.mxu0
    %v4243 = vadd.f32 %v1876, %v4242
    %v4244 = vpop.f32.mrf.mxu0
    %4245 = vmatprep.mubr.bf16.mxu0 0
    %4246 = vmatmul.mubr.bf16.gmra.mxu0 %v4136
    %v4247 = vpop.f32.mrf.mxu0
    %v4248 = vadd.f32 %v1877, %v4247
    %v4249 = vpop.f32.mrf.mxu0
    %v4250 = vpop.f32.mrf.mxu0
    %v4251 = vadd.f32 %v1878, %v4250
    %v4252 = vpop.f32.mrf.mxu0
    %4253 = vmatprep.mubr.bf16.mxu0 0
    %4254 = vmatmul.mubr.bf16.gmra.mxu0 %v4139
    %v4255 = vpop.f32.mrf.mxu0
    %v4256 = vadd.f32 %v1879, %v4255
    %v4257 = vpop.f32.mrf.mxu0
    %v4258 = vpop.f32.mrf.mxu0
    %v4259 = vadd.f32 %v1880, %v4258
    %v4260 = vpop.f32.mrf.mxu0
    %4261 = vdwg.mxu0
    %4262 = vmax.xlane.f32.xlu0 %v3621
    %v4263 = vpop.xlane.xlu0 %4262
    %4264 = vmax.xlane.f32.xlu0 %v3624
    %v4265 = vpop.xlane.xlu0 %4264
    %4266 = vmax.xlane.f32.xlu0 %v3629
    %v4267 = vpop.xlane.xlu0 %4266
    %4268 = vmax.xlane.f32.xlu0 %v3632
    %v4269 = vpop.xlane.xlu0 %4268
    %4270 = vmax.xlane.f32.xlu0 %v3637
    %v4271 = vpop.xlane.xlu0 %4270
    %4272 = vmax.xlane.f32.xlu0 %v3640
    %v4273 = vpop.xlane.xlu0 %4272
    %4274 = vmax.xlane.f32.xlu0 %v3645
    %v4275 = vpop.xlane.xlu0 %4274
    %4276 = vmax.xlane.f32.xlu0 %v3648
    %v4277 = vpop.xlane.xlu0 %4276
    %4278 = vmax.xlane.f32.xlu0 %v3653
    %v4279 = vpop.xlane.xlu0 %4278
    %4280 = vmax.xlane.f32.xlu0 %v3656
    %v4281 = vpop.xlane.xlu0 %4280
    %4282 = vmax.xlane.f32.xlu0 %v3661
    %v4283 = vpop.xlane.xlu0 %4282
    %4284 = vmax.xlane.f32.xlu0 %v3664
    %v4285 = vpop.xlane.xlu0 %4284
    %4286 = vmax.xlane.f32.xlu0 %v3669
    %v4287 = vpop.xlane.xlu0 %4286
    %4288 = vmax.xlane.f32.xlu0 %v3672
    %v4289 = vpop.xlane.xlu0 %4288
    %4290 = vmax.xlane.f32.xlu0 %v3677
    %v4291 = vpop.xlane.xlu0 %4290
    %4292 = vmax.xlane.f32.xlu0 %v3680
    %v4293 = vpop.xlane.xlu0 %4292
    %4294 = vmax.xlane.f32.xlu0 %v3814
    %v4295 = vpop.xlane.xlu0 %4294
    %4296 = vmax.xlane.f32.xlu0 %v3817
    %v4297 = vpop.xlane.xlu0 %4296
    %4298 = vmax.xlane.f32.xlu0 %v3822
    %v4299 = vpop.xlane.xlu0 %4298
    %4300 = vmax.xlane.f32.xlu0 %v3825
    %v4301 = vpop.xlane.xlu0 %4300
    %4302 = vmax.xlane.f32.xlu0 %v3830
    %v4303 = vpop.xlane.xlu0 %4302
    %4304 = vmax.xlane.f32.xlu0 %v3833
    %v4305 = vpop.xlane.xlu0 %4304
    %4306 = vmax.xlane.f32.xlu0 %v3838
    %v4307 = vpop.xlane.xlu0 %4306
    %4308 = vmax.xlane.f32.xlu0 %v3841
    %v4309 = vpop.xlane.xlu0 %4308
    %4310 = vmax.xlane.f32.xlu0 %v3846
    %v4311 = vpop.xlane.xlu0 %4310
    %4312 = vmax.xlane.f32.xlu0 %v3849
    %v4313 = vpop.xlane.xlu0 %4312
    %4314 = vmax.xlane.f32.xlu0 %v3854
    %v4315 = vpop.xlane.xlu0 %4314
    %4316 = vmax.xlane.f32.xlu0 %v3857
    %v4317 = vpop.xlane.xlu0 %4316
    %4318 = vmax.xlane.f32.xlu0 %v3862
    %v4319 = vpop.xlane.xlu0 %4318
    %4320 = vmax.xlane.f32.xlu0 %v3865
    %v4321 = vpop.xlane.xlu0 %4320
    %4322 = vmax.xlane.f32.xlu0 %v3870
    %v4323 = vpop.xlane.xlu0 %4322
    %4324 = vmax.xlane.f32.xlu0 %v3873
    %v4325 = vpop.xlane.xlu0 %4324
    %4326 = vmax.xlane.f32.xlu0 %v4007
    %v4327 = vpop.xlane.xlu0 %4326
    %4328 = vmax.xlane.f32.xlu0 %v4010
    %v4329 = vpop.xlane.xlu0 %4328
    %4330 = vmax.xlane.f32.xlu0 %v4015
    %v4331 = vpop.xlane.xlu0 %4330
    %4332 = vmax.xlane.f32.xlu0 %v4018
    %v4333 = vpop.xlane.xlu0 %4332
    %4334 = vmax.xlane.f32.xlu0 %v4023
    %v4335 = vpop.xlane.xlu0 %4334
    %4336 = vmax.xlane.f32.xlu0 %v4026
    %v4337 = vpop.xlane.xlu0 %4336
    %4338 = vmax.xlane.f32.xlu0 %v4031
    %v4339 = vpop.xlane.xlu0 %4338
    %4340 = vmax.xlane.f32.xlu0 %v4034
    %v4341 = vpop.xlane.xlu0 %4340
    %4342 = vmax.xlane.f32.xlu0 %v4039
    %v4343 = vpop.xlane.xlu0 %4342
    %4344 = vmax.xlane.f32.xlu0 %v4042
    %v4345 = vpop.xlane.xlu0 %4344
    %4346 = vmax.xlane.f32.xlu0 %v4047
    %v4347 = vpop.xlane.xlu0 %4346
    %4348 = vmax.xlane.f32.xlu0 %v4050
    %v4349 = vpop.xlane.xlu0 %4348
    %4350 = vmax.xlane.f32.xlu0 %v4055
    %v4351 = vpop.xlane.xlu0 %4350
    %4352 = vmax.xlane.f32.xlu0 %v4058
    %v4353 = vpop.xlane.xlu0 %4352
    %4354 = vmax.xlane.f32.xlu0 %v4063
    %v4355 = vpop.xlane.xlu0 %4354
    %4356 = vmax.xlane.f32.xlu0 %v4066
    %v4357 = vpop.xlane.xlu0 %4356
    %4358 = vmax.xlane.f32.xlu0 %v4200
    %v4359 = vpop.xlane.xlu0 %4358
    %4360 = vmax.xlane.f32.xlu0 %v4203
    %v4361 = vpop.xlane.xlu0 %4360
    %4362 = vmax.xlane.f32.xlu0 %v4208
    %v4363 = vpop.xlane.xlu0 %4362
    %4364 = vmax.xlane.f32.xlu0 %v4211
    %v4365 = vpop.xlane.xlu0 %4364
    %4366 = vmax.xlane.f32.xlu0 %v4216
    %v4367 = vpop.xlane.xlu0 %4366
    %4368 = vmax.xlane.f32.xlu0 %v4219
    %v4369 = vpop.xlane.xlu0 %4368
    %4370 = vmax.xlane.f32.xlu0 %v4224
    %v4371 = vpop.xlane.xlu0 %4370
    %4372 = vmax.xlane.f32.xlu0 %v4227
    %v4373 = vpop.xlane.xlu0 %4372
    %4374 = vmax.xlane.f32.xlu0 %v4232
    %v4375 = vpop.xlane.xlu0 %4374
    %4376 = vmax.xlane.f32.xlu0 %v4235
    %v4377 = vpop.xlane.xlu0 %4376
    %4378 = vmax.xlane.f32.xlu0 %v4240
    %v4379 = vpop.xlane.xlu0 %4378
    %4380 = vmax.xlane.f32.xlu0 %v4243
    %v4381 = vpop.xlane.xlu0 %4380
    %4382 = vmax.xlane.f32.xlu0 %v4248
    %v4383 = vpop.xlane.xlu0 %4382
    %4384 = vmax.xlane.f32.xlu0 %v4251
    %v4385 = vpop.xlane.xlu0 %4384
    %4386 = vmax.xlane.f32.xlu0 %v4256
    %v4387 = vpop.xlane.xlu0 %4386
    %4388 = vmax.xlane.f32.xlu0 %v4259
    %v4389 = vpop.xlane.xlu0 %4388
    %v4390 = vsub.f32 %v3621, %v4263
    %v4391 = vsub.f32 %v3624, %v4265
    %v4392 = vsub.f32 %v3629, %v4267
    %v4393 = vsub.f32 %v3632, %v4269
    %v4394 = vsub.f32 %v3637, %v4271
    %v4395 = vsub.f32 %v3640, %v4273
    %v4396 = vsub.f32 %v3645, %v4275
    %v4397 = vsub.f32 %v3648, %v4277
    %v4398 = vsub.f32 %v3653, %v4279
    %v4399 = vsub.f32 %v3656, %v4281
    %v4400 = vsub.f32 %v3661, %v4283
    %v4401 = vsub.f32 %v3664, %v4285
    %v4402 = vsub.f32 %v3669, %v4287
    %v4403 = vsub.f32 %v3672, %v4289
    %v4404 = vsub.f32 %v3677, %v4291
    %v4405 = vsub.f32 %v3680, %v4293
    %v4406 = vsub.f32 %v3814, %v4295
    %v4407 = vsub.f32 %v3817, %v4297
    %v4408 = vsub.f32 %v3822, %v4299
    %v4409 = vsub.f32 %v3825, %v4301
    %v4410 = vsub.f32 %v3830, %v4303
    %v4411 = vsub.f32 %v3833, %v4305
    %v4412 = vsub.f32 %v3838, %v4307
    %v4413 = vsub.f32 %v3841, %v4309
    %v4414 = vsub.f32 %v3846, %v4311
    %v4415 = vsub.f32 %v3849, %v4313
    %v4416 = vsub.f32 %v3854, %v4315
    %v4417 = vsub.f32 %v3857, %v4317
    %v4418 = vsub.f32 %v3862, %v4319
    %v4419 = vsub.f32 %v3865, %v4321
    %v4420 = vsub.f32 %v3870, %v4323
    %v4421 = vsub.f32 %v3873, %v4325
    %v4422 = vsub.f32 %v4007, %v4327
    %v4423 = vsub.f32 %v4010, %v4329
    %v4424 = vsub.f32 %v4015, %v4331
    %v4425 = vsub.f32 %v4018, %v4333
    %v4426 = vsub.f32 %v4023, %v4335
    %v4427 = vsub.f32 %v4026, %v4337
    %v4428 = vsub.f32 %v4031, %v4339
    %v4429 = vsub.f32 %v4034, %v4341
    %v4430 = vsub.f32 %v4039, %v4343
    %v4431 = vsub.f32 %v4042, %v4345
    %v4432 = vsub.f32 %v4047, %v4347
    %v4433 = vsub.f32 %v4050, %v4349
    %v4434 = vsub.f32 %v4055, %v4351
    %v4435 = vsub.f32 %v4058, %v4353
    %v4436 = vsub.f32 %v4063, %v4355
    %v4437 = vsub.f32 %v4066, %v4357
    %v4438 = vsub.f32 %v4200, %v4359
    %v4439 = vsub.f32 %v4203, %v4361
    %v4440 = vsub.f32 %v4208, %v4363
    %v4441 = vsub.f32 %v4211, %v4365
    %v4442 = vsub.f32 %v4216, %v4367
    %v4443 = vsub.f32 %v4219, %v4369
    %v4444 = vsub.f32 %v4224, %v4371
    %v4445 = vsub.f32 %v4227, %v4373
    %v4446 = vsub.f32 %v4232, %v4375
    %v4447 = vsub.f32 %v4235, %v4377
    %v4448 = vsub.f32 %v4240, %v4379
    %v4449 = vsub.f32 %v4243, %v4381
    %v4450 = vsub.f32 %v4248, %v4383
    %v4451 = vsub.f32 %v4251, %v4385
    %v4452 = vsub.f32 %v4256, %v4387
    %v4453 = vsub.f32 %v4259, %v4389
    %v4454 = vmul.f32 %v4390, 1.442695
    %v4455 = vpow.pop %v4454
    %v4456 = vmul.f32 %v4391, 1.442695
    %v4457 = vpow.pop %v4456
    %v4458 = vmul.f32 %v4392, 1.442695
    %v4459 = vpow.pop %v4458
    %v4460 = vmul.f32 %v4393, 1.442695
    %v4461 = vpow.pop %v4460
    %v4462 = vmul.f32 %v4394, 1.442695
    %v4463 = vpow.pop %v4462
    %v4464 = vmul.f32 %v4395, 1.442695
    %v4465 = vpow.pop %v4464
    %v4466 = vmul.f32 %v4396, 1.442695
    %v4467 = vpow.pop %v4466
    %v4468 = vmul.f32 %v4397, 1.442695
    %v4469 = vpow.pop %v4468
    %v4470 = vmul.f32 %v4398, 1.442695
    %v4471 = vpow.pop %v4470
    %v4472 = vmul.f32 %v4399, 1.442695
    %v4473 = vpow.pop %v4472
    %v4474 = vmul.f32 %v4400, 1.442695
    %v4475 = vpow.pop %v4474
    %v4476 = vmul.f32 %v4401, 1.442695
    %v4477 = vpow.pop %v4476
    %v4478 = vmul.f32 %v4402, 1.442695
    %v4479 = vpow.pop %v4478
    %v4480 = vmul.f32 %v4403, 1.442695
    %v4481 = vpow.pop %v4480
    %v4482 = vmul.f32 %v4404, 1.442695
    %v4483 = vpow.pop %v4482
    %v4484 = vmul.f32 %v4405, 1.442695
    %v4485 = vpow.pop %v4484
    %v4486 = vmul.f32 %v4406, 1.442695
    %v4487 = vpow.pop %v4486
    %v4488 = vmul.f32 %v4407, 1.442695
    %v4489 = vpow.pop %v4488
    %v4490 = vmul.f32 %v4408, 1.442695
    %v4491 = vpow.pop %v4490
    %v4492 = vmul.f32 %v4409, 1.442695
    %v4493 = vpow.pop %v4492
    %v4494 = vmul.f32 %v4410, 1.442695
    %v4495 = vpow.pop %v4494
    %v4496 = vmul.f32 %v4411, 1.442695
    %v4497 = vpow.pop %v4496
    %v4498 = vmul.f32 %v4412, 1.442695
    %v4499 = vpow.pop %v4498
    %v4500 = vmul.f32 %v4413, 1.442695
    %v4501 = vpow.pop %v4500
    %v4502 = vmul.f32 %v4414, 1.442695
    %v4503 = vpow.pop %v4502
    %v4504 = vmul.f32 %v4415, 1.442695
    %v4505 = vpow.pop %v4504
    %v4506 = vmul.f32 %v4416, 1.442695
    %v4507 = vpow.pop %v4506
    %v4508 = vmul.f32 %v4417, 1.442695
    %v4509 = vpow.pop %v4508
    %v4510 = vmul.f32 %v4418, 1.442695
    %v4511 = vpow.pop %v4510
    %v4512 = vmul.f32 %v4419, 1.442695
    %v4513 = vpow.pop %v4512
    %v4514 = vmul.f32 %v4420, 1.442695
    %v4515 = vpow.pop %v4514
    %v4516 = vmul.f32 %v4421, 1.442695
    %v4517 = vpow.pop %v4516
    %v4518 = vmul.f32 %v4422, 1.442695
    %v4519 = vpow.pop %v4518
    %v4520 = vmul.f32 %v4423, 1.442695
    %v4521 = vpow.pop %v4520
    %v4522 = vmul.f32 %v4424, 1.442695
    %v4523 = vpow.pop %v4522
    %v4524 = vmul.f32 %v4425, 1.442695
    %v4525 = vpow.pop %v4524
    %v4526 = vmul.f32 %v4426, 1.442695
    %v4527 = vpow.pop %v4526
    %v4528 = vmul.f32 %v4427, 1.442695
    %v4529 = vpow.pop %v4528
    %v4530 = vmul.f32 %v4428, 1.442695
    %v4531 = vpow.pop %v4530
    %v4532 = vmul.f32 %v4429, 1.442695
    %v4533 = vpow.pop %v4532
    %v4534 = vmul.f32 %v4430, 1.442695
    %v4535 = vpow.pop %v4534
    %v4536 = vmul.f32 %v4431, 1.442695
    %v4537 = vpow.pop %v4536
    %v4538 = vmul.f32 %v4432, 1.442695
    %v4539 = vpow.pop %v4538
    %v4540 = vmul.f32 %v4433, 1.442695
    %v4541 = vpow.pop %v4540
    %v4542 = vmul.f32 %v4434, 1.442695
    %v4543 = vpow.pop %v4542
    %v4544 = vmul.f32 %v4435, 1.442695
    %v4545 = vpow.pop %v4544
    %v4546 = vmul.f32 %v4436, 1.442695
    %v4547 = vpow.pop %v4546
    %v4548 = vmul.f32 %v4437, 1.442695
    %v4549 = vpow.pop %v4548
    %v4550 = vmul.f32 %v4438, 1.442695
    %v4551 = vpow.pop %v4550
    %v4552 = vmul.f32 %v4439, 1.442695
    %v4553 = vpow.pop %v4552
    %v4554 = vmul.f32 %v4440, 1.442695
    %v4555 = vpow.pop %v4554
    %v4556 = vmul.f32 %v4441, 1.442695
    %v4557 = vpow.pop %v4556
    %v4558 = vmul.f32 %v4442, 1.442695
    %v4559 = vpow.pop %v4558
    %v4560 = vmul.f32 %v4443, 1.442695
    %v4561 = vpow.pop %v4560
    %v4562 = vmul.f32 %v4444, 1.442695
    %v4563 = vpow.pop %v4562
    %v4564 = vmul.f32 %v4445, 1.442695
    %v4565 = vpow.pop %v4564
    %v4566 = vmul.f32 %v4446, 1.442695
    %v4567 = vpow.pop %v4566
    %v4568 = vmul.f32 %v4447, 1.442695
    %v4569 = vpow.pop %v4568
    %v4570 = vmul.f32 %v4448, 1.442695
    %v4571 = vpow.pop %v4570
    %v4572 = vmul.f32 %v4449, 1.442695
    %v4573 = vpow.pop %v4572
    %v4574 = vmul.f32 %v4450, 1.442695
    %v4575 = vpow.pop %v4574
    %v4576 = vmul.f32 %v4451, 1.442695
    %v4577 = vpow.pop %v4576
    %v4578 = vmul.f32 %v4452, 1.442695
    %v4579 = vpow.pop %v4578
    %v4580 = vmul.f32 %v4453, 1.442695
    %v4581 = vpow.pop %v4580
    %4582 = vadd.xlane.f32.xlu0 %v4455
    %v4583 = vpop.xlane.xlu0 %4582
    %4584 = vadd.xlane.f32.xlu0 %v4457
    %v4585 = vpop.xlane.xlu0 %4584
    %4586 = vadd.xlane.f32.xlu0 %v4459
    %v4587 = vpop.xlane.xlu0 %4586
    %4588 = vadd.xlane.f32.xlu0 %v4461
    %v4589 = vpop.xlane.xlu0 %4588
    %4590 = vadd.xlane.f32.xlu0 %v4463
    %v4591 = vpop.xlane.xlu0 %4590
    %4592 = vadd.xlane.f32.xlu0 %v4465
    %v4593 = vpop.xlane.xlu0 %4592
    %4594 = vadd.xlane.f32.xlu0 %v4467
    %v4595 = vpop.xlane.xlu0 %4594
    %4596 = vadd.xlane.f32.xlu0 %v4469
    %v4597 = vpop.xlane.xlu0 %4596
    %4598 = vadd.xlane.f32.xlu0 %v4471
    %v4599 = vpop.xlane.xlu0 %4598
    %4600 = vadd.xlane.f32.xlu0 %v4473
    %v4601 = vpop.xlane.xlu0 %4600
    %4602 = vadd.xlane.f32.xlu0 %v4475
    %v4603 = vpop.xlane.xlu0 %4602
    %4604 = vadd.xlane.f32.xlu0 %v4477
    %v4605 = vpop.xlane.xlu0 %4604
    %4606 = vadd.xlane.f32.xlu0 %v4479
    %v4607 = vpop.xlane.xlu0 %4606
    %4608 = vadd.xlane.f32.xlu0 %v4481
    %v4609 = vpop.xlane.xlu0 %4608
    %4610 = vadd.xlane.f32.xlu0 %v4483
    %v4611 = vpop.xlane.xlu0 %4610
    %4612 = vadd.xlane.f32.xlu0 %v4485
    %v4613 = vpop.xlane.xlu0 %4612
    %4614 = vadd.xlane.f32.xlu0 %v4487
    %v4615 = vpop.xlane.xlu0 %4614
    %4616 = vadd.xlane.f32.xlu0 %v4489
    %v4617 = vpop.xlane.xlu0 %4616
    %4618 = vadd.xlane.f32.xlu0 %v4491
    %v4619 = vpop.xlane.xlu0 %4618
    %4620 = vadd.xlane.f32.xlu0 %v4493
    %v4621 = vpop.xlane.xlu0 %4620
    %4622 = vadd.xlane.f32.xlu0 %v4495
    %v4623 = vpop.xlane.xlu0 %4622
    %4624 = vadd.xlane.f32.xlu0 %v4497
    %v4625 = vpop.xlane.xlu0 %4624
    %4626 = vadd.xlane.f32.xlu0 %v4499
    %v4627 = vpop.xlane.xlu0 %4626
    %4628 = vadd.xlane.f32.xlu0 %v4501
    %v4629 = vpop.xlane.xlu0 %4628
    %4630 = vadd.xlane.f32.xlu0 %v4503
    %v4631 = vpop.xlane.xlu0 %4630
    %4632 = vadd.xlane.f32.xlu0 %v4505
    %v4633 = vpop.xlane.xlu0 %4632
    %4634 = vadd.xlane.f32.xlu0 %v4507
    %v4635 = vpop.xlane.xlu0 %4634
    %4636 = vadd.xlane.f32.xlu0 %v4509
    %v4637 = vpop.xlane.xlu0 %4636
    %4638 = vadd.xlane.f32.xlu0 %v4511
    %v4639 = vpop.xlane.xlu0 %4638
    %4640 = vadd.xlane.f32.xlu0 %v4513
    %v4641 = vpop.xlane.xlu0 %4640
    %4642 = vadd.xlane.f32.xlu0 %v4515
    %v4643 = vpop.xlane.xlu0 %4642
    %4644 = vadd.xlane.f32.xlu0 %v4517
    %v4645 = vpop.xlane.xlu0 %4644
    %4646 = vadd.xlane.f32.xlu0 %v4519
    %v4647 = vpop.xlane.xlu0 %4646
    %4648 = vadd.xlane.f32.xlu0 %v4521
    %v4649 = vpop.xlane.xlu0 %4648
    %4650 = vadd.xlane.f32.xlu0 %v4523
    %v4651 = vpop.xlane.xlu0 %4650
    %4652 = vadd.xlane.f32.xlu0 %v4525
    %v4653 = vpop.xlane.xlu0 %4652
    %4654 = vadd.xlane.f32.xlu0 %v4527
    %v4655 = vpop.xlane.xlu0 %4654
    %4656 = vadd.xlane.f32.xlu0 %v4529
    %v4657 = vpop.xlane.xlu0 %4656
    %4658 = vadd.xlane.f32.xlu0 %v4531
    %v4659 = vpop.xlane.xlu0 %4658
    %4660 = vadd.xlane.f32.xlu0 %v4533
    %v4661 = vpop.xlane.xlu0 %4660
    %4662 = vadd.xlane.f32.xlu0 %v4535
    %v4663 = vpop.xlane.xlu0 %4662
    %4664 = vadd.xlane.f32.xlu0 %v4537
    %v4665 = vpop.xlane.xlu0 %4664
    %4666 = vadd.xlane.f32.xlu0 %v4539
    %v4667 = vpop.xlane.xlu0 %4666
    %4668 = vadd.xlane.f32.xlu0 %v4541
    %v4669 = vpop.xlane.xlu0 %4668
    %4670 = vadd.xlane.f32.xlu0 %v4543
    %v4671 = vpop.xlane.xlu0 %4670
    %4672 = vadd.xlane.f32.xlu0 %v4545
    %v4673 = vpop.xlane.xlu0 %4672
    %4674 = vadd.xlane.f32.xlu0 %v4547
    %v4675 = vpop.xlane.xlu0 %4674
    %4676 = vadd.xlane.f32.xlu0 %v4549
    %v4677 = vpop.xlane.xlu0 %4676
    %4678 = vadd.xlane.f32.xlu0 %v4551
    %v4679 = vpop.xlane.xlu0 %4678
    %4680 = vadd.xlane.f32.xlu0 %v4553
    %v4681 = vpop.xlane.xlu0 %4680
    %4682 = vadd.xlane.f32.xlu0 %v4555
    %v4683 = vpop.xlane.xlu0 %4682
    %4684 = vadd.xlane.f32.xlu0 %v4557
    %v4685 = vpop.xlane.xlu0 %4684
    %4686 = vadd.xlane.f32.xlu0 %v4559
    %v4687 = vpop.xlane.xlu0 %4686
    %4688 = vadd.xlane.f32.xlu0 %v4561
    %v4689 = vpop.xlane.xlu0 %4688
    %4690 = vadd.xlane.f32.xlu0 %v4563
    %v4691 = vpop.xlane.xlu0 %4690
    %4692 = vadd.xlane.f32.xlu0 %v4565
    %v4693 = vpop.xlane.xlu0 %4692
    %4694 = vadd.xlane.f32.xlu0 %v4567
    %v4695 = vpop.xlane.xlu0 %4694
    %4696 = vadd.xlane.f32.xlu0 %v4569
    %v4697 = vpop.xlane.xlu0 %4696
    %4698 = vadd.xlane.f32.xlu0 %v4571
    %v4699 = vpop.xlane.xlu0 %4698
    %4700 = vadd.xlane.f32.xlu0 %v4573
    %v4701 = vpop.xlane.xlu0 %4700
    %4702 = vadd.xlane.f32.xlu0 %v4575
    %v4703 = vpop.xlane.xlu0 %4702
    %4704 = vadd.xlane.f32.xlu0 %v4577
    %v4705 = vpop.xlane.xlu0 %4704
    %4706 = vadd.xlane.f32.xlu0 %v4579
    %v4707 = vpop.xlane.xlu0 %4706
    %4708 = vadd.xlane.f32.xlu0 %v4581
    %v4709 = vpop.xlane.xlu0 %4708
    %v4710 = vrcp.pop %v4583
    %v4711 = vrcp.pop %v4585
    %v4712 = vrcp.pop %v4587
    %v4713 = vrcp.pop %v4589
    %v4714 = vrcp.pop %v4591
    %v4715 = vrcp.pop %v4593
    %v4716 = vrcp.pop %v4595
    %v4717 = vrcp.pop %v4597
    %v4718 = vrcp.pop %v4599
    %v4719 = vrcp.pop %v4601
    %v4720 = vrcp.pop %v4603
    %v4721 = vrcp.pop %v4605
    %v4722 = vrcp.pop %v4607
    %v4723 = vrcp.pop %v4609
    %v4724 = vrcp.pop %v4611
    %v4725 = vrcp.pop %v4613
    %v4726 = vrcp.pop %v4615
    %v4727 = vrcp.pop %v4617
    %v4728 = vrcp.pop %v4619
    %v4729 = vrcp.pop %v4621
    %v4730 = vrcp.pop %v4623
    %v4731 = vrcp.pop %v4625
    %v4732 = vrcp.pop %v4627
    %v4733 = vrcp.pop %v4629
    %v4734 = vrcp.pop %v4631
    %v4735 = vrcp.pop %v4633
    %v4736 = vrcp.pop %v4635
    %v4737 = vrcp.pop %v4637
    %v4738 = vrcp.pop %v4639
    %v4739 = vrcp.pop %v4641
    %v4740 = vrcp.pop %v4643
    %v4741 = vrcp.pop %v4645
    %v4742 = vrcp.pop %v4647
    %v4743 = vrcp.pop %v4649
    %v4744 = vrcp.pop %v4651
    %v4745 = vrcp.pop %v4653
    %v4746 = vrcp.pop %v4655
    %v4747 = vrcp.pop %v4657
    %v4748 = vrcp.pop %v4659
    %v4749 = vrcp.pop %v4661
    %v4750 = vrcp.pop %v4663
    %v4751 = vrcp.pop %v4665
    %v4752 = vrcp.pop %v4667
    %v4753 = vrcp.pop %v4669
    %v4754 = vrcp.pop %v4671
    %v4755 = vrcp.pop %v4673
    %v4756 = vrcp.pop %v4675
    %v4757 = vrcp.pop %v4677
    %v4758 = vrcp.pop %v4679
    %v4759 = vrcp.pop %v4681
    %v4760 = vrcp.pop %v4683
    %v4761 = vrcp.pop %v4685
    %v4762 = vrcp.pop %v4687
    %v4763 = vrcp.pop %v4689
    %v4764 = vrcp.pop %v4691
    %v4765 = vrcp.pop %v4693
    %v4766 = vrcp.pop %v4695
    %v4767 = vrcp.pop %v4697
    %v4768 = vrcp.pop %v4699
    %v4769 = vrcp.pop %v4701
    %v4770 = vrcp.pop %v4703
    %v4771 = vrcp.pop %v4705
    %v4772 = vrcp.pop %v4707
    %v4773 = vrcp.pop %v4709
    %v4774 = vmul.f32 %v4455, %v4710
    %v4775 = vmul.f32 %v4457, %v4711
    %v4776 = vmul.f32 %v4459, %v4712
    %v4777 = vmul.f32 %v4461, %v4713
    %v4778 = vmul.f32 %v4463, %v4714
    %v4779 = vmul.f32 %v4465, %v4715
    %v4780 = vmul.f32 %v4467, %v4716
    %v4781 = vmul.f32 %v4469, %v4717
    %v4782 = vmul.f32 %v4471, %v4718
    %v4783 = vmul.f32 %v4473, %v4719
    %v4784 = vmul.f32 %v4475, %v4720
    %v4785 = vmul.f32 %v4477, %v4721
    %v4786 = vmul.f32 %v4479, %v4722
    %v4787 = vmul.f32 %v4481, %v4723
    %v4788 = vmul.f32 %v4483, %v4724
    %v4789 = vmul.f32 %v4485, %v4725
    %v4790 = vmul.f32 %v4487, %v4726
    %v4791 = vmul.f32 %v4489, %v4727
    %v4792 = vmul.f32 %v4491, %v4728
    %v4793 = vmul.f32 %v4493, %v4729
    %v4794 = vmul.f32 %v4495, %v4730
    %v4795 = vmul.f32 %v4497, %v4731
    %v4796 = vmul.f32 %v4499, %v4732
    %v4797 = vmul.f32 %v4501, %v4733
    %v4798 = vmul.f32 %v4503, %v4734
    %v4799 = vmul.f32 %v4505, %v4735
    %v4800 = vmul.f32 %v4507, %v4736
    %v4801 = vmul.f32 %v4509, %v4737
    %v4802 = vmul.f32 %v4511, %v4738
    %v4803 = vmul.f32 %v4513, %v4739
    %v4804 = vmul.f32 %v4515, %v4740
    %v4805 = vmul.f32 %v4517, %v4741
    %v4806 = vmul.f32 %v4519, %v4742
    %v4807 = vmul.f32 %v4521, %v4743
    %v4808 = vmul.f32 %v4523, %v4744
    %v4809 = vmul.f32 %v4525, %v4745
    %v4810 = vmul.f32 %v4527, %v4746
    %v4811 = vmul.f32 %v4529, %v4747
    %v4812 = vmul.f32 %v4531, %v4748
    %v4813 = vmul.f32 %v4533, %v4749
    %v4814 = vmul.f32 %v4535, %v4750
    %v4815 = vmul.f32 %v4537, %v4751
    %v4816 = vmul.f32 %v4539, %v4752
    %v4817 = vmul.f32 %v4541, %v4753
    %v4818 = vmul.f32 %v4543, %v4754
    %v4819 = vmul.f32 %v4545, %v4755
    %v4820 = vmul.f32 %v4547, %v4756
    %v4821 = vmul.f32 %v4549, %v4757
    %v4822 = vmul.f32 %v4551, %v4758
    %v4823 = vmul.f32 %v4553, %v4759
    %v4824 = vmul.f32 %v4555, %v4760
    %v4825 = vmul.f32 %v4557, %v4761
    %v4826 = vmul.f32 %v4559, %v4762
    %v4827 = vmul.f32 %v4561, %v4763
    %v4828 = vmul.f32 %v4563, %v4764
    %v4829 = vmul.f32 %v4565, %v4765
    %v4830 = vmul.f32 %v4567, %v4766
    %v4831 = vmul.f32 %v4569, %v4767
    %v4832 = vmul.f32 %v4571, %v4768
    %v4833 = vmul.f32 %v4573, %v4769
    %v4834 = vmul.f32 %v4575, %v4770
    %v4835 = vmul.f32 %v4577, %v4771
    %v4836 = vmul.f32 %v4579, %v4772
    %v4837 = vmul.f32 %v4581, %v4773
    %v4838 = vpack.c.bf16 %v4775, %v4774
    %v4839 = vpack.c.bf16 %v4777, %v4776
    %v4840 = vpack.c.bf16 %v4779, %v4778
    %v4841 = vpack.c.bf16 %v4781, %v4780
    %v4842 = vpack.c.bf16 %v4783, %v4782
    %v4843 = vpack.c.bf16 %v4785, %v4784
    %v4844 = vpack.c.bf16 %v4787, %v4786
    %v4845 = vpack.c.bf16 %v4789, %v4788
    %v4846 = vpack.c.bf16 %v4791, %v4790
    %v4847 = vpack.c.bf16 %v4793, %v4792
    %v4848 = vpack.c.bf16 %v4795, %v4794
    %v4849 = vpack.c.bf16 %v4797, %v4796
    %v4850 = vpack.c.bf16 %v4799, %v4798
    %v4851 = vpack.c.bf16 %v4801, %v4800
    %v4852 = vpack.c.bf16 %v4803, %v4802
    %v4853 = vpack.c.bf16 %v4805, %v4804
    %v4854 = vpack.c.bf16 %v4807, %v4806
    %v4855 = vpack.c.bf16 %v4809, %v4808
    %v4856 = vpack.c.bf16 %v4811, %v4810
    %v4857 = vpack.c.bf16 %v4813, %v4812
    %v4858 = vpack.c.bf16 %v4815, %v4814
    %v4859 = vpack.c.bf16 %v4817, %v4816
    %v4860 = vpack.c.bf16 %v4819, %v4818
    %v4861 = vpack.c.bf16 %v4821, %v4820
    %v4862 = vpack.c.bf16 %v4823, %v4822
    %v4863 = vpack.c.bf16 %v4825, %v4824
    %v4864 = vpack.c.bf16 %v4827, %v4826
    %v4865 = vpack.c.bf16 %v4829, %v4828
    %v4866 = vpack.c.bf16 %v4831, %v4830
    %v4867 = vpack.c.bf16 %v4833, %v4832
    %v4868 = vpack.c.bf16 %v4835, %v4834
    %v4869 = vpack.c.bf16 %v4837, %v4836
    %4878 = vrot.lane.b32.xlu0 %v1736, 96
    %v4879 = vpop.permute.xlu0 %4878
    %4880 = vrot.lane.b32.xlu0 %v1739, 96
    %v4881 = vpop.permute.xlu0 %4880
    %4882 = vrot.lane.b32.xlu0 %v1742, 96
    %v4883 = vpop.permute.xlu0 %4882
    %4884 = vrot.lane.b32.xlu0 %v1745, 96
    %v4885 = vpop.permute.xlu0 %4884
    %4886 = vrot.lane.b32.xlu0 %v1748, 96
    %v4887 = vpop.permute.xlu0 %4886
    %4888 = vrot.lane.b32.xlu0 %v1751, 96
    %v4889 = vpop.permute.xlu0 %4888
    %4890 = vrot.lane.b32.xlu0 %v1754, 96
    %v4891 = vpop.permute.xlu0 %4890
    %4892 = vrot.lane.b32.xlu0 %v1757, 96
    %v4893 = vpop.permute.xlu0 %4892
    %4902 = vmatprep.subr.bf16.mxu0 0
    %4903 = vmatpush1.bf16.msra.mxu0 %v4893
    %4904 = vmatprep.subr.bf16.mxu0 0
    %4905 = vmatpush1.bf16.msra.mxu0 %v4891
    %4906 = vmatprep.subr.bf16.mxu0 0
    %4907 = vmatpush1.bf16.msra.mxu0 %v4889
    %4908 = vmatprep.subr.bf16.mxu0 0
    %4909 = vmatpush1.bf16.msra.mxu0 %v4887
    %4910 = vmatprep.subr.bf16.mxu0 0
    %4911 = vmatpush1.bf16.msra.mxu0 %v4885
    %4912 = vmatprep.subr.bf16.mxu0 0
    %4913 = vmatpush1.bf16.msra.mxu0 %v4883
    %4914 = vmatprep.subr.bf16.mxu0 0
    %4915 = vmatpush1.bf16.msra.mxu0 %v4881
    %4916 = vmatprep.subr.bf16.mxu0 0
    %4917 = vmatpush1.bf16.msra.mxu0 %v4879
    %4918 = vmatprep.subr.bf16.mxu0 0
    %4919 = vmatpush2.bf16.msra.mxu0 0
    %4920 = vmatprep.subr.bf16.mxu0 0
    %4921 = vmatpush2.bf16.msra.mxu0 0
    %4922 = vmatprep.subr.bf16.mxu0 0
    %4923 = vmatpush2.bf16.msra.mxu0 0
    %4924 = vmatprep.subr.bf16.mxu0 0
    %4925 = vmatpush2.bf16.msra.mxu0 0
    %4926 = vmatprep.subr.bf16.mxu0 0
    %4927 = vmatpush2.bf16.msra.mxu0 0
    %4928 = vmatprep.subr.bf16.mxu0 0
    %4929 = vmatpush2.bf16.msra.mxu0 0
    %4930 = vmatprep.subr.bf16.mxu0 0
    %4931 = vmatpush2.bf16.msra.mxu0 0
    %4932 = vmatprep.subr.bf16.mxu0 0
    %4933 = vmatpush2.bf16.msra.mxu0 0
    %4934 = vmatprep.mubr.bf16.mxu0 0
    %4935 = vmatmul.mubr.bf16.gmra.mxu0 %v4838
    %v4936 = vpop.f32.mrf.mxu0
    %v4937 = vadd.f32 0.0, %v4936
    %v4938 = vpop.f32.mrf.mxu0
    %v4939 = vpop.f32.mrf.mxu0
    %v4940 = vadd.f32 0.0, %v4939
    %v4941 = vpop.f32.mrf.mxu0
    %4942 = vmatprep.mubr.bf16.mxu0 0
    %4943 = vmatmul.mubr.bf16.gmra.mxu0 %v4839
    %v4944 = vpop.f32.mrf.mxu0
    %v4945 = vadd.f32 0.0, %v4944
    %v4946 = vpop.f32.mrf.mxu0
    %v4947 = vpop.f32.mrf.mxu0
    %v4948 = vadd.f32 0.0, %v4947
    %v4949 = vpop.f32.mrf.mxu0
    %4950 = vmatprep.mubr.bf16.mxu0 0
    %4951 = vmatmul.mubr.bf16.gmra.mxu0 %v4840
    %v4952 = vpop.f32.mrf.mxu0
    %v4953 = vadd.f32 0.0, %v4952
    %v4954 = vpop.f32.mrf.mxu0
    %v4955 = vpop.f32.mrf.mxu0
    %v4956 = vadd.f32 0.0, %v4955
    %v4957 = vpop.f32.mrf.mxu0
    %4958 = vmatprep.mubr.bf16.mxu0 0
    %4959 = vmatmul.mubr.bf16.gmra.mxu0 %v4841
    %v4960 = vpop.f32.mrf.mxu0
    %v4961 = vadd.f32 0.0, %v4960
    %v4962 = vpop.f32.mrf.mxu0
    %v4963 = vpop.f32.mrf.mxu0
    %v4964 = vadd.f32 0.0, %v4963
    %v4965 = vpop.f32.mrf.mxu0
    %4966 = vmatprep.mubr.bf16.mxu0 0
    %4967 = vmatmul.mubr.bf16.gmra.mxu0 %v4842
    %v4968 = vpop.f32.mrf.mxu0
    %v4969 = vadd.f32 0.0, %v4968
    %v4970 = vpop.f32.mrf.mxu0
    %v4971 = vpop.f32.mrf.mxu0
    %v4972 = vadd.f32 0.0, %v4971
    %v4973 = vpop.f32.mrf.mxu0
    %4974 = vmatprep.mubr.bf16.mxu0 0
    %4975 = vmatmul.mubr.bf16.gmra.mxu0 %v4843
    %v4976 = vpop.f32.mrf.mxu0
    %v4977 = vadd.f32 0.0, %v4976
    %v4978 = vpop.f32.mrf.mxu0
    %v4979 = vpop.f32.mrf.mxu0
    %v4980 = vadd.f32 0.0, %v4979
    %v4981 = vpop.f32.mrf.mxu0
    %4982 = vmatprep.mubr.bf16.mxu0 0
    %4983 = vmatmul.mubr.bf16.gmra.mxu0 %v4844
    %v4984 = vpop.f32.mrf.mxu0
    %v4985 = vadd.f32 0.0, %v4984
    %v4986 = vpop.f32.mrf.mxu0
    %v4987 = vpop.f32.mrf.mxu0
    %v4988 = vadd.f32 0.0, %v4987
    %v4989 = vpop.f32.mrf.mxu0
    %4990 = vmatprep.mubr.bf16.mxu0 0
    %4991 = vmatmul.mubr.bf16.gmra.mxu0 %v4845
    %v4992 = vpop.f32.mrf.mxu0
    %v4993 = vadd.f32 0.0, %v4992
    %v4994 = vpop.f32.mrf.mxu0
    %v4995 = vpop.f32.mrf.mxu0
    %v4996 = vadd.f32 0.0, %v4995
    %v4997 = vpop.f32.mrf.mxu0
    %4998 = vdwg.mxu0
    %5007 = vrot.lane.b32.xlu0 %v1760, 96
    %v5008 = vpop.permute.xlu0 %5007
    %5009 = vrot.lane.b32.xlu0 %v1763, 96
    %v5010 = vpop.permute.xlu0 %5009
    %5011 = vrot.lane.b32.xlu0 %v1766, 96
    %v5012 = vpop.permute.xlu0 %5011
    %5013 = vrot.lane.b32.xlu0 %v1769, 96
    %v5014 = vpop.permute.xlu0 %5013
    %5015 = vrot.lane.b32.xlu0 %v1772, 96
    %v5016 = vpop.permute.xlu0 %5015
    %5017 = vrot.lane.b32.xlu0 %v1775, 96
    %v5018 = vpop.permute.xlu0 %5017
    %5019 = vrot.lane.b32.xlu0 %v1778, 96
    %v5020 = vpop.permute.xlu0 %5019
    %5021 = vrot.lane.b32.xlu0 %v1781, 96
    %v5022 = vpop.permute.xlu0 %5021
    %5031 = vmatprep.subr.bf16.mxu0 0
    %5032 = vmatpush1.bf16.msra.mxu0 %v5022
    %5033 = vmatprep.subr.bf16.mxu0 0
    %5034 = vmatpush1.bf16.msra.mxu0 %v5020
    %5035 = vmatprep.subr.bf16.mxu0 0
    %5036 = vmatpush1.bf16.msra.mxu0 %v5018
    %5037 = vmatprep.subr.bf16.mxu0 0
    %5038 = vmatpush1.bf16.msra.mxu0 %v5016
    %5039 = vmatprep.subr.bf16.mxu0 0
    %5040 = vmatpush1.bf16.msra.mxu0 %v5014
    %5041 = vmatprep.subr.bf16.mxu0 0
    %5042 = vmatpush1.bf16.msra.mxu0 %v5012
    %5043 = vmatprep.subr.bf16.mxu0 0
    %5044 = vmatpush1.bf16.msra.mxu0 %v5010
    %5045 = vmatprep.subr.bf16.mxu0 0
    %5046 = vmatpush1.bf16.msra.mxu0 %v5008
    %5047 = vmatprep.subr.bf16.mxu0 0
    %5048 = vmatpush2.bf16.msra.mxu0 0
    %5049 = vmatprep.subr.bf16.mxu0 0
    %5050 = vmatpush2.bf16.msra.mxu0 0
    %5051 = vmatprep.subr.bf16.mxu0 0
    %5052 = vmatpush2.bf16.msra.mxu0 0
    %5053 = vmatprep.subr.bf16.mxu0 0
    %5054 = vmatpush2.bf16.msra.mxu0 0
    %5055 = vmatprep.subr.bf16.mxu0 0
    %5056 = vmatpush2.bf16.msra.mxu0 0
    %5057 = vmatprep.subr.bf16.mxu0 0
    %5058 = vmatpush2.bf16.msra.mxu0 0
    %5059 = vmatprep.subr.bf16.mxu0 0
    %5060 = vmatpush2.bf16.msra.mxu0 0
    %5061 = vmatprep.subr.bf16.mxu0 0
    %5062 = vmatpush2.bf16.msra.mxu0 0
    %5063 = vmatprep.mubr.bf16.mxu0 0
    %5064 = vmatmul.mubr.bf16.gmra.mxu0 %v4846
    %v5065 = vpop.f32.mrf.mxu0
    %v5066 = vadd.f32 0.0, %v5065
    %v5067 = vpop.f32.mrf.mxu0
    %v5068 = vpop.f32.mrf.mxu0
    %v5069 = vadd.f32 0.0, %v5068
    %v5070 = vpop.f32.mrf.mxu0
    %5071 = vmatprep.mubr.bf16.mxu0 0
    %5072 = vmatmul.mubr.bf16.gmra.mxu0 %v4847
    %v5073 = vpop.f32.mrf.mxu0
    %v5074 = vadd.f32 0.0, %v5073
    %v5075 = vpop.f32.mrf.mxu0
    %v5076 = vpop.f32.mrf.mxu0
    %v5077 = vadd.f32 0.0, %v5076
    %v5078 = vpop.f32.mrf.mxu0
    %5079 = vmatprep.mubr.bf16.mxu0 0
    %5080 = vmatmul.mubr.bf16.gmra.mxu0 %v4848
    %v5081 = vpop.f32.mrf.mxu0
    %v5082 = vadd.f32 0.0, %v5081
    %v5083 = vpop.f32.mrf.mxu0
    %v5084 = vpop.f32.mrf.mxu0
    %v5085 = vadd.f32 0.0, %v5084
    %v5086 = vpop.f32.mrf.mxu0
    %5087 = vmatprep.mubr.bf16.mxu0 0
    %5088 = vmatmul.mubr.bf16.gmra.mxu0 %v4849
    %v5089 = vpop.f32.mrf.mxu0
    %v5090 = vadd.f32 0.0, %v5089
    %v5091 = vpop.f32.mrf.mxu0
    %v5092 = vpop.f32.mrf.mxu0
    %v5093 = vadd.f32 0.0, %v5092
    %v5094 = vpop.f32.mrf.mxu0
    %5095 = vmatprep.mubr.bf16.mxu0 0
    %5096 = vmatmul.mubr.bf16.gmra.mxu0 %v4850
    %v5097 = vpop.f32.mrf.mxu0
    %v5098 = vadd.f32 0.0, %v5097
    %v5099 = vpop.f32.mrf.mxu0
    %v5100 = vpop.f32.mrf.mxu0
    %v5101 = vadd.f32 0.0, %v5100
    %v5102 = vpop.f32.mrf.mxu0
    %5103 = vmatprep.mubr.bf16.mxu0 0
    %5104 = vmatmul.mubr.bf16.gmra.mxu0 %v4851
    %v5105 = vpop.f32.mrf.mxu0
    %v5106 = vadd.f32 0.0, %v5105
    %v5107 = vpop.f32.mrf.mxu0
    %v5108 = vpop.f32.mrf.mxu0
    %v5109 = vadd.f32 0.0, %v5108
    %v5110 = vpop.f32.mrf.mxu0
    %5111 = vmatprep.mubr.bf16.mxu0 0
    %5112 = vmatmul.mubr.bf16.gmra.mxu0 %v4852
    %v5113 = vpop.f32.mrf.mxu0
    %v5114 = vadd.f32 0.0, %v5113
    %v5115 = vpop.f32.mrf.mxu0
    %v5116 = vpop.f32.mrf.mxu0
    %v5117 = vadd.f32 0.0, %v5116
    %v5118 = vpop.f32.mrf.mxu0
    %5119 = vmatprep.mubr.bf16.mxu0 0
    %5120 = vmatmul.mubr.bf16.gmra.mxu0 %v4853
    %v5121 = vpop.f32.mrf.mxu0
    %v5122 = vadd.f32 0.0, %v5121
    %v5123 = vpop.f32.mrf.mxu0
    %v5124 = vpop.f32.mrf.mxu0
    %v5125 = vadd.f32 0.0, %v5124
    %v5126 = vpop.f32.mrf.mxu0
    %5127 = vdwg.mxu0
    %5136 = vrot.lane.b32.xlu0 %v1784, 96
    %v5137 = vpop.permute.xlu0 %5136
    %5138 = vrot.lane.b32.xlu0 %v1787, 96
    %v5139 = vpop.permute.xlu0 %5138
    %5140 = vrot.lane.b32.xlu0 %v1790, 96
    %v5141 = vpop.permute.xlu0 %5140
    %5142 = vrot.lane.b32.xlu0 %v1793, 96
    %v5143 = vpop.permute.xlu0 %5142
    %5144 = vrot.lane.b32.xlu0 %v1796, 96
    %v5145 = vpop.permute.xlu0 %5144
    %5146 = vrot.lane.b32.xlu0 %v1799, 96
    %v5147 = vpop.permute.xlu0 %5146
    %5148 = vrot.lane.b32.xlu0 %v1802, 96
    %v5149 = vpop.permute.xlu0 %5148
    %5150 = vrot.lane.b32.xlu0 %v1805, 96
    %v5151 = vpop.permute.xlu0 %5150
    %5160 = vmatprep.subr.bf16.mxu0 0
    %5161 = vmatpush1.bf16.msra.mxu0 %v5151
    %5162 = vmatprep.subr.bf16.mxu0 0
    %5163 = vmatpush1.bf16.msra.mxu0 %v5149
    %5164 = vmatprep.subr.bf16.mxu0 0
    %5165 = vmatpush1.bf16.msra.mxu0 %v5147
    %5166 = vmatprep.subr.bf16.mxu0 0
    %5167 = vmatpush1.bf16.msra.mxu0 %v5145
    %5168 = vmatprep.subr.bf16.mxu0 0
    %5169 = vmatpush1.bf16.msra.mxu0 %v5143
    %5170 = vmatprep.subr.bf16.mxu0 0
    %5171 = vmatpush1.bf16.msra.mxu0 %v5141
    %5172 = vmatprep.subr.bf16.mxu0 0
    %5173 = vmatpush1.bf16.msra.mxu0 %v5139
    %5174 = vmatprep.subr.bf16.mxu0 0
    %5175 = vmatpush1.bf16.msra.mxu0 %v5137
    %5176 = vmatprep.subr.bf16.mxu0 0
    %5177 = vmatpush2.bf16.msra.mxu0 0
    %5178 = vmatprep.subr.bf16.mxu0 0
    %5179 = vmatpush2.bf16.msra.mxu0 0
    %5180 = vmatprep.subr.bf16.mxu0 0
    %5181 = vmatpush2.bf16.msra.mxu0 0
    %5182 = vmatprep.subr.bf16.mxu0 0
    %5183 = vmatpush2.bf16.msra.mxu0 0
    %5184 = vmatprep.subr.bf16.mxu0 0
    %5185 = vmatpush2.bf16.msra.mxu0 0
    %5186 = vmatprep.subr.bf16.mxu0 0
    %5187 = vmatpush2.bf16.msra.mxu0 0
    %5188 = vmatprep.subr.bf16.mxu0 0
    %5189 = vmatpush2.bf16.msra.mxu0 0
    %5190 = vmatprep.subr.bf16.mxu0 0
    %5191 = vmatpush2.bf16.msra.mxu0 0
    %5192 = vmatprep.mubr.bf16.mxu0 0
    %5193 = vmatmul.mubr.bf16.gmra.mxu0 %v4854
    %v5194 = vpop.f32.mrf.mxu0
    %v5195 = vadd.f32 0.0, %v5194
    %v5196 = vpop.f32.mrf.mxu0
    %v5197 = vpop.f32.mrf.mxu0
    %v5198 = vadd.f32 0.0, %v5197
    %v5199 = vpop.f32.mrf.mxu0
    %5200 = vmatprep.mubr.bf16.mxu0 0
    %5201 = vmatmul.mubr.bf16.gmra.mxu0 %v4855
    %v5202 = vpop.f32.mrf.mxu0
    %v5203 = vadd.f32 0.0, %v5202
    %v5204 = vpop.f32.mrf.mxu0
    %v5205 = vpop.f32.mrf.mxu0
    %v5206 = vadd.f32 0.0, %v5205
    %v5207 = vpop.f32.mrf.mxu0
    %5208 = vmatprep.mubr.bf16.mxu0 0
    %5209 = vmatmul.mubr.bf16.gmra.mxu0 %v4856
    %v5210 = vpop.f32.mrf.mxu0
    %v5211 = vadd.f32 0.0, %v5210
    %v5212 = vpop.f32.mrf.mxu0
    %v5213 = vpop.f32.mrf.mxu0
    %v5214 = vadd.f32 0.0, %v5213
    %v5215 = vpop.f32.mrf.mxu0
    %5216 = vmatprep.mubr.bf16.mxu0 0
    %5217 = vmatmul.mubr.bf16.gmra.mxu0 %v4857
    %v5218 = vpop.f32.mrf.mxu0
    %v5219 = vadd.f32 0.0, %v5218
    %v5220 = vpop.f32.mrf.mxu0
    %v5221 = vpop.f32.mrf.mxu0
    %v5222 = vadd.f32 0.0, %v5221
    %v5223 = vpop.f32.mrf.mxu0
    %5224 = vmatprep.mubr.bf16.mxu0 0
    %5225 = vmatmul.mubr.bf16.gmra.mxu0 %v4858
    %v5226 = vpop.f32.mrf.mxu0
    %v5227 = vadd.f32 0.0, %v5226
    %v5228 = vpop.f32.mrf.mxu0
    %v5229 = vpop.f32.mrf.mxu0
    %v5230 = vadd.f32 0.0, %v5229
    %v5231 = vpop.f32.mrf.mxu0
    %5232 = vmatprep.mubr.bf16.mxu0 0
    %5233 = vmatmul.mubr.bf16.gmra.mxu0 %v4859
    %v5234 = vpop.f32.mrf.mxu0
    %v5235 = vadd.f32 0.0, %v5234
    %v5236 = vpop.f32.mrf.mxu0
    %v5237 = vpop.f32.mrf.mxu0
    %v5238 = vadd.f32 0.0, %v5237
    %v5239 = vpop.f32.mrf.mxu0
    %5240 = vmatprep.mubr.bf16.mxu0 0
    %5241 = vmatmul.mubr.bf16.gmra.mxu0 %v4860
    %v5242 = vpop.f32.mrf.mxu0
    %v5243 = vadd.f32 0.0, %v5242
    %v5244 = vpop.f32.mrf.mxu0
    %v5245 = vpop.f32.mrf.mxu0
    %v5246 = vadd.f32 0.0, %v5245
    %v5247 = vpop.f32.mrf.mxu0
    %5248 = vmatprep.mubr.bf16.mxu0 0
    %5249 = vmatmul.mubr.bf16.gmra.mxu0 %v4861
    %v5250 = vpop.f32.mrf.mxu0
    %v5251 = vadd.f32 0.0, %v5250
    %v5252 = vpop.f32.mrf.mxu0
    %v5253 = vpop.f32.mrf.mxu0
    %v5254 = vadd.f32 0.0, %v5253
    %v5255 = vpop.f32.mrf.mxu0
    %5256 = vdwg.mxu0
    %5265 = vrot.lane.b32.xlu0 %v1808, 96
    %v5266 = vpop.permute.xlu0 %5265
    %5267 = vrot.lane.b32.xlu0 %v1811, 96
    %v5268 = vpop.permute.xlu0 %5267
    %5269 = vrot.lane.b32.xlu0 %v1814, 96
    %v5270 = vpop.permute.xlu0 %5269
    %5271 = vrot.lane.b32.xlu0 %v1817, 96
    %v5272 = vpop.permute.xlu0 %5271
    %5273 = vrot.lane.b32.xlu0 %v1820, 96
    %v5274 = vpop.permute.xlu0 %5273
    %5275 = vrot.lane.b32.xlu0 %v1823, 96
    %v5276 = vpop.permute.xlu0 %5275
    %5277 = vrot.lane.b32.xlu0 %v1826, 96
    %v5278 = vpop.permute.xlu0 %5277
    %5279 = vrot.lane.b32.xlu0 %v1829, 96
    %v5280 = vpop.permute.xlu0 %5279
    %5289 = vmatprep.subr.bf16.mxu0 0
    %5290 = vmatpush1.bf16.msra.mxu0 %v5280
    %5291 = vmatprep.subr.bf16.mxu0 0
    %5292 = vmatpush1.bf16.msra.mxu0 %v5278
    %5293 = vmatprep.subr.bf16.mxu0 0
    %5294 = vmatpush1.bf16.msra.mxu0 %v5276
    %5295 = vmatprep.subr.bf16.mxu0 0
    %5296 = vmatpush1.bf16.msra.mxu0 %v5274
    %5297 = vmatprep.subr.bf16.mxu0 0
    %5298 = vmatpush1.bf16.msra.mxu0 %v5272
    %5299 = vmatprep.subr.bf16.mxu0 0
    %5300 = vmatpush1.bf16.msra.mxu0 %v5270
    %5301 = vmatprep.subr.bf16.mxu0 0
    %5302 = vmatpush1.bf16.msra.mxu0 %v5268
    %5303 = vmatprep.subr.bf16.mxu0 0
    %5304 = vmatpush1.bf16.msra.mxu0 %v5266
    %5305 = vmatprep.subr.bf16.mxu0 0
    %5306 = vmatpush2.bf16.msra.mxu0 0
    %5307 = vmatprep.subr.bf16.mxu0 0
    %5308 = vmatpush2.bf16.msra.mxu0 0
    %5309 = vmatprep.subr.bf16.mxu0 0
    %5310 = vmatpush2.bf16.msra.mxu0 0
    %5311 = vmatprep.subr.bf16.mxu0 0
    %5312 = vmatpush2.bf16.msra.mxu0 0
    %5313 = vmatprep.subr.bf16.mxu0 0
    %5314 = vmatpush2.bf16.msra.mxu0 0
    %5315 = vmatprep.subr.bf16.mxu0 0
    %5316 = vmatpush2.bf16.msra.mxu0 0
    %5317 = vmatprep.subr.bf16.mxu0 0
    %5318 = vmatpush2.bf16.msra.mxu0 0
    %5319 = vmatprep.subr.bf16.mxu0 0
    %5320 = vmatpush2.bf16.msra.mxu0 0
    %5321 = vmatprep.mubr.bf16.mxu0 0
    %5322 = vmatmul.mubr.bf16.gmra.mxu0 %v4862
    %v5323 = vpop.f32.mrf.mxu0
    %v5324 = vadd.f32 0.0, %v5323
    %v5325 = vpop.f32.mrf.mxu0
    %v5326 = vpop.f32.mrf.mxu0
    %v5327 = vadd.f32 0.0, %v5326
    %v5328 = vpop.f32.mrf.mxu0
    %5329 = vmatprep.mubr.bf16.mxu0 0
    %5330 = vmatmul.mubr.bf16.gmra.mxu0 %v4863
    %v5331 = vpop.f32.mrf.mxu0
    %v5332 = vadd.f32 0.0, %v5331
    %v5333 = vpop.f32.mrf.mxu0
    %v5334 = vpop.f32.mrf.mxu0
    %v5335 = vadd.f32 0.0, %v5334
    %v5336 = vpop.f32.mrf.mxu0
    %5337 = vmatprep.mubr.bf16.mxu0 0
    %5338 = vmatmul.mubr.bf16.gmra.mxu0 %v4864
    %v5339 = vpop.f32.mrf.mxu0
    %v5340 = vadd.f32 0.0, %v5339
    %v5341 = vpop.f32.mrf.mxu0
    %v5342 = vpop.f32.mrf.mxu0
    %v5343 = vadd.f32 0.0, %v5342
    %v5344 = vpop.f32.mrf.mxu0
    %5345 = vmatprep.mubr.bf16.mxu0 0
    %5346 = vmatmul.mubr.bf16.gmra.mxu0 %v4865
    %v5347 = vpop.f32.mrf.mxu0
    %v5348 = vadd.f32 0.0, %v5347
    %v5349 = vpop.f32.mrf.mxu0
    %v5350 = vpop.f32.mrf.mxu0
    %v5351 = vadd.f32 0.0, %v5350
    %v5352 = vpop.f32.mrf.mxu0
    %5353 = vmatprep.mubr.bf16.mxu0 0
    %5354 = vmatmul.mubr.bf16.gmra.mxu0 %v4866
    %v5355 = vpop.f32.mrf.mxu0
    %v5356 = vadd.f32 0.0, %v5355
    %v5357 = vpop.f32.mrf.mxu0
    %v5358 = vpop.f32.mrf.mxu0
    %v5359 = vadd.f32 0.0, %v5358
    %v5360 = vpop.f32.mrf.mxu0
    %5361 = vmatprep.mubr.bf16.mxu0 0
    %5362 = vmatmul.mubr.bf16.gmra.mxu0 %v4867
    %v5363 = vpop.f32.mrf.mxu0
    %v5364 = vadd.f32 0.0, %v5363
    %v5365 = vpop.f32.mrf.mxu0
    %v5366 = vpop.f32.mrf.mxu0
    %v5367 = vadd.f32 0.0, %v5366
    %v5368 = vpop.f32.mrf.mxu0
    %5369 = vmatprep.mubr.bf16.mxu0 0
    %5370 = vmatmul.mubr.bf16.gmra.mxu0 %v4868
    %v5371 = vpop.f32.mrf.mxu0
    %v5372 = vadd.f32 0.0, %v5371
    %v5373 = vpop.f32.mrf.mxu0
    %v5374 = vpop.f32.mrf.mxu0
    %v5375 = vadd.f32 0.0, %v5374
    %v5376 = vpop.f32.mrf.mxu0
    %5377 = vmatprep.mubr.bf16.mxu0 0
    %5378 = vmatmul.mubr.bf16.gmra.mxu0 %v4869
    %v5379 = vpop.f32.mrf.mxu0
    %v5380 = vadd.f32 0.0, %v5379
    %v5381 = vpop.f32.mrf.mxu0
    %v5382 = vpop.f32.mrf.mxu0
    %v5383 = vadd.f32 0.0, %v5382
    %v5384 = vpop.f32.mrf.mxu0
    %5385 = vdwg.mxu0
    %v5386 = vpack.c.bf16 %v4940, %v4937
    %v5387 = vpack.c.bf16 %v4948, %v4945
    %v5388 = vpack.c.bf16 %v4956, %v4953
    %v5389 = vpack.c.bf16 %v4964, %v4961
    %v5390 = vpack.c.bf16 %v4972, %v4969
    %v5391 = vpack.c.bf16 %v4980, %v4977
    %v5392 = vpack.c.bf16 %v4988, %v4985
    %v5393 = vpack.c.bf16 %v4996, %v4993
    %v5394 = vpack.c.bf16 %v5069, %v5066
    %v5395 = vpack.c.bf16 %v5077, %v5074
    %v5396 = vpack.c.bf16 %v5085, %v5082
    %v5397 = vpack.c.bf16 %v5093, %v5090
    %v5398 = vpack.c.bf16 %v5101, %v5098
    %v5399 = vpack.c.bf16 %v5109, %v5106
    %v5400 = vpack.c.bf16 %v5117, %v5114
    %v5401 = vpack.c.bf16 %v5125, %v5122
    %v5402 = vpack.c.bf16 %v5198, %v5195
    %v5403 = vpack.c.bf16 %v5206, %v5203
    %v5404 = vpack.c.bf16 %v5214, %v5211
    %v5405 = vpack.c.bf16 %v5222, %v5219
    %v5406 = vpack.c.bf16 %v5230, %v5227
    %v5407 = vpack.c.bf16 %v5238, %v5235
    %v5408 = vpack.c.bf16 %v5246, %v5243
    %v5409 = vpack.c.bf16 %v5254, %v5251
    %v5410 = vpack.c.bf16 %v5327, %v5324
    %v5411 = vpack.c.bf16 %v5335, %v5332
    %v5412 = vpack.c.bf16 %v5343, %v5340
    %v5413 = vpack.c.bf16 %v5351, %v5348
    %v5414 = vpack.c.bf16 %v5359, %v5356
    %v5415 = vpack.c.bf16 %v5367, %v5364
    %v5416 = vpack.c.bf16 %v5375, %v5372
    %v5417 = vpack.c.bf16 %v5383, %v5380
    %5418 = vrot.lane.b32.xlu0 %v1734, 64
    %v5419 = vpop.permute.xlu0 %5418
    %5420 = vrot.lane.b32.xlu0 %v1737, 64
    %v5421 = vpop.permute.xlu0 %5420
    %5422 = vrot.lane.b32.xlu0 %v1740, 64
    %v5423 = vpop.permute.xlu0 %5422
    %5424 = vrot.lane.b32.xlu0 %v1743, 64
    %v5425 = vpop.permute.xlu0 %5424
    %5426 = vrot.lane.b32.xlu0 %v1746, 64
    %v5427 = vpop.permute.xlu0 %5426
    %5428 = vrot.lane.b32.xlu0 %v1749, 64
    %v5429 = vpop.permute.xlu0 %5428
    %5430 = vrot.lane.b32.xlu0 %v1752, 64
    %v5431 = vpop.permute.xlu0 %5430
    %5432 = vrot.lane.b32.xlu0 %v1755, 64
    %v5433 = vpop.permute.xlu0 %5432
    %5434 = vrot.lane.b32.xlu0 %v1735, 64
    %v5435 = vpop.permute.xlu0 %5434
    %5436 = vrot.lane.b32.xlu0 %v1738, 64
    %v5437 = vpop.permute.xlu0 %5436
    %5438 = vrot.lane.b32.xlu0 %v1741, 64
    %v5439 = vpop.permute.xlu0 %5438
    %5440 = vrot.lane.b32.xlu0 %v1744, 64
    %v5441 = vpop.permute.xlu0 %5440
    %5442 = vrot.lane.b32.xlu0 %v1747, 64
    %v5443 = vpop.permute.xlu0 %5442
    %5444 = vrot.lane.b32.xlu0 %v1750, 64
    %v5445 = vpop.permute.xlu0 %5444
    %5446 = vrot.lane.b32.xlu0 %v1753, 64
    %v5447 = vpop.permute.xlu0 %5446
    %5448 = vrot.lane.b32.xlu0 %v1756, 64
    %v5449 = vpop.permute.xlu0 %5448
    %v5451 = vsel %vm1881, %v5419, 0
    %v5454 = vsel %vm1881, %v5421, 0
    %v5457 = vsel %vm1881, %v5423, 0
    %v5460 = vsel %vm1881, %v5425, 0
    %v5463 = vsel %vm1881, %v5427, 0
    %v5466 = vsel %vm1881, %v5429, 0
    %v5469 = vsel %vm1881, %v5431, 0
    %v5472 = vsel %vm1881, %v5433, 0
    %v5475 = vsel %vm1881, %v5435, 0
    %v5478 = vsel %vm1881, %v5437, 0
    %v5481 = vsel %vm1881, %v5439, 0
    %v5484 = vsel %vm1881, %v5441, 0
    %v5487 = vsel %vm1881, %v5443, 0
    %v5490 = vsel %vm1881, %v5445, 0
    %v5493 = vsel %vm1881, %v5447, 0
    %v5496 = vsel %vm1881, %v5449, 0
    %5498 = vmatprep.subr.bf16.mxu0 0
    %5499 = vmatpush1.bf16.xpose.msra.mxu0 %v5496
    %5500 = vmatprep.subr.bf16.mxu0 0
    %5501 = vmatpush1.bf16.xpose.msra.mxu0 %v5493
    %5502 = vmatprep.subr.bf16.mxu0 0
    %5503 = vmatpush1.bf16.xpose.msra.mxu0 %v5490
    %5504 = vmatprep.subr.bf16.mxu0 0
    %5505 = vmatpush1.bf16.xpose.msra.mxu0 %v5487
    %5506 = vmatprep.subr.bf16.mxu0 0
    %5507 = vmatpush1.bf16.xpose.msra.mxu0 %v5484
    %5508 = vmatprep.subr.bf16.mxu0 0
    %5509 = vmatpush1.bf16.xpose.msra.mxu0 %v5481
    %5510 = vmatprep.subr.bf16.mxu0 0
    %5511 = vmatpush1.bf16.xpose.msra.mxu0 %v5478
    %5512 = vmatprep.subr.bf16.mxu0 0
    %5513 = vmatpush1.bf16.xpose.msra.mxu0 %v5475
    %5514 = vmatprep.subr.bf16.mxu0 0
    %5515 = vmatpush2.bf16.xpose.msra.mxu0 0
    %5516 = vmatprep.subr.bf16.mxu0 0
    %5517 = vmatpush2.bf16.xpose.msra.mxu0 0
    %5518 = vmatprep.subr.bf16.mxu0 0
    %5519 = vmatpush2.bf16.xpose.msra.mxu0 0
    %5520 = vmatprep.subr.bf16.mxu0 0
    %5521 = vmatpush2.bf16.xpose.msra.mxu0 0
    %5522 = vmatprep.subr.bf16.mxu0 0
    %5523 = vmatpush2.bf16.xpose.msra.mxu0 0
    %5524 = vmatprep.subr.bf16.mxu0 0
    %5525 = vmatpush2.bf16.xpose.msra.mxu0 0
    %5526 = vmatprep.subr.bf16.mxu0 0
    %5527 = vmatpush2.bf16.xpose.msra.mxu0 0
    %5528 = vmatprep.subr.bf16.mxu0 0
    %5529 = vmatpush2.bf16.xpose.msra.mxu0 0
    %5530 = vmatprep.mubr.bf16.mxu0 0
    %5531 = vmatmul.mubr.bf16.gmra.mxu0 %v5451
    %v5532 = vpop.f32.mrf.mxu0
    %v5533 = vadd.f32 %v1865, %v5532
    %v5534 = vpop.f32.mrf.mxu0
    %v5535 = vpop.f32.mrf.mxu0
    %v5536 = vadd.f32 %v1866, %v5535
    %v5537 = vpop.f32.mrf.mxu0
    %5538 = vmatprep.mubr.bf16.mxu0 0
    %5539 = vmatmul.mubr.bf16.gmra.mxu0 %v5454
    %v5540 = vpop.f32.mrf.mxu0
    %v5541 = vadd.f32 %v1867, %v5540
    %v5542 = vpop.f32.mrf.mxu0
    %v5543 = vpop.f32.mrf.mxu0
    %v5544 = vadd.f32 %v1868, %v5543
    %v5545 = vpop.f32.mrf.mxu0
    %5546 = vmatprep.mubr.bf16.mxu0 0
    %5547 = vmatmul.mubr.bf16.gmra.mxu0 %v5457
    %v5548 = vpop.f32.mrf.mxu0
    %v5549 = vadd.f32 %v1869, %v5548
    %v5550 = vpop.f32.mrf.mxu0
    %v5551 = vpop.f32.mrf.mxu0
    %v5552 = vadd.f32 %v1870, %v5551
    %v5553 = vpop.f32.mrf.mxu0
    %5554 = vmatprep.mubr.bf16.mxu0 0
    %5555 = vmatmul.mubr.bf16.gmra.mxu0 %v5460
    %v5556 = vpop.f32.mrf.mxu0
    %v5557 = vadd.f32 %v1871, %v5556
    %v5558 = vpop.f32.mrf.mxu0
    %v5559 = vpop.f32.mrf.mxu0
    %v5560 = vadd.f32 %v1872, %v5559
    %v5561 = vpop.f32.mrf.mxu0
    %5562 = vmatprep.mubr.bf16.mxu0 0
    %5563 = vmatmul.mubr.bf16.gmra.mxu0 %v5463
    %v5564 = vpop.f32.mrf.mxu0
    %v5565 = vadd.f32 %v1873, %v5564
    %v5566 = vpop.f32.mrf.mxu0
    %v5567 = vpop.f32.mrf.mxu0
    %v5568 = vadd.f32 %v1874, %v5567
    %v5569 = vpop.f32.mrf.mxu0
    %5570 = vmatprep.mubr.bf16.mxu0 0
    %5571 = vmatmul.mubr.bf16.gmra.mxu0 %v5466
    %v5572 = vpop.f32.mrf.mxu0
    %v5573 = vadd.f32 %v1875, %v5572
    %v5574 = vpop.f32.mrf.mxu0
    %v5575 = vpop.f32.mrf.mxu0
    %v5576 = vadd.f32 %v1876, %v5575
    %v5577 = vpop.f32.mrf.mxu0
    %5578 = vmatprep.mubr.bf16.mxu0 0
    %5579 = vmatmul.mubr.bf16.gmra.mxu0 %v5469
    %v5580 = vpop.f32.mrf.mxu0
    %v5581 = vadd.f32 %v1877, %v5580
    %v5582 = vpop.f32.mrf.mxu0
    %v5583 = vpop.f32.mrf.mxu0
    %v5584 = vadd.f32 %v1878, %v5583
    %v5585 = vpop.f32.mrf.mxu0
    %5586 = vmatprep.mubr.bf16.mxu0 0
    %5587 = vmatmul.mubr.bf16.gmra.mxu0 %v5472
    %v5588 = vpop.f32.mrf.mxu0
    %v5589 = vadd.f32 %v1879, %v5588
    %v5590 = vpop.f32.mrf.mxu0
    %v5591 = vpop.f32.mrf.mxu0
    %v5592 = vadd.f32 %v1880, %v5591
    %v5593 = vpop.f32.mrf.mxu0
    %5594 = vdwg.mxu0
    %5595 = vrot.lane.b32.xlu0 %v1758, 64
    %v5596 = vpop.permute.xlu0 %5595
    %5597 = vrot.lane.b32.xlu0 %v1761, 64
    %v5598 = vpop.permute.xlu0 %5597
    %5599 = vrot.lane.b32.xlu0 %v1764, 64
    %v5600 = vpop.permute.xlu0 %5599
    %5601 = vrot.lane.b32.xlu0 %v1767, 64
    %v5602 = vpop.permute.xlu0 %5601
    %5603 = vrot.lane.b32.xlu0 %v1770, 64
    %v5604 = vpop.permute.xlu0 %5603
    %5605 = vrot.lane.b32.xlu0 %v1773, 64
    %v5606 = vpop.permute.xlu0 %5605
    %5607 = vrot.lane.b32.xlu0 %v1776, 64
    %v5608 = vpop.permute.xlu0 %5607
    %5609 = vrot.lane.b32.xlu0 %v1779, 64
    %v5610 = vpop.permute.xlu0 %5609
    %5611 = vrot.lane.b32.xlu0 %v1759, 64
    %v5612 = vpop.permute.xlu0 %5611
    %5613 = vrot.lane.b32.xlu0 %v1762, 64
    %v5614 = vpop.permute.xlu0 %5613
    %5615 = vrot.lane.b32.xlu0 %v1765, 64
    %v5616 = vpop.permute.xlu0 %5615
    %5617 = vrot.lane.b32.xlu0 %v1768, 64
    %v5618 = vpop.permute.xlu0 %5617
    %5619 = vrot.lane.b32.xlu0 %v1771, 64
    %v5620 = vpop.permute.xlu0 %5619
    %5621 = vrot.lane.b32.xlu0 %v1774, 64
    %v5622 = vpop.permute.xlu0 %5621
    %5623 = vrot.lane.b32.xlu0 %v1777, 64
    %v5624 = vpop.permute.xlu0 %5623
    %5625 = vrot.lane.b32.xlu0 %v1780, 64
    %v5626 = vpop.permute.xlu0 %5625
    %v5628 = vsel %vm1881, %v5596, 0
    %v5631 = vsel %vm1881, %v5598, 0
    %v5634 = vsel %vm1881, %v5600, 0
    %v5637 = vsel %vm1881, %v5602, 0
    %v5640 = vsel %vm1881, %v5604, 0
    %v5643 = vsel %vm1881, %v5606, 0
    %v5646 = vsel %vm1881, %v5608, 0
    %v5649 = vsel %vm1881, %v5610, 0
    %v5652 = vsel %vm1881, %v5612, 0
    %v5655 = vsel %vm1881, %v5614, 0
    %v5658 = vsel %vm1881, %v5616, 0
    %v5661 = vsel %vm1881, %v5618, 0
    %v5664 = vsel %vm1881, %v5620, 0
    %v5667 = vsel %vm1881, %v5622, 0
    %v5670 = vsel %vm1881, %v5624, 0
    %v5673 = vsel %vm1881, %v5626, 0
    %5675 = vmatprep.subr.bf16.mxu0 0
    %5676 = vmatpush1.bf16.xpose.msra.mxu0 %v5673
    %5677 = vmatprep.subr.bf16.mxu0 0
    %5678 = vmatpush1.bf16.xpose.msra.mxu0 %v5670
    %5679 = vmatprep.subr.bf16.mxu0 0
    %5680 = vmatpush1.bf16.xpose.msra.mxu0 %v5667
    %5681 = vmatprep.subr.bf16.mxu0 0
    %5682 = vmatpush1.bf16.xpose.msra.mxu0 %v5664
    %5683 = vmatprep.subr.bf16.mxu0 0
    %5684 = vmatpush1.bf16.xpose.msra.mxu0 %v5661
    %5685 = vmatprep.subr.bf16.mxu0 0
    %5686 = vmatpush1.bf16.xpose.msra.mxu0 %v5658
    %5687 = vmatprep.subr.bf16.mxu0 0
    %5688 = vmatpush1.bf16.xpose.msra.mxu0 %v5655
    %5689 = vmatprep.subr.bf16.mxu0 0
    %5690 = vmatpush1.bf16.xpose.msra.mxu0 %v5652
    %5691 = vmatprep.subr.bf16.mxu0 0
    %5692 = vmatpush2.bf16.xpose.msra.mxu0 0
    %5693 = vmatprep.subr.bf16.mxu0 0
    %5694 = vmatpush2.bf16.xpose.msra.mxu0 0
    %5695 = vmatprep.subr.bf16.mxu0 0
    %5696 = vmatpush2.bf16.xpose.msra.mxu0 0
    %5697 = vmatprep.subr.bf16.mxu0 0
    %5698 = vmatpush2.bf16.xpose.msra.mxu0 0
    %5699 = vmatprep.subr.bf16.mxu0 0
    %5700 = vmatpush2.bf16.xpose.msra.mxu0 0
    %5701 = vmatprep.subr.bf16.mxu0 0
    %5702 = vmatpush2.bf16.xpose.msra.mxu0 0
    %5703 = vmatprep.subr.bf16.mxu0 0
    %5704 = vmatpush2.bf16.xpose.msra.mxu0 0
    %5705 = vmatprep.subr.bf16.mxu0 0
    %5706 = vmatpush2.bf16.xpose.msra.mxu0 0
    %5707 = vmatprep.mubr.bf16.mxu0 0
    %5708 = vmatmul.mubr.bf16.gmra.mxu0 %v5628
    %v5709 = vpop.f32.mrf.mxu0
    %v5710 = vadd.f32 %v1865, %v5709
    %v5711 = vpop.f32.mrf.mxu0
    %v5712 = vpop.f32.mrf.mxu0
    %v5713 = vadd.f32 %v1866, %v5712
    %v5714 = vpop.f32.mrf.mxu0
    %5715 = vmatprep.mubr.bf16.mxu0 0
    %5716 = vmatmul.mubr.bf16.gmra.mxu0 %v5631
    %v5717 = vpop.f32.mrf.mxu0
    %v5718 = vadd.f32 %v1867, %v5717
    %v5719 = vpop.f32.mrf.mxu0
    %v5720 = vpop.f32.mrf.mxu0
    %v5721 = vadd.f32 %v1868, %v5720
    %v5722 = vpop.f32.mrf.mxu0
    %5723 = vmatprep.mubr.bf16.mxu0 0
    %5724 = vmatmul.mubr.bf16.gmra.mxu0 %v5634
    %v5725 = vpop.f32.mrf.mxu0
    %v5726 = vadd.f32 %v1869, %v5725
    %v5727 = vpop.f32.mrf.mxu0
    %v5728 = vpop.f32.mrf.mxu0
    %v5729 = vadd.f32 %v1870, %v5728
    %v5730 = vpop.f32.mrf.mxu0
    %5731 = vmatprep.mubr.bf16.mxu0 0
    %5732 = vmatmul.mubr.bf16.gmra.mxu0 %v5637
    %v5733 = vpop.f32.mrf.mxu0
    %v5734 = vadd.f32 %v1871, %v5733
    %v5735 = vpop.f32.mrf.mxu0
    %v5736 = vpop.f32.mrf.mxu0
    %v5737 = vadd.f32 %v1872, %v5736
    %v5738 = vpop.f32.mrf.mxu0
    %5739 = vmatprep.mubr.bf16.mxu0 0
    %5740 = vmatmul.mubr.bf16.gmra.mxu0 %v5640
    %v5741 = vpop.f32.mrf.mxu0
    %v5742 = vadd.f32 %v1873, %v5741
    %v5743 = vpop.f32.mrf.mxu0
    %v5744 = vpop.f32.mrf.mxu0
    %v5745 = vadd.f32 %v1874, %v5744
    %v5746 = vpop.f32.mrf.mxu0
    %5747 = vmatprep.mubr.bf16.mxu0 0
    %5748 = vmatmul.mubr.bf16.gmra.mxu0 %v5643
    %v5749 = vpop.f32.mrf.mxu0
    %v5750 = vadd.f32 %v1875, %v5749
    %v5751 = vpop.f32.mrf.mxu0
    %v5752 = vpop.f32.mrf.mxu0
    %v5753 = vadd.f32 %v1876, %v5752
    %v5754 = vpop.f32.mrf.mxu0
    %5755 = vmatprep.mubr.bf16.mxu0 0
    %5756 = vmatmul.mubr.bf16.gmra.mxu0 %v5646
    %v5757 = vpop.f32.mrf.mxu0
    %v5758 = vadd.f32 %v1877, %v5757
    %v5759 = vpop.f32.mrf.mxu0
    %v5760 = vpop.f32.mrf.mxu0
    %v5761 = vadd.f32 %v1878, %v5760
    %v5762 = vpop.f32.mrf.mxu0
    %5763 = vmatprep.mubr.bf16.mxu0 0
    %5764 = vmatmul.mubr.bf16.gmra.mxu0 %v5649
    %v5765 = vpop.f32.mrf.mxu0
    %v5766 = vadd.f32 %v1879, %v5765
    %v5767 = vpop.f32.mrf.mxu0
    %v5768 = vpop.f32.mrf.mxu0
    %v5769 = vadd.f32 %v1880, %v5768
    %v5770 = vpop.f32.mrf.mxu0
    %5771 = vdwg.mxu0
    %5772 = vrot.lane.b32.xlu0 %v1782, 64
    %v5773 = vpop.permute.xlu0 %5772
    %5774 = vrot.lane.b32.xlu0 %v1785, 64
    %v5775 = vpop.permute.xlu0 %5774
    %5776 = vrot.lane.b32.xlu0 %v1788, 64
    %v5777 = vpop.permute.xlu0 %5776
    %5778 = vrot.lane.b32.xlu0 %v1791, 64
    %v5779 = vpop.permute.xlu0 %5778
    %5780 = vrot.lane.b32.xlu0 %v1794, 64
    %v5781 = vpop.permute.xlu0 %5780
    %5782 = vrot.lane.b32.xlu0 %v1797, 64
    %v5783 = vpop.permute.xlu0 %5782
    %5784 = vrot.lane.b32.xlu0 %v1800, 64
    %v5785 = vpop.permute.xlu0 %5784
    %5786 = vrot.lane.b32.xlu0 %v1803, 64
    %v5787 = vpop.permute.xlu0 %5786
    %5788 = vrot.lane.b32.xlu0 %v1783, 64
    %v5789 = vpop.permute.xlu0 %5788
    %5790 = vrot.lane.b32.xlu0 %v1786, 64
    %v5791 = vpop.permute.xlu0 %5790
    %5792 = vrot.lane.b32.xlu0 %v1789, 64
    %v5793 = vpop.permute.xlu0 %5792
    %5794 = vrot.lane.b32.xlu0 %v1792, 64
    %v5795 = vpop.permute.xlu0 %5794
    %5796 = vrot.lane.b32.xlu0 %v1795, 64
    %v5797 = vpop.permute.xlu0 %5796
    %5798 = vrot.lane.b32.xlu0 %v1798, 64
    %v5799 = vpop.permute.xlu0 %5798
    %5800 = vrot.lane.b32.xlu0 %v1801, 64
    %v5801 = vpop.permute.xlu0 %5800
    %5802 = vrot.lane.b32.xlu0 %v1804, 64
    %v5803 = vpop.permute.xlu0 %5802
    %v5805 = vsel %vm1881, %v5773, 0
    %v5808 = vsel %vm1881, %v5775, 0
    %v5811 = vsel %vm1881, %v5777, 0
    %v5814 = vsel %vm1881, %v5779, 0
    %v5817 = vsel %vm1881, %v5781, 0
    %v5820 = vsel %vm1881, %v5783, 0
    %v5823 = vsel %vm1881, %v5785, 0
    %v5826 = vsel %vm1881, %v5787, 0
    %v5829 = vsel %vm1881, %v5789, 0
    %v5832 = vsel %vm1881, %v5791, 0
    %v5835 = vsel %vm1881, %v5793, 0
    %v5838 = vsel %vm1881, %v5795, 0
    %v5841 = vsel %vm1881, %v5797, 0
    %v5844 = vsel %vm1881, %v5799, 0
    %v5847 = vsel %vm1881, %v5801, 0
    %v5850 = vsel %vm1881, %v5803, 0
    %5852 = vmatprep.subr.bf16.mxu0 0
    %5853 = vmatpush1.bf16.xpose.msra.mxu0 %v5850
    %5854 = vmatprep.subr.bf16.mxu0 0
    %5855 = vmatpush1.bf16.xpose.msra.mxu0 %v5847
    %5856 = vmatprep.subr.bf16.mxu0 0
    %5857 = vmatpush1.bf16.xpose.msra.mxu0 %v5844
    %5858 = vmatprep.subr.bf16.mxu0 0
    %5859 = vmatpush1.bf16.xpose.msra.mxu0 %v5841
    %5860 = vmatprep.subr.bf16.mxu0 0
    %5861 = vmatpush1.bf16.xpose.msra.mxu0 %v5838
    %5862 = vmatprep.subr.bf16.mxu0 0
    %5863 = vmatpush1.bf16.xpose.msra.mxu0 %v5835
    %5864 = vmatprep.subr.bf16.mxu0 0
    %5865 = vmatpush1.bf16.xpose.msra.mxu0 %v5832
    %5866 = vmatprep.subr.bf16.mxu0 0
    %5867 = vmatpush1.bf16.xpose.msra.mxu0 %v5829
    %5868 = vmatprep.subr.bf16.mxu0 0
    %5869 = vmatpush2.bf16.xpose.msra.mxu0 0
    %5870 = vmatprep.subr.bf16.mxu0 0
    %5871 = vmatpush2.bf16.xpose.msra.mxu0 0
    %5872 = vmatprep.subr.bf16.mxu0 0
    %5873 = vmatpush2.bf16.xpose.msra.mxu0 0
    %5874 = vmatprep.subr.bf16.mxu0 0
    %5875 = vmatpush2.bf16.xpose.msra.mxu0 0
    %5876 = vmatprep.subr.bf16.mxu0 0
    %5877 = vmatpush2.bf16.xpose.msra.mxu0 0
    %5878 = vmatprep.subr.bf16.mxu0 0
    %5879 = vmatpush2.bf16.xpose.msra.mxu0 0
    %5880 = vmatprep.subr.bf16.mxu0 0
    %5881 = vmatpush2.bf16.xpose.msra.mxu0 0
    %5882 = vmatprep.subr.bf16.mxu0 0
    %5883 = vmatpush2.bf16.xpose.msra.mxu0 0
    %5884 = vmatprep.mubr.bf16.mxu0 0
    %5885 = vmatmul.mubr.bf16.gmra.mxu0 %v5805
    %v5886 = vpop.f32.mrf.mxu0
    %v5887 = vadd.f32 %v1865, %v5886
    %v5888 = vpop.f32.mrf.mxu0
    %v5889 = vpop.f32.mrf.mxu0
    %v5890 = vadd.f32 %v1866, %v5889
    %v5891 = vpop.f32.mrf.mxu0
    %5892 = vmatprep.mubr.bf16.mxu0 0
    %5893 = vmatmul.mubr.bf16.gmra.mxu0 %v5808
    %v5894 = vpop.f32.mrf.mxu0
    %v5895 = vadd.f32 %v1867, %v5894
    %v5896 = vpop.f32.mrf.mxu0
    %v5897 = vpop.f32.mrf.mxu0
    %v5898 = vadd.f32 %v1868, %v5897
    %v5899 = vpop.f32.mrf.mxu0
    %5900 = vmatprep.mubr.bf16.mxu0 0
    %5901 = vmatmul.mubr.bf16.gmra.mxu0 %v5811
    %v5902 = vpop.f32.mrf.mxu0
    %v5903 = vadd.f32 %v1869, %v5902
    %v5904 = vpop.f32.mrf.mxu0
    %v5905 = vpop.f32.mrf.mxu0
    %v5906 = vadd.f32 %v1870, %v5905
    %v5907 = vpop.f32.mrf.mxu0
    %5908 = vmatprep.mubr.bf16.mxu0 0
    %5909 = vmatmul.mubr.bf16.gmra.mxu0 %v5814
    %v5910 = vpop.f32.mrf.mxu0
    %v5911 = vadd.f32 %v1871, %v5910
    %v5912 = vpop.f32.mrf.mxu0
    %v5913 = vpop.f32.mrf.mxu0
    %v5914 = vadd.f32 %v1872, %v5913
    %v5915 = vpop.f32.mrf.mxu0
    %5916 = vmatprep.mubr.bf16.mxu0 0
    %5917 = vmatmul.mubr.bf16.gmra.mxu0 %v5817
    %v5918 = vpop.f32.mrf.mxu0
    %v5919 = vadd.f32 %v1873, %v5918
    %v5920 = vpop.f32.mrf.mxu0
    %v5921 = vpop.f32.mrf.mxu0
    %v5922 = vadd.f32 %v1874, %v5921
    %v5923 = vpop.f32.mrf.mxu0
    %5924 = vmatprep.mubr.bf16.mxu0 0
    %5925 = vmatmul.mubr.bf16.gmra.mxu0 %v5820
    %v5926 = vpop.f32.mrf.mxu0
    %v5927 = vadd.f32 %v1875, %v5926
    %v5928 = vpop.f32.mrf.mxu0
    %v5929 = vpop.f32.mrf.mxu0
    %v5930 = vadd.f32 %v1876, %v5929
    %v5931 = vpop.f32.mrf.mxu0
    %5932 = vmatprep.mubr.bf16.mxu0 0
    %5933 = vmatmul.mubr.bf16.gmra.mxu0 %v5823
    %v5934 = vpop.f32.mrf.mxu0
    %v5935 = vadd.f32 %v1877, %v5934
    %v5936 = vpop.f32.mrf.mxu0
    %v5937 = vpop.f32.mrf.mxu0
    %v5938 = vadd.f32 %v1878, %v5937
    %v5939 = vpop.f32.mrf.mxu0
    %5940 = vmatprep.mubr.bf16.mxu0 0
    %5941 = vmatmul.mubr.bf16.gmra.mxu0 %v5826
    %v5942 = vpop.f32.mrf.mxu0
    %v5943 = vadd.f32 %v1879, %v5942
    %v5944 = vpop.f32.mrf.mxu0
    %v5945 = vpop.f32.mrf.mxu0
    %v5946 = vadd.f32 %v1880, %v5945
    %v5947 = vpop.f32.mrf.mxu0
    %5948 = vdwg.mxu0
    %5949 = vrot.lane.b32.xlu0 %v1806, 64
    %v5950 = vpop.permute.xlu0 %5949
    %5951 = vrot.lane.b32.xlu0 %v1809, 64
    %v5952 = vpop.permute.xlu0 %5951
    %5953 = vrot.lane.b32.xlu0 %v1812, 64
    %v5954 = vpop.permute.xlu0 %5953
    %5955 = vrot.lane.b32.xlu0 %v1815, 64
    %v5956 = vpop.permute.xlu0 %5955
    %5957 = vrot.lane.b32.xlu0 %v1818, 64
    %v5958 = vpop.permute.xlu0 %5957
    %5959 = vrot.lane.b32.xlu0 %v1821, 64
    %v5960 = vpop.permute.xlu0 %5959
    %5961 = vrot.lane.b32.xlu0 %v1824, 64
    %v5962 = vpop.permute.xlu0 %5961
    %5963 = vrot.lane.b32.xlu0 %v1827, 64
    %v5964 = vpop.permute.xlu0 %5963
    %5965 = vrot.lane.b32.xlu0 %v1807, 64
    %v5966 = vpop.permute.xlu0 %5965
    %5967 = vrot.lane.b32.xlu0 %v1810, 64
    %v5968 = vpop.permute.xlu0 %5967
    %5969 = vrot.lane.b32.xlu0 %v1813, 64
    %v5970 = vpop.permute.xlu0 %5969
    %5971 = vrot.lane.b32.xlu0 %v1816, 64
    %v5972 = vpop.permute.xlu0 %5971
    %5973 = vrot.lane.b32.xlu0 %v1819, 64
    %v5974 = vpop.permute.xlu0 %5973
    %5975 = vrot.lane.b32.xlu0 %v1822, 64
    %v5976 = vpop.permute.xlu0 %5975
    %5977 = vrot.lane.b32.xlu0 %v1825, 64
    %v5978 = vpop.permute.xlu0 %5977
    %5979 = vrot.lane.b32.xlu0 %v1828, 64
    %v5980 = vpop.permute.xlu0 %5979
    %v5982 = vsel %vm1881, %v5950, 0
    %v5985 = vsel %vm1881, %v5952, 0
    %v5988 = vsel %vm1881, %v5954, 0
    %v5991 = vsel %vm1881, %v5956, 0
    %v5994 = vsel %vm1881, %v5958, 0
    %v5997 = vsel %vm1881, %v5960, 0
    %v6000 = vsel %vm1881, %v5962, 0
    %v6003 = vsel %vm1881, %v5964, 0
    %v6006 = vsel %vm1881, %v5966, 0
    %v6009 = vsel %vm1881, %v5968, 0
    %v6012 = vsel %vm1881, %v5970, 0
    %v6015 = vsel %vm1881, %v5972, 0
    %v6018 = vsel %vm1881, %v5974, 0
    %v6021 = vsel %vm1881, %v5976, 0
    %v6024 = vsel %vm1881, %v5978, 0
    %v6027 = vsel %vm1881, %v5980, 0
    %6029 = vmatprep.subr.bf16.mxu0 0
    %6030 = vmatpush1.bf16.xpose.msra.mxu0 %v6027
    %6031 = vmatprep.subr.bf16.mxu0 0
    %6032 = vmatpush1.bf16.xpose.msra.mxu0 %v6024
    %6033 = vmatprep.subr.bf16.mxu0 0
    %6034 = vmatpush1.bf16.xpose.msra.mxu0 %v6021
    %6035 = vmatprep.subr.bf16.mxu0 0
    %6036 = vmatpush1.bf16.xpose.msra.mxu0 %v6018
    %6037 = vmatprep.subr.bf16.mxu0 0
    %6038 = vmatpush1.bf16.xpose.msra.mxu0 %v6015
    %6039 = vmatprep.subr.bf16.mxu0 0
    %6040 = vmatpush1.bf16.xpose.msra.mxu0 %v6012
    %6041 = vmatprep.subr.bf16.mxu0 0
    %6042 = vmatpush1.bf16.xpose.msra.mxu0 %v6009
    %6043 = vmatprep.subr.bf16.mxu0 0
    %6044 = vmatpush1.bf16.xpose.msra.mxu0 %v6006
    %6045 = vmatprep.subr.bf16.mxu0 0
    %6046 = vmatpush2.bf16.xpose.msra.mxu0 0
    %6047 = vmatprep.subr.bf16.mxu0 0
    %6048 = vmatpush2.bf16.xpose.msra.mxu0 0
    %6049 = vmatprep.subr.bf16.mxu0 0
    %6050 = vmatpush2.bf16.xpose.msra.mxu0 0
    %6051 = vmatprep.subr.bf16.mxu0 0
    %6052 = vmatpush2.bf16.xpose.msra.mxu0 0
    %6053 = vmatprep.subr.bf16.mxu0 0
    %6054 = vmatpush2.bf16.xpose.msra.mxu0 0
    %6055 = vmatprep.subr.bf16.mxu0 0
    %6056 = vmatpush2.bf16.xpose.msra.mxu0 0
    %6057 = vmatprep.subr.bf16.mxu0 0
    %6058 = vmatpush2.bf16.xpose.msra.mxu0 0
    %6059 = vmatprep.subr.bf16.mxu0 0
    %6060 = vmatpush2.bf16.xpose.msra.mxu0 0
    %6061 = vmatprep.mubr.bf16.mxu0 0
    %6062 = vmatmul.mubr.bf16.gmra.mxu0 %v5982
    %v6063 = vpop.f32.mrf.mxu0
    %v6064 = vadd.f32 %v1865, %v6063
    %v6065 = vpop.f32.mrf.mxu0
    %v6066 = vpop.f32.mrf.mxu0
    %v6067 = vadd.f32 %v1866, %v6066
    %v6068 = vpop.f32.mrf.mxu0
    %6069 = vmatprep.mubr.bf16.mxu0 0
    %6070 = vmatmul.mubr.bf16.gmra.mxu0 %v5985
    %v6071 = vpop.f32.mrf.mxu0
    %v6072 = vadd.f32 %v1867, %v6071
    %v6073 = vpop.f32.mrf.mxu0
    %v6074 = vpop.f32.mrf.mxu0
    %v6075 = vadd.f32 %v1868, %v6074
    %v6076 = vpop.f32.mrf.mxu0
    %6077 = vmatprep.mubr.bf16.mxu0 0
    %6078 = vmatmul.mubr.bf16.gmra.mxu0 %v5988
    %v6079 = vpop.f32.mrf.mxu0
    %v6080 = vadd.f32 %v1869, %v6079
    %v6081 = vpop.f32.mrf.mxu0
    %v6082 = vpop.f32.mrf.mxu0
    %v6083 = vadd.f32 %v1870, %v6082
    %v6084 = vpop.f32.mrf.mxu0
    %6085 = vmatprep.mubr.bf16.mxu0 0
    %6086 = vmatmul.mubr.bf16.gmra.mxu0 %v5991
    %v6087 = vpop.f32.mrf.mxu0
    %v6088 = vadd.f32 %v1871, %v6087
    %v6089 = vpop.f32.mrf.mxu0
    %v6090 = vpop.f32.mrf.mxu0
    %v6091 = vadd.f32 %v1872, %v6090
    %v6092 = vpop.f32.mrf.mxu0
    %6093 = vmatprep.mubr.bf16.mxu0 0
    %6094 = vmatmul.mubr.bf16.gmra.mxu0 %v5994
    %v6095 = vpop.f32.mrf.mxu0
    %v6096 = vadd.f32 %v1873, %v6095
    %v6097 = vpop.f32.mrf.mxu0
    %v6098 = vpop.f32.mrf.mxu0
    %v6099 = vadd.f32 %v1874, %v6098
    %v6100 = vpop.f32.mrf.mxu0
    %6101 = vmatprep.mubr.bf16.mxu0 0
    %6102 = vmatmul.mubr.bf16.gmra.mxu0 %v5997
    %v6103 = vpop.f32.mrf.mxu0
    %v6104 = vadd.f32 %v1875, %v6103
    %v6105 = vpop.f32.mrf.mxu0
    %v6106 = vpop.f32.mrf.mxu0
    %v6107 = vadd.f32 %v1876, %v6106
    %v6108 = vpop.f32.mrf.mxu0
    %6109 = vmatprep.mubr.bf16.mxu0 0
    %6110 = vmatmul.mubr.bf16.gmra.mxu0 %v6000
    %v6111 = vpop.f32.mrf.mxu0
    %v6112 = vadd.f32 %v1877, %v6111
    %v6113 = vpop.f32.mrf.mxu0
    %v6114 = vpop.f32.mrf.mxu0
    %v6115 = vadd.f32 %v1878, %v6114
    %v6116 = vpop.f32.mrf.mxu0
    %6117 = vmatprep.mubr.bf16.mxu0 0
    %6118 = vmatmul.mubr.bf16.gmra.mxu0 %v6003
    %v6119 = vpop.f32.mrf.mxu0
    %v6120 = vadd.f32 %v1879, %v6119
    %v6121 = vpop.f32.mrf.mxu0
    %v6122 = vpop.f32.mrf.mxu0
    %v6123 = vadd.f32 %v1880, %v6122
    %v6124 = vpop.f32.mrf.mxu0
    %6125 = vdwg.mxu0
    %6126 = vmax.xlane.f32.xlu0 %v5533
    %v6127 = vpop.xlane.xlu0 %6126
    %6128 = vmax.xlane.f32.xlu0 %v5536
    %v6129 = vpop.xlane.xlu0 %6128
    %6130 = vmax.xlane.f32.xlu0 %v5541
    %v6131 = vpop.xlane.xlu0 %6130
    %6132 = vmax.xlane.f32.xlu0 %v5544
    %v6133 = vpop.xlane.xlu0 %6132
    %6134 = vmax.xlane.f32.xlu0 %v5549
    %v6135 = vpop.xlane.xlu0 %6134
    %6136 = vmax.xlane.f32.xlu0 %v5552
    %v6137 = vpop.xlane.xlu0 %6136
    %6138 = vmax.xlane.f32.xlu0 %v5557
    %v6139 = vpop.xlane.xlu0 %6138
    %6140 = vmax.xlane.f32.xlu0 %v5560
    %v6141 = vpop.xlane.xlu0 %6140
    %6142 = vmax.xlane.f32.xlu0 %v5565
    %v6143 = vpop.xlane.xlu0 %6142
    %6144 = vmax.xlane.f32.xlu0 %v5568
    %v6145 = vpop.xlane.xlu0 %6144
    %6146 = vmax.xlane.f32.xlu0 %v5573
    %v6147 = vpop.xlane.xlu0 %6146
    %6148 = vmax.xlane.f32.xlu0 %v5576
    %v6149 = vpop.xlane.xlu0 %6148
    %6150 = vmax.xlane.f32.xlu0 %v5581
    %v6151 = vpop.xlane.xlu0 %6150
    %6152 = vmax.xlane.f32.xlu0 %v5584
    %v6153 = vpop.xlane.xlu0 %6152
    %6154 = vmax.xlane.f32.xlu0 %v5589
    %v6155 = vpop.xlane.xlu0 %6154
    %6156 = vmax.xlane.f32.xlu0 %v5592
    %v6157 = vpop.xlane.xlu0 %6156
    %6158 = vmax.xlane.f32.xlu0 %v5710
    %v6159 = vpop.xlane.xlu0 %6158
    %6160 = vmax.xlane.f32.xlu0 %v5713
    %v6161 = vpop.xlane.xlu0 %6160
    %6162 = vmax.xlane.f32.xlu0 %v5718
    %v6163 = vpop.xlane.xlu0 %6162
    %6164 = vmax.xlane.f32.xlu0 %v5721
    %v6165 = vpop.xlane.xlu0 %6164
    %6166 = vmax.xlane.f32.xlu0 %v5726
    %v6167 = vpop.xlane.xlu0 %6166
    %6168 = vmax.xlane.f32.xlu0 %v5729
    %v6169 = vpop.xlane.xlu0 %6168
    %6170 = vmax.xlane.f32.xlu0 %v5734
    %v6171 = vpop.xlane.xlu0 %6170
    %6172 = vmax.xlane.f32.xlu0 %v5737
    %v6173 = vpop.xlane.xlu0 %6172
    %6174 = vmax.xlane.f32.xlu0 %v5742
    %v6175 = vpop.xlane.xlu0 %6174
    %6176 = vmax.xlane.f32.xlu0 %v5745
    %v6177 = vpop.xlane.xlu0 %6176
    %6178 = vmax.xlane.f32.xlu0 %v5750
    %v6179 = vpop.xlane.xlu0 %6178
    %6180 = vmax.xlane.f32.xlu0 %v5753
    %v6181 = vpop.xlane.xlu0 %6180
    %6182 = vmax.xlane.f32.xlu0 %v5758
    %v6183 = vpop.xlane.xlu0 %6182
    %6184 = vmax.xlane.f32.xlu0 %v5761
    %v6185 = vpop.xlane.xlu0 %6184
    %6186 = vmax.xlane.f32.xlu0 %v5766
    %v6187 = vpop.xlane.xlu0 %6186
    %6188 = vmax.xlane.f32.xlu0 %v5769
    %v6189 = vpop.xlane.xlu0 %6188
    %6190 = vmax.xlane.f32.xlu0 %v5887
    %v6191 = vpop.xlane.xlu0 %6190
    %6192 = vmax.xlane.f32.xlu0 %v5890
    %v6193 = vpop.xlane.xlu0 %6192
    %6194 = vmax.xlane.f32.xlu0 %v5895
    %v6195 = vpop.xlane.xlu0 %6194
    %6196 = vmax.xlane.f32.xlu0 %v5898
    %v6197 = vpop.xlane.xlu0 %6196
    %6198 = vmax.xlane.f32.xlu0 %v5903
    %v6199 = vpop.xlane.xlu0 %6198
    %6200 = vmax.xlane.f32.xlu0 %v5906
    %v6201 = vpop.xlane.xlu0 %6200
    %6202 = vmax.xlane.f32.xlu0 %v5911
    %v6203 = vpop.xlane.xlu0 %6202
    %6204 = vmax.xlane.f32.xlu0 %v5914
    %v6205 = vpop.xlane.xlu0 %6204
    %6206 = vmax.xlane.f32.xlu0 %v5919
    %v6207 = vpop.xlane.xlu0 %6206
    %6208 = vmax.xlane.f32.xlu0 %v5922
    %v6209 = vpop.xlane.xlu0 %6208
    %6210 = vmax.xlane.f32.xlu0 %v5927
    %v6211 = vpop.xlane.xlu0 %6210
    %6212 = vmax.xlane.f32.xlu0 %v5930
    %v6213 = vpop.xlane.xlu0 %6212
    %6214 = vmax.xlane.f32.xlu0 %v5935
    %v6215 = vpop.xlane.xlu0 %6214
    %6216 = vmax.xlane.f32.xlu0 %v5938
    %v6217 = vpop.xlane.xlu0 %6216
    %6218 = vmax.xlane.f32.xlu0 %v5943
    %v6219 = vpop.xlane.xlu0 %6218
    %6220 = vmax.xlane.f32.xlu0 %v5946
    %v6221 = vpop.xlane.xlu0 %6220
    %6222 = vmax.xlane.f32.xlu0 %v6064
    %v6223 = vpop.xlane.xlu0 %6222
    %6224 = vmax.xlane.f32.xlu0 %v6067
    %v6225 = vpop.xlane.xlu0 %6224
    %6226 = vmax.xlane.f32.xlu0 %v6072
    %v6227 = vpop.xlane.xlu0 %6226
    %6228 = vmax.xlane.f32.xlu0 %v6075
    %v6229 = vpop.xlane.xlu0 %6228
    %6230 = vmax.xlane.f32.xlu0 %v6080
    %v6231 = vpop.xlane.xlu0 %6230
    %6232 = vmax.xlane.f32.xlu0 %v6083
    %v6233 = vpop.xlane.xlu0 %6232
    %6234 = vmax.xlane.f32.xlu0 %v6088
    %v6235 = vpop.xlane.xlu0 %6234
    %6236 = vmax.xlane.f32.xlu0 %v6091
    %v6237 = vpop.xlane.xlu0 %6236
    %6238 = vmax.xlane.f32.xlu0 %v6096
    %v6239 = vpop.xlane.xlu0 %6238
    %6240 = vmax.xlane.f32.xlu0 %v6099
    %v6241 = vpop.xlane.xlu0 %6240
    %6242 = vmax.xlane.f32.xlu0 %v6104
    %v6243 = vpop.xlane.xlu0 %6242
    %6244 = vmax.xlane.f32.xlu0 %v6107
    %v6245 = vpop.xlane.xlu0 %6244
    %6246 = vmax.xlane.f32.xlu0 %v6112
    %v6247 = vpop.xlane.xlu0 %6246
    %6248 = vmax.xlane.f32.xlu0 %v6115
    %v6249 = vpop.xlane.xlu0 %6248
    %6250 = vmax.xlane.f32.xlu0 %v6120
    %v6251 = vpop.xlane.xlu0 %6250
    %6252 = vmax.xlane.f32.xlu0 %v6123
    %v6253 = vpop.xlane.xlu0 %6252
    %v6254 = vsub.f32 %v5533, %v6127
    %v6255 = vsub.f32 %v5536, %v6129
    %v6256 = vsub.f32 %v5541, %v6131
    %v6257 = vsub.f32 %v5544, %v6133
    %v6258 = vsub.f32 %v5549, %v6135
    %v6259 = vsub.f32 %v5552, %v6137
    %v6260 = vsub.f32 %v5557, %v6139
    %v6261 = vsub.f32 %v5560, %v6141
    %v6262 = vsub.f32 %v5565, %v6143
    %v6263 = vsub.f32 %v5568, %v6145
    %v6264 = vsub.f32 %v5573, %v6147
    %v6265 = vsub.f32 %v5576, %v6149
    %v6266 = vsub.f32 %v5581, %v6151
    %v6267 = vsub.f32 %v5584, %v6153
    %v6268 = vsub.f32 %v5589, %v6155
    %v6269 = vsub.f32 %v5592, %v6157
    %v6270 = vsub.f32 %v5710, %v6159
    %v6271 = vsub.f32 %v5713, %v6161
    %v6272 = vsub.f32 %v5718, %v6163
    %v6273 = vsub.f32 %v5721, %v6165
    %v6274 = vsub.f32 %v5726, %v6167
    %v6275 = vsub.f32 %v5729, %v6169
    %v6276 = vsub.f32 %v5734, %v6171
    %v6277 = vsub.f32 %v5737, %v6173
    %v6278 = vsub.f32 %v5742, %v6175
    %v6279 = vsub.f32 %v5745, %v6177
    %v6280 = vsub.f32 %v5750, %v6179
    %v6281 = vsub.f32 %v5753, %v6181
    %v6282 = vsub.f32 %v5758, %v6183
    %v6283 = vsub.f32 %v5761, %v6185
    %v6284 = vsub.f32 %v5766, %v6187
    %v6285 = vsub.f32 %v5769, %v6189
    %v6286 = vsub.f32 %v5887, %v6191
    %v6287 = vsub.f32 %v5890, %v6193
    %v6288 = vsub.f32 %v5895, %v6195
    %v6289 = vsub.f32 %v5898, %v6197
    %v6290 = vsub.f32 %v5903, %v6199
    %v6291 = vsub.f32 %v5906, %v6201
    %v6292 = vsub.f32 %v5911, %v6203
    %v6293 = vsub.f32 %v5914, %v6205
    %v6294 = vsub.f32 %v5919, %v6207
    %v6295 = vsub.f32 %v5922, %v6209
    %v6296 = vsub.f32 %v5927, %v6211
    %v6297 = vsub.f32 %v5930, %v6213
    %v6298 = vsub.f32 %v5935, %v6215
    %v6299 = vsub.f32 %v5938, %v6217
    %v6300 = vsub.f32 %v5943, %v6219
    %v6301 = vsub.f32 %v5946, %v6221
    %v6302 = vsub.f32 %v6064, %v6223
    %v6303 = vsub.f32 %v6067, %v6225
    %v6304 = vsub.f32 %v6072, %v6227
    %v6305 = vsub.f32 %v6075, %v6229
    %v6306 = vsub.f32 %v6080, %v6231
    %v6307 = vsub.f32 %v6083, %v6233
    %v6308 = vsub.f32 %v6088, %v6235
    %v6309 = vsub.f32 %v6091, %v6237
    %v6310 = vsub.f32 %v6096, %v6239
    %v6311 = vsub.f32 %v6099, %v6241
    %v6312 = vsub.f32 %v6104, %v6243
    %v6313 = vsub.f32 %v6107, %v6245
    %v6314 = vsub.f32 %v6112, %v6247
    %v6315 = vsub.f32 %v6115, %v6249
    %v6316 = vsub.f32 %v6120, %v6251
    %v6317 = vsub.f32 %v6123, %v6253
    %v6318 = vmul.f32 %v6254, 1.442695
    %v6319 = vpow.pop %v6318
    %v6320 = vmul.f32 %v6255, 1.442695
    %v6321 = vpow.pop %v6320
    %v6322 = vmul.f32 %v6256, 1.442695
    %v6323 = vpow.pop %v6322
    %v6324 = vmul.f32 %v6257, 1.442695
    %v6325 = vpow.pop %v6324
    %v6326 = vmul.f32 %v6258, 1.442695
    %v6327 = vpow.pop %v6326
    %v6328 = vmul.f32 %v6259, 1.442695
    %v6329 = vpow.pop %v6328
    %v6330 = vmul.f32 %v6260, 1.442695
    %v6331 = vpow.pop %v6330
    %v6332 = vmul.f32 %v6261, 1.442695
    %v6333 = vpow.pop %v6332
    %v6334 = vmul.f32 %v6262, 1.442695
    %v6335 = vpow.pop %v6334
    %v6336 = vmul.f32 %v6263, 1.442695
    %v6337 = vpow.pop %v6336
    %v6338 = vmul.f32 %v6264, 1.442695
    %v6339 = vpow.pop %v6338
    %v6340 = vmul.f32 %v6265, 1.442695
    %v6341 = vpow.pop %v6340
    %v6342 = vmul.f32 %v6266, 1.442695
    %v6343 = vpow.pop %v6342
    %v6344 = vmul.f32 %v6267, 1.442695
    %v6345 = vpow.pop %v6344
    %v6346 = vmul.f32 %v6268, 1.442695
    %v6347 = vpow.pop %v6346
    %v6348 = vmul.f32 %v6269, 1.442695
    %v6349 = vpow.pop %v6348
    %v6350 = vmul.f32 %v6270, 1.442695
    %v6351 = vpow.pop %v6350
    %v6352 = vmul.f32 %v6271, 1.442695
    %v6353 = vpow.pop %v6352
    %v6354 = vmul.f32 %v6272, 1.442695
    %v6355 = vpow.pop %v6354
    %v6356 = vmul.f32 %v6273, 1.442695
    %v6357 = vpow.pop %v6356
    %v6358 = vmul.f32 %v6274, 1.442695
    %v6359 = vpow.pop %v6358
    %v6360 = vmul.f32 %v6275, 1.442695
    %v6361 = vpow.pop %v6360
    %v6362 = vmul.f32 %v6276, 1.442695
    %v6363 = vpow.pop %v6362
    %v6364 = vmul.f32 %v6277, 1.442695
    %v6365 = vpow.pop %v6364
    %v6366 = vmul.f32 %v6278, 1.442695
    %v6367 = vpow.pop %v6366
    %v6368 = vmul.f32 %v6279, 1.442695
    %v6369 = vpow.pop %v6368
    %v6370 = vmul.f32 %v6280, 1.442695
    %v6371 = vpow.pop %v6370
    %v6372 = vmul.f32 %v6281, 1.442695
    %v6373 = vpow.pop %v6372
    %v6374 = vmul.f32 %v6282, 1.442695
    %v6375 = vpow.pop %v6374
    %v6376 = vmul.f32 %v6283, 1.442695
    %v6377 = vpow.pop %v6376
    %v6378 = vmul.f32 %v6284, 1.442695
    %v6379 = vpow.pop %v6378
    %v6380 = vmul.f32 %v6285, 1.442695
    %v6381 = vpow.pop %v6380
    %v6382 = vmul.f32 %v6286, 1.442695
    %v6383 = vpow.pop %v6382
    %v6384 = vmul.f32 %v6287, 1.442695
    %v6385 = vpow.pop %v6384
    %v6386 = vmul.f32 %v6288, 1.442695
    %v6387 = vpow.pop %v6386
    %v6388 = vmul.f32 %v6289, 1.442695
    %v6389 = vpow.pop %v6388
    %v6390 = vmul.f32 %v6290, 1.442695
    %v6391 = vpow.pop %v6390
    %v6392 = vmul.f32 %v6291, 1.442695
    %v6393 = vpow.pop %v6392
    %v6394 = vmul.f32 %v6292, 1.442695
    %v6395 = vpow.pop %v6394
    %v6396 = vmul.f32 %v6293, 1.442695
    %v6397 = vpow.pop %v6396
    %v6398 = vmul.f32 %v6294, 1.442695
    %v6399 = vpow.pop %v6398
    %v6400 = vmul.f32 %v6295, 1.442695
    %v6401 = vpow.pop %v6400
    %v6402 = vmul.f32 %v6296, 1.442695
    %v6403 = vpow.pop %v6402
    %v6404 = vmul.f32 %v6297, 1.442695
    %v6405 = vpow.pop %v6404
    %v6406 = vmul.f32 %v6298, 1.442695
    %v6407 = vpow.pop %v6406
    %v6408 = vmul.f32 %v6299, 1.442695
    %v6409 = vpow.pop %v6408
    %v6410 = vmul.f32 %v6300, 1.442695
    %v6411 = vpow.pop %v6410
    %v6412 = vmul.f32 %v6301, 1.442695
    %v6413 = vpow.pop %v6412
    %v6414 = vmul.f32 %v6302, 1.442695
    %v6415 = vpow.pop %v6414
    %v6416 = vmul.f32 %v6303, 1.442695
    %v6417 = vpow.pop %v6416
    %v6418 = vmul.f32 %v6304, 1.442695
    %v6419 = vpow.pop %v6418
    %v6420 = vmul.f32 %v6305, 1.442695
    %v6421 = vpow.pop %v6420
    %v6422 = vmul.f32 %v6306, 1.442695
    %v6423 = vpow.pop %v6422
    %v6424 = vmul.f32 %v6307, 1.442695
    %v6425 = vpow.pop %v6424
    %v6426 = vmul.f32 %v6308, 1.442695
    %v6427 = vpow.pop %v6426
    %v6428 = vmul.f32 %v6309, 1.442695
    %v6429 = vpow.pop %v6428
    %v6430 = vmul.f32 %v6310, 1.442695
    %v6431 = vpow.pop %v6430
    %v6432 = vmul.f32 %v6311, 1.442695
    %v6433 = vpow.pop %v6432
    %v6434 = vmul.f32 %v6312, 1.442695
    %v6435 = vpow.pop %v6434
    %v6436 = vmul.f32 %v6313, 1.442695
    %v6437 = vpow.pop %v6436
    %v6438 = vmul.f32 %v6314, 1.442695
    %v6439 = vpow.pop %v6438
    %v6440 = vmul.f32 %v6315, 1.442695
    %v6441 = vpow.pop %v6440
    %v6442 = vmul.f32 %v6316, 1.442695
    %v6443 = vpow.pop %v6442
    %v6444 = vmul.f32 %v6317, 1.442695
    %v6445 = vpow.pop %v6444
    %6446 = vadd.xlane.f32.xlu0 %v6319
    %v6447 = vpop.xlane.xlu0 %6446
    %6448 = vadd.xlane.f32.xlu0 %v6321
    %v6449 = vpop.xlane.xlu0 %6448
    %6450 = vadd.xlane.f32.xlu0 %v6323
    %v6451 = vpop.xlane.xlu0 %6450
    %6452 = vadd.xlane.f32.xlu0 %v6325
    %v6453 = vpop.xlane.xlu0 %6452
    %6454 = vadd.xlane.f32.xlu0 %v6327
    %v6455 = vpop.xlane.xlu0 %6454
    %6456 = vadd.xlane.f32.xlu0 %v6329
    %v6457 = vpop.xlane.xlu0 %6456
    %6458 = vadd.xlane.f32.xlu0 %v6331
    %v6459 = vpop.xlane.xlu0 %6458
    %6460 = vadd.xlane.f32.xlu0 %v6333
    %v6461 = vpop.xlane.xlu0 %6460
    %6462 = vadd.xlane.f32.xlu0 %v6335
    %v6463 = vpop.xlane.xlu0 %6462
    %6464 = vadd.xlane.f32.xlu0 %v6337
    %v6465 = vpop.xlane.xlu0 %6464
    %6466 = vadd.xlane.f32.xlu0 %v6339
    %v6467 = vpop.xlane.xlu0 %6466
    %6468 = vadd.xlane.f32.xlu0 %v6341
    %v6469 = vpop.xlane.xlu0 %6468
    %6470 = vadd.xlane.f32.xlu0 %v6343
    %v6471 = vpop.xlane.xlu0 %6470
    %6472 = vadd.xlane.f32.xlu0 %v6345
    %v6473 = vpop.xlane.xlu0 %6472
    %6474 = vadd.xlane.f32.xlu0 %v6347
    %v6475 = vpop.xlane.xlu0 %6474
    %6476 = vadd.xlane.f32.xlu0 %v6349
    %v6477 = vpop.xlane.xlu0 %6476
    %6478 = vadd.xlane.f32.xlu0 %v6351
    %v6479 = vpop.xlane.xlu0 %6478
    %6480 = vadd.xlane.f32.xlu0 %v6353
    %v6481 = vpop.xlane.xlu0 %6480
    %6482 = vadd.xlane.f32.xlu0 %v6355
    %v6483 = vpop.xlane.xlu0 %6482
    %6484 = vadd.xlane.f32.xlu0 %v6357
    %v6485 = vpop.xlane.xlu0 %6484
    %6486 = vadd.xlane.f32.xlu0 %v6359
    %v6487 = vpop.xlane.xlu0 %6486
    %6488 = vadd.xlane.f32.xlu0 %v6361
    %v6489 = vpop.xlane.xlu0 %6488
    %6490 = vadd.xlane.f32.xlu0 %v6363
    %v6491 = vpop.xlane.xlu0 %6490
    %6492 = vadd.xlane.f32.xlu0 %v6365
    %v6493 = vpop.xlane.xlu0 %6492
    %6494 = vadd.xlane.f32.xlu0 %v6367
    %v6495 = vpop.xlane.xlu0 %6494
    %6496 = vadd.xlane.f32.xlu0 %v6369
    %v6497 = vpop.xlane.xlu0 %6496
    %6498 = vadd.xlane.f32.xlu0 %v6371
    %v6499 = vpop.xlane.xlu0 %6498
    %6500 = vadd.xlane.f32.xlu0 %v6373
    %v6501 = vpop.xlane.xlu0 %6500
    %6502 = vadd.xlane.f32.xlu0 %v6375
    %v6503 = vpop.xlane.xlu0 %6502
    %6504 = vadd.xlane.f32.xlu0 %v6377
    %v6505 = vpop.xlane.xlu0 %6504
    %6506 = vadd.xlane.f32.xlu0 %v6379
    %v6507 = vpop.xlane.xlu0 %6506
    %6508 = vadd.xlane.f32.xlu0 %v6381
    %v6509 = vpop.xlane.xlu0 %6508
    %6510 = vadd.xlane.f32.xlu0 %v6383
    %v6511 = vpop.xlane.xlu0 %6510
    %6512 = vadd.xlane.f32.xlu0 %v6385
    %v6513 = vpop.xlane.xlu0 %6512
    %6514 = vadd.xlane.f32.xlu0 %v6387
    %v6515 = vpop.xlane.xlu0 %6514
    %6516 = vadd.xlane.f32.xlu0 %v6389
    %v6517 = vpop.xlane.xlu0 %6516
    %6518 = vadd.xlane.f32.xlu0 %v6391
    %v6519 = vpop.xlane.xlu0 %6518
    %6520 = vadd.xlane.f32.xlu0 %v6393
    %v6521 = vpop.xlane.xlu0 %6520
    %6522 = vadd.xlane.f32.xlu0 %v6395
    %v6523 = vpop.xlane.xlu0 %6522
    %6524 = vadd.xlane.f32.xlu0 %v6397
    %v6525 = vpop.xlane.xlu0 %6524
    %6526 = vadd.xlane.f32.xlu0 %v6399
    %v6527 = vpop.xlane.xlu0 %6526
    %6528 = vadd.xlane.f32.xlu0 %v6401
    %v6529 = vpop.xlane.xlu0 %6528
    %6530 = vadd.xlane.f32.xlu0 %v6403
    %v6531 = vpop.xlane.xlu0 %6530
    %6532 = vadd.xlane.f32.xlu0 %v6405
    %v6533 = vpop.xlane.xlu0 %6532
    %6534 = vadd.xlane.f32.xlu0 %v6407
    %v6535 = vpop.xlane.xlu0 %6534
    %6536 = vadd.xlane.f32.xlu0 %v6409
    %v6537 = vpop.xlane.xlu0 %6536
    %6538 = vadd.xlane.f32.xlu0 %v6411
    %v6539 = vpop.xlane.xlu0 %6538
    %6540 = vadd.xlane.f32.xlu0 %v6413
    %v6541 = vpop.xlane.xlu0 %6540
    %6542 = vadd.xlane.f32.xlu0 %v6415
    %v6543 = vpop.xlane.xlu0 %6542
    %6544 = vadd.xlane.f32.xlu0 %v6417
    %v6545 = vpop.xlane.xlu0 %6544
    %6546 = vadd.xlane.f32.xlu0 %v6419
    %v6547 = vpop.xlane.xlu0 %6546
    %6548 = vadd.xlane.f32.xlu0 %v6421
    %v6549 = vpop.xlane.xlu0 %6548
    %6550 = vadd.xlane.f32.xlu0 %v6423
    %v6551 = vpop.xlane.xlu0 %6550
    %6552 = vadd.xlane.f32.xlu0 %v6425
    %v6553 = vpop.xlane.xlu0 %6552
    %6554 = vadd.xlane.f32.xlu0 %v6427
    %v6555 = vpop.xlane.xlu0 %6554
    %6556 = vadd.xlane.f32.xlu0 %v6429
    %v6557 = vpop.xlane.xlu0 %6556
    %6558 = vadd.xlane.f32.xlu0 %v6431
    %v6559 = vpop.xlane.xlu0 %6558
    %6560 = vadd.xlane.f32.xlu0 %v6433
    %v6561 = vpop.xlane.xlu0 %6560
    %6562 = vadd.xlane.f32.xlu0 %v6435
    %v6563 = vpop.xlane.xlu0 %6562
    %6564 = vadd.xlane.f32.xlu0 %v6437
    %v6565 = vpop.xlane.xlu0 %6564
    %6566 = vadd.xlane.f32.xlu0 %v6439
    %v6567 = vpop.xlane.xlu0 %6566
    %6568 = vadd.xlane.f32.xlu0 %v6441
    %v6569 = vpop.xlane.xlu0 %6568
    %6570 = vadd.xlane.f32.xlu0 %v6443
    %v6571 = vpop.xlane.xlu0 %6570
    %6572 = vadd.xlane.f32.xlu0 %v6445
    %v6573 = vpop.xlane.xlu0 %6572
    %v6574 = vrcp.pop %v6447
    %v6575 = vrcp.pop %v6449
    %v6576 = vrcp.pop %v6451
    %v6577 = vrcp.pop %v6453
    %v6578 = vrcp.pop %v6455
    %v6579 = vrcp.pop %v6457
    %v6580 = vrcp.pop %v6459
    %v6581 = vrcp.pop %v6461
    %v6582 = vrcp.pop %v6463
    %v6583 = vrcp.pop %v6465
    %v6584 = vrcp.pop %v6467
    %v6585 = vrcp.pop %v6469
    %v6586 = vrcp.pop %v6471
    %v6587 = vrcp.pop %v6473
    %v6588 = vrcp.pop %v6475
    %v6589 = vrcp.pop %v6477
    %v6590 = vrcp.pop %v6479
    %v6591 = vrcp.pop %v6481
    %v6592 = vrcp.pop %v6483
    %v6593 = vrcp.pop %v6485
    %v6594 = vrcp.pop %v6487
    %v6595 = vrcp.pop %v6489
    %v6596 = vrcp.pop %v6491
    %v6597 = vrcp.pop %v6493
    %v6598 = vrcp.pop %v6495
    %v6599 = vrcp.pop %v6497
    %v6600 = vrcp.pop %v6499
    %v6601 = vrcp.pop %v6501
    %v6602 = vrcp.pop %v6503
    %v6603 = vrcp.pop %v6505
    %v6604 = vrcp.pop %v6507
    %v6605 = vrcp.pop %v6509
    %v6606 = vrcp.pop %v6511
    %v6607 = vrcp.pop %v6513
    %v6608 = vrcp.pop %v6515
    %v6609 = vrcp.pop %v6517
    %v6610 = vrcp.pop %v6519
    %v6611 = vrcp.pop %v6521
    %v6612 = vrcp.pop %v6523
    %v6613 = vrcp.pop %v6525
    %v6614 = vrcp.pop %v6527
    %v6615 = vrcp.pop %v6529
    %v6616 = vrcp.pop %v6531
    %v6617 = vrcp.pop %v6533
    %v6618 = vrcp.pop %v6535
    %v6619 = vrcp.pop %v6537
    %v6620 = vrcp.pop %v6539
    %v6621 = vrcp.pop %v6541
    %v6622 = vrcp.pop %v6543
    %v6623 = vrcp.pop %v6545
    %v6624 = vrcp.pop %v6547
    %v6625 = vrcp.pop %v6549
    %v6626 = vrcp.pop %v6551
    %v6627 = vrcp.pop %v6553
    %v6628 = vrcp.pop %v6555
    %v6629 = vrcp.pop %v6557
    %v6630 = vrcp.pop %v6559
    %v6631 = vrcp.pop %v6561
    %v6632 = vrcp.pop %v6563
    %v6633 = vrcp.pop %v6565
    %v6634 = vrcp.pop %v6567
    %v6635 = vrcp.pop %v6569
    %v6636 = vrcp.pop %v6571
    %v6637 = vrcp.pop %v6573
    %v6638 = vmul.f32 %v6319, %v6574
    %v6639 = vmul.f32 %v6321, %v6575
    %v6640 = vmul.f32 %v6323, %v6576
    %v6641 = vmul.f32 %v6325, %v6577
    %v6642 = vmul.f32 %v6327, %v6578
    %v6643 = vmul.f32 %v6329, %v6579
    %v6644 = vmul.f32 %v6331, %v6580
    %v6645 = vmul.f32 %v6333, %v6581
    %v6646 = vmul.f32 %v6335, %v6582
    %v6647 = vmul.f32 %v6337, %v6583
    %v6648 = vmul.f32 %v6339, %v6584
    %v6649 = vmul.f32 %v6341, %v6585
    %v6650 = vmul.f32 %v6343, %v6586
    %v6651 = vmul.f32 %v6345, %v6587
    %v6652 = vmul.f32 %v6347, %v6588
    %v6653 = vmul.f32 %v6349, %v6589
    %v6654 = vmul.f32 %v6351, %v6590
    %v6655 = vmul.f32 %v6353, %v6591
    %v6656 = vmul.f32 %v6355, %v6592
    %v6657 = vmul.f32 %v6357, %v6593
    %v6658 = vmul.f32 %v6359, %v6594
    %v6659 = vmul.f32 %v6361, %v6595
    %v6660 = vmul.f32 %v6363, %v6596
    %v6661 = vmul.f32 %v6365, %v6597
    %v6662 = vmul.f32 %v6367, %v6598
    %v6663 = vmul.f32 %v6369, %v6599
    %v6664 = vmul.f32 %v6371, %v6600
    %v6665 = vmul.f32 %v6373, %v6601
    %v6666 = vmul.f32 %v6375, %v6602
    %v6667 = vmul.f32 %v6377, %v6603
    %v6668 = vmul.f32 %v6379, %v6604
    %v6669 = vmul.f32 %v6381, %v6605
    %v6670 = vmul.f32 %v6383, %v6606
    %v6671 = vmul.f32 %v6385, %v6607
    %v6672 = vmul.f32 %v6387, %v6608
    %v6673 = vmul.f32 %v6389, %v6609
    %v6674 = vmul.f32 %v6391, %v6610
    %v6675 = vmul.f32 %v6393, %v6611
    %v6676 = vmul.f32 %v6395, %v6612
    %v6677 = vmul.f32 %v6397, %v6613
    %v6678 = vmul.f32 %v6399, %v6614
    %v6679 = vmul.f32 %v6401, %v6615
    %v6680 = vmul.f32 %v6403, %v6616
    %v6681 = vmul.f32 %v6405, %v6617
    %v6682 = vmul.f32 %v6407, %v6618
    %v6683 = vmul.f32 %v6409, %v6619
    %v6684 = vmul.f32 %v6411, %v6620
    %v6685 = vmul.f32 %v6413, %v6621
    %v6686 = vmul.f32 %v6415, %v6622
    %v6687 = vmul.f32 %v6417, %v6623
    %v6688 = vmul.f32 %v6419, %v6624
    %v6689 = vmul.f32 %v6421, %v6625
    %v6690 = vmul.f32 %v6423, %v6626
    %v6691 = vmul.f32 %v6425, %v6627
    %v6692 = vmul.f32 %v6427, %v6628
    %v6693 = vmul.f32 %v6429, %v6629
    %v6694 = vmul.f32 %v6431, %v6630
    %v6695 = vmul.f32 %v6433, %v6631
    %v6696 = vmul.f32 %v6435, %v6632
    %v6697 = vmul.f32 %v6437, %v6633
    %v6698 = vmul.f32 %v6439, %v6634
    %v6699 = vmul.f32 %v6441, %v6635
    %v6700 = vmul.f32 %v6443, %v6636
    %v6701 = vmul.f32 %v6445, %v6637
    %v6702 = vpack.c.bf16 %v6639, %v6638
    %v6703 = vpack.c.bf16 %v6641, %v6640
    %v6704 = vpack.c.bf16 %v6643, %v6642
    %v6705 = vpack.c.bf16 %v6645, %v6644
    %v6706 = vpack.c.bf16 %v6647, %v6646
    %v6707 = vpack.c.bf16 %v6649, %v6648
    %v6708 = vpack.c.bf16 %v6651, %v6650
    %v6709 = vpack.c.bf16 %v6653, %v6652
    %v6710 = vpack.c.bf16 %v6655, %v6654
    %v6711 = vpack.c.bf16 %v6657, %v6656
    %v6712 = vpack.c.bf16 %v6659, %v6658
    %v6713 = vpack.c.bf16 %v6661, %v6660
    %v6714 = vpack.c.bf16 %v6663, %v6662
    %v6715 = vpack.c.bf16 %v6665, %v6664
    %v6716 = vpack.c.bf16 %v6667, %v6666
    %v6717 = vpack.c.bf16 %v6669, %v6668
    %v6718 = vpack.c.bf16 %v6671, %v6670
    %v6719 = vpack.c.bf16 %v6673, %v6672
    %v6720 = vpack.c.bf16 %v6675, %v6674
    %v6721 = vpack.c.bf16 %v6677, %v6676
    %v6722 = vpack.c.bf16 %v6679, %v6678
    %v6723 = vpack.c.bf16 %v6681, %v6680
    %v6724 = vpack.c.bf16 %v6683, %v6682
    %v6725 = vpack.c.bf16 %v6685, %v6684
    %v6726 = vpack.c.bf16 %v6687, %v6686
    %v6727 = vpack.c.bf16 %v6689, %v6688
    %v6728 = vpack.c.bf16 %v6691, %v6690
    %v6729 = vpack.c.bf16 %v6693, %v6692
    %v6730 = vpack.c.bf16 %v6695, %v6694
    %v6731 = vpack.c.bf16 %v6697, %v6696
    %v6732 = vpack.c.bf16 %v6699, %v6698
    %v6733 = vpack.c.bf16 %v6701, %v6700
    %6734 = vrot.lane.b32.xlu0 %v1736, 64
    %v6735 = vpop.permute.xlu0 %6734
    %6736 = vrot.lane.b32.xlu0 %v1739, 64
    %v6737 = vpop.permute.xlu0 %6736
    %6738 = vrot.lane.b32.xlu0 %v1742, 64
    %v6739 = vpop.permute.xlu0 %6738
    %6740 = vrot.lane.b32.xlu0 %v1745, 64
    %v6741 = vpop.permute.xlu0 %6740
    %6742 = vrot.lane.b32.xlu0 %v1748, 64
    %v6743 = vpop.permute.xlu0 %6742
    %6744 = vrot.lane.b32.xlu0 %v1751, 64
    %v6745 = vpop.permute.xlu0 %6744
    %6746 = vrot.lane.b32.xlu0 %v1754, 64
    %v6747 = vpop.permute.xlu0 %6746
    %6748 = vrot.lane.b32.xlu0 %v1757, 64
    %v6749 = vpop.permute.xlu0 %6748
    %6758 = vmatprep.subr.bf16.mxu0 0
    %6759 = vmatpush1.bf16.msra.mxu0 %v6749
    %6760 = vmatprep.subr.bf16.mxu0 0
    %6761 = vmatpush1.bf16.msra.mxu0 %v6747
    %6762 = vmatprep.subr.bf16.mxu0 0
    %6763 = vmatpush1.bf16.msra.mxu0 %v6745
    %6764 = vmatprep.subr.bf16.mxu0 0
    %6765 = vmatpush1.bf16.msra.mxu0 %v6743
    %6766 = vmatprep.subr.bf16.mxu0 0
    %6767 = vmatpush1.bf16.msra.mxu0 %v6741
    %6768 = vmatprep.subr.bf16.mxu0 0
    %6769 = vmatpush1.bf16.msra.mxu0 %v6739
    %6770 = vmatprep.subr.bf16.mxu0 0
    %6771 = vmatpush1.bf16.msra.mxu0 %v6737
    %6772 = vmatprep.subr.bf16.mxu0 0
    %6773 = vmatpush1.bf16.msra.mxu0 %v6735
    %6774 = vmatprep.subr.bf16.mxu0 0
    %6775 = vmatpush2.bf16.msra.mxu0 0
    %6776 = vmatprep.subr.bf16.mxu0 0
    %6777 = vmatpush2.bf16.msra.mxu0 0
    %6778 = vmatprep.subr.bf16.mxu0 0
    %6779 = vmatpush2.bf16.msra.mxu0 0
    %6780 = vmatprep.subr.bf16.mxu0 0
    %6781 = vmatpush2.bf16.msra.mxu0 0
    %6782 = vmatprep.subr.bf16.mxu0 0
    %6783 = vmatpush2.bf16.msra.mxu0 0
    %6784 = vmatprep.subr.bf16.mxu0 0
    %6785 = vmatpush2.bf16.msra.mxu0 0
    %6786 = vmatprep.subr.bf16.mxu0 0
    %6787 = vmatpush2.bf16.msra.mxu0 0
    %6788 = vmatprep.subr.bf16.mxu0 0
    %6789 = vmatpush2.bf16.msra.mxu0 0
    %6790 = vmatprep.mubr.bf16.mxu0 0
    %6791 = vmatmul.mubr.bf16.gmra.mxu0 %v6702
    %v6792 = vpop.f32.mrf.mxu0
    %v6793 = vadd.f32 0.0, %v6792
    %v6794 = vpop.f32.mrf.mxu0
    %v6795 = vpop.f32.mrf.mxu0
    %v6796 = vadd.f32 0.0, %v6795
    %v6797 = vpop.f32.mrf.mxu0
    %6798 = vmatprep.mubr.bf16.mxu0 0
    %6799 = vmatmul.mubr.bf16.gmra.mxu0 %v6703
    %v6800 = vpop.f32.mrf.mxu0
    %v6801 = vadd.f32 0.0, %v6800
    %v6802 = vpop.f32.mrf.mxu0
    %v6803 = vpop.f32.mrf.mxu0
    %v6804 = vadd.f32 0.0, %v6803
    %v6805 = vpop.f32.mrf.mxu0
    %6806 = vmatprep.mubr.bf16.mxu0 0
    %6807 = vmatmul.mubr.bf16.gmra.mxu0 %v6704
    %v6808 = vpop.f32.mrf.mxu0
    %v6809 = vadd.f32 0.0, %v6808
    %v6810 = vpop.f32.mrf.mxu0
    %v6811 = vpop.f32.mrf.mxu0
    %v6812 = vadd.f32 0.0, %v6811
    %v6813 = vpop.f32.mrf.mxu0
    %6814 = vmatprep.mubr.bf16.mxu0 0
    %6815 = vmatmul.mubr.bf16.gmra.mxu0 %v6705
    %v6816 = vpop.f32.mrf.mxu0
    %v6817 = vadd.f32 0.0, %v6816
    %v6818 = vpop.f32.mrf.mxu0
    %v6819 = vpop.f32.mrf.mxu0
    %v6820 = vadd.f32 0.0, %v6819
    %v6821 = vpop.f32.mrf.mxu0
    %6822 = vmatprep.mubr.bf16.mxu0 0
    %6823 = vmatmul.mubr.bf16.gmra.mxu0 %v6706
    %v6824 = vpop.f32.mrf.mxu0
    %v6825 = vadd.f32 0.0, %v6824
    %v6826 = vpop.f32.mrf.mxu0
    %v6827 = vpop.f32.mrf.mxu0
    %v6828 = vadd.f32 0.0, %v6827
    %v6829 = vpop.f32.mrf.mxu0
    %6830 = vmatprep.mubr.bf16.mxu0 0
    %6831 = vmatmul.mubr.bf16.gmra.mxu0 %v6707
    %v6832 = vpop.f32.mrf.mxu0
    %v6833 = vadd.f32 0.0, %v6832
    %v6834 = vpop.f32.mrf.mxu0
    %v6835 = vpop.f32.mrf.mxu0
    %v6836 = vadd.f32 0.0, %v6835
    %v6837 = vpop.f32.mrf.mxu0
    %6838 = vmatprep.mubr.bf16.mxu0 0
    %6839 = vmatmul.mubr.bf16.gmra.mxu0 %v6708
    %v6840 = vpop.f32.mrf.mxu0
    %v6841 = vadd.f32 0.0, %v6840
    %v6842 = vpop.f32.mrf.mxu0
    %v6843 = vpop.f32.mrf.mxu0
    %v6844 = vadd.f32 0.0, %v6843
    %v6845 = vpop.f32.mrf.mxu0
    %6846 = vmatprep.mubr.bf16.mxu0 0
    %6847 = vmatmul.mubr.bf16.gmra.mxu0 %v6709
    %v6848 = vpop.f32.mrf.mxu0
    %v6849 = vadd.f32 0.0, %v6848
    %v6850 = vpop.f32.mrf.mxu0
    %v6851 = vpop.f32.mrf.mxu0
    %v6852 = vadd.f32 0.0, %v6851
    %v6853 = vpop.f32.mrf.mxu0
    %6854 = vdwg.mxu0
    %6855 = vrot.lane.b32.xlu0 %v1760, 64
    %v6856 = vpop.permute.xlu0 %6855
    %6857 = vrot.lane.b32.xlu0 %v1763, 64
    %v6858 = vpop.permute.xlu0 %6857
    %6859 = vrot.lane.b32.xlu0 %v1766, 64
    %v6860 = vpop.permute.xlu0 %6859
    %6861 = vrot.lane.b32.xlu0 %v1769, 64
    %v6862 = vpop.permute.xlu0 %6861
    %6863 = vrot.lane.b32.xlu0 %v1772, 64
    %v6864 = vpop.permute.xlu0 %6863
    %6865 = vrot.lane.b32.xlu0 %v1775, 64
    %v6866 = vpop.permute.xlu0 %6865
    %6867 = vrot.lane.b32.xlu0 %v1778, 64
    %v6868 = vpop.permute.xlu0 %6867
    %6869 = vrot.lane.b32.xlu0 %v1781, 64
    %v6870 = vpop.permute.xlu0 %6869
    %6879 = vmatprep.subr.bf16.mxu0 0
    %6880 = vmatpush1.bf16.msra.mxu0 %v6870
    %6881 = vmatprep.subr.bf16.mxu0 0
    %6882 = vmatpush1.bf16.msra.mxu0 %v6868
    %6883 = vmatprep.subr.bf16.mxu0 0
    %6884 = vmatpush1.bf16.msra.mxu0 %v6866
    %6885 = vmatprep.subr.bf16.mxu0 0
    %6886 = vmatpush1.bf16.msra.mxu0 %v6864
    %6887 = vmatprep.subr.bf16.mxu0 0
    %6888 = vmatpush1.bf16.msra.mxu0 %v6862
    %6889 = vmatprep.subr.bf16.mxu0 0
    %6890 = vmatpush1.bf16.msra.mxu0 %v6860
    %6891 = vmatprep.subr.bf16.mxu0 0
    %6892 = vmatpush1.bf16.msra.mxu0 %v6858
    %6893 = vmatprep.subr.bf16.mxu0 0
    %6894 = vmatpush1.bf16.msra.mxu0 %v6856
    %6895 = vmatprep.subr.bf16.mxu0 0
    %6896 = vmatpush2.bf16.msra.mxu0 0
    %6897 = vmatprep.subr.bf16.mxu0 0
    %6898 = vmatpush2.bf16.msra.mxu0 0
    %6899 = vmatprep.subr.bf16.mxu0 0
    %6900 = vmatpush2.bf16.msra.mxu0 0
    %6901 = vmatprep.subr.bf16.mxu0 0
    %6902 = vmatpush2.bf16.msra.mxu0 0
    %6903 = vmatprep.subr.bf16.mxu0 0
    %6904 = vmatpush2.bf16.msra.mxu0 0
    %6905 = vmatprep.subr.bf16.mxu0 0
    %6906 = vmatpush2.bf16.msra.mxu0 0
    %6907 = vmatprep.subr.bf16.mxu0 0
    %6908 = vmatpush2.bf16.msra.mxu0 0
    %6909 = vmatprep.subr.bf16.mxu0 0
    %6910 = vmatpush2.bf16.msra.mxu0 0
    %6911 = vmatprep.mubr.bf16.mxu0 0
    %6912 = vmatmul.mubr.bf16.gmra.mxu0 %v6710
    %v6913 = vpop.f32.mrf.mxu0
    %v6914 = vadd.f32 0.0, %v6913
    %v6915 = vpop.f32.mrf.mxu0
    %v6916 = vpop.f32.mrf.mxu0
    %v6917 = vadd.f32 0.0, %v6916
    %v6918 = vpop.f32.mrf.mxu0
    %6919 = vmatprep.mubr.bf16.mxu0 0
    %6920 = vmatmul.mubr.bf16.gmra.mxu0 %v6711
    %v6921 = vpop.f32.mrf.mxu0
    %v6922 = vadd.f32 0.0, %v6921
    %v6923 = vpop.f32.mrf.mxu0
    %v6924 = vpop.f32.mrf.mxu0
    %v6925 = vadd.f32 0.0, %v6924
    %v6926 = vpop.f32.mrf.mxu0
    %6927 = vmatprep.mubr.bf16.mxu0 0
    %6928 = vmatmul.mubr.bf16.gmra.mxu0 %v6712
    %v6929 = vpop.f32.mrf.mxu0
    %v6930 = vadd.f32 0.0, %v6929
    %v6931 = vpop.f32.mrf.mxu0
    %v6932 = vpop.f32.mrf.mxu0
    %v6933 = vadd.f32 0.0, %v6932
    %v6934 = vpop.f32.mrf.mxu0
    %6935 = vmatprep.mubr.bf16.mxu0 0
    %6936 = vmatmul.mubr.bf16.gmra.mxu0 %v6713
    %v6937 = vpop.f32.mrf.mxu0
    %v6938 = vadd.f32 0.0, %v6937
    %v6939 = vpop.f32.mrf.mxu0
    %v6940 = vpop.f32.mrf.mxu0
    %v6941 = vadd.f32 0.0, %v6940
    %v6942 = vpop.f32.mrf.mxu0
    %6943 = vmatprep.mubr.bf16.mxu0 0
    %6944 = vmatmul.mubr.bf16.gmra.mxu0 %v6714
    %v6945 = vpop.f32.mrf.mxu0
    %v6946 = vadd.f32 0.0, %v6945
    %v6947 = vpop.f32.mrf.mxu0
    %v6948 = vpop.f32.mrf.mxu0
    %v6949 = vadd.f32 0.0, %v6948
    %v6950 = vpop.f32.mrf.mxu0
    %6951 = vmatprep.mubr.bf16.mxu0 0
    %6952 = vmatmul.mubr.bf16.gmra.mxu0 %v6715
    %v6953 = vpop.f32.mrf.mxu0
    %v6954 = vadd.f32 0.0, %v6953
    %v6955 = vpop.f32.mrf.mxu0
    %v6956 = vpop.f32.mrf.mxu0
    %v6957 = vadd.f32 0.0, %v6956
    %v6958 = vpop.f32.mrf.mxu0
    %6959 = vmatprep.mubr.bf16.mxu0 0
    %6960 = vmatmul.mubr.bf16.gmra.mxu0 %v6716
    %v6961 = vpop.f32.mrf.mxu0
    %v6962 = vadd.f32 0.0, %v6961
    %v6963 = vpop.f32.mrf.mxu0
    %v6964 = vpop.f32.mrf.mxu0
    %v6965 = vadd.f32 0.0, %v6964
    %v6966 = vpop.f32.mrf.mxu0
    %6967 = vmatprep.mubr.bf16.mxu0 0
    %6968 = vmatmul.mubr.bf16.gmra.mxu0 %v6717
    %v6969 = vpop.f32.mrf.mxu0
    %v6970 = vadd.f32 0.0, %v6969
    %v6971 = vpop.f32.mrf.mxu0
    %v6972 = vpop.f32.mrf.mxu0
    %v6973 = vadd.f32 0.0, %v6972
    %v6974 = vpop.f32.mrf.mxu0
    %6975 = vdwg.mxu0
    %6976 = vrot.lane.b32.xlu0 %v1784, 64
    %v6977 = vpop.permute.xlu0 %6976
    %6978 = vrot.lane.b32.xlu0 %v1787, 64
    %v6979 = vpop.permute.xlu0 %6978
    %6980 = vrot.lane.b32.xlu0 %v1790, 64
    %v6981 = vpop.permute.xlu0 %6980
    %6982 = vrot.lane.b32.xlu0 %v1793, 64
    %v6983 = vpop.permute.xlu0 %6982
    %6984 = vrot.lane.b32.xlu0 %v1796, 64
    %v6985 = vpop.permute.xlu0 %6984
    %6986 = vrot.lane.b32.xlu0 %v1799, 64
    %v6987 = vpop.permute.xlu0 %6986
    %6988 = vrot.lane.b32.xlu0 %v1802, 64
    %v6989 = vpop.permute.xlu0 %6988
    %6990 = vrot.lane.b32.xlu0 %v1805, 64
    %v6991 = vpop.permute.xlu0 %6990
    %7000 = vmatprep.subr.bf16.mxu0 0
    %7001 = vmatpush1.bf16.msra.mxu0 %v6991
    %7002 = vmatprep.subr.bf16.mxu0 0
    %7003 = vmatpush1.bf16.msra.mxu0 %v6989
    %7004 = vmatprep.subr.bf16.mxu0 0
    %7005 = vmatpush1.bf16.msra.mxu0 %v6987
    %7006 = vmatprep.subr.bf16.mxu0 0
    %7007 = vmatpush1.bf16.msra.mxu0 %v6985
    %7008 = vmatprep.subr.bf16.mxu0 0
    %7009 = vmatpush1.bf16.msra.mxu0 %v6983
    %7010 = vmatprep.subr.bf16.mxu0 0
    %7011 = vmatpush1.bf16.msra.mxu0 %v6981
    %7012 = vmatprep.subr.bf16.mxu0 0
    %7013 = vmatpush1.bf16.msra.mxu0 %v6979
    %7014 = vmatprep.subr.bf16.mxu0 0
    %7015 = vmatpush1.bf16.msra.mxu0 %v6977
    %7016 = vmatprep.subr.bf16.mxu0 0
    %7017 = vmatpush2.bf16.msra.mxu0 0
    %7018 = vmatprep.subr.bf16.mxu0 0
    %7019 = vmatpush2.bf16.msra.mxu0 0
    %7020 = vmatprep.subr.bf16.mxu0 0
    %7021 = vmatpush2.bf16.msra.mxu0 0
    %7022 = vmatprep.subr.bf16.mxu0 0
    %7023 = vmatpush2.bf16.msra.mxu0 0
    %7024 = vmatprep.subr.bf16.mxu0 0
    %7025 = vmatpush2.bf16.msra.mxu0 0
    %7026 = vmatprep.subr.bf16.mxu0 0
    %7027 = vmatpush2.bf16.msra.mxu0 0
    %7028 = vmatprep.subr.bf16.mxu0 0
    %7029 = vmatpush2.bf16.msra.mxu0 0
    %7030 = vmatprep.subr.bf16.mxu0 0
    %7031 = vmatpush2.bf16.msra.mxu0 0
    %7032 = vmatprep.mubr.bf16.mxu0 0
    %7033 = vmatmul.mubr.bf16.gmra.mxu0 %v6718
    %v7034 = vpop.f32.mrf.mxu0
    %v7035 = vadd.f32 0.0, %v7034
    %v7036 = vpop.f32.mrf.mxu0
    %v7037 = vpop.f32.mrf.mxu0
    %v7038 = vadd.f32 0.0, %v7037
    %v7039 = vpop.f32.mrf.mxu0
    %7040 = vmatprep.mubr.bf16.mxu0 0
    %7041 = vmatmul.mubr.bf16.gmra.mxu0 %v6719
    %v7042 = vpop.f32.mrf.mxu0
    %v7043 = vadd.f32 0.0, %v7042
    %v7044 = vpop.f32.mrf.mxu0
    %v7045 = vpop.f32.mrf.mxu0
    %v7046 = vadd.f32 0.0, %v7045
    %v7047 = vpop.f32.mrf.mxu0
    %7048 = vmatprep.mubr.bf16.mxu0 0
    %7049 = vmatmul.mubr.bf16.gmra.mxu0 %v6720
    %v7050 = vpop.f32.mrf.mxu0
    %v7051 = vadd.f32 0.0, %v7050
    %v7052 = vpop.f32.mrf.mxu0
    %v7053 = vpop.f32.mrf.mxu0
    %v7054 = vadd.f32 0.0, %v7053
    %v7055 = vpop.f32.mrf.mxu0
    %7056 = vmatprep.mubr.bf16.mxu0 0
    %7057 = vmatmul.mubr.bf16.gmra.mxu0 %v6721
    %v7058 = vpop.f32.mrf.mxu0
    %v7059 = vadd.f32 0.0, %v7058
    %v7060 = vpop.f32.mrf.mxu0
    %v7061 = vpop.f32.mrf.mxu0
    %v7062 = vadd.f32 0.0, %v7061
    %v7063 = vpop.f32.mrf.mxu0
    %7064 = vmatprep.mubr.bf16.mxu0 0
    %7065 = vmatmul.mubr.bf16.gmra.mxu0 %v6722
    %v7066 = vpop.f32.mrf.mxu0
    %v7067 = vadd.f32 0.0, %v7066
    %v7068 = vpop.f32.mrf.mxu0
    %v7069 = vpop.f32.mrf.mxu0
    %v7070 = vadd.f32 0.0, %v7069
    %v7071 = vpop.f32.mrf.mxu0
    %7072 = vmatprep.mubr.bf16.mxu0 0
    %7073 = vmatmul.mubr.bf16.gmra.mxu0 %v6723
    %v7074 = vpop.f32.mrf.mxu0
    %v7075 = vadd.f32 0.0, %v7074
    %v7076 = vpop.f32.mrf.mxu0
    %v7077 = vpop.f32.mrf.mxu0
    %v7078 = vadd.f32 0.0, %v7077
    %v7079 = vpop.f32.mrf.mxu0
    %7080 = vmatprep.mubr.bf16.mxu0 0
    %7081 = vmatmul.mubr.bf16.gmra.mxu0 %v6724
    %v7082 = vpop.f32.mrf.mxu0
    %v7083 = vadd.f32 0.0, %v7082
    %v7084 = vpop.f32.mrf.mxu0
    %v7085 = vpop.f32.mrf.mxu0
    %v7086 = vadd.f32 0.0, %v7085
    %v7087 = vpop.f32.mrf.mxu0
    %7088 = vmatprep.mubr.bf16.mxu0 0
    %7089 = vmatmul.mubr.bf16.gmra.mxu0 %v6725
    %v7090 = vpop.f32.mrf.mxu0
    %v7091 = vadd.f32 0.0, %v7090
    %v7092 = vpop.f32.mrf.mxu0
    %v7093 = vpop.f32.mrf.mxu0
    %v7094 = vadd.f32 0.0, %v7093
    %v7095 = vpop.f32.mrf.mxu0
    %7096 = vdwg.mxu0
    %7097 = vrot.lane.b32.xlu0 %v1808, 64
    %v7098 = vpop.permute.xlu0 %7097
    %7099 = vrot.lane.b32.xlu0 %v1811, 64
    %v7100 = vpop.permute.xlu0 %7099
    %7101 = vrot.lane.b32.xlu0 %v1814, 64
    %v7102 = vpop.permute.xlu0 %7101
    %7103 = vrot.lane.b32.xlu0 %v1817, 64
    %v7104 = vpop.permute.xlu0 %7103
    %7105 = vrot.lane.b32.xlu0 %v1820, 64
    %v7106 = vpop.permute.xlu0 %7105
    %7107 = vrot.lane.b32.xlu0 %v1823, 64
    %v7108 = vpop.permute.xlu0 %7107
    %7109 = vrot.lane.b32.xlu0 %v1826, 64
    %v7110 = vpop.permute.xlu0 %7109
    %7111 = vrot.lane.b32.xlu0 %v1829, 64
    %v7112 = vpop.permute.xlu0 %7111
    %7121 = vmatprep.subr.bf16.mxu0 0
    %7122 = vmatpush1.bf16.msra.mxu0 %v7112
    %7123 = vmatprep.subr.bf16.mxu0 0
    %7124 = vmatpush1.bf16.msra.mxu0 %v7110
    %7125 = vmatprep.subr.bf16.mxu0 0
    %7126 = vmatpush1.bf16.msra.mxu0 %v7108
    %7127 = vmatprep.subr.bf16.mxu0 0
    %7128 = vmatpush1.bf16.msra.mxu0 %v7106
    %7129 = vmatprep.subr.bf16.mxu0 0
    %7130 = vmatpush1.bf16.msra.mxu0 %v7104
    %7131 = vmatprep.subr.bf16.mxu0 0
    %7132 = vmatpush1.bf16.msra.mxu0 %v7102
    %7133 = vmatprep.subr.bf16.mxu0 0
    %7134 = vmatpush1.bf16.msra.mxu0 %v7100
    %7135 = vmatprep.subr.bf16.mxu0 0
    %7136 = vmatpush1.bf16.msra.mxu0 %v7098
    %7137 = vmatprep.subr.bf16.mxu0 0
    %7138 = vmatpush2.bf16.msra.mxu0 0
    %7139 = vmatprep.subr.bf16.mxu0 0
    %7140 = vmatpush2.bf16.msra.mxu0 0
    %7141 = vmatprep.subr.bf16.mxu0 0
    %7142 = vmatpush2.bf16.msra.mxu0 0
    %7143 = vmatprep.subr.bf16.mxu0 0
    %7144 = vmatpush2.bf16.msra.mxu0 0
    %7145 = vmatprep.subr.bf16.mxu0 0
    %7146 = vmatpush2.bf16.msra.mxu0 0
    %7147 = vmatprep.subr.bf16.mxu0 0
    %7148 = vmatpush2.bf16.msra.mxu0 0
    %7149 = vmatprep.subr.bf16.mxu0 0
    %7150 = vmatpush2.bf16.msra.mxu0 0
    %7151 = vmatprep.subr.bf16.mxu0 0
    %7152 = vmatpush2.bf16.msra.mxu0 0
    %7153 = vmatprep.mubr.bf16.mxu0 0
    %7154 = vmatmul.mubr.bf16.gmra.mxu0 %v6726
    %v7155 = vpop.f32.mrf.mxu0
    %v7156 = vadd.f32 0.0, %v7155
    %v7157 = vpop.f32.mrf.mxu0
    %v7158 = vpop.f32.mrf.mxu0
    %v7159 = vadd.f32 0.0, %v7158
    %v7160 = vpop.f32.mrf.mxu0
    %7161 = vmatprep.mubr.bf16.mxu0 0
    %7162 = vmatmul.mubr.bf16.gmra.mxu0 %v6727
    %v7163 = vpop.f32.mrf.mxu0
    %v7164 = vadd.f32 0.0, %v7163
    %v7165 = vpop.f32.mrf.mxu0
    %v7166 = vpop.f32.mrf.mxu0
    %v7167 = vadd.f32 0.0, %v7166
    %v7168 = vpop.f32.mrf.mxu0
    %7169 = vmatprep.mubr.bf16.mxu0 0
    %7170 = vmatmul.mubr.bf16.gmra.mxu0 %v6728
    %v7171 = vpop.f32.mrf.mxu0
    %v7172 = vadd.f32 0.0, %v7171
    %v7173 = vpop.f32.mrf.mxu0
    %v7174 = vpop.f32.mrf.mxu0
    %v7175 = vadd.f32 0.0, %v7174
    %v7176 = vpop.f32.mrf.mxu0
    %7177 = vmatprep.mubr.bf16.mxu0 0
    %7178 = vmatmul.mubr.bf16.gmra.mxu0 %v6729
    %v7179 = vpop.f32.mrf.mxu0
    %v7180 = vadd.f32 0.0, %v7179
    %v7181 = vpop.f32.mrf.mxu0
    %v7182 = vpop.f32.mrf.mxu0
    %v7183 = vadd.f32 0.0, %v7182
    %v7184 = vpop.f32.mrf.mxu0
    %7185 = vmatprep.mubr.bf16.mxu0 0
    %7186 = vmatmul.mubr.bf16.gmra.mxu0 %v6730
    %v7187 = vpop.f32.mrf.mxu0
    %v7188 = vadd.f32 0.0, %v7187
    %v7189 = vpop.f32.mrf.mxu0
    %v7190 = vpop.f32.mrf.mxu0
    %v7191 = vadd.f32 0.0, %v7190
    %v7192 = vpop.f32.mrf.mxu0
    %7193 = vmatprep.mubr.bf16.mxu0 0
    %7194 = vmatmul.mubr.bf16.gmra.mxu0 %v6731
    %v7195 = vpop.f32.mrf.mxu0
    %v7196 = vadd.f32 0.0, %v7195
    %v7197 = vpop.f32.mrf.mxu0
    %v7198 = vpop.f32.mrf.mxu0
    %v7199 = vadd.f32 0.0, %v7198
    %v7200 = vpop.f32.mrf.mxu0
    %7201 = vmatprep.mubr.bf16.mxu0 0
    %7202 = vmatmul.mubr.bf16.gmra.mxu0 %v6732
    %v7203 = vpop.f32.mrf.mxu0
    %v7204 = vadd.f32 0.0, %v7203
    %v7205 = vpop.f32.mrf.mxu0
    %v7206 = vpop.f32.mrf.mxu0
    %v7207 = vadd.f32 0.0, %v7206
    %v7208 = vpop.f32.mrf.mxu0
    %7209 = vmatprep.mubr.bf16.mxu0 0
    %7210 = vmatmul.mubr.bf16.gmra.mxu0 %v6733
    %v7211 = vpop.f32.mrf.mxu0
    %v7212 = vadd.f32 0.0, %v7211
    %v7213 = vpop.f32.mrf.mxu0
    %v7214 = vpop.f32.mrf.mxu0
    %v7215 = vadd.f32 0.0, %v7214
    %v7216 = vpop.f32.mrf.mxu0
    %7217 = vdwg.mxu0
    %v7218 = vpack.c.bf16 %v6796, %v6793
    %v7219 = vpack.c.bf16 %v6804, %v6801
    %v7220 = vpack.c.bf16 %v6812, %v6809
    %v7221 = vpack.c.bf16 %v6820, %v6817
    %v7222 = vpack.c.bf16 %v6828, %v6825
    %v7223 = vpack.c.bf16 %v6836, %v6833
    %v7224 = vpack.c.bf16 %v6844, %v6841
    %v7225 = vpack.c.bf16 %v6852, %v6849
    %v7226 = vpack.c.bf16 %v6917, %v6914
    %v7227 = vpack.c.bf16 %v6925, %v6922
    %v7228 = vpack.c.bf16 %v6933, %v6930
    %v7229 = vpack.c.bf16 %v6941, %v6938
    %v7230 = vpack.c.bf16 %v6949, %v6946
    %v7231 = vpack.c.bf16 %v6957, %v6954
    %v7232 = vpack.c.bf16 %v6965, %v6962
    %v7233 = vpack.c.bf16 %v6973, %v6970
    %v7234 = vpack.c.bf16 %v7038, %v7035
    %v7235 = vpack.c.bf16 %v7046, %v7043
    %v7236 = vpack.c.bf16 %v7054, %v7051
    %v7237 = vpack.c.bf16 %v7062, %v7059
    %v7238 = vpack.c.bf16 %v7070, %v7067
    %v7239 = vpack.c.bf16 %v7078, %v7075
    %v7240 = vpack.c.bf16 %v7086, %v7083
    %v7241 = vpack.c.bf16 %v7094, %v7091
    %v7242 = vpack.c.bf16 %v7159, %v7156
    %v7243 = vpack.c.bf16 %v7167, %v7164
    %v7244 = vpack.c.bf16 %v7175, %v7172
    %v7245 = vpack.c.bf16 %v7183, %v7180
    %v7246 = vpack.c.bf16 %v7191, %v7188
    %v7247 = vpack.c.bf16 %v7199, %v7196
    %v7248 = vpack.c.bf16 %v7207, %v7204
    %v7249 = vpack.c.bf16 %v7215, %v7212
    %7250 = vrot.lane.b32.xlu0 %v1734, 32
    %v7251 = vpop.permute.xlu0 %7250
    %7252 = vrot.lane.b32.xlu0 %v1737, 32
    %v7253 = vpop.permute.xlu0 %7252
    %7254 = vrot.lane.b32.xlu0 %v1740, 32
    %v7255 = vpop.permute.xlu0 %7254
    %7256 = vrot.lane.b32.xlu0 %v1743, 32
    %v7257 = vpop.permute.xlu0 %7256
    %7258 = vrot.lane.b32.xlu0 %v1746, 32
    %v7259 = vpop.permute.xlu0 %7258
    %7260 = vrot.lane.b32.xlu0 %v1749, 32
    %v7261 = vpop.permute.xlu0 %7260
    %7262 = vrot.lane.b32.xlu0 %v1752, 32
    %v7263 = vpop.permute.xlu0 %7262
    %7264 = vrot.lane.b32.xlu0 %v1755, 32
    %v7265 = vpop.permute.xlu0 %7264
    %7266 = vrot.lane.b32.xlu0 %v1735, 32
    %v7267 = vpop.permute.xlu0 %7266
    %7268 = vrot.lane.b32.xlu0 %v1738, 32
    %v7269 = vpop.permute.xlu0 %7268
    %7270 = vrot.lane.b32.xlu0 %v1741, 32
    %v7271 = vpop.permute.xlu0 %7270
    %7272 = vrot.lane.b32.xlu0 %v1744, 32
    %v7273 = vpop.permute.xlu0 %7272
    %7274 = vrot.lane.b32.xlu0 %v1747, 32
    %v7275 = vpop.permute.xlu0 %7274
    %7276 = vrot.lane.b32.xlu0 %v1750, 32
    %v7277 = vpop.permute.xlu0 %7276
    %7278 = vrot.lane.b32.xlu0 %v1753, 32
    %v7279 = vpop.permute.xlu0 %7278
    %7280 = vrot.lane.b32.xlu0 %v1756, 32
    %v7281 = vpop.permute.xlu0 %7280
    %v7283 = vsel %vm1881, %v7251, 0
    %v7286 = vsel %vm1881, %v7253, 0
    %v7289 = vsel %vm1881, %v7255, 0
    %v7292 = vsel %vm1881, %v7257, 0
    %v7295 = vsel %vm1881, %v7259, 0
    %v7298 = vsel %vm1881, %v7261, 0
    %v7301 = vsel %vm1881, %v7263, 0
    %v7304 = vsel %vm1881, %v7265, 0
    %v7307 = vsel %vm1881, %v7267, 0
    %v7310 = vsel %vm1881, %v7269, 0
    %v7313 = vsel %vm1881, %v7271, 0
    %v7316 = vsel %vm1881, %v7273, 0
    %v7319 = vsel %vm1881, %v7275, 0
    %v7322 = vsel %vm1881, %v7277, 0
    %v7325 = vsel %vm1881, %v7279, 0
    %v7328 = vsel %vm1881, %v7281, 0
    %7330 = vmatprep.subr.bf16.mxu0 0
    %7331 = vmatpush1.bf16.xpose.msra.mxu0 %v7328
    %7332 = vmatprep.subr.bf16.mxu0 0
    %7333 = vmatpush1.bf16.xpose.msra.mxu0 %v7325
    %7334 = vmatprep.subr.bf16.mxu0 0
    %7335 = vmatpush1.bf16.xpose.msra.mxu0 %v7322
    %7336 = vmatprep.subr.bf16.mxu0 0
    %7337 = vmatpush1.bf16.xpose.msra.mxu0 %v7319
    %7338 = vmatprep.subr.bf16.mxu0 0
    %7339 = vmatpush1.bf16.xpose.msra.mxu0 %v7316
    %7340 = vmatprep.subr.bf16.mxu0 0
    %7341 = vmatpush1.bf16.xpose.msra.mxu0 %v7313
    %7342 = vmatprep.subr.bf16.mxu0 0
    %7343 = vmatpush1.bf16.xpose.msra.mxu0 %v7310
    %7344 = vmatprep.subr.bf16.mxu0 0
    %7345 = vmatpush1.bf16.xpose.msra.mxu0 %v7307
    %7346 = vmatprep.subr.bf16.mxu0 0
    %7347 = vmatpush2.bf16.xpose.msra.mxu0 0
    %7348 = vmatprep.subr.bf16.mxu0 0
    %7349 = vmatpush2.bf16.xpose.msra.mxu0 0
    %7350 = vmatprep.subr.bf16.mxu0 0
    %7351 = vmatpush2.bf16.xpose.msra.mxu0 0
    %7352 = vmatprep.subr.bf16.mxu0 0
    %7353 = vmatpush2.bf16.xpose.msra.mxu0 0
    %7354 = vmatprep.subr.bf16.mxu0 0
    %7355 = vmatpush2.bf16.xpose.msra.mxu0 0
    %7356 = vmatprep.subr.bf16.mxu0 0
    %7357 = vmatpush2.bf16.xpose.msra.mxu0 0
    %7358 = vmatprep.subr.bf16.mxu0 0
    %7359 = vmatpush2.bf16.xpose.msra.mxu0 0
    %7360 = vmatprep.subr.bf16.mxu0 0
    %7361 = vmatpush2.bf16.xpose.msra.mxu0 0
    %7362 = vmatprep.mubr.bf16.mxu0 0
    %7363 = vmatmul.mubr.bf16.gmra.mxu0 %v7283
    %v7364 = vpop.f32.mrf.mxu0
    %v7365 = vadd.f32 %v1865, %v7364
    %v7366 = vpop.f32.mrf.mxu0
    %v7367 = vpop.f32.mrf.mxu0
    %v7368 = vadd.f32 %v1866, %v7367
    %v7369 = vpop.f32.mrf.mxu0
    %7370 = vmatprep.mubr.bf16.mxu0 0
    %7371 = vmatmul.mubr.bf16.gmra.mxu0 %v7286
    %v7372 = vpop.f32.mrf.mxu0
    %v7373 = vadd.f32 %v1867, %v7372
    %v7374 = vpop.f32.mrf.mxu0
    %v7375 = vpop.f32.mrf.mxu0
    %v7376 = vadd.f32 %v1868, %v7375
    %v7377 = vpop.f32.mrf.mxu0
    %7378 = vmatprep.mubr.bf16.mxu0 0
    %7379 = vmatmul.mubr.bf16.gmra.mxu0 %v7289
    %v7380 = vpop.f32.mrf.mxu0
    %v7381 = vadd.f32 %v1869, %v7380
    %v7382 = vpop.f32.mrf.mxu0
    %v7383 = vpop.f32.mrf.mxu0
    %v7384 = vadd.f32 %v1870, %v7383
    %v7385 = vpop.f32.mrf.mxu0
    %7386 = vmatprep.mubr.bf16.mxu0 0
    %7387 = vmatmul.mubr.bf16.gmra.mxu0 %v7292
    %v7388 = vpop.f32.mrf.mxu0
    %v7389 = vadd.f32 %v1871, %v7388
    %v7390 = vpop.f32.mrf.mxu0
    %v7391 = vpop.f32.mrf.mxu0
    %v7392 = vadd.f32 %v1872, %v7391
    %v7393 = vpop.f32.mrf.mxu0
    %7394 = vmatprep.mubr.bf16.mxu0 0
    %7395 = vmatmul.mubr.bf16.gmra.mxu0 %v7295
    %v7396 = vpop.f32.mrf.mxu0
    %v7397 = vadd.f32 %v1873, %v7396
    %v7398 = vpop.f32.mrf.mxu0
    %v7399 = vpop.f32.mrf.mxu0
    %v7400 = vadd.f32 %v1874, %v7399
    %v7401 = vpop.f32.mrf.mxu0
    %7402 = vmatprep.mubr.bf16.mxu0 0
    %7403 = vmatmul.mubr.bf16.gmra.mxu0 %v7298
    %v7404 = vpop.f32.mrf.mxu0
    %v7405 = vadd.f32 %v1875, %v7404
    %v7406 = vpop.f32.mrf.mxu0
    %v7407 = vpop.f32.mrf.mxu0
    %v7408 = vadd.f32 %v1876, %v7407
    %v7409 = vpop.f32.mrf.mxu0
    %7410 = vmatprep.mubr.bf16.mxu0 0
    %7411 = vmatmul.mubr.bf16.gmra.mxu0 %v7301
    %v7412 = vpop.f32.mrf.mxu0
    %v7413 = vadd.f32 %v1877, %v7412
    %v7414 = vpop.f32.mrf.mxu0
    %v7415 = vpop.f32.mrf.mxu0
    %v7416 = vadd.f32 %v1878, %v7415
    %v7417 = vpop.f32.mrf.mxu0
    %7418 = vmatprep.mubr.bf16.mxu0 0
    %7419 = vmatmul.mubr.bf16.gmra.mxu0 %v7304
    %v7420 = vpop.f32.mrf.mxu0
    %v7421 = vadd.f32 %v1879, %v7420
    %v7422 = vpop.f32.mrf.mxu0
    %v7423 = vpop.f32.mrf.mxu0
    %v7424 = vadd.f32 %v1880, %v7423
    %v7425 = vpop.f32.mrf.mxu0
    %7426 = vdwg.mxu0
    %7427 = vrot.lane.b32.xlu0 %v1758, 32
    %v7428 = vpop.permute.xlu0 %7427
    %7429 = vrot.lane.b32.xlu0 %v1761, 32
    %v7430 = vpop.permute.xlu0 %7429
    %7431 = vrot.lane.b32.xlu0 %v1764, 32
    %v7432 = vpop.permute.xlu0 %7431
    %7433 = vrot.lane.b32.xlu0 %v1767, 32
    %v7434 = vpop.permute.xlu0 %7433
    %7435 = vrot.lane.b32.xlu0 %v1770, 32
    %v7436 = vpop.permute.xlu0 %7435
    %7437 = vrot.lane.b32.xlu0 %v1773, 32
    %v7438 = vpop.permute.xlu0 %7437
    %7439 = vrot.lane.b32.xlu0 %v1776, 32
    %v7440 = vpop.permute.xlu0 %7439
    %7441 = vrot.lane.b32.xlu0 %v1779, 32
    %v7442 = vpop.permute.xlu0 %7441
    %7443 = vrot.lane.b32.xlu0 %v1759, 32
    %v7444 = vpop.permute.xlu0 %7443
    %7445 = vrot.lane.b32.xlu0 %v1762, 32
    %v7446 = vpop.permute.xlu0 %7445
    %7447 = vrot.lane.b32.xlu0 %v1765, 32
    %v7448 = vpop.permute.xlu0 %7447
    %7449 = vrot.lane.b32.xlu0 %v1768, 32
    %v7450 = vpop.permute.xlu0 %7449
    %7451 = vrot.lane.b32.xlu0 %v1771, 32
    %v7452 = vpop.permute.xlu0 %7451
    %7453 = vrot.lane.b32.xlu0 %v1774, 32
    %v7454 = vpop.permute.xlu0 %7453
    %7455 = vrot.lane.b32.xlu0 %v1777, 32
    %v7456 = vpop.permute.xlu0 %7455
    %7457 = vrot.lane.b32.xlu0 %v1780, 32
    %v7458 = vpop.permute.xlu0 %7457
    %v7460 = vsel %vm1881, %v7428, 0
    %v7463 = vsel %vm1881, %v7430, 0
    %v7466 = vsel %vm1881, %v7432, 0
    %v7469 = vsel %vm1881, %v7434, 0
    %v7472 = vsel %vm1881, %v7436, 0
    %v7475 = vsel %vm1881, %v7438, 0
    %v7478 = vsel %vm1881, %v7440, 0
    %v7481 = vsel %vm1881, %v7442, 0
    %v7484 = vsel %vm1881, %v7444, 0
    %v7487 = vsel %vm1881, %v7446, 0
    %v7490 = vsel %vm1881, %v7448, 0
    %v7493 = vsel %vm1881, %v7450, 0
    %v7496 = vsel %vm1881, %v7452, 0
    %v7499 = vsel %vm1881, %v7454, 0
    %v7502 = vsel %vm1881, %v7456, 0
    %v7505 = vsel %vm1881, %v7458, 0
    %7507 = vmatprep.subr.bf16.mxu0 0
    %7508 = vmatpush1.bf16.xpose.msra.mxu0 %v7505
    %7509 = vmatprep.subr.bf16.mxu0 0
    %7510 = vmatpush1.bf16.xpose.msra.mxu0 %v7502
    %7511 = vmatprep.subr.bf16.mxu0 0
    %7512 = vmatpush1.bf16.xpose.msra.mxu0 %v7499
    %7513 = vmatprep.subr.bf16.mxu0 0
    %7514 = vmatpush1.bf16.xpose.msra.mxu0 %v7496
    %7515 = vmatprep.subr.bf16.mxu0 0
    %7516 = vmatpush1.bf16.xpose.msra.mxu0 %v7493
    %7517 = vmatprep.subr.bf16.mxu0 0
    %7518 = vmatpush1.bf16.xpose.msra.mxu0 %v7490
    %7519 = vmatprep.subr.bf16.mxu0 0
    %7520 = vmatpush1.bf16.xpose.msra.mxu0 %v7487
    %7521 = vmatprep.subr.bf16.mxu0 0
    %7522 = vmatpush1.bf16.xpose.msra.mxu0 %v7484
    %7523 = vmatprep.subr.bf16.mxu0 0
    %7524 = vmatpush2.bf16.xpose.msra.mxu0 0
    %7525 = vmatprep.subr.bf16.mxu0 0
    %7526 = vmatpush2.bf16.xpose.msra.mxu0 0
    %7527 = vmatprep.subr.bf16.mxu0 0
    %7528 = vmatpush2.bf16.xpose.msra.mxu0 0
    %7529 = vmatprep.subr.bf16.mxu0 0
    %7530 = vmatpush2.bf16.xpose.msra.mxu0 0
    %7531 = vmatprep.subr.bf16.mxu0 0
    %7532 = vmatpush2.bf16.xpose.msra.mxu0 0
    %7533 = vmatprep.subr.bf16.mxu0 0
    %7534 = vmatpush2.bf16.xpose.msra.mxu0 0
    %7535 = vmatprep.subr.bf16.mxu0 0
    %7536 = vmatpush2.bf16.xpose.msra.mxu0 0
    %7537 = vmatprep.subr.bf16.mxu0 0
    %7538 = vmatpush2.bf16.xpose.msra.mxu0 0
    %7539 = vmatprep.mubr.bf16.mxu0 0
    %7540 = vmatmul.mubr.bf16.gmra.mxu0 %v7460
    %v7541 = vpop.f32.mrf.mxu0
    %v7542 = vadd.f32 %v1865, %v7541
    %v7543 = vpop.f32.mrf.mxu0
    %v7544 = vpop.f32.mrf.mxu0
    %v7545 = vadd.f32 %v1866, %v7544
    %v7546 = vpop.f32.mrf.mxu0
    %7547 = vmatprep.mubr.bf16.mxu0 0
    %7548 = vmatmul.mubr.bf16.gmra.mxu0 %v7463
    %v7549 = vpop.f32.mrf.mxu0
    %v7550 = vadd.f32 %v1867, %v7549
    %v7551 = vpop.f32.mrf.mxu0
    %v7552 = vpop.f32.mrf.mxu0
    %v7553 = vadd.f32 %v1868, %v7552
    %v7554 = vpop.f32.mrf.mxu0
    %7555 = vmatprep.mubr.bf16.mxu0 0
    %7556 = vmatmul.mubr.bf16.gmra.mxu0 %v7466
    %v7557 = vpop.f32.mrf.mxu0
    %v7558 = vadd.f32 %v1869, %v7557
    %v7559 = vpop.f32.mrf.mxu0
    %v7560 = vpop.f32.mrf.mxu0
    %v7561 = vadd.f32 %v1870, %v7560
    %v7562 = vpop.f32.mrf.mxu0
    %7563 = vmatprep.mubr.bf16.mxu0 0
    %7564 = vmatmul.mubr.bf16.gmra.mxu0 %v7469
    %v7565 = vpop.f32.mrf.mxu0
    %v7566 = vadd.f32 %v1871, %v7565
    %v7567 = vpop.f32.mrf.mxu0
    %v7568 = vpop.f32.mrf.mxu0
    %v7569 = vadd.f32 %v1872, %v7568
    %v7570 = vpop.f32.mrf.mxu0
    %7571 = vmatprep.mubr.bf16.mxu0 0
    %7572 = vmatmul.mubr.bf16.gmra.mxu0 %v7472
    %v7573 = vpop.f32.mrf.mxu0
    %v7574 = vadd.f32 %v1873, %v7573
    %v7575 = vpop.f32.mrf.mxu0
    %v7576 = vpop.f32.mrf.mxu0
    %v7577 = vadd.f32 %v1874, %v7576
    %v7578 = vpop.f32.mrf.mxu0
    %7579 = vmatprep.mubr.bf16.mxu0 0
    %7580 = vmatmul.mubr.bf16.gmra.mxu0 %v7475
    %v7581 = vpop.f32.mrf.mxu0
    %v7582 = vadd.f32 %v1875, %v7581
    %v7583 = vpop.f32.mrf.mxu0
    %v7584 = vpop.f32.mrf.mxu0
    %v7585 = vadd.f32 %v1876, %v7584
    %v7586 = vpop.f32.mrf.mxu0
    %7587 = vmatprep.mubr.bf16.mxu0 0
    %7588 = vmatmul.mubr.bf16.gmra.mxu0 %v7478
    %v7589 = vpop.f32.mrf.mxu0
    %v7590 = vadd.f32 %v1877, %v7589
    %v7591 = vpop.f32.mrf.mxu0
    %v7592 = vpop.f32.mrf.mxu0
    %v7593 = vadd.f32 %v1878, %v7592
    %v7594 = vpop.f32.mrf.mxu0
    %7595 = vmatprep.mubr.bf16.mxu0 0
    %7596 = vmatmul.mubr.bf16.gmra.mxu0 %v7481
    %v7597 = vpop.f32.mrf.mxu0
    %v7598 = vadd.f32 %v1879, %v7597
    %v7599 = vpop.f32.mrf.mxu0
    %v7600 = vpop.f32.mrf.mxu0
    %v7601 = vadd.f32 %v1880, %v7600
    %v7602 = vpop.f32.mrf.mxu0
    %7603 = vdwg.mxu0
    %7604 = vrot.lane.b32.xlu0 %v1782, 32
    %v7605 = vpop.permute.xlu0 %7604
    %7606 = vrot.lane.b32.xlu0 %v1785, 32
    %v7607 = vpop.permute.xlu0 %7606
    %7608 = vrot.lane.b32.xlu0 %v1788, 32
    %v7609 = vpop.permute.xlu0 %7608
    %7610 = vrot.lane.b32.xlu0 %v1791, 32
    %v7611 = vpop.permute.xlu0 %7610
    %7612 = vrot.lane.b32.xlu0 %v1794, 32
    %v7613 = vpop.permute.xlu0 %7612
    %7614 = vrot.lane.b32.xlu0 %v1797, 32
    %v7615 = vpop.permute.xlu0 %7614
    %7616 = vrot.lane.b32.xlu0 %v1800, 32
    %v7617 = vpop.permute.xlu0 %7616
    %7618 = vrot.lane.b32.xlu0 %v1803, 32
    %v7619 = vpop.permute.xlu0 %7618
    %7620 = vrot.lane.b32.xlu0 %v1783, 32
    %v7621 = vpop.permute.xlu0 %7620
    %7622 = vrot.lane.b32.xlu0 %v1786, 32
    %v7623 = vpop.permute.xlu0 %7622
    %7624 = vrot.lane.b32.xlu0 %v1789, 32
    %v7625 = vpop.permute.xlu0 %7624
    %7626 = vrot.lane.b32.xlu0 %v1792, 32
    %v7627 = vpop.permute.xlu0 %7626
    %7628 = vrot.lane.b32.xlu0 %v1795, 32
    %v7629 = vpop.permute.xlu0 %7628
    %7630 = vrot.lane.b32.xlu0 %v1798, 32
    %v7631 = vpop.permute.xlu0 %7630
    %7632 = vrot.lane.b32.xlu0 %v1801, 32
    %v7633 = vpop.permute.xlu0 %7632
    %7634 = vrot.lane.b32.xlu0 %v1804, 32
    %v7635 = vpop.permute.xlu0 %7634
    %v7637 = vsel %vm1881, %v7605, 0
    %v7640 = vsel %vm1881, %v7607, 0
    %v7643 = vsel %vm1881, %v7609, 0
    %v7646 = vsel %vm1881, %v7611, 0
    %v7649 = vsel %vm1881, %v7613, 0
    %v7652 = vsel %vm1881, %v7615, 0
    %v7655 = vsel %vm1881, %v7617, 0
    %v7658 = vsel %vm1881, %v7619, 0
    %v7661 = vsel %vm1881, %v7621, 0
    %v7664 = vsel %vm1881, %v7623, 0
    %v7667 = vsel %vm1881, %v7625, 0
    %v7670 = vsel %vm1881, %v7627, 0
    %v7673 = vsel %vm1881, %v7629, 0
    %v7676 = vsel %vm1881, %v7631, 0
    %v7679 = vsel %vm1881, %v7633, 0
    %v7682 = vsel %vm1881, %v7635, 0
    %7684 = vmatprep.subr.bf16.mxu0 0
    %7685 = vmatpush1.bf16.xpose.msra.mxu0 %v7682
    %7686 = vmatprep.subr.bf16.mxu0 0
    %7687 = vmatpush1.bf16.xpose.msra.mxu0 %v7679
    %7688 = vmatprep.subr.bf16.mxu0 0
    %7689 = vmatpush1.bf16.xpose.msra.mxu0 %v7676
    %7690 = vmatprep.subr.bf16.mxu0 0
    %7691 = vmatpush1.bf16.xpose.msra.mxu0 %v7673
    %7692 = vmatprep.subr.bf16.mxu0 0
    %7693 = vmatpush1.bf16.xpose.msra.mxu0 %v7670
    %7694 = vmatprep.subr.bf16.mxu0 0
    %7695 = vmatpush1.bf16.xpose.msra.mxu0 %v7667
    %7696 = vmatprep.subr.bf16.mxu0 0
    %7697 = vmatpush1.bf16.xpose.msra.mxu0 %v7664
    %7698 = vmatprep.subr.bf16.mxu0 0
    %7699 = vmatpush1.bf16.xpose.msra.mxu0 %v7661
    %7700 = vmatprep.subr.bf16.mxu0 0
    %7701 = vmatpush2.bf16.xpose.msra.mxu0 0
    %7702 = vmatprep.subr.bf16.mxu0 0
    %7703 = vmatpush2.bf16.xpose.msra.mxu0 0
    %7704 = vmatprep.subr.bf16.mxu0 0
    %7705 = vmatpush2.bf16.xpose.msra.mxu0 0
    %7706 = vmatprep.subr.bf16.mxu0 0
    %7707 = vmatpush2.bf16.xpose.msra.mxu0 0
    %7708 = vmatprep.subr.bf16.mxu0 0
    %7709 = vmatpush2.bf16.xpose.msra.mxu0 0
    %7710 = vmatprep.subr.bf16.mxu0 0
    %7711 = vmatpush2.bf16.xpose.msra.mxu0 0
    %7712 = vmatprep.subr.bf16.mxu0 0
    %7713 = vmatpush2.bf16.xpose.msra.mxu0 0
    %7714 = vmatprep.subr.bf16.mxu0 0
    %7715 = vmatpush2.bf16.xpose.msra.mxu0 0
    %7716 = vmatprep.mubr.bf16.mxu0 0
    %7717 = vmatmul.mubr.bf16.gmra.mxu0 %v7637
    %v7718 = vpop.f32.mrf.mxu0
    %v7719 = vadd.f32 %v1865, %v7718
    %v7720 = vpop.f32.mrf.mxu0
    %v7721 = vpop.f32.mrf.mxu0
    %v7722 = vadd.f32 %v1866, %v7721
    %v7723 = vpop.f32.mrf.mxu0
    %7724 = vmatprep.mubr.bf16.mxu0 0
    %7725 = vmatmul.mubr.bf16.gmra.mxu0 %v7640
    %v7726 = vpop.f32.mrf.mxu0
    %v7727 = vadd.f32 %v1867, %v7726
    %v7728 = vpop.f32.mrf.mxu0
    %v7729 = vpop.f32.mrf.mxu0
    %v7730 = vadd.f32 %v1868, %v7729
    %v7731 = vpop.f32.mrf.mxu0
    %7732 = vmatprep.mubr.bf16.mxu0 0
    %7733 = vmatmul.mubr.bf16.gmra.mxu0 %v7643
    %v7734 = vpop.f32.mrf.mxu0
    %v7735 = vadd.f32 %v1869, %v7734
    %v7736 = vpop.f32.mrf.mxu0
    %v7737 = vpop.f32.mrf.mxu0
    %v7738 = vadd.f32 %v1870, %v7737
    %v7739 = vpop.f32.mrf.mxu0
    %7740 = vmatprep.mubr.bf16.mxu0 0
    %7741 = vmatmul.mubr.bf16.gmra.mxu0 %v7646
    %v7742 = vpop.f32.mrf.mxu0
    %v7743 = vadd.f32 %v1871, %v7742
    %v7744 = vpop.f32.mrf.mxu0
    %v7745 = vpop.f32.mrf.mxu0
    %v7746 = vadd.f32 %v1872, %v7745
    %v7747 = vpop.f32.mrf.mxu0
    %7748 = vmatprep.mubr.bf16.mxu0 0
    %7749 = vmatmul.mubr.bf16.gmra.mxu0 %v7649
    %v7750 = vpop.f32.mrf.mxu0
    %v7751 = vadd.f32 %v1873, %v7750
    %v7752 = vpop.f32.mrf.mxu0
    %v7753 = vpop.f32.mrf.mxu0
    %v7754 = vadd.f32 %v1874, %v7753
    %v7755 = vpop.f32.mrf.mxu0
    %7756 = vmatprep.mubr.bf16.mxu0 0
    %7757 = vmatmul.mubr.bf16.gmra.mxu0 %v7652
    %v7758 = vpop.f32.mrf.mxu0
    %v7759 = vadd.f32 %v1875, %v7758
    %v7760 = vpop.f32.mrf.mxu0
    %v7761 = vpop.f32.mrf.mxu0
    %v7762 = vadd.f32 %v1876, %v7761
    %v7763 = vpop.f32.mrf.mxu0
    %7764 = vmatprep.mubr.bf16.mxu0 0
    %7765 = vmatmul.mubr.bf16.gmra.mxu0 %v7655
    %v7766 = vpop.f32.mrf.mxu0
    %v7767 = vadd.f32 %v1877, %v7766
    %v7768 = vpop.f32.mrf.mxu0
    %v7769 = vpop.f32.mrf.mxu0
    %v7770 = vadd.f32 %v1878, %v7769
    %v7771 = vpop.f32.mrf.mxu0
    %7772 = vmatprep.mubr.bf16.mxu0 0
    %7773 = vmatmul.mubr.bf16.gmra.mxu0 %v7658
    %v7774 = vpop.f32.mrf.mxu0
    %v7775 = vadd.f32 %v1879, %v7774
    %v7776 = vpop.f32.mrf.mxu0
    %v7777 = vpop.f32.mrf.mxu0
    %v7778 = vadd.f32 %v1880, %v7777
    %v7779 = vpop.f32.mrf.mxu0
    %7780 = vdwg.mxu0
    %7781 = vrot.lane.b32.xlu0 %v1806, 32
    %v7782 = vpop.permute.xlu0 %7781
    %7783 = vrot.lane.b32.xlu0 %v1809, 32
    %v7784 = vpop.permute.xlu0 %7783
    %7785 = vrot.lane.b32.xlu0 %v1812, 32
    %v7786 = vpop.permute.xlu0 %7785
    %7787 = vrot.lane.b32.xlu0 %v1815, 32
    %v7788 = vpop.permute.xlu0 %7787
    %7789 = vrot.lane.b32.xlu0 %v1818, 32
    %v7790 = vpop.permute.xlu0 %7789
    %7791 = vrot.lane.b32.xlu0 %v1821, 32
    %v7792 = vpop.permute.xlu0 %7791
    %7793 = vrot.lane.b32.xlu0 %v1824, 32
    %v7794 = vpop.permute.xlu0 %7793
    %7795 = vrot.lane.b32.xlu0 %v1827, 32
    %v7796 = vpop.permute.xlu0 %7795
    %7797 = vrot.lane.b32.xlu0 %v1807, 32
    %v7798 = vpop.permute.xlu0 %7797
    %7799 = vrot.lane.b32.xlu0 %v1810, 32
    %v7800 = vpop.permute.xlu0 %7799
    %7801 = vrot.lane.b32.xlu0 %v1813, 32
    %v7802 = vpop.permute.xlu0 %7801
    %7803 = vrot.lane.b32.xlu0 %v1816, 32
    %v7804 = vpop.permute.xlu0 %7803
    %7805 = vrot.lane.b32.xlu0 %v1819, 32
    %v7806 = vpop.permute.xlu0 %7805
    %7807 = vrot.lane.b32.xlu0 %v1822, 32
    %v7808 = vpop.permute.xlu0 %7807
    %7809 = vrot.lane.b32.xlu0 %v1825, 32
    %v7810 = vpop.permute.xlu0 %7809
    %7811 = vrot.lane.b32.xlu0 %v1828, 32
    %v7812 = vpop.permute.xlu0 %7811
    %v7814 = vsel %vm1881, %v7782, 0
    %v7817 = vsel %vm1881, %v7784, 0
    %v7820 = vsel %vm1881, %v7786, 0
    %v7823 = vsel %vm1881, %v7788, 0
    %v7826 = vsel %vm1881, %v7790, 0
    %v7829 = vsel %vm1881, %v7792, 0
    %v7832 = vsel %vm1881, %v7794, 0
    %v7835 = vsel %vm1881, %v7796, 0
    %v7838 = vsel %vm1881, %v7798, 0
    %v7841 = vsel %vm1881, %v7800, 0
    %v7844 = vsel %vm1881, %v7802, 0
    %v7847 = vsel %vm1881, %v7804, 0
    %v7850 = vsel %vm1881, %v7806, 0
    %v7853 = vsel %vm1881, %v7808, 0
    %v7856 = vsel %vm1881, %v7810, 0
    %v7859 = vsel %vm1881, %v7812, 0
    %7861 = vmatprep.subr.bf16.mxu0 0
    %7862 = vmatpush1.bf16.xpose.msra.mxu0 %v7859
    %7863 = vmatprep.subr.bf16.mxu0 0
    %7864 = vmatpush1.bf16.xpose.msra.mxu0 %v7856
    %7865 = vmatprep.subr.bf16.mxu0 0
    %7866 = vmatpush1.bf16.xpose.msra.mxu0 %v7853
    %7867 = vmatprep.subr.bf16.mxu0 0
    %7868 = vmatpush1.bf16.xpose.msra.mxu0 %v7850
    %7869 = vmatprep.subr.bf16.mxu0 0
    %7870 = vmatpush1.bf16.xpose.msra.mxu0 %v7847
    %7871 = vmatprep.subr.bf16.mxu0 0
    %7872 = vmatpush1.bf16.xpose.msra.mxu0 %v7844
    %7873 = vmatprep.subr.bf16.mxu0 0
    %7874 = vmatpush1.bf16.xpose.msra.mxu0 %v7841
    %7875 = vmatprep.subr.bf16.mxu0 0
    %7876 = vmatpush1.bf16.xpose.msra.mxu0 %v7838
    %7877 = vmatprep.subr.bf16.mxu0 0
    %7878 = vmatpush2.bf16.xpose.msra.mxu0 0
    %7879 = vmatprep.subr.bf16.mxu0 0
    %7880 = vmatpush2.bf16.xpose.msra.mxu0 0
    %7881 = vmatprep.subr.bf16.mxu0 0
    %7882 = vmatpush2.bf16.xpose.msra.mxu0 0
    %7883 = vmatprep.subr.bf16.mxu0 0
    %7884 = vmatpush2.bf16.xpose.msra.mxu0 0
    %7885 = vmatprep.subr.bf16.mxu0 0
    %7886 = vmatpush2.bf16.xpose.msra.mxu0 0
    %7887 = vmatprep.subr.bf16.mxu0 0
    %7888 = vmatpush2.bf16.xpose.msra.mxu0 0
    %7889 = vmatprep.subr.bf16.mxu0 0
    %7890 = vmatpush2.bf16.xpose.msra.mxu0 0
    %7891 = vmatprep.subr.bf16.mxu0 0
    %7892 = vmatpush2.bf16.xpose.msra.mxu0 0
    %7893 = vmatprep.mubr.bf16.mxu0 0
    %7894 = vmatmul.mubr.bf16.gmra.mxu0 %v7814
    %v7895 = vpop.f32.mrf.mxu0
    %v7896 = vadd.f32 %v1865, %v7895
    %v7897 = vpop.f32.mrf.mxu0
    %v7898 = vpop.f32.mrf.mxu0
    %v7899 = vadd.f32 %v1866, %v7898
    %v7900 = vpop.f32.mrf.mxu0
    %7901 = vmatprep.mubr.bf16.mxu0 0
    %7902 = vmatmul.mubr.bf16.gmra.mxu0 %v7817
    %v7903 = vpop.f32.mrf.mxu0
    %v7904 = vadd.f32 %v1867, %v7903
    %v7905 = vpop.f32.mrf.mxu0
    %v7906 = vpop.f32.mrf.mxu0
    %v7907 = vadd.f32 %v1868, %v7906
    %v7908 = vpop.f32.mrf.mxu0
    %7909 = vmatprep.mubr.bf16.mxu0 0
    %7910 = vmatmul.mubr.bf16.gmra.mxu0 %v7820
    %v7911 = vpop.f32.mrf.mxu0
    %v7912 = vadd.f32 %v1869, %v7911
    %v7913 = vpop.f32.mrf.mxu0
    %v7914 = vpop.f32.mrf.mxu0
    %v7915 = vadd.f32 %v1870, %v7914
    %v7916 = vpop.f32.mrf.mxu0
    %7917 = vmatprep.mubr.bf16.mxu0 0
    %7918 = vmatmul.mubr.bf16.gmra.mxu0 %v7823
    %v7919 = vpop.f32.mrf.mxu0
    %v7920 = vadd.f32 %v1871, %v7919
    %v7921 = vpop.f32.mrf.mxu0
    %v7922 = vpop.f32.mrf.mxu0
    %v7923 = vadd.f32 %v1872, %v7922
    %v7924 = vpop.f32.mrf.mxu0
    %7925 = vmatprep.mubr.bf16.mxu0 0
    %7926 = vmatmul.mubr.bf16.gmra.mxu0 %v7826
    %v7927 = vpop.f32.mrf.mxu0
    %v7928 = vadd.f32 %v1873, %v7927
    %v7929 = vpop.f32.mrf.mxu0
    %v7930 = vpop.f32.mrf.mxu0
    %v7931 = vadd.f32 %v1874, %v7930
    %v7932 = vpop.f32.mrf.mxu0
    %7933 = vmatprep.mubr.bf16.mxu0 0
    %7934 = vmatmul.mubr.bf16.gmra.mxu0 %v7829
    %v7935 = vpop.f32.mrf.mxu0
    %v7936 = vadd.f32 %v1875, %v7935
    %v7937 = vpop.f32.mrf.mxu0
    %v7938 = vpop.f32.mrf.mxu0
    %v7939 = vadd.f32 %v1876, %v7938
    %v7940 = vpop.f32.mrf.mxu0
    %7941 = vmatprep.mubr.bf16.mxu0 0
    %7942 = vmatmul.mubr.bf16.gmra.mxu0 %v7832
    %v7943 = vpop.f32.mrf.mxu0
    %v7944 = vadd.f32 %v1877, %v7943
    %v7945 = vpop.f32.mrf.mxu0
    %v7946 = vpop.f32.mrf.mxu0
    %v7947 = vadd.f32 %v1878, %v7946
    %v7948 = vpop.f32.mrf.mxu0
    %7949 = vmatprep.mubr.bf16.mxu0 0
    %7950 = vmatmul.mubr.bf16.gmra.mxu0 %v7835
    %v7951 = vpop.f32.mrf.mxu0
    %v7952 = vadd.f32 %v1879, %v7951
    %v7953 = vpop.f32.mrf.mxu0
    %v7954 = vpop.f32.mrf.mxu0
    %v7955 = vadd.f32 %v1880, %v7954
    %v7956 = vpop.f32.mrf.mxu0
    %7957 = vdwg.mxu0
    %7958 = vmax.xlane.f32.xlu0 %v7365
    %v7959 = vpop.xlane.xlu0 %7958
    %7960 = vmax.xlane.f32.xlu0 %v7368
    %v7961 = vpop.xlane.xlu0 %7960
    %7962 = vmax.xlane.f32.xlu0 %v7373
    %v7963 = vpop.xlane.xlu0 %7962
    %7964 = vmax.xlane.f32.xlu0 %v7376
    %v7965 = vpop.xlane.xlu0 %7964
    %7966 = vmax.xlane.f32.xlu0 %v7381
    %v7967 = vpop.xlane.xlu0 %7966
    %7968 = vmax.xlane.f32.xlu0 %v7384
    %v7969 = vpop.xlane.xlu0 %7968
    %7970 = vmax.xlane.f32.xlu0 %v7389
    %v7971 = vpop.xlane.xlu0 %7970
    %7972 = vmax.xlane.f32.xlu0 %v7392
    %v7973 = vpop.xlane.xlu0 %7972
    %7974 = vmax.xlane.f32.xlu0 %v7397
    %v7975 = vpop.xlane.xlu0 %7974
    %7976 = vmax.xlane.f32.xlu0 %v7400
    %v7977 = vpop.xlane.xlu0 %7976
    %7978 = vmax.xlane.f32.xlu0 %v7405
    %v7979 = vpop.xlane.xlu0 %7978
    %7980 = vmax.xlane.f32.xlu0 %v7408
    %v7981 = vpop.xlane.xlu0 %7980
    %7982 = vmax.xlane.f32.xlu0 %v7413
    %v7983 = vpop.xlane.xlu0 %7982
    %7984 = vmax.xlane.f32.xlu0 %v7416
    %v7985 = vpop.xlane.xlu0 %7984
    %7986 = vmax.xlane.f32.xlu0 %v7421
    %v7987 = vpop.xlane.xlu0 %7986
    %7988 = vmax.xlane.f32.xlu0 %v7424
    %v7989 = vpop.xlane.xlu0 %7988
    %7990 = vmax.xlane.f32.xlu0 %v7542
    %v7991 = vpop.xlane.xlu0 %7990
    %7992 = vmax.xlane.f32.xlu0 %v7545
    %v7993 = vpop.xlane.xlu0 %7992
    %7994 = vmax.xlane.f32.xlu0 %v7550
    %v7995 = vpop.xlane.xlu0 %7994
    %7996 = vmax.xlane.f32.xlu0 %v7553
    %v7997 = vpop.xlane.xlu0 %7996
    %7998 = vmax.xlane.f32.xlu0 %v7558
    %v7999 = vpop.xlane.xlu0 %7998
    %8000 = vmax.xlane.f32.xlu0 %v7561
    %v8001 = vpop.xlane.xlu0 %8000
    %8002 = vmax.xlane.f32.xlu0 %v7566
    %v8003 = vpop.xlane.xlu0 %8002
    %8004 = vmax.xlane.f32.xlu0 %v7569
    %v8005 = vpop.xlane.xlu0 %8004
    %8006 = vmax.xlane.f32.xlu0 %v7574
    %v8007 = vpop.xlane.xlu0 %8006
    %8008 = vmax.xlane.f32.xlu0 %v7577
    %v8009 = vpop.xlane.xlu0 %8008
    %8010 = vmax.xlane.f32.xlu0 %v7582
    %v8011 = vpop.xlane.xlu0 %8010
    %8012 = vmax.xlane.f32.xlu0 %v7585
    %v8013 = vpop.xlane.xlu0 %8012
    %8014 = vmax.xlane.f32.xlu0 %v7590
    %v8015 = vpop.xlane.xlu0 %8014
    %8016 = vmax.xlane.f32.xlu0 %v7593
    %v8017 = vpop.xlane.xlu0 %8016
    %8018 = vmax.xlane.f32.xlu0 %v7598
    %v8019 = vpop.xlane.xlu0 %8018
    %8020 = vmax.xlane.f32.xlu0 %v7601
    %v8021 = vpop.xlane.xlu0 %8020
    %8022 = vmax.xlane.f32.xlu0 %v7719
    %v8023 = vpop.xlane.xlu0 %8022
    %8024 = vmax.xlane.f32.xlu0 %v7722
    %v8025 = vpop.xlane.xlu0 %8024
    %8026 = vmax.xlane.f32.xlu0 %v7727
    %v8027 = vpop.xlane.xlu0 %8026
    %8028 = vmax.xlane.f32.xlu0 %v7730
    %v8029 = vpop.xlane.xlu0 %8028
    %8030 = vmax.xlane.f32.xlu0 %v7735
    %v8031 = vpop.xlane.xlu0 %8030
    %8032 = vmax.xlane.f32.xlu0 %v7738
    %v8033 = vpop.xlane.xlu0 %8032
    %8034 = vmax.xlane.f32.xlu0 %v7743
    %v8035 = vpop.xlane.xlu0 %8034
    %8036 = vmax.xlane.f32.xlu0 %v7746
    %v8037 = vpop.xlane.xlu0 %8036
    %8038 = vmax.xlane.f32.xlu0 %v7751
    %v8039 = vpop.xlane.xlu0 %8038
    %8040 = vmax.xlane.f32.xlu0 %v7754
    %v8041 = vpop.xlane.xlu0 %8040
    %8042 = vmax.xlane.f32.xlu0 %v7759
    %v8043 = vpop.xlane.xlu0 %8042
    %8044 = vmax.xlane.f32.xlu0 %v7762
    %v8045 = vpop.xlane.xlu0 %8044
    %8046 = vmax.xlane.f32.xlu0 %v7767
    %v8047 = vpop.xlane.xlu0 %8046
    %8048 = vmax.xlane.f32.xlu0 %v7770
    %v8049 = vpop.xlane.xlu0 %8048
    %8050 = vmax.xlane.f32.xlu0 %v7775
    %v8051 = vpop.xlane.xlu0 %8050
    %8052 = vmax.xlane.f32.xlu0 %v7778
    %v8053 = vpop.xlane.xlu0 %8052
    %8054 = vmax.xlane.f32.xlu0 %v7896
    %v8055 = vpop.xlane.xlu0 %8054
    %8056 = vmax.xlane.f32.xlu0 %v7899
    %v8057 = vpop.xlane.xlu0 %8056
    %8058 = vmax.xlane.f32.xlu0 %v7904
    %v8059 = vpop.xlane.xlu0 %8058
    %8060 = vmax.xlane.f32.xlu0 %v7907
    %v8061 = vpop.xlane.xlu0 %8060
    %8062 = vmax.xlane.f32.xlu0 %v7912
    %v8063 = vpop.xlane.xlu0 %8062
    %8064 = vmax.xlane.f32.xlu0 %v7915
    %v8065 = vpop.xlane.xlu0 %8064
    %8066 = vmax.xlane.f32.xlu0 %v7920
    %v8067 = vpop.xlane.xlu0 %8066
    %8068 = vmax.xlane.f32.xlu0 %v7923
    %v8069 = vpop.xlane.xlu0 %8068
    %8070 = vmax.xlane.f32.xlu0 %v7928
    %v8071 = vpop.xlane.xlu0 %8070
    %8072 = vmax.xlane.f32.xlu0 %v7931
    %v8073 = vpop.xlane.xlu0 %8072
    %8074 = vmax.xlane.f32.xlu0 %v7936
    %v8075 = vpop.xlane.xlu0 %8074
    %8076 = vmax.xlane.f32.xlu0 %v7939
    %v8077 = vpop.xlane.xlu0 %8076
    %8078 = vmax.xlane.f32.xlu0 %v7944
    %v8079 = vpop.xlane.xlu0 %8078
    %8080 = vmax.xlane.f32.xlu0 %v7947
    %v8081 = vpop.xlane.xlu0 %8080
    %8082 = vmax.xlane.f32.xlu0 %v7952
    %v8083 = vpop.xlane.xlu0 %8082
    %8084 = vmax.xlane.f32.xlu0 %v7955
    %v8085 = vpop.xlane.xlu0 %8084
    %v8086 = vsub.f32 %v7365, %v7959
    %v8087 = vsub.f32 %v7368, %v7961
    %v8088 = vsub.f32 %v7373, %v7963
    %v8089 = vsub.f32 %v7376, %v7965
    %v8090 = vsub.f32 %v7381, %v7967
    %v8091 = vsub.f32 %v7384, %v7969
    %v8092 = vsub.f32 %v7389, %v7971
    %v8093 = vsub.f32 %v7392, %v7973
    %v8094 = vsub.f32 %v7397, %v7975
    %v8095 = vsub.f32 %v7400, %v7977
    %v8096 = vsub.f32 %v7405, %v7979
    %v8097 = vsub.f32 %v7408, %v7981
    %v8098 = vsub.f32 %v7413, %v7983
    %v8099 = vsub.f32 %v7416, %v7985
    %v8100 = vsub.f32 %v7421, %v7987
    %v8101 = vsub.f32 %v7424, %v7989
    %v8102 = vsub.f32 %v7542, %v7991
    %v8103 = vsub.f32 %v7545, %v7993
    %v8104 = vsub.f32 %v7550, %v7995
    %v8105 = vsub.f32 %v7553, %v7997
    %v8106 = vsub.f32 %v7558, %v7999
    %v8107 = vsub.f32 %v7561, %v8001
    %v8108 = vsub.f32 %v7566, %v8003
    %v8109 = vsub.f32 %v7569, %v8005
    %v8110 = vsub.f32 %v7574, %v8007
    %v8111 = vsub.f32 %v7577, %v8009
    %v8112 = vsub.f32 %v7582, %v8011
    %v8113 = vsub.f32 %v7585, %v8013
    %v8114 = vsub.f32 %v7590, %v8015
    %v8115 = vsub.f32 %v7593, %v8017
    %v8116 = vsub.f32 %v7598, %v8019
    %v8117 = vsub.f32 %v7601, %v8021
    %v8118 = vsub.f32 %v7719, %v8023
    %v8119 = vsub.f32 %v7722, %v8025
    %v8120 = vsub.f32 %v7727, %v8027
    %v8121 = vsub.f32 %v7730, %v8029
    %v8122 = vsub.f32 %v7735, %v8031
    %v8123 = vsub.f32 %v7738, %v8033
    %v8124 = vsub.f32 %v7743, %v8035
    %v8125 = vsub.f32 %v7746, %v8037
    %v8126 = vsub.f32 %v7751, %v8039
    %v8127 = vsub.f32 %v7754, %v8041
    %v8128 = vsub.f32 %v7759, %v8043
    %v8129 = vsub.f32 %v7762, %v8045
    %v8130 = vsub.f32 %v7767, %v8047
    %v8131 = vsub.f32 %v7770, %v8049
    %v8132 = vsub.f32 %v7775, %v8051
    %v8133 = vsub.f32 %v7778, %v8053
    %v8134 = vsub.f32 %v7896, %v8055
    %v8135 = vsub.f32 %v7899, %v8057
    %v8136 = vsub.f32 %v7904, %v8059
    %v8137 = vsub.f32 %v7907, %v8061
    %v8138 = vsub.f32 %v7912, %v8063
    %v8139 = vsub.f32 %v7915, %v8065
    %v8140 = vsub.f32 %v7920, %v8067
    %v8141 = vsub.f32 %v7923, %v8069
    %v8142 = vsub.f32 %v7928, %v8071
    %v8143 = vsub.f32 %v7931, %v8073
    %v8144 = vsub.f32 %v7936, %v8075
    %v8145 = vsub.f32 %v7939, %v8077
    %v8146 = vsub.f32 %v7944, %v8079
    %v8147 = vsub.f32 %v7947, %v8081
    %v8148 = vsub.f32 %v7952, %v8083
    %v8149 = vsub.f32 %v7955, %v8085
    %v8150 = vmul.f32 %v8086, 1.442695
    %v8151 = vpow.pop %v8150
    %v8152 = vmul.f32 %v8087, 1.442695
    %v8153 = vpow.pop %v8152
    %v8154 = vmul.f32 %v8088, 1.442695
    %v8155 = vpow.pop %v8154
    %v8156 = vmul.f32 %v8089, 1.442695
    %v8157 = vpow.pop %v8156
    %v8158 = vmul.f32 %v8090, 1.442695
    %v8159 = vpow.pop %v8158
    %v8160 = vmul.f32 %v8091, 1.442695
    %v8161 = vpow.pop %v8160
    %v8162 = vmul.f32 %v8092, 1.442695
    %v8163 = vpow.pop %v8162
    %v8164 = vmul.f32 %v8093, 1.442695
    %v8165 = vpow.pop %v8164
    %v8166 = vmul.f32 %v8094, 1.442695
    %v8167 = vpow.pop %v8166
    %v8168 = vmul.f32 %v8095, 1.442695
    %v8169 = vpow.pop %v8168
    %v8170 = vmul.f32 %v8096, 1.442695
    %v8171 = vpow.pop %v8170
    %v8172 = vmul.f32 %v8097, 1.442695
    %v8173 = vpow.pop %v8172
    %v8174 = vmul.f32 %v8098, 1.442695
    %v8175 = vpow.pop %v8174
    %v8176 = vmul.f32 %v8099, 1.442695
    %v8177 = vpow.pop %v8176
    %v8178 = vmul.f32 %v8100, 1.442695
    %v8179 = vpow.pop %v8178
    %v8180 = vmul.f32 %v8101, 1.442695
    %v8181 = vpow.pop %v8180
    %v8182 = vmul.f32 %v8102, 1.442695
    %v8183 = vpow.pop %v8182
    %v8184 = vmul.f32 %v8103, 1.442695
    %v8185 = vpow.pop %v8184
    %v8186 = vmul.f32 %v8104, 1.442695
    %v8187 = vpow.pop %v8186
    %v8188 = vmul.f32 %v8105, 1.442695
    %v8189 = vpow.pop %v8188
    %v8190 = vmul.f32 %v8106, 1.442695
    %v8191 = vpow.pop %v8190
    %v8192 = vmul.f32 %v8107, 1.442695
    %v8193 = vpow.pop %v8192
    %v8194 = vmul.f32 %v8108, 1.442695
    %v8195 = vpow.pop %v8194
    %v8196 = vmul.f32 %v8109, 1.442695
    %v8197 = vpow.pop %v8196
    %v8198 = vmul.f32 %v8110, 1.442695
    %v8199 = vpow.pop %v8198
    %v8200 = vmul.f32 %v8111, 1.442695
    %v8201 = vpow.pop %v8200
    %v8202 = vmul.f32 %v8112, 1.442695
    %v8203 = vpow.pop %v8202
    %v8204 = vmul.f32 %v8113, 1.442695
    %v8205 = vpow.pop %v8204
    %v8206 = vmul.f32 %v8114, 1.442695
    %v8207 = vpow.pop %v8206
    %v8208 = vmul.f32 %v8115, 1.442695
    %v8209 = vpow.pop %v8208
    %v8210 = vmul.f32 %v8116, 1.442695
    %v8211 = vpow.pop %v8210
    %v8212 = vmul.f32 %v8117, 1.442695
    %v8213 = vpow.pop %v8212
    %v8214 = vmul.f32 %v8118, 1.442695
    %v8215 = vpow.pop %v8214
    %v8216 = vmul.f32 %v8119, 1.442695
    %v8217 = vpow.pop %v8216
    %v8218 = vmul.f32 %v8120, 1.442695
    %v8219 = vpow.pop %v8218
    %v8220 = vmul.f32 %v8121, 1.442695
    %v8221 = vpow.pop %v8220
    %v8222 = vmul.f32 %v8122, 1.442695
    %v8223 = vpow.pop %v8222
    %v8224 = vmul.f32 %v8123, 1.442695
    %v8225 = vpow.pop %v8224
    %v8226 = vmul.f32 %v8124, 1.442695
    %v8227 = vpow.pop %v8226
    %v8228 = vmul.f32 %v8125, 1.442695
    %v8229 = vpow.pop %v8228
    %v8230 = vmul.f32 %v8126, 1.442695
    %v8231 = vpow.pop %v8230
    %v8232 = vmul.f32 %v8127, 1.442695
    %v8233 = vpow.pop %v8232
    %v8234 = vmul.f32 %v8128, 1.442695
    %v8235 = vpow.pop %v8234
    %v8236 = vmul.f32 %v8129, 1.442695
    %v8237 = vpow.pop %v8236
    %v8238 = vmul.f32 %v8130, 1.442695
    %v8239 = vpow.pop %v8238
    %v8240 = vmul.f32 %v8131, 1.442695
    %v8241 = vpow.pop %v8240
    %v8242 = vmul.f32 %v8132, 1.442695
    %v8243 = vpow.pop %v8242
    %v8244 = vmul.f32 %v8133, 1.442695
    %v8245 = vpow.pop %v8244
    %v8246 = vmul.f32 %v8134, 1.442695
    %v8247 = vpow.pop %v8246
    %v8248 = vmul.f32 %v8135, 1.442695
    %v8249 = vpow.pop %v8248
    %v8250 = vmul.f32 %v8136, 1.442695
    %v8251 = vpow.pop %v8250
    %v8252 = vmul.f32 %v8137, 1.442695
    %v8253 = vpow.pop %v8252
    %v8254 = vmul.f32 %v8138, 1.442695
    %v8255 = vpow.pop %v8254
    %v8256 = vmul.f32 %v8139, 1.442695
    %v8257 = vpow.pop %v8256
    %v8258 = vmul.f32 %v8140, 1.442695
    %v8259 = vpow.pop %v8258
    %v8260 = vmul.f32 %v8141, 1.442695
    %v8261 = vpow.pop %v8260
    %v8262 = vmul.f32 %v8142, 1.442695
    %v8263 = vpow.pop %v8262
    %v8264 = vmul.f32 %v8143, 1.442695
    %v8265 = vpow.pop %v8264
    %v8266 = vmul.f32 %v8144, 1.442695
    %v8267 = vpow.pop %v8266
    %v8268 = vmul.f32 %v8145, 1.442695
    %v8269 = vpow.pop %v8268
    %v8270 = vmul.f32 %v8146, 1.442695
    %v8271 = vpow.pop %v8270
    %v8272 = vmul.f32 %v8147, 1.442695
    %v8273 = vpow.pop %v8272
    %v8274 = vmul.f32 %v8148, 1.442695
    %v8275 = vpow.pop %v8274
    %v8276 = vmul.f32 %v8149, 1.442695
    %v8277 = vpow.pop %v8276
    %8278 = vadd.xlane.f32.xlu0 %v8151
    %v8279 = vpop.xlane.xlu0 %8278
    %8280 = vadd.xlane.f32.xlu0 %v8153
    %v8281 = vpop.xlane.xlu0 %8280
    %8282 = vadd.xlane.f32.xlu0 %v8155
    %v8283 = vpop.xlane.xlu0 %8282
    %8284 = vadd.xlane.f32.xlu0 %v8157
    %v8285 = vpop.xlane.xlu0 %8284
    %8286 = vadd.xlane.f32.xlu0 %v8159
    %v8287 = vpop.xlane.xlu0 %8286
    %8288 = vadd.xlane.f32.xlu0 %v8161
    %v8289 = vpop.xlane.xlu0 %8288
    %8290 = vadd.xlane.f32.xlu0 %v8163
    %v8291 = vpop.xlane.xlu0 %8290
    %8292 = vadd.xlane.f32.xlu0 %v8165
    %v8293 = vpop.xlane.xlu0 %8292
    %8294 = vadd.xlane.f32.xlu0 %v8167
    %v8295 = vpop.xlane.xlu0 %8294
    %8296 = vadd.xlane.f32.xlu0 %v8169
    %v8297 = vpop.xlane.xlu0 %8296
    %8298 = vadd.xlane.f32.xlu0 %v8171
    %v8299 = vpop.xlane.xlu0 %8298
    %8300 = vadd.xlane.f32.xlu0 %v8173
    %v8301 = vpop.xlane.xlu0 %8300
    %8302 = vadd.xlane.f32.xlu0 %v8175
    %v8303 = vpop.xlane.xlu0 %8302
    %8304 = vadd.xlane.f32.xlu0 %v8177
    %v8305 = vpop.xlane.xlu0 %8304
    %8306 = vadd.xlane.f32.xlu0 %v8179
    %v8307 = vpop.xlane.xlu0 %8306
    %8308 = vadd.xlane.f32.xlu0 %v8181
    %v8309 = vpop.xlane.xlu0 %8308
    %8310 = vadd.xlane.f32.xlu0 %v8183
    %v8311 = vpop.xlane.xlu0 %8310
    %8312 = vadd.xlane.f32.xlu0 %v8185
    %v8313 = vpop.xlane.xlu0 %8312
    %8314 = vadd.xlane.f32.xlu0 %v8187
    %v8315 = vpop.xlane.xlu0 %8314
    %8316 = vadd.xlane.f32.xlu0 %v8189
    %v8317 = vpop.xlane.xlu0 %8316
    %8318 = vadd.xlane.f32.xlu0 %v8191
    %v8319 = vpop.xlane.xlu0 %8318
    %8320 = vadd.xlane.f32.xlu0 %v8193
    %v8321 = vpop.xlane.xlu0 %8320
    %8322 = vadd.xlane.f32.xlu0 %v8195
    %v8323 = vpop.xlane.xlu0 %8322
    %8324 = vadd.xlane.f32.xlu0 %v8197
    %v8325 = vpop.xlane.xlu0 %8324
    %8326 = vadd.xlane.f32.xlu0 %v8199
    %v8327 = vpop.xlane.xlu0 %8326
    %8328 = vadd.xlane.f32.xlu0 %v8201
    %v8329 = vpop.xlane.xlu0 %8328
    %8330 = vadd.xlane.f32.xlu0 %v8203
    %v8331 = vpop.xlane.xlu0 %8330
    %8332 = vadd.xlane.f32.xlu0 %v8205
    %v8333 = vpop.xlane.xlu0 %8332
    %8334 = vadd.xlane.f32.xlu0 %v8207
    %v8335 = vpop.xlane.xlu0 %8334
    %8336 = vadd.xlane.f32.xlu0 %v8209
    %v8337 = vpop.xlane.xlu0 %8336
    %8338 = vadd.xlane.f32.xlu0 %v8211
    %v8339 = vpop.xlane.xlu0 %8338
    %8340 = vadd.xlane.f32.xlu0 %v8213
    %v8341 = vpop.xlane.xlu0 %8340
    %8342 = vadd.xlane.f32.xlu0 %v8215
    %v8343 = vpop.xlane.xlu0 %8342
    %8344 = vadd.xlane.f32.xlu0 %v8217
    %v8345 = vpop.xlane.xlu0 %8344
    %8346 = vadd.xlane.f32.xlu0 %v8219
    %v8347 = vpop.xlane.xlu0 %8346
    %8348 = vadd.xlane.f32.xlu0 %v8221
    %v8349 = vpop.xlane.xlu0 %8348
    %8350 = vadd.xlane.f32.xlu0 %v8223
    %v8351 = vpop.xlane.xlu0 %8350
    %8352 = vadd.xlane.f32.xlu0 %v8225
    %v8353 = vpop.xlane.xlu0 %8352
    %8354 = vadd.xlane.f32.xlu0 %v8227
    %v8355 = vpop.xlane.xlu0 %8354
    %8356 = vadd.xlane.f32.xlu0 %v8229
    %v8357 = vpop.xlane.xlu0 %8356
    %8358 = vadd.xlane.f32.xlu0 %v8231
    %v8359 = vpop.xlane.xlu0 %8358
    %8360 = vadd.xlane.f32.xlu0 %v8233
    %v8361 = vpop.xlane.xlu0 %8360
    %8362 = vadd.xlane.f32.xlu0 %v8235
    %v8363 = vpop.xlane.xlu0 %8362
    %8364 = vadd.xlane.f32.xlu0 %v8237
    %v8365 = vpop.xlane.xlu0 %8364
    %8366 = vadd.xlane.f32.xlu0 %v8239
    %v8367 = vpop.xlane.xlu0 %8366
    %8368 = vadd.xlane.f32.xlu0 %v8241
    %v8369 = vpop.xlane.xlu0 %8368
    %8370 = vadd.xlane.f32.xlu0 %v8243
    %v8371 = vpop.xlane.xlu0 %8370
    %8372 = vadd.xlane.f32.xlu0 %v8245
    %v8373 = vpop.xlane.xlu0 %8372
    %8374 = vadd.xlane.f32.xlu0 %v8247
    %v8375 = vpop.xlane.xlu0 %8374
    %8376 = vadd.xlane.f32.xlu0 %v8249
    %v8377 = vpop.xlane.xlu0 %8376
    %8378 = vadd.xlane.f32.xlu0 %v8251
    %v8379 = vpop.xlane.xlu0 %8378
    %8380 = vadd.xlane.f32.xlu0 %v8253
    %v8381 = vpop.xlane.xlu0 %8380
    %8382 = vadd.xlane.f32.xlu0 %v8255
    %v8383 = vpop.xlane.xlu0 %8382
    %8384 = vadd.xlane.f32.xlu0 %v8257
    %v8385 = vpop.xlane.xlu0 %8384
    %8386 = vadd.xlane.f32.xlu0 %v8259
    %v8387 = vpop.xlane.xlu0 %8386
    %8388 = vadd.xlane.f32.xlu0 %v8261
    %v8389 = vpop.xlane.xlu0 %8388
    %8390 = vadd.xlane.f32.xlu0 %v8263
    %v8391 = vpop.xlane.xlu0 %8390
    %8392 = vadd.xlane.f32.xlu0 %v8265
    %v8393 = vpop.xlane.xlu0 %8392
    %8394 = vadd.xlane.f32.xlu0 %v8267
    %v8395 = vpop.xlane.xlu0 %8394
    %8396 = vadd.xlane.f32.xlu0 %v8269
    %v8397 = vpop.xlane.xlu0 %8396
    %8398 = vadd.xlane.f32.xlu0 %v8271
    %v8399 = vpop.xlane.xlu0 %8398
    %8400 = vadd.xlane.f32.xlu0 %v8273
    %v8401 = vpop.xlane.xlu0 %8400
    %8402 = vadd.xlane.f32.xlu0 %v8275
    %v8403 = vpop.xlane.xlu0 %8402
    %8404 = vadd.xlane.f32.xlu0 %v8277
    %v8405 = vpop.xlane.xlu0 %8404
    %v8406 = vrcp.pop %v8279
    %v8407 = vrcp.pop %v8281
    %v8408 = vrcp.pop %v8283
    %v8409 = vrcp.pop %v8285
    %v8410 = vrcp.pop %v8287
    %v8411 = vrcp.pop %v8289
    %v8412 = vrcp.pop %v8291
    %v8413 = vrcp.pop %v8293
    %v8414 = vrcp.pop %v8295
    %v8415 = vrcp.pop %v8297
    %v8416 = vrcp.pop %v8299
    %v8417 = vrcp.pop %v8301
    %v8418 = vrcp.pop %v8303
    %v8419 = vrcp.pop %v8305
    %v8420 = vrcp.pop %v8307
    %v8421 = vrcp.pop %v8309
    %v8422 = vrcp.pop %v8311
    %v8423 = vrcp.pop %v8313
    %v8424 = vrcp.pop %v8315
    %v8425 = vrcp.pop %v8317
    %v8426 = vrcp.pop %v8319
    %v8427 = vrcp.pop %v8321
    %v8428 = vrcp.pop %v8323
    %v8429 = vrcp.pop %v8325
    %v8430 = vrcp.pop %v8327
    %v8431 = vrcp.pop %v8329
    %v8432 = vrcp.pop %v8331
    %v8433 = vrcp.pop %v8333
    %v8434 = vrcp.pop %v8335
    %v8435 = vrcp.pop %v8337
    %v8436 = vrcp.pop %v8339
    %v8437 = vrcp.pop %v8341
    %v8438 = vrcp.pop %v8343
    %v8439 = vrcp.pop %v8345
    %v8440 = vrcp.pop %v8347
    %v8441 = vrcp.pop %v8349
    %v8442 = vrcp.pop %v8351
    %v8443 = vrcp.pop %v8353
    %v8444 = vrcp.pop %v8355
    %v8445 = vrcp.pop %v8357
    %v8446 = vrcp.pop %v8359
    %v8447 = vrcp.pop %v8361
    %v8448 = vrcp.pop %v8363
    %v8449 = vrcp.pop %v8365
    %v8450 = vrcp.pop %v8367
    %v8451 = vrcp.pop %v8369
    %v8452 = vrcp.pop %v8371
    %v8453 = vrcp.pop %v8373
    %v8454 = vrcp.pop %v8375
    %v8455 = vrcp.pop %v8377
    %v8456 = vrcp.pop %v8379
    %v8457 = vrcp.pop %v8381
    %v8458 = vrcp.pop %v8383
    %v8459 = vrcp.pop %v8385
    %v8460 = vrcp.pop %v8387
    %v8461 = vrcp.pop %v8389
    %v8462 = vrcp.pop %v8391
    %v8463 = vrcp.pop %v8393
    %v8464 = vrcp.pop %v8395
    %v8465 = vrcp.pop %v8397
    %v8466 = vrcp.pop %v8399
    %v8467 = vrcp.pop %v8401
    %v8468 = vrcp.pop %v8403
    %v8469 = vrcp.pop %v8405
    %v8470 = vmul.f32 %v8151, %v8406
    %v8471 = vmul.f32 %v8153, %v8407
    %v8472 = vmul.f32 %v8155, %v8408
    %v8473 = vmul.f32 %v8157, %v8409
    %v8474 = vmul.f32 %v8159, %v8410
    %v8475 = vmul.f32 %v8161, %v8411
    %v8476 = vmul.f32 %v8163, %v8412
    %v8477 = vmul.f32 %v8165, %v8413
    %v8478 = vmul.f32 %v8167, %v8414
    %v8479 = vmul.f32 %v8169, %v8415
    %v8480 = vmul.f32 %v8171, %v8416
    %v8481 = vmul.f32 %v8173, %v8417
    %v8482 = vmul.f32 %v8175, %v8418
    %v8483 = vmul.f32 %v8177, %v8419
    %v8484 = vmul.f32 %v8179, %v8420
    %v8485 = vmul.f32 %v8181, %v8421
    %v8486 = vmul.f32 %v8183, %v8422
    %v8487 = vmul.f32 %v8185, %v8423
    %v8488 = vmul.f32 %v8187, %v8424
    %v8489 = vmul.f32 %v8189, %v8425
    %v8490 = vmul.f32 %v8191, %v8426
    %v8491 = vmul.f32 %v8193, %v8427
    %v8492 = vmul.f32 %v8195, %v8428
    %v8493 = vmul.f32 %v8197, %v8429
    %v8494 = vmul.f32 %v8199, %v8430
    %v8495 = vmul.f32 %v8201, %v8431
    %v8496 = vmul.f32 %v8203, %v8432
    %v8497 = vmul.f32 %v8205, %v8433
    %v8498 = vmul.f32 %v8207, %v8434
    %v8499 = vmul.f32 %v8209, %v8435
    %v8500 = vmul.f32 %v8211, %v8436
    %v8501 = vmul.f32 %v8213, %v8437
    %v8502 = vmul.f32 %v8215, %v8438
    %v8503 = vmul.f32 %v8217, %v8439
    %v8504 = vmul.f32 %v8219, %v8440
    %v8505 = vmul.f32 %v8221, %v8441
    %v8506 = vmul.f32 %v8223, %v8442
    %v8507 = vmul.f32 %v8225, %v8443
    %v8508 = vmul.f32 %v8227, %v8444
    %v8509 = vmul.f32 %v8229, %v8445
    %v8510 = vmul.f32 %v8231, %v8446
    %v8511 = vmul.f32 %v8233, %v8447
    %v8512 = vmul.f32 %v8235, %v8448
    %v8513 = vmul.f32 %v8237, %v8449
    %v8514 = vmul.f32 %v8239, %v8450
    %v8515 = vmul.f32 %v8241, %v8451
    %v8516 = vmul.f32 %v8243, %v8452
    %v8517 = vmul.f32 %v8245, %v8453
    %v8518 = vmul.f32 %v8247, %v8454
    %v8519 = vmul.f32 %v8249, %v8455
    %v8520 = vmul.f32 %v8251, %v8456
    %v8521 = vmul.f32 %v8253, %v8457
    %v8522 = vmul.f32 %v8255, %v8458
    %v8523 = vmul.f32 %v8257, %v8459
    %v8524 = vmul.f32 %v8259, %v8460
    %v8525 = vmul.f32 %v8261, %v8461
    %v8526 = vmul.f32 %v8263, %v8462
    %v8527 = vmul.f32 %v8265, %v8463
    %v8528 = vmul.f32 %v8267, %v8464
    %v8529 = vmul.f32 %v8269, %v8465
    %v8530 = vmul.f32 %v8271, %v8466
    %v8531 = vmul.f32 %v8273, %v8467
    %v8532 = vmul.f32 %v8275, %v8468
    %v8533 = vmul.f32 %v8277, %v8469
    %v8534 = vpack.c.bf16 %v8471, %v8470
    %v8535 = vpack.c.bf16 %v8473, %v8472
    %v8536 = vpack.c.bf16 %v8475, %v8474
    %v8537 = vpack.c.bf16 %v8477, %v8476
    %v8538 = vpack.c.bf16 %v8479, %v8478
    %v8539 = vpack.c.bf16 %v8481, %v8480
    %v8540 = vpack.c.bf16 %v8483, %v8482
    %v8541 = vpack.c.bf16 %v8485, %v8484
    %v8542 = vpack.c.bf16 %v8487, %v8486
    %v8543 = vpack.c.bf16 %v8489, %v8488
    %v8544 = vpack.c.bf16 %v8491, %v8490
    %v8545 = vpack.c.bf16 %v8493, %v8492
    %v8546 = vpack.c.bf16 %v8495, %v8494
    %v8547 = vpack.c.bf16 %v8497, %v8496
    %v8548 = vpack.c.bf16 %v8499, %v8498
    %v8549 = vpack.c.bf16 %v8501, %v8500
    %v8550 = vpack.c.bf16 %v8503, %v8502
    %v8551 = vpack.c.bf16 %v8505, %v8504
    %v8552 = vpack.c.bf16 %v8507, %v8506
    %v8553 = vpack.c.bf16 %v8509, %v8508
    %v8554 = vpack.c.bf16 %v8511, %v8510
    %v8555 = vpack.c.bf16 %v8513, %v8512
    %v8556 = vpack.c.bf16 %v8515, %v8514
    %v8557 = vpack.c.bf16 %v8517, %v8516
    %v8558 = vpack.c.bf16 %v8519, %v8518
    %v8559 = vpack.c.bf16 %v8521, %v8520
    %v8560 = vpack.c.bf16 %v8523, %v8522
    %v8561 = vpack.c.bf16 %v8525, %v8524
    %v8562 = vpack.c.bf16 %v8527, %v8526
    %v8563 = vpack.c.bf16 %v8529, %v8528
    %v8564 = vpack.c.bf16 %v8531, %v8530
    %v8565 = vpack.c.bf16 %v8533, %v8532
    %8566 = vrot.lane.b32.xlu0 %v1736, 32
    %v8567 = vpop.permute.xlu0 %8566
    %8568 = vrot.lane.b32.xlu0 %v1739, 32
    %v8569 = vpop.permute.xlu0 %8568
    %8570 = vrot.lane.b32.xlu0 %v1742, 32
    %v8571 = vpop.permute.xlu0 %8570
    %8572 = vrot.lane.b32.xlu0 %v1745, 32
    %v8573 = vpop.permute.xlu0 %8572
    %8574 = vrot.lane.b32.xlu0 %v1748, 32
    %v8575 = vpop.permute.xlu0 %8574
    %8576 = vrot.lane.b32.xlu0 %v1751, 32
    %v8577 = vpop.permute.xlu0 %8576
    %8578 = vrot.lane.b32.xlu0 %v1754, 32
    %v8579 = vpop.permute.xlu0 %8578
    %8580 = vrot.lane.b32.xlu0 %v1757, 32
    %v8581 = vpop.permute.xlu0 %8580
    %8590 = vmatprep.subr.bf16.mxu0 0
    %8591 = vmatpush1.bf16.msra.mxu0 %v8581
    %8592 = vmatprep.subr.bf16.mxu0 0
    %8593 = vmatpush1.bf16.msra.mxu0 %v8579
    %8594 = vmatprep.subr.bf16.mxu0 0
    %8595 = vmatpush1.bf16.msra.mxu0 %v8577
    %8596 = vmatprep.subr.bf16.mxu0 0
    %8597 = vmatpush1.bf16.msra.mxu0 %v8575
    %8598 = vmatprep.subr.bf16.mxu0 0
    %8599 = vmatpush1.bf16.msra.mxu0 %v8573
    %8600 = vmatprep.subr.bf16.mxu0 0
    %8601 = vmatpush1.bf16.msra.mxu0 %v8571
    %8602 = vmatprep.subr.bf16.mxu0 0
    %8603 = vmatpush1.bf16.msra.mxu0 %v8569
    %8604 = vmatprep.subr.bf16.mxu0 0
    %8605 = vmatpush1.bf16.msra.mxu0 %v8567
    %8606 = vmatprep.subr.bf16.mxu0 0
    %8607 = vmatpush2.bf16.msra.mxu0 0
    %8608 = vmatprep.subr.bf16.mxu0 0
    %8609 = vmatpush2.bf16.msra.mxu0 0
    %8610 = vmatprep.subr.bf16.mxu0 0
    %8611 = vmatpush2.bf16.msra.mxu0 0
    %8612 = vmatprep.subr.bf16.mxu0 0
    %8613 = vmatpush2.bf16.msra.mxu0 0
    %8614 = vmatprep.subr.bf16.mxu0 0
    %8615 = vmatpush2.bf16.msra.mxu0 0
    %8616 = vmatprep.subr.bf16.mxu0 0
    %8617 = vmatpush2.bf16.msra.mxu0 0
    %8618 = vmatprep.subr.bf16.mxu0 0
    %8619 = vmatpush2.bf16.msra.mxu0 0
    %8620 = vmatprep.subr.bf16.mxu0 0
    %8621 = vmatpush2.bf16.msra.mxu0 0
    %8622 = vmatprep.mubr.bf16.mxu0 0
    %8623 = vmatmul.mubr.bf16.gmra.mxu0 %v8534
    %v8624 = vpop.f32.mrf.mxu0
    %v8625 = vadd.f32 0.0, %v8624
    %v8626 = vpop.f32.mrf.mxu0
    %v8627 = vpop.f32.mrf.mxu0
    %v8628 = vadd.f32 0.0, %v8627
    %v8629 = vpop.f32.mrf.mxu0
    %8630 = vmatprep.mubr.bf16.mxu0 0
    %8631 = vmatmul.mubr.bf16.gmra.mxu0 %v8535
    %v8632 = vpop.f32.mrf.mxu0
    %v8633 = vadd.f32 0.0, %v8632
    %v8634 = vpop.f32.mrf.mxu0
    %v8635 = vpop.f32.mrf.mxu0
    %v8636 = vadd.f32 0.0, %v8635
    %v8637 = vpop.f32.mrf.mxu0
    %8638 = vmatprep.mubr.bf16.mxu0 0
    %8639 = vmatmul.mubr.bf16.gmra.mxu0 %v8536
    %v8640 = vpop.f32.mrf.mxu0
    %v8641 = vadd.f32 0.0, %v8640
    %v8642 = vpop.f32.mrf.mxu0
    %v8643 = vpop.f32.mrf.mxu0
    %v8644 = vadd.f32 0.0, %v8643
    %v8645 = vpop.f32.mrf.mxu0
    %8646 = vmatprep.mubr.bf16.mxu0 0
    %8647 = vmatmul.mubr.bf16.gmra.mxu0 %v8537
    %v8648 = vpop.f32.mrf.mxu0
    %v8649 = vadd.f32 0.0, %v8648
    %v8650 = vpop.f32.mrf.mxu0
    %v8651 = vpop.f32.mrf.mxu0
    %v8652 = vadd.f32 0.0, %v8651
    %v8653 = vpop.f32.mrf.mxu0
    %8654 = vmatprep.mubr.bf16.mxu0 0
    %8655 = vmatmul.mubr.bf16.gmra.mxu0 %v8538
    %v8656 = vpop.f32.mrf.mxu0
    %v8657 = vadd.f32 0.0, %v8656
    %v8658 = vpop.f32.mrf.mxu0
    %v8659 = vpop.f32.mrf.mxu0
    %v8660 = vadd.f32 0.0, %v8659
    %v8661 = vpop.f32.mrf.mxu0
    %8662 = vmatprep.mubr.bf16.mxu0 0
    %8663 = vmatmul.mubr.bf16.gmra.mxu0 %v8539
    %v8664 = vpop.f32.mrf.mxu0
    %v8665 = vadd.f32 0.0, %v8664
    %v8666 = vpop.f32.mrf.mxu0
    %v8667 = vpop.f32.mrf.mxu0
    %v8668 = vadd.f32 0.0, %v8667
    %v8669 = vpop.f32.mrf.mxu0
    %8670 = vmatprep.mubr.bf16.mxu0 0
    %8671 = vmatmul.mubr.bf16.gmra.mxu0 %v8540
    %v8672 = vpop.f32.mrf.mxu0
    %v8673 = vadd.f32 0.0, %v8672
    %v8674 = vpop.f32.mrf.mxu0
    %v8675 = vpop.f32.mrf.mxu0
    %v8676 = vadd.f32 0.0, %v8675
    %v8677 = vpop.f32.mrf.mxu0
    %8678 = vmatprep.mubr.bf16.mxu0 0
    %8679 = vmatmul.mubr.bf16.gmra.mxu0 %v8541
    %v8680 = vpop.f32.mrf.mxu0
    %v8681 = vadd.f32 0.0, %v8680
    %v8682 = vpop.f32.mrf.mxu0
    %v8683 = vpop.f32.mrf.mxu0
    %v8684 = vadd.f32 0.0, %v8683
    %v8685 = vpop.f32.mrf.mxu0
    %8686 = vdwg.mxu0
    %8687 = vrot.lane.b32.xlu0 %v1760, 32
    %v8688 = vpop.permute.xlu0 %8687
    %8689 = vrot.lane.b32.xlu0 %v1763, 32
    %v8690 = vpop.permute.xlu0 %8689
    %8691 = vrot.lane.b32.xlu0 %v1766, 32
    %v8692 = vpop.permute.xlu0 %8691
    %8693 = vrot.lane.b32.xlu0 %v1769, 32
    %v8694 = vpop.permute.xlu0 %8693
    %8695 = vrot.lane.b32.xlu0 %v1772, 32
    %v8696 = vpop.permute.xlu0 %8695
    %8697 = vrot.lane.b32.xlu0 %v1775, 32
    %v8698 = vpop.permute.xlu0 %8697
    %8699 = vrot.lane.b32.xlu0 %v1778, 32
    %v8700 = vpop.permute.xlu0 %8699
    %8701 = vrot.lane.b32.xlu0 %v1781, 32
    %v8702 = vpop.permute.xlu0 %8701
    %8711 = vmatprep.subr.bf16.mxu0 0
    %8712 = vmatpush1.bf16.msra.mxu0 %v8702
    %8713 = vmatprep.subr.bf16.mxu0 0
    %8714 = vmatpush1.bf16.msra.mxu0 %v8700
    %8715 = vmatprep.subr.bf16.mxu0 0
    %8716 = vmatpush1.bf16.msra.mxu0 %v8698
    %8717 = vmatprep.subr.bf16.mxu0 0
    %8718 = vmatpush1.bf16.msra.mxu0 %v8696
    %8719 = vmatprep.subr.bf16.mxu0 0
    %8720 = vmatpush1.bf16.msra.mxu0 %v8694
    %8721 = vmatprep.subr.bf16.mxu0 0
    %8722 = vmatpush1.bf16.msra.mxu0 %v8692
    %8723 = vmatprep.subr.bf16.mxu0 0
    %8724 = vmatpush1.bf16.msra.mxu0 %v8690
    %8725 = vmatprep.subr.bf16.mxu0 0
    %8726 = vmatpush1.bf16.msra.mxu0 %v8688
    %8727 = vmatprep.subr.bf16.mxu0 0
    %8728 = vmatpush2.bf16.msra.mxu0 0
    %8729 = vmatprep.subr.bf16.mxu0 0
    %8730 = vmatpush2.bf16.msra.mxu0 0
    %8731 = vmatprep.subr.bf16.mxu0 0
    %8732 = vmatpush2.bf16.msra.mxu0 0
    %8733 = vmatprep.subr.bf16.mxu0 0
    %8734 = vmatpush2.bf16.msra.mxu0 0
    %8735 = vmatprep.subr.bf16.mxu0 0
    %8736 = vmatpush2.bf16.msra.mxu0 0
    %8737 = vmatprep.subr.bf16.mxu0 0
    %8738 = vmatpush2.bf16.msra.mxu0 0
    %8739 = vmatprep.subr.bf16.mxu0 0
    %8740 = vmatpush2.bf16.msra.mxu0 0
    %8741 = vmatprep.subr.bf16.mxu0 0
    %8742 = vmatpush2.bf16.msra.mxu0 0
    %8743 = vmatprep.mubr.bf16.mxu0 0
    %8744 = vmatmul.mubr.bf16.gmra.mxu0 %v8542
    %v8745 = vpop.f32.mrf.mxu0
    %v8746 = vadd.f32 0.0, %v8745
    %v8747 = vpop.f32.mrf.mxu0
    %v8748 = vpop.f32.mrf.mxu0
    %v8749 = vadd.f32 0.0, %v8748
    %v8750 = vpop.f32.mrf.mxu0
    %8751 = vmatprep.mubr.bf16.mxu0 0
    %8752 = vmatmul.mubr.bf16.gmra.mxu0 %v8543
    %v8753 = vpop.f32.mrf.mxu0
    %v8754 = vadd.f32 0.0, %v8753
    %v8755 = vpop.f32.mrf.mxu0
    %v8756 = vpop.f32.mrf.mxu0
    %v8757 = vadd.f32 0.0, %v8756
    %v8758 = vpop.f32.mrf.mxu0
    %8759 = vmatprep.mubr.bf16.mxu0 0
    %8760 = vmatmul.mubr.bf16.gmra.mxu0 %v8544
    %v8761 = vpop.f32.mrf.mxu0
    %v8762 = vadd.f32 0.0, %v8761
    %v8763 = vpop.f32.mrf.mxu0
    %v8764 = vpop.f32.mrf.mxu0
    %v8765 = vadd.f32 0.0, %v8764
    %v8766 = vpop.f32.mrf.mxu0
    %8767 = vmatprep.mubr.bf16.mxu0 0
    %8768 = vmatmul.mubr.bf16.gmra.mxu0 %v8545
    %v8769 = vpop.f32.mrf.mxu0
    %v8770 = vadd.f32 0.0, %v8769
    %v8771 = vpop.f32.mrf.mxu0
    %v8772 = vpop.f32.mrf.mxu0
    %v8773 = vadd.f32 0.0, %v8772
    %v8774 = vpop.f32.mrf.mxu0
    %8775 = vmatprep.mubr.bf16.mxu0 0
    %8776 = vmatmul.mubr.bf16.gmra.mxu0 %v8546
    %v8777 = vpop.f32.mrf.mxu0
    %v8778 = vadd.f32 0.0, %v8777
    %v8779 = vpop.f32.mrf.mxu0
    %v8780 = vpop.f32.mrf.mxu0
    %v8781 = vadd.f32 0.0, %v8780
    %v8782 = vpop.f32.mrf.mxu0
    %8783 = vmatprep.mubr.bf16.mxu0 0
    %8784 = vmatmul.mubr.bf16.gmra.mxu0 %v8547
    %v8785 = vpop.f32.mrf.mxu0
    %v8786 = vadd.f32 0.0, %v8785
    %v8787 = vpop.f32.mrf.mxu0
    %v8788 = vpop.f32.mrf.mxu0
    %v8789 = vadd.f32 0.0, %v8788
    %v8790 = vpop.f32.mrf.mxu0
    %8791 = vmatprep.mubr.bf16.mxu0 0
    %8792 = vmatmul.mubr.bf16.gmra.mxu0 %v8548
    %v8793 = vpop.f32.mrf.mxu0
    %v8794 = vadd.f32 0.0, %v8793
    %v8795 = vpop.f32.mrf.mxu0
    %v8796 = vpop.f32.mrf.mxu0
    %v8797 = vadd.f32 0.0, %v8796
    %v8798 = vpop.f32.mrf.mxu0
    %8799 = vmatprep.mubr.bf16.mxu0 0
    %8800 = vmatmul.mubr.bf16.gmra.mxu0 %v8549
    %v8801 = vpop.f32.mrf.mxu0
    %v8802 = vadd.f32 0.0, %v8801
    %v8803 = vpop.f32.mrf.mxu0
    %v8804 = vpop.f32.mrf.mxu0
    %v8805 = vadd.f32 0.0, %v8804
    %v8806 = vpop.f32.mrf.mxu0
    %8807 = vdwg.mxu0
    %8808 = vrot.lane.b32.xlu0 %v1784, 32
    %v8809 = vpop.permute.xlu0 %8808
    %8810 = vrot.lane.b32.xlu0 %v1787, 32
    %v8811 = vpop.permute.xlu0 %8810
    %8812 = vrot.lane.b32.xlu0 %v1790, 32
    %v8813 = vpop.permute.xlu0 %8812
    %8814 = vrot.lane.b32.xlu0 %v1793, 32
    %v8815 = vpop.permute.xlu0 %8814
    %8816 = vrot.lane.b32.xlu0 %v1796, 32
    %v8817 = vpop.permute.xlu0 %8816
    %8818 = vrot.lane.b32.xlu0 %v1799, 32
    %v8819 = vpop.permute.xlu0 %8818
    %8820 = vrot.lane.b32.xlu0 %v1802, 32
    %v8821 = vpop.permute.xlu0 %8820
    %8822 = vrot.lane.b32.xlu0 %v1805, 32
    %v8823 = vpop.permute.xlu0 %8822
    %8832 = vmatprep.subr.bf16.mxu0 0
    %8833 = vmatpush1.bf16.msra.mxu0 %v8823
    %8834 = vmatprep.subr.bf16.mxu0 0
    %8835 = vmatpush1.bf16.msra.mxu0 %v8821
    %8836 = vmatprep.subr.bf16.mxu0 0
    %8837 = vmatpush1.bf16.msra.mxu0 %v8819
    %8838 = vmatprep.subr.bf16.mxu0 0
    %8839 = vmatpush1.bf16.msra.mxu0 %v8817
    %8840 = vmatprep.subr.bf16.mxu0 0
    %8841 = vmatpush1.bf16.msra.mxu0 %v8815
    %8842 = vmatprep.subr.bf16.mxu0 0
    %8843 = vmatpush1.bf16.msra.mxu0 %v8813
    %8844 = vmatprep.subr.bf16.mxu0 0
    %8845 = vmatpush1.bf16.msra.mxu0 %v8811
    %8846 = vmatprep.subr.bf16.mxu0 0
    %8847 = vmatpush1.bf16.msra.mxu0 %v8809
    %8848 = vmatprep.subr.bf16.mxu0 0
    %8849 = vmatpush2.bf16.msra.mxu0 0
    %8850 = vmatprep.subr.bf16.mxu0 0
    %8851 = vmatpush2.bf16.msra.mxu0 0
    %8852 = vmatprep.subr.bf16.mxu0 0
    %8853 = vmatpush2.bf16.msra.mxu0 0
    %8854 = vmatprep.subr.bf16.mxu0 0
    %8855 = vmatpush2.bf16.msra.mxu0 0
    %8856 = vmatprep.subr.bf16.mxu0 0
    %8857 = vmatpush2.bf16.msra.mxu0 0
    %8858 = vmatprep.subr.bf16.mxu0 0
    %8859 = vmatpush2.bf16.msra.mxu0 0
    %8860 = vmatprep.subr.bf16.mxu0 0
    %8861 = vmatpush2.bf16.msra.mxu0 0
    %8862 = vmatprep.subr.bf16.mxu0 0
    %8863 = vmatpush2.bf16.msra.mxu0 0
    %8864 = vmatprep.mubr.bf16.mxu0 0
    %8865 = vmatmul.mubr.bf16.gmra.mxu0 %v8550
    %v8866 = vpop.f32.mrf.mxu0
    %v8867 = vadd.f32 0.0, %v8866
    %v8868 = vpop.f32.mrf.mxu0
    %v8869 = vpop.f32.mrf.mxu0
    %v8870 = vadd.f32 0.0, %v8869
    %v8871 = vpop.f32.mrf.mxu0
    %8872 = vmatprep.mubr.bf16.mxu0 0
    %8873 = vmatmul.mubr.bf16.gmra.mxu0 %v8551
    %v8874 = vpop.f32.mrf.mxu0
    %v8875 = vadd.f32 0.0, %v8874
    %v8876 = vpop.f32.mrf.mxu0
    %v8877 = vpop.f32.mrf.mxu0
    %v8878 = vadd.f32 0.0, %v8877
    %v8879 = vpop.f32.mrf.mxu0
    %8880 = vmatprep.mubr.bf16.mxu0 0
    %8881 = vmatmul.mubr.bf16.gmra.mxu0 %v8552
    %v8882 = vpop.f32.mrf.mxu0
    %v8883 = vadd.f32 0.0, %v8882
    %v8884 = vpop.f32.mrf.mxu0
    %v8885 = vpop.f32.mrf.mxu0
    %v8886 = vadd.f32 0.0, %v8885
    %v8887 = vpop.f32.mrf.mxu0
    %8888 = vmatprep.mubr.bf16.mxu0 0
    %8889 = vmatmul.mubr.bf16.gmra.mxu0 %v8553
    %v8890 = vpop.f32.mrf.mxu0
    %v8891 = vadd.f32 0.0, %v8890
    %v8892 = vpop.f32.mrf.mxu0
    %v8893 = vpop.f32.mrf.mxu0
    %v8894 = vadd.f32 0.0, %v8893
    %v8895 = vpop.f32.mrf.mxu0
    %8896 = vmatprep.mubr.bf16.mxu0 0
    %8897 = vmatmul.mubr.bf16.gmra.mxu0 %v8554
    %v8898 = vpop.f32.mrf.mxu0
    %v8899 = vadd.f32 0.0, %v8898
    %v8900 = vpop.f32.mrf.mxu0
    %v8901 = vpop.f32.mrf.mxu0
    %v8902 = vadd.f32 0.0, %v8901
    %v8903 = vpop.f32.mrf.mxu0
    %8904 = vmatprep.mubr.bf16.mxu0 0
    %8905 = vmatmul.mubr.bf16.gmra.mxu0 %v8555
    %v8906 = vpop.f32.mrf.mxu0
    %v8907 = vadd.f32 0.0, %v8906
    %v8908 = vpop.f32.mrf.mxu0
    %v8909 = vpop.f32.mrf.mxu0
    %v8910 = vadd.f32 0.0, %v8909
    %v8911 = vpop.f32.mrf.mxu0
    %8912 = vmatprep.mubr.bf16.mxu0 0
    %8913 = vmatmul.mubr.bf16.gmra.mxu0 %v8556
    %v8914 = vpop.f32.mrf.mxu0
    %v8915 = vadd.f32 0.0, %v8914
    %v8916 = vpop.f32.mrf.mxu0
    %v8917 = vpop.f32.mrf.mxu0
    %v8918 = vadd.f32 0.0, %v8917
    %v8919 = vpop.f32.mrf.mxu0
    %8920 = vmatprep.mubr.bf16.mxu0 0
    %8921 = vmatmul.mubr.bf16.gmra.mxu0 %v8557
    %v8922 = vpop.f32.mrf.mxu0
    %v8923 = vadd.f32 0.0, %v8922
    %v8924 = vpop.f32.mrf.mxu0
    %v8925 = vpop.f32.mrf.mxu0
    %v8926 = vadd.f32 0.0, %v8925
    %v8927 = vpop.f32.mrf.mxu0
    %8928 = vdwg.mxu0
    %8929 = vrot.lane.b32.xlu0 %v1808, 32
    %v8930 = vpop.permute.xlu0 %8929
    %8931 = vrot.lane.b32.xlu0 %v1811, 32
    %v8932 = vpop.permute.xlu0 %8931
    %8933 = vrot.lane.b32.xlu0 %v1814, 32
    %v8934 = vpop.permute.xlu0 %8933
    %8935 = vrot.lane.b32.xlu0 %v1817, 32
    %v8936 = vpop.permute.xlu0 %8935
    %8937 = vrot.lane.b32.xlu0 %v1820, 32
    %v8938 = vpop.permute.xlu0 %8937
    %8939 = vrot.lane.b32.xlu0 %v1823, 32
    %v8940 = vpop.permute.xlu0 %8939
    %8941 = vrot.lane.b32.xlu0 %v1826, 32
    %v8942 = vpop.permute.xlu0 %8941
    %8943 = vrot.lane.b32.xlu0 %v1829, 32
    %v8944 = vpop.permute.xlu0 %8943
    %8953 = vmatprep.subr.bf16.mxu0 0
    %8954 = vmatpush1.bf16.msra.mxu0 %v8944
    %8955 = vmatprep.subr.bf16.mxu0 0
    %8956 = vmatpush1.bf16.msra.mxu0 %v8942
    %8957 = vmatprep.subr.bf16.mxu0 0
    %8958 = vmatpush1.bf16.msra.mxu0 %v8940
    %8959 = vmatprep.subr.bf16.mxu0 0
    %8960 = vmatpush1.bf16.msra.mxu0 %v8938
    %8961 = vmatprep.subr.bf16.mxu0 0
    %8962 = vmatpush1.bf16.msra.mxu0 %v8936
    %8963 = vmatprep.subr.bf16.mxu0 0
    %8964 = vmatpush1.bf16.msra.mxu0 %v8934
    %8965 = vmatprep.subr.bf16.mxu0 0
    %8966 = vmatpush1.bf16.msra.mxu0 %v8932
    %8967 = vmatprep.subr.bf16.mxu0 0
    %8968 = vmatpush1.bf16.msra.mxu0 %v8930
    %8969 = vmatprep.subr.bf16.mxu0 0
    %8970 = vmatpush2.bf16.msra.mxu0 0
    %8971 = vmatprep.subr.bf16.mxu0 0
    %8972 = vmatpush2.bf16.msra.mxu0 0
    %8973 = vmatprep.subr.bf16.mxu0 0
    %8974 = vmatpush2.bf16.msra.mxu0 0
    %8975 = vmatprep.subr.bf16.mxu0 0
    %8976 = vmatpush2.bf16.msra.mxu0 0
    %8977 = vmatprep.subr.bf16.mxu0 0
    %8978 = vmatpush2.bf16.msra.mxu0 0
    %8979 = vmatprep.subr.bf16.mxu0 0
    %8980 = vmatpush2.bf16.msra.mxu0 0
    %8981 = vmatprep.subr.bf16.mxu0 0
    %8982 = vmatpush2.bf16.msra.mxu0 0
    %8983 = vmatprep.subr.bf16.mxu0 0
    %8984 = vmatpush2.bf16.msra.mxu0 0
    %8985 = vmatprep.mubr.bf16.mxu0 0
    %8986 = vmatmul.mubr.bf16.gmra.mxu0 %v8558
    %v8987 = vpop.f32.mrf.mxu0
    %v8988 = vadd.f32 0.0, %v8987
    %v8989 = vpop.f32.mrf.mxu0
    %v8990 = vpop.f32.mrf.mxu0
    %v8991 = vadd.f32 0.0, %v8990
    %v8992 = vpop.f32.mrf.mxu0
    %8993 = vmatprep.mubr.bf16.mxu0 0
    %8994 = vmatmul.mubr.bf16.gmra.mxu0 %v8559
    %v8995 = vpop.f32.mrf.mxu0
    %v8996 = vadd.f32 0.0, %v8995
    %v8997 = vpop.f32.mrf.mxu0
    %v8998 = vpop.f32.mrf.mxu0
    %v8999 = vadd.f32 0.0, %v8998
    %v9000 = vpop.f32.mrf.mxu0
    %9001 = vmatprep.mubr.bf16.mxu0 0
    %9002 = vmatmul.mubr.bf16.gmra.mxu0 %v8560
    %v9003 = vpop.f32.mrf.mxu0
    %v9004 = vadd.f32 0.0, %v9003
    %v9005 = vpop.f32.mrf.mxu0
    %v9006 = vpop.f32.mrf.mxu0
    %v9007 = vadd.f32 0.0, %v9006
    %v9008 = vpop.f32.mrf.mxu0
    %9009 = vmatprep.mubr.bf16.mxu0 0
    %9010 = vmatmul.mubr.bf16.gmra.mxu0 %v8561
    %v9011 = vpop.f32.mrf.mxu0
    %v9012 = vadd.f32 0.0, %v9011
    %v9013 = vpop.f32.mrf.mxu0
    %v9014 = vpop.f32.mrf.mxu0
    %v9015 = vadd.f32 0.0, %v9014
    %v9016 = vpop.f32.mrf.mxu0
    %9017 = vmatprep.mubr.bf16.mxu0 0
    %9018 = vmatmul.mubr.bf16.gmra.mxu0 %v8562
    %v9019 = vpop.f32.mrf.mxu0
    %v9020 = vadd.f32 0.0, %v9019
    %v9021 = vpop.f32.mrf.mxu0
    %v9022 = vpop.f32.mrf.mxu0
    %v9023 = vadd.f32 0.0, %v9022
    %v9024 = vpop.f32.mrf.mxu0
    %9025 = vmatprep.mubr.bf16.mxu0 0
    %9026 = vmatmul.mubr.bf16.gmra.mxu0 %v8563
    %v9027 = vpop.f32.mrf.mxu0
    %v9028 = vadd.f32 0.0, %v9027
    %v9029 = vpop.f32.mrf.mxu0
    %v9030 = vpop.f32.mrf.mxu0
    %v9031 = vadd.f32 0.0, %v9030
    %v9032 = vpop.f32.mrf.mxu0
    %9033 = vmatprep.mubr.bf16.mxu0 0
    %9034 = vmatmul.mubr.bf16.gmra.mxu0 %v8564
    %v9035 = vpop.f32.mrf.mxu0
    %v9036 = vadd.f32 0.0, %v9035
    %v9037 = vpop.f32.mrf.mxu0
    %v9038 = vpop.f32.mrf.mxu0
    %v9039 = vadd.f32 0.0, %v9038
    %v9040 = vpop.f32.mrf.mxu0
    %9041 = vmatprep.mubr.bf16.mxu0 0
    %9042 = vmatmul.mubr.bf16.gmra.mxu0 %v8565
    %v9043 = vpop.f32.mrf.mxu0
    %v9044 = vadd.f32 0.0, %v9043
    %v9045 = vpop.f32.mrf.mxu0
    %v9046 = vpop.f32.mrf.mxu0
    %v9047 = vadd.f32 0.0, %v9046
    %v9048 = vpop.f32.mrf.mxu0
    %9049 = vdwg.mxu0
    %v9050 = vpack.c.bf16 %v8628, %v8625
    %v9051 = vpack.c.bf16 %v8636, %v8633
    %v9052 = vpack.c.bf16 %v8644, %v8641
    %v9053 = vpack.c.bf16 %v8652, %v8649
    %v9054 = vpack.c.bf16 %v8660, %v8657
    %v9055 = vpack.c.bf16 %v8668, %v8665
    %v9056 = vpack.c.bf16 %v8676, %v8673
    %v9057 = vpack.c.bf16 %v8684, %v8681
    %v9058 = vpack.c.bf16 %v8749, %v8746
    %v9059 = vpack.c.bf16 %v8757, %v8754
    %v9060 = vpack.c.bf16 %v8765, %v8762
    %v9061 = vpack.c.bf16 %v8773, %v8770
    %v9062 = vpack.c.bf16 %v8781, %v8778
    %v9063 = vpack.c.bf16 %v8789, %v8786
    %v9064 = vpack.c.bf16 %v8797, %v8794
    %v9065 = vpack.c.bf16 %v8805, %v8802
    %v9066 = vpack.c.bf16 %v8870, %v8867
    %v9067 = vpack.c.bf16 %v8878, %v8875
    %v9068 = vpack.c.bf16 %v8886, %v8883
    %v9069 = vpack.c.bf16 %v8894, %v8891
    %v9070 = vpack.c.bf16 %v8902, %v8899
    %v9071 = vpack.c.bf16 %v8910, %v8907
    %v9072 = vpack.c.bf16 %v8918, %v8915
    %v9073 = vpack.c.bf16 %v8926, %v8923
    %v9074 = vpack.c.bf16 %v8991, %v8988
    %v9075 = vpack.c.bf16 %v8999, %v8996
    %v9076 = vpack.c.bf16 %v9007, %v9004
    %v9077 = vpack.c.bf16 %v9015, %v9012
    %v9078 = vpack.c.bf16 %v9023, %v9020
    %v9079 = vpack.c.bf16 %v9031, %v9028
    %v9080 = vpack.c.bf16 %v9039, %v9036
    %v9081 = vpack.c.bf16 %v9047, %v9044
    %9114 = vrot.lane.b32.xlu0 %v5386, 32
    %v9115 = vpop.permute.xlu0 %9114
    %9116 = vrot.lane.b32.xlu0 %v5387, 32
    %v9117 = vpop.permute.xlu0 %9116
    %9118 = vrot.lane.b32.xlu0 %v5388, 32
    %v9119 = vpop.permute.xlu0 %9118
    %9120 = vrot.lane.b32.xlu0 %v5389, 32
    %v9121 = vpop.permute.xlu0 %9120
    %9122 = vrot.lane.b32.xlu0 %v5390, 32
    %v9123 = vpop.permute.xlu0 %9122
    %9124 = vrot.lane.b32.xlu0 %v5391, 32
    %v9125 = vpop.permute.xlu0 %9124
    %9126 = vrot.lane.b32.xlu0 %v5392, 32
    %v9127 = vpop.permute.xlu0 %9126
    %9128 = vrot.lane.b32.xlu0 %v5393, 32
    %v9129 = vpop.permute.xlu0 %9128
    %9130 = vrot.lane.b32.xlu0 %v5394, 32
    %v9131 = vpop.permute.xlu0 %9130
    %9132 = vrot.lane.b32.xlu0 %v5395, 32
    %v9133 = vpop.permute.xlu0 %9132
    %9134 = vrot.lane.b32.xlu0 %v5396, 32
    %v9135 = vpop.permute.xlu0 %9134
    %9136 = vrot.lane.b32.xlu0 %v5397, 32
    %v9137 = vpop.permute.xlu0 %9136
    %9138 = vrot.lane.b32.xlu0 %v5398, 32
    %v9139 = vpop.permute.xlu0 %9138
    %9140 = vrot.lane.b32.xlu0 %v5399, 32
    %v9141 = vpop.permute.xlu0 %9140
    %9142 = vrot.lane.b32.xlu0 %v5400, 32
    %v9143 = vpop.permute.xlu0 %9142
    %9144 = vrot.lane.b32.xlu0 %v5401, 32
    %v9145 = vpop.permute.xlu0 %9144
    %9146 = vrot.lane.b32.xlu0 %v5402, 32
    %v9147 = vpop.permute.xlu0 %9146
    %9148 = vrot.lane.b32.xlu0 %v5403, 32
    %v9149 = vpop.permute.xlu0 %9148
    %9150 = vrot.lane.b32.xlu0 %v5404, 32
    %v9151 = vpop.permute.xlu0 %9150
    %9152 = vrot.lane.b32.xlu0 %v5405, 32
    %v9153 = vpop.permute.xlu0 %9152
    %9154 = vrot.lane.b32.xlu0 %v5406, 32
    %v9155 = vpop.permute.xlu0 %9154
    %9156 = vrot.lane.b32.xlu0 %v5407, 32
    %v9157 = vpop.permute.xlu0 %9156
    %9158 = vrot.lane.b32.xlu0 %v5408, 32
    %v9159 = vpop.permute.xlu0 %9158
    %9160 = vrot.lane.b32.xlu0 %v5409, 32
    %v9161 = vpop.permute.xlu0 %9160
    %9162 = vrot.lane.b32.xlu0 %v5410, 32
    %v9163 = vpop.permute.xlu0 %9162
    %9164 = vrot.lane.b32.xlu0 %v5411, 32
    %v9165 = vpop.permute.xlu0 %9164
    %9166 = vrot.lane.b32.xlu0 %v5412, 32
    %v9167 = vpop.permute.xlu0 %9166
    %9168 = vrot.lane.b32.xlu0 %v5413, 32
    %v9169 = vpop.permute.xlu0 %9168
    %9170 = vrot.lane.b32.xlu0 %v5414, 32
    %v9171 = vpop.permute.xlu0 %9170
    %9172 = vrot.lane.b32.xlu0 %v5415, 32
    %v9173 = vpop.permute.xlu0 %9172
    %9174 = vrot.lane.b32.xlu0 %v5416, 32
    %v9175 = vpop.permute.xlu0 %9174
    %9176 = vrot.lane.b32.xlu0 %v5417, 32
    %v9177 = vpop.permute.xlu0 %9176
    %9210 = vrot.lane.b32.xlu0 %v7218, 64
    %v9211 = vpop.permute.xlu0 %9210
    %9212 = vrot.lane.b32.xlu0 %v7219, 64
    %v9213 = vpop.permute.xlu0 %9212
    %9214 = vrot.lane.b32.xlu0 %v7220, 64
    %v9215 = vpop.permute.xlu0 %9214
    %9216 = vrot.lane.b32.xlu0 %v7221, 64
    %v9217 = vpop.permute.xlu0 %9216
    %9218 = vrot.lane.b32.xlu0 %v7222, 64
    %v9219 = vpop.permute.xlu0 %9218
    %9220 = vrot.lane.b32.xlu0 %v7223, 64
    %v9221 = vpop.permute.xlu0 %9220
    %9222 = vrot.lane.b32.xlu0 %v7224, 64
    %v9223 = vpop.permute.xlu0 %9222
    %9224 = vrot.lane.b32.xlu0 %v7225, 64
    %v9225 = vpop.permute.xlu0 %9224
    %9226 = vrot.lane.b32.xlu0 %v7226, 64
    %v9227 = vpop.permute.xlu0 %9226
    %9228 = vrot.lane.b32.xlu0 %v7227, 64
    %v9229 = vpop.permute.xlu0 %9228
    %9230 = vrot.lane.b32.xlu0 %v7228, 64
    %v9231 = vpop.permute.xlu0 %9230
    %9232 = vrot.lane.b32.xlu0 %v7229, 64
    %v9233 = vpop.permute.xlu0 %9232
    %9234 = vrot.lane.b32.xlu0 %v7230, 64
    %v9235 = vpop.permute.xlu0 %9234
    %9236 = vrot.lane.b32.xlu0 %v7231, 64
    %v9237 = vpop.permute.xlu0 %9236
    %9238 = vrot.lane.b32.xlu0 %v7232, 64
    %v9239 = vpop.permute.xlu0 %9238
    %9240 = vrot.lane.b32.xlu0 %v7233, 64
    %v9241 = vpop.permute.xlu0 %9240
    %9242 = vrot.lane.b32.xlu0 %v7234, 64
    %v9243 = vpop.permute.xlu0 %9242
    %9244 = vrot.lane.b32.xlu0 %v7235, 64
    %v9245 = vpop.permute.xlu0 %9244
    %9246 = vrot.lane.b32.xlu0 %v7236, 64
    %v9247 = vpop.permute.xlu0 %9246
    %9248 = vrot.lane.b32.xlu0 %v7237, 64
    %v9249 = vpop.permute.xlu0 %9248
    %9250 = vrot.lane.b32.xlu0 %v7238, 64
    %v9251 = vpop.permute.xlu0 %9250
    %9252 = vrot.lane.b32.xlu0 %v7239, 64
    %v9253 = vpop.permute.xlu0 %9252
    %9254 = vrot.lane.b32.xlu0 %v7240, 64
    %v9255 = vpop.permute.xlu0 %9254
    %9256 = vrot.lane.b32.xlu0 %v7241, 64
    %v9257 = vpop.permute.xlu0 %9256
    %9258 = vrot.lane.b32.xlu0 %v7242, 64
    %v9259 = vpop.permute.xlu0 %9258
    %9260 = vrot.lane.b32.xlu0 %v7243, 64
    %v9261 = vpop.permute.xlu0 %9260
    %9262 = vrot.lane.b32.xlu0 %v7244, 64
    %v9263 = vpop.permute.xlu0 %9262
    %9264 = vrot.lane.b32.xlu0 %v7245, 64
    %v9265 = vpop.permute.xlu0 %9264
    %9266 = vrot.lane.b32.xlu0 %v7246, 64
    %v9267 = vpop.permute.xlu0 %9266
    %9268 = vrot.lane.b32.xlu0 %v7247, 64
    %v9269 = vpop.permute.xlu0 %9268
    %9270 = vrot.lane.b32.xlu0 %v7248, 64
    %v9271 = vpop.permute.xlu0 %9270
    %9272 = vrot.lane.b32.xlu0 %v7249, 64
    %v9273 = vpop.permute.xlu0 %9272
    %9306 = vrot.lane.b32.xlu0 %v9050, 96
    %v9307 = vpop.permute.xlu0 %9306
    %9308 = vrot.lane.b32.xlu0 %v9051, 96
    %v9309 = vpop.permute.xlu0 %9308
    %9310 = vrot.lane.b32.xlu0 %v9052, 96
    %v9311 = vpop.permute.xlu0 %9310
    %9312 = vrot.lane.b32.xlu0 %v9053, 96
    %v9313 = vpop.permute.xlu0 %9312
    %9314 = vrot.lane.b32.xlu0 %v9054, 96
    %v9315 = vpop.permute.xlu0 %9314
    %9316 = vrot.lane.b32.xlu0 %v9055, 96
    %v9317 = vpop.permute.xlu0 %9316
    %9318 = vrot.lane.b32.xlu0 %v9056, 96
    %v9319 = vpop.permute.xlu0 %9318
    %9320 = vrot.lane.b32.xlu0 %v9057, 96
    %v9321 = vpop.permute.xlu0 %9320
    %9322 = vrot.lane.b32.xlu0 %v9058, 96
    %v9323 = vpop.permute.xlu0 %9322
    %9324 = vrot.lane.b32.xlu0 %v9059, 96
    %v9325 = vpop.permute.xlu0 %9324
    %9326 = vrot.lane.b32.xlu0 %v9060, 96
    %v9327 = vpop.permute.xlu0 %9326
    %9328 = vrot.lane.b32.xlu0 %v9061, 96
    %v9329 = vpop.permute.xlu0 %9328
    %9330 = vrot.lane.b32.xlu0 %v9062, 96
    %v9331 = vpop.permute.xlu0 %9330
    %9332 = vrot.lane.b32.xlu0 %v9063, 96
    %v9333 = vpop.permute.xlu0 %9332
    %9334 = vrot.lane.b32.xlu0 %v9064, 96
    %v9335 = vpop.permute.xlu0 %9334
    %9336 = vrot.lane.b32.xlu0 %v9065, 96
    %v9337 = vpop.permute.xlu0 %9336
    %9338 = vrot.lane.b32.xlu0 %v9066, 96
    %v9339 = vpop.permute.xlu0 %9338
    %9340 = vrot.lane.b32.xlu0 %v9067, 96
    %v9341 = vpop.permute.xlu0 %9340
    %9342 = vrot.lane.b32.xlu0 %v9068, 96
    %v9343 = vpop.permute.xlu0 %9342
    %9344 = vrot.lane.b32.xlu0 %v9069, 96
    %v9345 = vpop.permute.xlu0 %9344
    %9346 = vrot.lane.b32.xlu0 %v9070, 96
    %v9347 = vpop.permute.xlu0 %9346
    %9348 = vrot.lane.b32.xlu0 %v9071, 96
    %v9349 = vpop.permute.xlu0 %9348
    %9350 = vrot.lane.b32.xlu0 %v9072, 96
    %v9351 = vpop.permute.xlu0 %9350
    %9352 = vrot.lane.b32.xlu0 %v9073, 96
    %v9353 = vpop.permute.xlu0 %9352
    %9354 = vrot.lane.b32.xlu0 %v9074, 96
    %v9355 = vpop.permute.xlu0 %9354
    %9356 = vrot.lane.b32.xlu0 %v9075, 96
    %v9357 = vpop.permute.xlu0 %9356
    %9358 = vrot.lane.b32.xlu0 %v9076, 96
    %v9359 = vpop.permute.xlu0 %9358
    %9360 = vrot.lane.b32.xlu0 %v9077, 96
    %v9361 = vpop.permute.xlu0 %9360
    %9362 = vrot.lane.b32.xlu0 %v9078, 96
    %v9363 = vpop.permute.xlu0 %9362
    %9364 = vrot.lane.b32.xlu0 %v9079, 96
    %v9365 = vpop.permute.xlu0 %9364
    %9366 = vrot.lane.b32.xlu0 %v9080, 96
    %v9367 = vpop.permute.xlu0 %9366
    %9368 = vrot.lane.b32.xlu0 %v9081, 96
    %v9369 = vpop.permute.xlu0 %9368
    %v9372 = vsel %vm1881, %v3458, %v9115
    %v9375 = vsel %vm1881, %v3459, %v9117
    %v9378 = vsel %vm1881, %v3460, %v9119
    %v9381 = vsel %vm1881, %v3461, %v9121
    %v9384 = vsel %vm1881, %v3462, %v9123
    %v9387 = vsel %vm1881, %v3463, %v9125
    %v9390 = vsel %vm1881, %v3464, %v9127
    %v9393 = vsel %vm1881, %v3465, %v9129
    %v9396 = vsel %vm1881, %v3466, %v9131
    %v9399 = vsel %vm1881, %v3467, %v9133
    %v9402 = vsel %vm1881, %v3468, %v9135
    %v9405 = vsel %vm1881, %v3469, %v9137
    %v9408 = vsel %vm1881, %v3470, %v9139
    %v9411 = vsel %vm1881, %v3471, %v9141
    %v9414 = vsel %vm1881, %v3472, %v9143
    %v9417 = vsel %vm1881, %v3473, %v9145
    %v9420 = vsel %vm1881, %v3474, %v9147
    %v9423 = vsel %vm1881, %v3475, %v9149
    %v9426 = vsel %vm1881, %v3476, %v9151
    %v9429 = vsel %vm1881, %v3477, %v9153
    %v9432 = vsel %vm1881, %v3478, %v9155
    %v9435 = vsel %vm1881, %v3479, %v9157
    %v9438 = vsel %vm1881, %v3480, %v9159
    %v9441 = vsel %vm1881, %v3481, %v9161
    %v9444 = vsel %vm1881, %v3482, %v9163
    %v9447 = vsel %vm1881, %v3483, %v9165
    %v9450 = vsel %vm1881, %v3484, %v9167
    %v9453 = vsel %vm1881, %v3485, %v9169
    %v9456 = vsel %vm1881, %v3486, %v9171
    %v9459 = vsel %vm1881, %v3487, %v9173
    %v9462 = vsel %vm1881, %v3488, %v9175
    %v9465 = vsel %vm1881, %v3489, %v9177
    %vm9466 = vcmask 523264
    %v9468 = vsel %vm9466, %v9372, %v9211
    %v9470 = vsel %vm9466, %v9375, %v9213
    %v9472 = vsel %vm9466, %v9378, %v9215
    %v9474 = vsel %vm9466, %v9381, %v9217
    %v9476 = vsel %vm9466, %v9384, %v9219
    %v9478 = vsel %vm9466, %v9387, %v9221
    %v9480 = vsel %vm9466, %v9390, %v9223
    %v9482 = vsel %vm9466, %v9393, %v9225
    %v9484 = vsel %vm9466, %v9396, %v9227
    %v9486 = vsel %vm9466, %v9399, %v9229
    %v9488 = vsel %vm9466, %v9402, %v9231
    %v9490 = vsel %vm9466, %v9405, %v9233
    %v9492 = vsel %vm9466, %v9408, %v9235
    %v9494 = vsel %vm9466, %v9411, %v9237
    %v9496 = vsel %vm9466, %v9414, %v9239
    %v9498 = vsel %vm9466, %v9417, %v9241
    %v9500 = vsel %vm9466, %v9420, %v9243
    %v9502 = vsel %vm9466, %v9423, %v9245
    %v9504 = vsel %vm9466, %v9426, %v9247
    %v9506 = vsel %vm9466, %v9429, %v9249
    %v9508 = vsel %vm9466, %v9432, %v9251
    %v9510 = vsel %vm9466, %v9435, %v9253
    %v9512 = vsel %vm9466, %v9438, %v9255
    %v9514 = vsel %vm9466, %v9441, %v9257
    %v9516 = vsel %vm9466, %v9444, %v9259
    %v9518 = vsel %vm9466, %v9447, %v9261
    %v9520 = vsel %vm9466, %v9450, %v9263
    %v9522 = vsel %vm9466, %v9453, %v9265
    %v9524 = vsel %vm9466, %v9456, %v9267
    %v9526 = vsel %vm9466, %v9459, %v9269
    %v9528 = vsel %vm9466, %v9462, %v9271
    %v9530 = vsel %vm9466, %v9465, %v9273
    %vm9531 = vcmask 785408
    %v9533 = vsel %vm9531, %v9468, %v9307
    %v9536 = vsel %vm9531, %v9470, %v9309
    %v9539 = vsel %vm9531, %v9472, %v9311
    %v9542 = vsel %vm9531, %v9474, %v9313
    %v9545 = vsel %vm9531, %v9476, %v9315
    %v9548 = vsel %vm9531, %v9478, %v9317
    %v9551 = vsel %vm9531, %v9480, %v9319
    %v9554 = vsel %vm9531, %v9482, %v9321
    %v9557 = vsel %vm9531, %v9484, %v9323
    %v9560 = vsel %vm9531, %v9486, %v9325
    %v9563 = vsel %vm9531, %v9488, %v9327
    %v9566 = vsel %vm9531, %v9490, %v9329
    %v9569 = vsel %vm9531, %v9492, %v9331
    %v9572 = vsel %vm9531, %v9494, %v9333
    %v9575 = vsel %vm9531, %v9496, %v9335
    %v9578 = vsel %vm9531, %v9498, %v9337
    %v9581 = vsel %vm9531, %v9500, %v9339
    %v9584 = vsel %vm9531, %v9502, %v9341
    %v9587 = vsel %vm9531, %v9504, %v9343
    %v9590 = vsel %vm9531, %v9506, %v9345
    %v9593 = vsel %vm9531, %v9508, %v9347
    %v9596 = vsel %vm9531, %v9510, %v9349
    %v9599 = vsel %vm9531, %v9512, %v9351
    %v9602 = vsel %vm9531, %v9514, %v9353
    %v9605 = vsel %vm9531, %v9516, %v9355
    %v9608 = vsel %vm9531, %v9518, %v9357
    %v9611 = vsel %vm9531, %v9520, %v9359
    %v9614 = vsel %vm9531, %v9522, %v9361
    %v9617 = vsel %vm9531, %v9524, %v9363
    %v9620 = vsel %vm9531, %v9526, %v9365
    %v9623 = vsel %vm9531, %v9528, %v9367
    %v9626 = vsel %vm9531, %v9530, %v9369
    %v9628 = vld [vmem:[#allocation7] sm:$0xf]
    %v9629 = vld [vmem:[#allocation7 + $0x4] sm:$0xf]
    %v9630 = vld [vmem:[#allocation7 + $0x8] sm:$0xf]
    %v9631 = vld [vmem:[#allocation7 + $0xc] sm:$0xf]
    %v9632 = vld [vmem:[#allocation7 + $0x10] sm:$0xf]
    %v9633 = vld [vmem:[#allocation7 + $0x14] sm:$0xf]
    %v9634 = vld [vmem:[#allocation7 + $0x18] sm:$0xf]
    %v9635 = vld [vmem:[#allocation7 + $0x1c] sm:$0xf]
    %v9636 = vld [vmem:[#allocation7 + $0x20] sm:$0xf]
    %v9637 = vld [vmem:[#allocation7 + $0x24] sm:$0xf]
    %v9638 = vld [vmem:[#allocation7 + $0x28] sm:$0xf]
    %v9639 = vld [vmem:[#allocation7 + $0x2c] sm:$0xf]
    %v9640 = vld [vmem:[#allocation7 + $0x30] sm:$0xf]
    %v9641 = vld [vmem:[#allocation7 + $0x34] sm:$0xf]
    %v9642 = vld [vmem:[#allocation7 + $0x38] sm:$0xf]
    %v9643 = vld [vmem:[#allocation7 + $0x3c] sm:$0xf]
    %v9660 = vunpack.c.l.b16 %v9628
    %v9661 = vunpack.c.l.b16 %v9629
    %v9662 = vunpack.c.l.b16 %v9630
    %v9663 = vunpack.c.l.b16 %v9631
    %v9664 = vunpack.c.l.b16 %v9632
    %v9665 = vunpack.c.l.b16 %v9633
    %v9666 = vunpack.c.l.b16 %v9634
    %v9667 = vunpack.c.l.b16 %v9635
    %v9668 = vunpack.c.l.b16 %v9636
    %v9669 = vunpack.c.l.b16 %v9637
    %v9670 = vunpack.c.l.b16 %v9638
    %v9671 = vunpack.c.l.b16 %v9639
    %v9672 = vunpack.c.l.b16 %v9640
    %v9673 = vunpack.c.l.b16 %v9641
    %v9674 = vunpack.c.l.b16 %v9642
    %v9675 = vunpack.c.l.b16 %v9643
    %v9676 = vpack.c.b16 %v9661, %v9660
    %v9677 = vpack.c.b16 %v9663, %v9662
    %v9678 = vpack.c.b16 %v9665, %v9664
    %v9679 = vpack.c.b16 %v9667, %v9666
    %v9680 = vpack.c.b16 %v9669, %v9668
    %v9681 = vpack.c.b16 %v9671, %v9670
    %v9682 = vpack.c.b16 %v9673, %v9672
    %v9683 = vpack.c.b16 %v9675, %v9674
    %9692 = vmatprep.subr.bf16.mxu0 0
    %9693 = vmatpush1.bf16.msra.mxu0 %v9683
    %9694 = vmatprep.subr.bf16.mxu0 0
    %9695 = vmatpush1.bf16.msra.mxu0 %v9682
    %9696 = vmatprep.subr.bf16.mxu0 0
    %9697 = vmatpush1.bf16.msra.mxu0 %v9681
    %9698 = vmatprep.subr.bf16.mxu0 0
    %9699 = vmatpush1.bf16.msra.mxu0 %v9680
    %9700 = vmatprep.subr.bf16.mxu0 0
    %9701 = vmatpush1.bf16.msra.mxu0 %v9679
    %9702 = vmatprep.subr.bf16.mxu0 0
    %9703 = vmatpush1.bf16.msra.mxu0 %v9678
    %9704 = vmatprep.subr.bf16.mxu0 0
    %9705 = vmatpush1.bf16.msra.mxu0 %v9677
    %9706 = vmatprep.subr.bf16.mxu0 0
    %9707 = vmatpush1.bf16.msra.mxu0 %v9676
    %9708 = vmatprep.subr.bf16.mxu0 0
    %9709 = vmatpush2.bf16.msra.mxu0 0
    %9710 = vmatprep.subr.bf16.mxu0 0
    %9711 = vmatpush2.bf16.msra.mxu0 0
    %9712 = vmatprep.subr.bf16.mxu0 0
    %9713 = vmatpush2.bf16.msra.mxu0 0
    %9714 = vmatprep.subr.bf16.mxu0 0
    %9715 = vmatpush2.bf16.msra.mxu0 0
    %9716 = vmatprep.subr.bf16.mxu0 0
    %9717 = vmatpush2.bf16.msra.mxu0 0
    %9718 = vmatprep.subr.bf16.mxu0 0
    %9719 = vmatpush2.bf16.msra.mxu0 0
    %9720 = vmatprep.subr.bf16.mxu0 0
    %9721 = vmatpush2.bf16.msra.mxu0 0
    %9722 = vmatprep.subr.bf16.mxu0 0
    %9723 = vmatpush2.bf16.msra.mxu0 0
    %9724 = vmatprep.mubr.bf16.mxu0 0
    %9725 = vmatmul.mubr.bf16.gmra.mxu0 %v9533
    %v9726 = vpop.f32.mrf.mxu0
    %v9727 = vadd.f32 0.0, %v9726
    %v9728 = vpop.f32.mrf.mxu0
    %v9729 = vpop.f32.mrf.mxu0
    %v9730 = vadd.f32 0.0, %v9729
    %v9731 = vpop.f32.mrf.mxu0
    %9732 = vmatprep.mubr.bf16.mxu0 0
    %9733 = vmatmul.mubr.bf16.gmra.mxu0 %v9536
    %v9734 = vpop.f32.mrf.mxu0
    %v9735 = vadd.f32 0.0, %v9734
    %v9736 = vpop.f32.mrf.mxu0
    %v9737 = vpop.f32.mrf.mxu0
    %v9738 = vadd.f32 0.0, %v9737
    %v9739 = vpop.f32.mrf.mxu0
    %9740 = vmatprep.mubr.bf16.mxu0 0
    %9741 = vmatmul.mubr.bf16.gmra.mxu0 %v9539
    %v9742 = vpop.f32.mrf.mxu0
    %v9743 = vadd.f32 0.0, %v9742
    %v9744 = vpop.f32.mrf.mxu0
    %v9745 = vpop.f32.mrf.mxu0
    %v9746 = vadd.f32 0.0, %v9745
    %v9747 = vpop.f32.mrf.mxu0
    %9748 = vmatprep.mubr.bf16.mxu0 0
    %9749 = vmatmul.mubr.bf16.gmra.mxu0 %v9542
    %v9750 = vpop.f32.mrf.mxu0
    %v9751 = vadd.f32 0.0, %v9750
    %v9752 = vpop.f32.mrf.mxu0
    %v9753 = vpop.f32.mrf.mxu0
    %v9754 = vadd.f32 0.0, %v9753
    %v9755 = vpop.f32.mrf.mxu0
    %9756 = vmatprep.mubr.bf16.mxu0 0
    %9757 = vmatmul.mubr.bf16.gmra.mxu0 %v9545
    %v9758 = vpop.f32.mrf.mxu0
    %v9759 = vadd.f32 0.0, %v9758
    %v9760 = vpop.f32.mrf.mxu0
    %v9761 = vpop.f32.mrf.mxu0
    %v9762 = vadd.f32 0.0, %v9761
    %v9763 = vpop.f32.mrf.mxu0
    %9764 = vmatprep.mubr.bf16.mxu0 0
    %9765 = vmatmul.mubr.bf16.gmra.mxu0 %v9548
    %v9766 = vpop.f32.mrf.mxu0
    %v9767 = vadd.f32 0.0, %v9766
    %v9768 = vpop.f32.mrf.mxu0
    %v9769 = vpop.f32.mrf.mxu0
    %v9770 = vadd.f32 0.0, %v9769
    %v9771 = vpop.f32.mrf.mxu0
    %9772 = vmatprep.mubr.bf16.mxu0 0
    %9773 = vmatmul.mubr.bf16.gmra.mxu0 %v9551
    %v9774 = vpop.f32.mrf.mxu0
    %v9775 = vadd.f32 0.0, %v9774
    %v9776 = vpop.f32.mrf.mxu0
    %v9777 = vpop.f32.mrf.mxu0
    %v9778 = vadd.f32 0.0, %v9777
    %v9779 = vpop.f32.mrf.mxu0
    %9780 = vmatprep.mubr.bf16.mxu0 0
    %9781 = vmatmul.mubr.bf16.gmra.mxu0 %v9554
    %v9782 = vpop.f32.mrf.mxu0
    %v9783 = vadd.f32 0.0, %v9782
    %v9784 = vpop.f32.mrf.mxu0
    %v9785 = vpop.f32.mrf.mxu0
    %v9786 = vadd.f32 0.0, %v9785
    %v9787 = vpop.f32.mrf.mxu0
    %9788 = vmatprep.mubr.bf16.mxu0 0
    %9789 = vmatmul.mubr.bf16.gmra.mxu0 %v9557
    %v9790 = vpop.f32.mrf.mxu0
    %v9791 = vadd.f32 0.0, %v9790
    %v9792 = vpop.f32.mrf.mxu0
    %v9793 = vpop.f32.mrf.mxu0
    %v9794 = vadd.f32 0.0, %v9793
    %v9795 = vpop.f32.mrf.mxu0
    %9796 = vmatprep.mubr.bf16.mxu0 0
    %9797 = vmatmul.mubr.bf16.gmra.mxu0 %v9560
    %v9798 = vpop.f32.mrf.mxu0
    %v9799 = vadd.f32 0.0, %v9798
    %v9800 = vpop.f32.mrf.mxu0
    %v9801 = vpop.f32.mrf.mxu0
    %v9802 = vadd.f32 0.0, %v9801
    %v9803 = vpop.f32.mrf.mxu0
    %9804 = vmatprep.mubr.bf16.mxu0 0
    %9805 = vmatmul.mubr.bf16.gmra.mxu0 %v9563
    %v9806 = vpop.f32.mrf.mxu0
    %v9807 = vadd.f32 0.0, %v9806
    %v9808 = vpop.f32.mrf.mxu0
    %v9809 = vpop.f32.mrf.mxu0
    %v9810 = vadd.f32 0.0, %v9809
    %v9811 = vpop.f32.mrf.mxu0
    %9812 = vmatprep.mubr.bf16.mxu0 0
    %9813 = vmatmul.mubr.bf16.gmra.mxu0 %v9566
    %v9814 = vpop.f32.mrf.mxu0
    %v9815 = vadd.f32 0.0, %v9814
    %v9816 = vpop.f32.mrf.mxu0
    %v9817 = vpop.f32.mrf.mxu0
    %v9818 = vadd.f32 0.0, %v9817
    %v9819 = vpop.f32.mrf.mxu0
    %9820 = vmatprep.mubr.bf16.mxu0 0
    %9821 = vmatmul.mubr.bf16.gmra.mxu0 %v9569
    %v9822 = vpop.f32.mrf.mxu0
    %v9823 = vadd.f32 0.0, %v9822
    %v9824 = vpop.f32.mrf.mxu0
    %v9825 = vpop.f32.mrf.mxu0
    %v9826 = vadd.f32 0.0, %v9825
    %v9827 = vpop.f32.mrf.mxu0
    %9828 = vmatprep.mubr.bf16.mxu0 0
    %9829 = vmatmul.mubr.bf16.gmra.mxu0 %v9572
    %v9830 = vpop.f32.mrf.mxu0
    %v9831 = vadd.f32 0.0, %v9830
    %v9832 = vpop.f32.mrf.mxu0
    %v9833 = vpop.f32.mrf.mxu0
    %v9834 = vadd.f32 0.0, %v9833
    %v9835 = vpop.f32.mrf.mxu0
    %9836 = vmatprep.mubr.bf16.mxu0 0
    %9837 = vmatmul.mubr.bf16.gmra.mxu0 %v9575
    %v9838 = vpop.f32.mrf.mxu0
    %v9839 = vadd.f32 0.0, %v9838
    %v9840 = vpop.f32.mrf.mxu0
    %v9841 = vpop.f32.mrf.mxu0
    %v9842 = vadd.f32 0.0, %v9841
    %v9843 = vpop.f32.mrf.mxu0
    %9844 = vmatprep.mubr.bf16.mxu0 0
    %9845 = vmatmul.mubr.bf16.gmra.mxu0 %v9578
    %v9846 = vpop.f32.mrf.mxu0
    %v9847 = vadd.f32 0.0, %v9846
    %v9848 = vpop.f32.mrf.mxu0
    %v9849 = vpop.f32.mrf.mxu0
    %v9850 = vadd.f32 0.0, %v9849
    %v9851 = vpop.f32.mrf.mxu0
    %9852 = vmatprep.mubr.bf16.mxu0 0
    %9853 = vmatmul.mubr.bf16.gmra.mxu0 %v9581
    %v9854 = vpop.f32.mrf.mxu0
    %v9855 = vadd.f32 0.0, %v9854
    %v9856 = vpop.f32.mrf.mxu0
    %v9857 = vpop.f32.mrf.mxu0
    %v9858 = vadd.f32 0.0, %v9857
    %v9859 = vpop.f32.mrf.mxu0
    %9860 = vmatprep.mubr.bf16.mxu0 0
    %9861 = vmatmul.mubr.bf16.gmra.mxu0 %v9584
    %v9862 = vpop.f32.mrf.mxu0
    %v9863 = vadd.f32 0.0, %v9862
    %v9864 = vpop.f32.mrf.mxu0
    %v9865 = vpop.f32.mrf.mxu0
    %v9866 = vadd.f32 0.0, %v9865
    %v9867 = vpop.f32.mrf.mxu0
    %9868 = vmatprep.mubr.bf16.mxu0 0
    %9869 = vmatmul.mubr.bf16.gmra.mxu0 %v9587
    %v9870 = vpop.f32.mrf.mxu0
    %v9871 = vadd.f32 0.0, %v9870
    %v9872 = vpop.f32.mrf.mxu0
    %v9873 = vpop.f32.mrf.mxu0
    %v9874 = vadd.f32 0.0, %v9873
    %v9875 = vpop.f32.mrf.mxu0
    %9876 = vmatprep.mubr.bf16.mxu0 0
    %9877 = vmatmul.mubr.bf16.gmra.mxu0 %v9590
    %v9878 = vpop.f32.mrf.mxu0
    %v9879 = vadd.f32 0.0, %v9878
    %v9880 = vpop.f32.mrf.mxu0
    %v9881 = vpop.f32.mrf.mxu0
    %v9882 = vadd.f32 0.0, %v9881
    %v9883 = vpop.f32.mrf.mxu0
    %9884 = vmatprep.mubr.bf16.mxu0 0
    %9885 = vmatmul.mubr.bf16.gmra.mxu0 %v9593
    %v9886 = vpop.f32.mrf.mxu0
    %v9887 = vadd.f32 0.0, %v9886
    %v9888 = vpop.f32.mrf.mxu0
    %v9889 = vpop.f32.mrf.mxu0
    %v9890 = vadd.f32 0.0, %v9889
    %v9891 = vpop.f32.mrf.mxu0
    %9892 = vmatprep.mubr.bf16.mxu0 0
    %9893 = vmatmul.mubr.bf16.gmra.mxu0 %v9596
    %v9894 = vpop.f32.mrf.mxu0
    %v9895 = vadd.f32 0.0, %v9894
    %v9896 = vpop.f32.mrf.mxu0
    %v9897 = vpop.f32.mrf.mxu0
    %v9898 = vadd.f32 0.0, %v9897
    %v9899 = vpop.f32.mrf.mxu0
    %9900 = vmatprep.mubr.bf16.mxu0 0
    %9901 = vmatmul.mubr.bf16.gmra.mxu0 %v9599
    %v9902 = vpop.f32.mrf.mxu0
    %v9903 = vadd.f32 0.0, %v9902
    %v9904 = vpop.f32.mrf.mxu0
    %v9905 = vpop.f32.mrf.mxu0
    %v9906 = vadd.f32 0.0, %v9905
    %v9907 = vpop.f32.mrf.mxu0
    %9908 = vmatprep.mubr.bf16.mxu0 0
    %9909 = vmatmul.mubr.bf16.gmra.mxu0 %v9602
    %v9910 = vpop.f32.mrf.mxu0
    %v9911 = vadd.f32 0.0, %v9910
    %v9912 = vpop.f32.mrf.mxu0
    %v9913 = vpop.f32.mrf.mxu0
    %v9914 = vadd.f32 0.0, %v9913
    %v9915 = vpop.f32.mrf.mxu0
    %9916 = vmatprep.mubr.bf16.mxu0 0
    %9917 = vmatmul.mubr.bf16.gmra.mxu0 %v9605
    %v9918 = vpop.f32.mrf.mxu0
    %v9919 = vadd.f32 0.0, %v9918
    %v9920 = vpop.f32.mrf.mxu0
    %v9921 = vpop.f32.mrf.mxu0
    %v9922 = vadd.f32 0.0, %v9921
    %v9923 = vpop.f32.mrf.mxu0
    %9924 = vmatprep.mubr.bf16.mxu0 0
    %9925 = vmatmul.mubr.bf16.gmra.mxu0 %v9608
    %v9926 = vpop.f32.mrf.mxu0
    %v9927 = vadd.f32 0.0, %v9926
    %v9928 = vpop.f32.mrf.mxu0
    %v9929 = vpop.f32.mrf.mxu0
    %v9930 = vadd.f32 0.0, %v9929
    %v9931 = vpop.f32.mrf.mxu0
    %9932 = vmatprep.mubr.bf16.mxu0 0
    %9933 = vmatmul.mubr.bf16.gmra.mxu0 %v9611
    %v9934 = vpop.f32.mrf.mxu0
    %v9935 = vadd.f32 0.0, %v9934
    %v9936 = vpop.f32.mrf.mxu0
    %v9937 = vpop.f32.mrf.mxu0
    %v9938 = vadd.f32 0.0, %v9937
    %v9939 = vpop.f32.mrf.mxu0
    %9940 = vmatprep.mubr.bf16.mxu0 0
    %9941 = vmatmul.mubr.bf16.gmra.mxu0 %v9614
    %v9942 = vpop.f32.mrf.mxu0
    %v9943 = vadd.f32 0.0, %v9942
    %v9944 = vpop.f32.mrf.mxu0
    %v9945 = vpop.f32.mrf.mxu0
    %v9946 = vadd.f32 0.0, %v9945
    %v9947 = vpop.f32.mrf.mxu0
    %9948 = vmatprep.mubr.bf16.mxu0 0
    %9949 = vmatmul.mubr.bf16.gmra.mxu0 %v9617
    %v9950 = vpop.f32.mrf.mxu0
    %v9951 = vadd.f32 0.0, %v9950
    %v9952 = vpop.f32.mrf.mxu0
    %v9953 = vpop.f32.mrf.mxu0
    %v9954 = vadd.f32 0.0, %v9953
    %v9955 = vpop.f32.mrf.mxu0
    %9956 = vmatprep.mubr.bf16.mxu0 0
    %9957 = vmatmul.mubr.bf16.gmra.mxu0 %v9620
    %v9958 = vpop.f32.mrf.mxu0
    %v9959 = vadd.f32 0.0, %v9958
    %v9960 = vpop.f32.mrf.mxu0
    %v9961 = vpop.f32.mrf.mxu0
    %v9962 = vadd.f32 0.0, %v9961
    %v9963 = vpop.f32.mrf.mxu0
    %9964 = vmatprep.mubr.bf16.mxu0 0
    %9965 = vmatmul.mubr.bf16.gmra.mxu0 %v9623
    %v9966 = vpop.f32.mrf.mxu0
    %v9967 = vadd.f32 0.0, %v9966
    %v9968 = vpop.f32.mrf.mxu0
    %v9969 = vpop.f32.mrf.mxu0
    %v9970 = vadd.f32 0.0, %v9969
    %v9971 = vpop.f32.mrf.mxu0
    %9972 = vmatprep.mubr.bf16.mxu0 0
    %9973 = vmatmul.mubr.bf16.gmra.mxu0 %v9626
    %v9974 = vpop.f32.mrf.mxu0
    %v9975 = vadd.f32 0.0, %v9974
    %v9976 = vpop.f32.mrf.mxu0
    %v9977 = vpop.f32.mrf.mxu0
    %v9978 = vadd.f32 0.0, %v9977
    %v9979 = vpop.f32.mrf.mxu0
    %9980 = vdwg.mxu0
    %v9981 = vadd.f32 %v114, %v9727
    %v9982 = vadd.f32 %v115, %v9730
    %v9983 = vadd.f32 %v116, %v9735
    %v9984 = vadd.f32 %v117, %v9738
    %v9985 = vadd.f32 %v118, %v9743
    %v9986 = vadd.f32 %v119, %v9746
    %v9987 = vadd.f32 %v120, %v9751
    %v9988 = vadd.f32 %v121, %v9754
    %v9989 = vadd.f32 %v122, %v9759
    %v9990 = vadd.f32 %v123, %v9762
    %v9991 = vadd.f32 %v124, %v9767
    %v9992 = vadd.f32 %v125, %v9770
    %v9993 = vadd.f32 %v126, %v9775
    %v9994 = vadd.f32 %v127, %v9778
    %v9995 = vadd.f32 %v128, %v9783
    %v9996 = vadd.f32 %v129, %v9786
    %v9997 = vadd.f32 %v130, %v9791
    %v9998 = vadd.f32 %v131, %v9794
    %v9999 = vadd.f32 %v132, %v9799
    %v10000 = vadd.f32 %v133, %v9802
    %v10001 = vadd.f32 %v134, %v9807
    %v10002 = vadd.f32 %v135, %v9810
    %v10003 = vadd.f32 %v136, %v9815
    %v10004 = vadd.f32 %v137, %v9818
    %v10005 = vadd.f32 %v138, %v9823
    %v10006 = vadd.f32 %v139, %v9826
    %v10007 = vadd.f32 %v140, %v9831
    %v10008 = vadd.f32 %v141, %v9834
    %v10009 = vadd.f32 %v142, %v9839
    %v10010 = vadd.f32 %v143, %v9842
    %v10011 = vadd.f32 %v144, %v9847
    %v10012 = vadd.f32 %v145, %v9850
    %v10013 = vadd.f32 %v146, %v9855
    %v10014 = vadd.f32 %v147, %v9858
    %v10015 = vadd.f32 %v148, %v9863
    %v10016 = vadd.f32 %v149, %v9866
    %v10017 = vadd.f32 %v150, %v9871
    %v10018 = vadd.f32 %v151, %v9874
    %v10019 = vadd.f32 %v152, %v9879
    %v10020 = vadd.f32 %v153, %v9882
    %v10021 = vadd.f32 %v154, %v9887
    %v10022 = vadd.f32 %v155, %v9890
    %v10023 = vadd.f32 %v156, %v9895
    %v10024 = vadd.f32 %v157, %v9898
    %v10025 = vadd.f32 %v158, %v9903
    %v10026 = vadd.f32 %v159, %v9906
    %v10027 = vadd.f32 %v160, %v9911
    %v10028 = vadd.f32 %v161, %v9914
    %v10029 = vadd.f32 %v162, %v9919
    %v10030 = vadd.f32 %v163, %v9922
    %v10031 = vadd.f32 %v164, %v9927
    %v10032 = vadd.f32 %v165, %v9930
    %v10033 = vadd.f32 %v166, %v9935
    %v10034 = vadd.f32 %v167, %v9938
    %v10035 = vadd.f32 %v168, %v9943
    %v10036 = vadd.f32 %v169, %v9946
    %v10037 = vadd.f32 %v170, %v9951
    %v10038 = vadd.f32 %v171, %v9954
    %v10039 = vadd.f32 %v172, %v9959
    %v10040 = vadd.f32 %v173, %v9962
    %v10041 = vadd.f32 %v174, %v9967
    %v10042 = vadd.f32 %v175, %v9970
    %v10043 = vadd.f32 %v176, %v9975
    %v10044 = vadd.f32 %v177, %v9978
    %v10045 = vld [vmem:[#allocation8] sm:$0x1]
    %v10047 = vlaneseq
    %v10048 = vshrl.u32 %v10047, 7
    %v10049 = vsub.s32 0, %v10048
    %v10050 = vrot.slane %v10045, %v10049
    %v10052 = vadd.f32 %v9981, %v10050
    %v10053 = vadd.f32 %v9982, %v10050
    %v10054 = vadd.f32 %v9983, %v10050
    %v10055 = vadd.f32 %v9984, %v10050
    %v10056 = vadd.f32 %v9985, %v10050
    %v10057 = vadd.f32 %v9986, %v10050
    %v10058 = vadd.f32 %v9987, %v10050
    %v10059 = vadd.f32 %v9988, %v10050
    %v10060 = vadd.f32 %v9989, %v10050
    %v10061 = vadd.f32 %v9990, %v10050
    %v10062 = vadd.f32 %v9991, %v10050
    %v10063 = vadd.f32 %v9992, %v10050
    %v10064 = vadd.f32 %v9993, %v10050
    %v10065 = vadd.f32 %v9994, %v10050
    %v10066 = vadd.f32 %v9995, %v10050
    %v10067 = vadd.f32 %v9996, %v10050
    %v10068 = vadd.f32 %v9997, %v10050
    %v10069 = vadd.f32 %v9998, %v10050
    %v10070 = vadd.f32 %v9999, %v10050
    %v10071 = vadd.f32 %v10000, %v10050
    %v10072 = vadd.f32 %v10001, %v10050
    %v10073 = vadd.f32 %v10002, %v10050
    %v10074 = vadd.f32 %v10003, %v10050
    %v10075 = vadd.f32 %v10004, %v10050
    %v10076 = vadd.f32 %v10005, %v10050
    %v10077 = vadd.f32 %v10006, %v10050
    %v10078 = vadd.f32 %v10007, %v10050
    %v10079 = vadd.f32 %v10008, %v10050
    %v10080 = vadd.f32 %v10009, %v10050
    %v10081 = vadd.f32 %v10010, %v10050
    %v10082 = vadd.f32 %v10011, %v10050
    %v10083 = vadd.f32 %v10012, %v10050
    %v10084 = vadd.f32 %v10013, %v10050
    %v10085 = vadd.f32 %v10014, %v10050
    %v10086 = vadd.f32 %v10015, %v10050
    %v10087 = vadd.f32 %v10016, %v10050
    %v10088 = vadd.f32 %v10017, %v10050
    %v10089 = vadd.f32 %v10018, %v10050
    %v10090 = vadd.f32 %v10019, %v10050
    %v10091 = vadd.f32 %v10020, %v10050
    %v10092 = vadd.f32 %v10021, %v10050
    %v10093 = vadd.f32 %v10022, %v10050
    %v10094 = vadd.f32 %v10023, %v10050
    %v10095 = vadd.f32 %v10024, %v10050
    %v10096 = vadd.f32 %v10025, %v10050
    %v10097 = vadd.f32 %v10026, %v10050
    %v10098 = vadd.f32 %v10027, %v10050
    %v10099 = vadd.f32 %v10028, %v10050
    %v10100 = vadd.f32 %v10029, %v10050
    %v10101 = vadd.f32 %v10030, %v10050
    %v10102 = vadd.f32 %v10031, %v10050
    %v10103 = vadd.f32 %v10032, %v10050
    %v10104 = vadd.f32 %v10033, %v10050
    %v10105 = vadd.f32 %v10034, %v10050
    %v10106 = vadd.f32 %v10035, %v10050
    %v10107 = vadd.f32 %v10036, %v10050
    %v10108 = vadd.f32 %v10037, %v10050
    %v10109 = vadd.f32 %v10038, %v10050
    %v10110 = vadd.f32 %v10039, %v10050
    %v10111 = vadd.f32 %v10040, %v10050
    %v10112 = vadd.f32 %v10041, %v10050
    %v10113 = vadd.f32 %v10042, %v10050
    %v10114 = vadd.f32 %v10043, %v10050
    %v10115 = vadd.f32 %v10044, %v10050
    %10116 = vadd.xlane.f32.xlu0 %v10052
    %v10117 = vpop.xlane.xlu0 %10116
    %10118 = vadd.xlane.f32.xlu0 %v10053
    %v10119 = vpop.xlane.xlu0 %10118
    %10120 = vadd.xlane.f32.xlu0 %v10054
    %v10121 = vpop.xlane.xlu0 %10120
    %10122 = vadd.xlane.f32.xlu0 %v10055
    %v10123 = vpop.xlane.xlu0 %10122
    %10124 = vadd.xlane.f32.xlu0 %v10056
    %v10125 = vpop.xlane.xlu0 %10124
    %10126 = vadd.xlane.f32.xlu0 %v10057
    %v10127 = vpop.xlane.xlu0 %10126
    %10128 = vadd.xlane.f32.xlu0 %v10058
    %v10129 = vpop.xlane.xlu0 %10128
    %10130 = vadd.xlane.f32.xlu0 %v10059
    %v10131 = vpop.xlane.xlu0 %10130
    %10132 = vadd.xlane.f32.xlu0 %v10060
    %v10133 = vpop.xlane.xlu0 %10132
    %10134 = vadd.xlane.f32.xlu0 %v10061
    %v10135 = vpop.xlane.xlu0 %10134
    %10136 = vadd.xlane.f32.xlu0 %v10062
    %v10137 = vpop.xlane.xlu0 %10136
    %10138 = vadd.xlane.f32.xlu0 %v10063
    %v10139 = vpop.xlane.xlu0 %10138
    %10140 = vadd.xlane.f32.xlu0 %v10064
    %v10141 = vpop.xlane.xlu0 %10140
    %10142 = vadd.xlane.f32.xlu0 %v10065
    %v10143 = vpop.xlane.xlu0 %10142
    %10144 = vadd.xlane.f32.xlu0 %v10066
    %v10145 = vpop.xlane.xlu0 %10144
    %10146 = vadd.xlane.f32.xlu0 %v10067
    %v10147 = vpop.xlane.xlu0 %10146
    %10148 = vadd.xlane.f32.xlu0 %v10068
    %v10149 = vpop.xlane.xlu0 %10148
    %10150 = vadd.xlane.f32.xlu0 %v10069
    %v10151 = vpop.xlane.xlu0 %10150
    %10152 = vadd.xlane.f32.xlu0 %v10070
    %v10153 = vpop.xlane.xlu0 %10152
    %10154 = vadd.xlane.f32.xlu0 %v10071
    %v10155 = vpop.xlane.xlu0 %10154
    %10156 = vadd.xlane.f32.xlu0 %v10072
    %v10157 = vpop.xlane.xlu0 %10156
    %10158 = vadd.xlane.f32.xlu0 %v10073
    %v10159 = vpop.xlane.xlu0 %10158
    %10160 = vadd.xlane.f32.xlu0 %v10074
    %v10161 = vpop.xlane.xlu0 %10160
    %10162 = vadd.xlane.f32.xlu0 %v10075
    %v10163 = vpop.xlane.xlu0 %10162
    %10164 = vadd.xlane.f32.xlu0 %v10076
    %v10165 = vpop.xlane.xlu0 %10164
    %10166 = vadd.xlane.f32.xlu0 %v10077
    %v10167 = vpop.xlane.xlu0 %10166
    %10168 = vadd.xlane.f32.xlu0 %v10078
    %v10169 = vpop.xlane.xlu0 %10168
    %10170 = vadd.xlane.f32.xlu0 %v10079
    %v10171 = vpop.xlane.xlu0 %10170
    %10172 = vadd.xlane.f32.xlu0 %v10080
    %v10173 = vpop.xlane.xlu0 %10172
    %10174 = vadd.xlane.f32.xlu0 %v10081
    %v10175 = vpop.xlane.xlu0 %10174
    %10176 = vadd.xlane.f32.xlu0 %v10082
    %v10177 = vpop.xlane.xlu0 %10176
    %10178 = vadd.xlane.f32.xlu0 %v10083
    %v10179 = vpop.xlane.xlu0 %10178
    %10180 = vadd.xlane.f32.xlu0 %v10084
    %v10181 = vpop.xlane.xlu0 %10180
    %10182 = vadd.xlane.f32.xlu0 %v10085
    %v10183 = vpop.xlane.xlu0 %10182
    %10184 = vadd.xlane.f32.xlu0 %v10086
    %v10185 = vpop.xlane.xlu0 %10184
    %10186 = vadd.xlane.f32.xlu0 %v10087
    %v10187 = vpop.xlane.xlu0 %10186
    %10188 = vadd.xlane.f32.xlu0 %v10088
    %v10189 = vpop.xlane.xlu0 %10188
    %10190 = vadd.xlane.f32.xlu0 %v10089
    %v10191 = vpop.xlane.xlu0 %10190
    %10192 = vadd.xlane.f32.xlu0 %v10090
    %v10193 = vpop.xlane.xlu0 %10192
    %10194 = vadd.xlane.f32.xlu0 %v10091
    %v10195 = vpop.xlane.xlu0 %10194
    %10196 = vadd.xlane.f32.xlu0 %v10092
    %v10197 = vpop.xlane.xlu0 %10196
    %10198 = vadd.xlane.f32.xlu0 %v10093
    %v10199 = vpop.xlane.xlu0 %10198
    %10200 = vadd.xlane.f32.xlu0 %v10094
    %v10201 = vpop.xlane.xlu0 %10200
    %10202 = vadd.xlane.f32.xlu0 %v10095
    %v10203 = vpop.xlane.xlu0 %10202
    %10204 = vadd.xlane.f32.xlu0 %v10096
    %v10205 = vpop.xlane.xlu0 %10204
    %10206 = vadd.xlane.f32.xlu0 %v10097
    %v10207 = vpop.xlane.xlu0 %10206
    %10208 = vadd.xlane.f32.xlu0 %v10098
    %v10209 = vpop.xlane.xlu0 %10208
    %10210 = vadd.xlane.f32.xlu0 %v10099
    %v10211 = vpop.xlane.xlu0 %10210
    %10212 = vadd.xlane.f32.xlu0 %v10100
    %v10213 = vpop.xlane.xlu0 %10212
    %10214 = vadd.xlane.f32.xlu0 %v10101
    %v10215 = vpop.xlane.xlu0 %10214
    %10216 = vadd.xlane.f32.xlu0 %v10102
    %v10217 = vpop.xlane.xlu0 %10216
    %10218 = vadd.xlane.f32.xlu0 %v10103
    %v10219 = vpop.xlane.xlu0 %10218
    %10220 = vadd.xlane.f32.xlu0 %v10104
    %v10221 = vpop.xlane.xlu0 %10220
    %10222 = vadd.xlane.f32.xlu0 %v10105
    %v10223 = vpop.xlane.xlu0 %10222
    %10224 = vadd.xlane.f32.xlu0 %v10106
    %v10225 = vpop.xlane.xlu0 %10224
    %10226 = vadd.xlane.f32.xlu0 %v10107
    %v10227 = vpop.xlane.xlu0 %10226
    %10228 = vadd.xlane.f32.xlu0 %v10108
    %v10229 = vpop.xlane.xlu0 %10228
    %10230 = vadd.xlane.f32.xlu0 %v10109
    %v10231 = vpop.xlane.xlu0 %10230
    %10232 = vadd.xlane.f32.xlu0 %v10110
    %v10233 = vpop.xlane.xlu0 %10232
    %10234 = vadd.xlane.f32.xlu0 %v10111
    %v10235 = vpop.xlane.xlu0 %10234
    %10236 = vadd.xlane.f32.xlu0 %v10112
    %v10237 = vpop.xlane.xlu0 %10236
    %10238 = vadd.xlane.f32.xlu0 %v10113
    %v10239 = vpop.xlane.xlu0 %10238
    %10240 = vadd.xlane.f32.xlu0 %v10114
    %v10241 = vpop.xlane.xlu0 %10240
    %10242 = vadd.xlane.f32.xlu0 %v10115
    %v10243 = vpop.xlane.xlu0 %10242
    %v10244 = vmul.f32 %v10117, %v306
    %v10245 = vmul.f32 %v10119, %v306
    %v10246 = vmul.f32 %v10121, %v306
    %v10247 = vmul.f32 %v10123, %v306
    %v10248 = vmul.f32 %v10125, %v306
    %v10249 = vmul.f32 %v10127, %v306
    %v10250 = vmul.f32 %v10129, %v306
    %v10251 = vmul.f32 %v10131, %v306
    %v10252 = vmul.f32 %v10133, %v306
    %v10253 = vmul.f32 %v10135, %v306
    %v10254 = vmul.f32 %v10137, %v306
    %v10255 = vmul.f32 %v10139, %v306
    %v10256 = vmul.f32 %v10141, %v306
    %v10257 = vmul.f32 %v10143, %v306
    %v10258 = vmul.f32 %v10145, %v306
    %v10259 = vmul.f32 %v10147, %v306
    %v10260 = vmul.f32 %v10149, %v306
    %v10261 = vmul.f32 %v10151, %v306
    %v10262 = vmul.f32 %v10153, %v306
    %v10263 = vmul.f32 %v10155, %v306
    %v10264 = vmul.f32 %v10157, %v306
    %v10265 = vmul.f32 %v10159, %v306
    %v10266 = vmul.f32 %v10161, %v306
    %v10267 = vmul.f32 %v10163, %v306
    %v10268 = vmul.f32 %v10165, %v306
    %v10269 = vmul.f32 %v10167, %v306
    %v10270 = vmul.f32 %v10169, %v306
    %v10271 = vmul.f32 %v10171, %v306
    %v10272 = vmul.f32 %v10173, %v306
    %v10273 = vmul.f32 %v10175, %v306
    %v10274 = vmul.f32 %v10177, %v306
    %v10275 = vmul.f32 %v10179, %v306
    %v10276 = vmul.f32 %v10181, %v306
    %v10277 = vmul.f32 %v10183, %v306
    %v10278 = vmul.f32 %v10185, %v306
    %v10279 = vmul.f32 %v10187, %v306
    %v10280 = vmul.f32 %v10189, %v306
    %v10281 = vmul.f32 %v10191, %v306
    %v10282 = vmul.f32 %v10193, %v306
    %v10283 = vmul.f32 %v10195, %v306
    %v10284 = vmul.f32 %v10197, %v306
    %v10285 = vmul.f32 %v10199, %v306
    %v10286 = vmul.f32 %v10201, %v306
    %v10287 = vmul.f32 %v10203, %v306
    %v10288 = vmul.f32 %v10205, %v306
    %v10289 = vmul.f32 %v10207, %v306
    %v10290 = vmul.f32 %v10209, %v306
    %v10291 = vmul.f32 %v10211, %v306
    %v10292 = vmul.f32 %v10213, %v306
    %v10293 = vmul.f32 %v10215, %v306
    %v10294 = vmul.f32 %v10217, %v306
    %v10295 = vmul.f32 %v10219, %v306
    %v10296 = vmul.f32 %v10221, %v306
    %v10297 = vmul.f32 %v10223, %v306
    %v10298 = vmul.f32 %v10225, %v306
    %v10299 = vmul.f32 %v10227, %v306
    %v10300 = vmul.f32 %v10229, %v306
    %v10301 = vmul.f32 %v10231, %v306
    %v10302 = vmul.f32 %v10233, %v306
    %v10303 = vmul.f32 %v10235, %v306
    %v10304 = vmul.f32 %v10237, %v306
    %v10305 = vmul.f32 %v10239, %v306
    %v10306 = vmul.f32 %v10241, %v306
    %v10307 = vmul.f32 %v10243, %v306
    %v10308 = vsub.f32 %v10052, %v10244
    %v10309 = vsub.f32 %v10053, %v10245
    %v10310 = vsub.f32 %v10054, %v10246
    %v10311 = vsub.f32 %v10055, %v10247
    %v10312 = vsub.f32 %v10056, %v10248
    %v10313 = vsub.f32 %v10057, %v10249
    %v10314 = vsub.f32 %v10058, %v10250
    %v10315 = vsub.f32 %v10059, %v10251
    %v10316 = vsub.f32 %v10060, %v10252
    %v10317 = vsub.f32 %v10061, %v10253
    %v10318 = vsub.f32 %v10062, %v10254
    %v10319 = vsub.f32 %v10063, %v10255
    %v10320 = vsub.f32 %v10064, %v10256
    %v10321 = vsub.f32 %v10065, %v10257
    %v10322 = vsub.f32 %v10066, %v10258
    %v10323 = vsub.f32 %v10067, %v10259
    %v10324 = vsub.f32 %v10068, %v10260
    %v10325 = vsub.f32 %v10069, %v10261
    %v10326 = vsub.f32 %v10070, %v10262
    %v10327 = vsub.f32 %v10071, %v10263
    %v10328 = vsub.f32 %v10072, %v10264
    %v10329 = vsub.f32 %v10073, %v10265
    %v10330 = vsub.f32 %v10074, %v10266
    %v10331 = vsub.f32 %v10075, %v10267
    %v10332 = vsub.f32 %v10076, %v10268
    %v10333 = vsub.f32 %v10077, %v10269
    %v10334 = vsub.f32 %v10078, %v10270
    %v10335 = vsub.f32 %v10079, %v10271
    %v10336 = vsub.f32 %v10080, %v10272
    %v10337 = vsub.f32 %v10081, %v10273
    %v10338 = vsub.f32 %v10082, %v10274
    %v10339 = vsub.f32 %v10083, %v10275
    %v10340 = vsub.f32 %v10084, %v10276
    %v10341 = vsub.f32 %v10085, %v10277
    %v10342 = vsub.f32 %v10086, %v10278
    %v10343 = vsub.f32 %v10087, %v10279
    %v10344 = vsub.f32 %v10088, %v10280
    %v10345 = vsub.f32 %v10089, %v10281
    %v10346 = vsub.f32 %v10090, %v10282
    %v10347 = vsub.f32 %v10091, %v10283
    %v10348 = vsub.f32 %v10092, %v10284
    %v10349 = vsub.f32 %v10093, %v10285
    %v10350 = vsub.f32 %v10094, %v10286
    %v10351 = vsub.f32 %v10095, %v10287
    %v10352 = vsub.f32 %v10096, %v10288
    %v10353 = vsub.f32 %v10097, %v10289
    %v10354 = vsub.f32 %v10098, %v10290
    %v10355 = vsub.f32 %v10099, %v10291
    %v10356 = vsub.f32 %v10100, %v10292
    %v10357 = vsub.f32 %v10101, %v10293
    %v10358 = vsub.f32 %v10102, %v10294
    %v10359 = vsub.f32 %v10103, %v10295
    %v10360 = vsub.f32 %v10104, %v10296
    %v10361 = vsub.f32 %v10105, %v10297
    %v10362 = vsub.f32 %v10106, %v10298
    %v10363 = vsub.f32 %v10107, %v10299
    %v10364 = vsub.f32 %v10108, %v10300
    %v10365 = vsub.f32 %v10109, %v10301
    %v10366 = vsub.f32 %v10110, %v10302
    %v10367 = vsub.f32 %v10111, %v10303
    %v10368 = vsub.f32 %v10112, %v10304
    %v10369 = vsub.f32 %v10113, %v10305
    %v10370 = vsub.f32 %v10114, %v10306
    %v10371 = vsub.f32 %v10115, %v10307
    %v10372 = vmul.f32 %v10308, %v10308
    %v10373 = vmul.f32 %v10309, %v10309
    %v10374 = vmul.f32 %v10310, %v10310
    %v10375 = vmul.f32 %v10311, %v10311
    %v10376 = vmul.f32 %v10312, %v10312
    %v10377 = vmul.f32 %v10313, %v10313
    %v10378 = vmul.f32 %v10314, %v10314
    %v10379 = vmul.f32 %v10315, %v10315
    %v10380 = vmul.f32 %v10316, %v10316
    %v10381 = vmul.f32 %v10317, %v10317
    %v10382 = vmul.f32 %v10318, %v10318
    %v10383 = vmul.f32 %v10319, %v10319
    %v10384 = vmul.f32 %v10320, %v10320
    %v10385 = vmul.f32 %v10321, %v10321
    %v10386 = vmul.f32 %v10322, %v10322
    %v10387 = vmul.f32 %v10323, %v10323
    %v10388 = vmul.f32 %v10324, %v10324
    %v10389 = vmul.f32 %v10325, %v10325
    %v10390 = vmul.f32 %v10326, %v10326
    %v10391 = vmul.f32 %v10327, %v10327
    %v10392 = vmul.f32 %v10328, %v10328
    %v10393 = vmul.f32 %v10329, %v10329
    %v10394 = vmul.f32 %v10330, %v10330
    %v10395 = vmul.f32 %v10331, %v10331
    %v10396 = vmul.f32 %v10332, %v10332
    %v10397 = vmul.f32 %v10333, %v10333
    %v10398 = vmul.f32 %v10334, %v10334
    %v10399 = vmul.f32 %v10335, %v10335
    %v10400 = vmul.f32 %v10336, %v10336
    %v10401 = vmul.f32 %v10337, %v10337
    %v10402 = vmul.f32 %v10338, %v10338
    %v10403 = vmul.f32 %v10339, %v10339
    %v10404 = vmul.f32 %v10340, %v10340
    %v10405 = vmul.f32 %v10341, %v10341
    %v10406 = vmul.f32 %v10342, %v10342
    %v10407 = vmul.f32 %v10343, %v10343
    %v10408 = vmul.f32 %v10344, %v10344
    %v10409 = vmul.f32 %v10345, %v10345
    %v10410 = vmul.f32 %v10346, %v10346
    %v10411 = vmul.f32 %v10347, %v10347
    %v10412 = vmul.f32 %v10348, %v10348
    %v10413 = vmul.f32 %v10349, %v10349
    %v10414 = vmul.f32 %v10350, %v10350
    %v10415 = vmul.f32 %v10351, %v10351
    %v10416 = vmul.f32 %v10352, %v10352
    %v10417 = vmul.f32 %v10353, %v10353
    %v10418 = vmul.f32 %v10354, %v10354
    %v10419 = vmul.f32 %v10355, %v10355
    %v10420 = vmul.f32 %v10356, %v10356
    %v10421 = vmul.f32 %v10357, %v10357
    %v10422 = vmul.f32 %v10358, %v10358
    %v10423 = vmul.f32 %v10359, %v10359
    %v10424 = vmul.f32 %v10360, %v10360
    %v10425 = vmul.f32 %v10361, %v10361
    %v10426 = vmul.f32 %v10362, %v10362
    %v10427 = vmul.f32 %v10363, %v10363
    %v10428 = vmul.f32 %v10364, %v10364
    %v10429 = vmul.f32 %v10365, %v10365
    %v10430 = vmul.f32 %v10366, %v10366
    %v10431 = vmul.f32 %v10367, %v10367
    %v10432 = vmul.f32 %v10368, %v10368
    %v10433 = vmul.f32 %v10369, %v10369
    %v10434 = vmul.f32 %v10370, %v10370
    %v10435 = vmul.f32 %v10371, %v10371
    %10436 = vadd.xlane.f32.xlu0 %v10372
    %v10437 = vpop.xlane.xlu0 %10436
    %10438 = vadd.xlane.f32.xlu0 %v10373
    %v10439 = vpop.xlane.xlu0 %10438
    %10440 = vadd.xlane.f32.xlu0 %v10374
    %v10441 = vpop.xlane.xlu0 %10440
    %10442 = vadd.xlane.f32.xlu0 %v10375
    %v10443 = vpop.xlane.xlu0 %10442
    %10444 = vadd.xlane.f32.xlu0 %v10376
    %v10445 = vpop.xlane.xlu0 %10444
    %10446 = vadd.xlane.f32.xlu0 %v10377
    %v10447 = vpop.xlane.xlu0 %10446
    %10448 = vadd.xlane.f32.xlu0 %v10378
    %v10449 = vpop.xlane.xlu0 %10448
    %10450 = vadd.xlane.f32.xlu0 %v10379
    %v10451 = vpop.xlane.xlu0 %10450
    %10452 = vadd.xlane.f32.xlu0 %v10380
    %v10453 = vpop.xlane.xlu0 %10452
    %10454 = vadd.xlane.f32.xlu0 %v10381
    %v10455 = vpop.xlane.xlu0 %10454
    %10456 = vadd.xlane.f32.xlu0 %v10382
    %v10457 = vpop.xlane.xlu0 %10456
    %10458 = vadd.xlane.f32.xlu0 %v10383
    %v10459 = vpop.xlane.xlu0 %10458
    %10460 = vadd.xlane.f32.xlu0 %v10384
    %v10461 = vpop.xlane.xlu0 %10460
    %10462 = vadd.xlane.f32.xlu0 %v10385
    %v10463 = vpop.xlane.xlu0 %10462
    %10464 = vadd.xlane.f32.xlu0 %v10386
    %v10465 = vpop.xlane.xlu0 %10464
    %10466 = vadd.xlane.f32.xlu0 %v10387
    %v10467 = vpop.xlane.xlu0 %10466
    %10468 = vadd.xlane.f32.xlu0 %v10388
    %v10469 = vpop.xlane.xlu0 %10468
    %10470 = vadd.xlane.f32.xlu0 %v10389
    %v10471 = vpop.xlane.xlu0 %10470
    %10472 = vadd.xlane.f32.xlu0 %v10390
    %v10473 = vpop.xlane.xlu0 %10472
    %10474 = vadd.xlane.f32.xlu0 %v10391
    %v10475 = vpop.xlane.xlu0 %10474
    %10476 = vadd.xlane.f32.xlu0 %v10392
    %v10477 = vpop.xlane.xlu0 %10476
    %10478 = vadd.xlane.f32.xlu0 %v10393
    %v10479 = vpop.xlane.xlu0 %10478
    %10480 = vadd.xlane.f32.xlu0 %v10394
    %v10481 = vpop.xlane.xlu0 %10480
    %10482 = vadd.xlane.f32.xlu0 %v10395
    %v10483 = vpop.xlane.xlu0 %10482
    %10484 = vadd.xlane.f32.xlu0 %v10396
    %v10485 = vpop.xlane.xlu0 %10484
    %10486 = vadd.xlane.f32.xlu0 %v10397
    %v10487 = vpop.xlane.xlu0 %10486
    %10488 = vadd.xlane.f32.xlu0 %v10398
    %v10489 = vpop.xlane.xlu0 %10488
    %10490 = vadd.xlane.f32.xlu0 %v10399
    %v10491 = vpop.xlane.xlu0 %10490
    %10492 = vadd.xlane.f32.xlu0 %v10400
    %v10493 = vpop.xlane.xlu0 %10492
    %10494 = vadd.xlane.f32.xlu0 %v10401
    %v10495 = vpop.xlane.xlu0 %10494
    %10496 = vadd.xlane.f32.xlu0 %v10402
    %v10497 = vpop.xlane.xlu0 %10496
    %10498 = vadd.xlane.f32.xlu0 %v10403
    %v10499 = vpop.xlane.xlu0 %10498
    %10500 = vadd.xlane.f32.xlu0 %v10404
    %v10501 = vpop.xlane.xlu0 %10500
    %10502 = vadd.xlane.f32.xlu0 %v10405
    %v10503 = vpop.xlane.xlu0 %10502
    %10504 = vadd.xlane.f32.xlu0 %v10406
    %v10505 = vpop.xlane.xlu0 %10504
    %10506 = vadd.xlane.f32.xlu0 %v10407
    %v10507 = vpop.xlane.xlu0 %10506
    %10508 = vadd.xlane.f32.xlu0 %v10408
    %v10509 = vpop.xlane.xlu0 %10508
    %10510 = vadd.xlane.f32.xlu0 %v10409
    %v10511 = vpop.xlane.xlu0 %10510
    %10512 = vadd.xlane.f32.xlu0 %v10410
    %v10513 = vpop.xlane.xlu0 %10512
    %10514 = vadd.xlane.f32.xlu0 %v10411
    %v10515 = vpop.xlane.xlu0 %10514
    %10516 = vadd.xlane.f32.xlu0 %v10412
    %v10517 = vpop.xlane.xlu0 %10516
    %10518 = vadd.xlane.f32.xlu0 %v10413
    %v10519 = vpop.xlane.xlu0 %10518
    %10520 = vadd.xlane.f32.xlu0 %v10414
    %v10521 = vpop.xlane.xlu0 %10520
    %10522 = vadd.xlane.f32.xlu0 %v10415
    %v10523 = vpop.xlane.xlu0 %10522
    %10524 = vadd.xlane.f32.xlu0 %v10416
    %v10525 = vpop.xlane.xlu0 %10524
    %10526 = vadd.xlane.f32.xlu0 %v10417
    %v10527 = vpop.xlane.xlu0 %10526
    %10528 = vadd.xlane.f32.xlu0 %v10418
    %v10529 = vpop.xlane.xlu0 %10528
    %10530 = vadd.xlane.f32.xlu0 %v10419
    %v10531 = vpop.xlane.xlu0 %10530
    %10532 = vadd.xlane.f32.xlu0 %v10420
    %v10533 = vpop.xlane.xlu0 %10532
    %10534 = vadd.xlane.f32.xlu0 %v10421
    %v10535 = vpop.xlane.xlu0 %10534
    %10536 = vadd.xlane.f32.xlu0 %v10422
    %v10537 = vpop.xlane.xlu0 %10536
    %10538 = vadd.xlane.f32.xlu0 %v10423
    %v10539 = vpop.xlane.xlu0 %10538
    %10540 = vadd.xlane.f32.xlu0 %v10424
    %v10541 = vpop.xlane.xlu0 %10540
    %10542 = vadd.xlane.f32.xlu0 %v10425
    %v10543 = vpop.xlane.xlu0 %10542
    %10544 = vadd.xlane.f32.xlu0 %v10426
    %v10545 = vpop.xlane.xlu0 %10544
    %10546 = vadd.xlane.f32.xlu0 %v10427
    %v10547 = vpop.xlane.xlu0 %10546
    %10548 = vadd.xlane.f32.xlu0 %v10428
    %v10549 = vpop.xlane.xlu0 %10548
    %10550 = vadd.xlane.f32.xlu0 %v10429
    %v10551 = vpop.xlane.xlu0 %10550
    %10552 = vadd.xlane.f32.xlu0 %v10430
    %v10553 = vpop.xlane.xlu0 %10552
    %10554 = vadd.xlane.f32.xlu0 %v10431
    %v10555 = vpop.xlane.xlu0 %10554
    %10556 = vadd.xlane.f32.xlu0 %v10432
    %v10557 = vpop.xlane.xlu0 %10556
    %10558 = vadd.xlane.f32.xlu0 %v10433
    %v10559 = vpop.xlane.xlu0 %10558
    %10560 = vadd.xlane.f32.xlu0 %v10434
    %v10561 = vpop.xlane.xlu0 %10560
    %10562 = vadd.xlane.f32.xlu0 %v10435
    %v10563 = vpop.xlane.xlu0 %10562
    %v10564 = vmul.f32 %v10437, %v306
    %v10565 = vmul.f32 %v10439, %v306
    %v10566 = vmul.f32 %v10441, %v306
    %v10567 = vmul.f32 %v10443, %v306
    %v10568 = vmul.f32 %v10445, %v306
    %v10569 = vmul.f32 %v10447, %v306
    %v10570 = vmul.f32 %v10449, %v306
    %v10571 = vmul.f32 %v10451, %v306
    %v10572 = vmul.f32 %v10453, %v306
    %v10573 = vmul.f32 %v10455, %v306
    %v10574 = vmul.f32 %v10457, %v306
    %v10575 = vmul.f32 %v10459, %v306
    %v10576 = vmul.f32 %v10461, %v306
    %v10577 = vmul.f32 %v10463, %v306
    %v10578 = vmul.f32 %v10465, %v306
    %v10579 = vmul.f32 %v10467, %v306
    %v10580 = vmul.f32 %v10469, %v306
    %v10581 = vmul.f32 %v10471, %v306
    %v10582 = vmul.f32 %v10473, %v306
    %v10583 = vmul.f32 %v10475, %v306
    %v10584 = vmul.f32 %v10477, %v306
    %v10585 = vmul.f32 %v10479, %v306
    %v10586 = vmul.f32 %v10481, %v306
    %v10587 = vmul.f32 %v10483, %v306
    %v10588 = vmul.f32 %v10485, %v306
    %v10589 = vmul.f32 %v10487, %v306
    %v10590 = vmul.f32 %v10489, %v306
    %v10591 = vmul.f32 %v10491, %v306
    %v10592 = vmul.f32 %v10493, %v306
    %v10593 = vmul.f32 %v10495, %v306
    %v10594 = vmul.f32 %v10497, %v306
    %v10595 = vmul.f32 %v10499, %v306
    %v10596 = vmul.f32 %v10501, %v306
    %v10597 = vmul.f32 %v10503, %v306
    %v10598 = vmul.f32 %v10505, %v306
    %v10599 = vmul.f32 %v10507, %v306
    %v10600 = vmul.f32 %v10509, %v306
    %v10601 = vmul.f32 %v10511, %v306
    %v10602 = vmul.f32 %v10513, %v306
    %v10603 = vmul.f32 %v10515, %v306
    %v10604 = vmul.f32 %v10517, %v306
    %v10605 = vmul.f32 %v10519, %v306
    %v10606 = vmul.f32 %v10521, %v306
    %v10607 = vmul.f32 %v10523, %v306
    %v10608 = vmul.f32 %v10525, %v306
    %v10609 = vmul.f32 %v10527, %v306
    %v10610 = vmul.f32 %v10529, %v306
    %v10611 = vmul.f32 %v10531, %v306
    %v10612 = vmul.f32 %v10533, %v306
    %v10613 = vmul.f32 %v10535, %v306
    %v10614 = vmul.f32 %v10537, %v306
    %v10615 = vmul.f32 %v10539, %v306
    %v10616 = vmul.f32 %v10541, %v306
    %v10617 = vmul.f32 %v10543, %v306
    %v10618 = vmul.f32 %v10545, %v306
    %v10619 = vmul.f32 %v10547, %v306
    %v10620 = vmul.f32 %v10549, %v306
    %v10621 = vmul.f32 %v10551, %v306
    %v10622 = vmul.f32 %v10553, %v306
    %v10623 = vmul.f32 %v10555, %v306
    %v10624 = vmul.f32 %v10557, %v306
    %v10625 = vmul.f32 %v10559, %v306
    %v10626 = vmul.f32 %v10561, %v306
    %v10627 = vmul.f32 %v10563, %v306
    %v10628 = vadd.f32 %v10564, 1e-05
    %v10629 = vadd.f32 %v10565, 1e-05
    %v10630 = vadd.f32 %v10566, 1e-05
    %v10631 = vadd.f32 %v10567, 1e-05
    %v10632 = vadd.f32 %v10568, 1e-05
    %v10633 = vadd.f32 %v10569, 1e-05
    %v10634 = vadd.f32 %v10570, 1e-05
    %v10635 = vadd.f32 %v10571, 1e-05
    %v10636 = vadd.f32 %v10572, 1e-05
    %v10637 = vadd.f32 %v10573, 1e-05
    %v10638 = vadd.f32 %v10574, 1e-05
    %v10639 = vadd.f32 %v10575, 1e-05
    %v10640 = vadd.f32 %v10576, 1e-05
    %v10641 = vadd.f32 %v10577, 1e-05
    %v10642 = vadd.f32 %v10578, 1e-05
    %v10643 = vadd.f32 %v10579, 1e-05
    %v10644 = vadd.f32 %v10580, 1e-05
    %v10645 = vadd.f32 %v10581, 1e-05
    %v10646 = vadd.f32 %v10582, 1e-05
    %v10647 = vadd.f32 %v10583, 1e-05
    %v10648 = vadd.f32 %v10584, 1e-05
    %v10649 = vadd.f32 %v10585, 1e-05
    %v10650 = vadd.f32 %v10586, 1e-05
    %v10651 = vadd.f32 %v10587, 1e-05
    %v10652 = vadd.f32 %v10588, 1e-05
    %v10653 = vadd.f32 %v10589, 1e-05
    %v10654 = vadd.f32 %v10590, 1e-05
    %v10655 = vadd.f32 %v10591, 1e-05
    %v10656 = vadd.f32 %v10592, 1e-05
    %v10657 = vadd.f32 %v10593, 1e-05
    %v10658 = vadd.f32 %v10594, 1e-05
    %v10659 = vadd.f32 %v10595, 1e-05
    %v10660 = vadd.f32 %v10596, 1e-05
    %v10661 = vadd.f32 %v10597, 1e-05
    %v10662 = vadd.f32 %v10598, 1e-05
    %v10663 = vadd.f32 %v10599, 1e-05
    %v10664 = vadd.f32 %v10600, 1e-05
    %v10665 = vadd.f32 %v10601, 1e-05
    %v10666 = vadd.f32 %v10602, 1e-05
    %v10667 = vadd.f32 %v10603, 1e-05
    %v10668 = vadd.f32 %v10604, 1e-05
    %v10669 = vadd.f32 %v10605, 1e-05
    %v10670 = vadd.f32 %v10606, 1e-05
    %v10671 = vadd.f32 %v10607, 1e-05
    %v10672 = vadd.f32 %v10608, 1e-05
    %v10673 = vadd.f32 %v10609, 1e-05
    %v10674 = vadd.f32 %v10610, 1e-05
    %v10675 = vadd.f32 %v10611, 1e-05
    %v10676 = vadd.f32 %v10612, 1e-05
    %v10677 = vadd.f32 %v10613, 1e-05
    %v10678 = vadd.f32 %v10614, 1e-05
    %v10679 = vadd.f32 %v10615, 1e-05
    %v10680 = vadd.f32 %v10616, 1e-05
    %v10681 = vadd.f32 %v10617, 1e-05
    %v10682 = vadd.f32 %v10618, 1e-05
    %v10683 = vadd.f32 %v10619, 1e-05
    %v10684 = vadd.f32 %v10620, 1e-05
    %v10685 = vadd.f32 %v10621, 1e-05
    %v10686 = vadd.f32 %v10622, 1e-05
    %v10687 = vadd.f32 %v10623, 1e-05
    %v10688 = vadd.f32 %v10624, 1e-05
    %v10689 = vadd.f32 %v10625, 1e-05
    %v10690 = vadd.f32 %v10626, 1e-05
    %v10691 = vadd.f32 %v10627, 1e-05
    %v10692 = vrsqrt.pop %v10628
    %v10693 = vrsqrt.pop %v10629
    %v10694 = vrsqrt.pop %v10630
    %v10695 = vrsqrt.pop %v10631
    %v10696 = vrsqrt.pop %v10632
    %v10697 = vrsqrt.pop %v10633
    %v10698 = vrsqrt.pop %v10634
    %v10699 = vrsqrt.pop %v10635
    %v10700 = vrsqrt.pop %v10636
    %v10701 = vrsqrt.pop %v10637
    %v10702 = vrsqrt.pop %v10638
    %v10703 = vrsqrt.pop %v10639
    %v10704 = vrsqrt.pop %v10640
    %v10705 = vrsqrt.pop %v10641
    %v10706 = vrsqrt.pop %v10642
    %v10707 = vrsqrt.pop %v10643
    %v10708 = vrsqrt.pop %v10644
    %v10709 = vrsqrt.pop %v10645
    %v10710 = vrsqrt.pop %v10646
    %v10711 = vrsqrt.pop %v10647
    %v10712 = vrsqrt.pop %v10648
    %v10713 = vrsqrt.pop %v10649
    %v10714 = vrsqrt.pop %v10650
    %v10715 = vrsqrt.pop %v10651
    %v10716 = vrsqrt.pop %v10652
    %v10717 = vrsqrt.pop %v10653
    %v10718 = vrsqrt.pop %v10654
    %v10719 = vrsqrt.pop %v10655
    %v10720 = vrsqrt.pop %v10656
    %v10721 = vrsqrt.pop %v10657
    %v10722 = vrsqrt.pop %v10658
    %v10723 = vrsqrt.pop %v10659
    %v10724 = vrsqrt.pop %v10660
    %v10725 = vrsqrt.pop %v10661
    %v10726 = vrsqrt.pop %v10662
    %v10727 = vrsqrt.pop %v10663
    %v10728 = vrsqrt.pop %v10664
    %v10729 = vrsqrt.pop %v10665
    %v10730 = vrsqrt.pop %v10666
    %v10731 = vrsqrt.pop %v10667
    %v10732 = vrsqrt.pop %v10668
    %v10733 = vrsqrt.pop %v10669
    %v10734 = vrsqrt.pop %v10670
    %v10735 = vrsqrt.pop %v10671
    %v10736 = vrsqrt.pop %v10672
    %v10737 = vrsqrt.pop %v10673
    %v10738 = vrsqrt.pop %v10674
    %v10739 = vrsqrt.pop %v10675
    %v10740 = vrsqrt.pop %v10676
    %v10741 = vrsqrt.pop %v10677
    %v10742 = vrsqrt.pop %v10678
    %v10743 = vrsqrt.pop %v10679
    %v10744 = vrsqrt.pop %v10680
    %v10745 = vrsqrt.pop %v10681
    %v10746 = vrsqrt.pop %v10682
    %v10747 = vrsqrt.pop %v10683
    %v10748 = vrsqrt.pop %v10684
    %v10749 = vrsqrt.pop %v10685
    %v10750 = vrsqrt.pop %v10686
    %v10751 = vrsqrt.pop %v10687
    %v10752 = vrsqrt.pop %v10688
    %v10753 = vrsqrt.pop %v10689
    %v10754 = vrsqrt.pop %v10690
    %v10755 = vrsqrt.pop %v10691
    %v10756 = vmul.f32 %v10308, %v10692
    %v10757 = vmul.f32 %v10309, %v10693
    %v10758 = vmul.f32 %v10310, %v10694
    %v10759 = vmul.f32 %v10311, %v10695
    %v10760 = vmul.f32 %v10312, %v10696
    %v10761 = vmul.f32 %v10313, %v10697
    %v10762 = vmul.f32 %v10314, %v10698
    %v10763 = vmul.f32 %v10315, %v10699
    %v10764 = vmul.f32 %v10316, %v10700
    %v10765 = vmul.f32 %v10317, %v10701
    %v10766 = vmul.f32 %v10318, %v10702
    %v10767 = vmul.f32 %v10319, %v10703
    %v10768 = vmul.f32 %v10320, %v10704
    %v10769 = vmul.f32 %v10321, %v10705
    %v10770 = vmul.f32 %v10322, %v10706
    %v10771 = vmul.f32 %v10323, %v10707
    %v10772 = vmul.f32 %v10324, %v10708
    %v10773 = vmul.f32 %v10325, %v10709
    %v10774 = vmul.f32 %v10326, %v10710
    %v10775 = vmul.f32 %v10327, %v10711
    %v10776 = vmul.f32 %v10328, %v10712
    %v10777 = vmul.f32 %v10329, %v10713
    %v10778 = vmul.f32 %v10330, %v10714
    %v10779 = vmul.f32 %v10331, %v10715
    %v10780 = vmul.f32 %v10332, %v10716
    %v10781 = vmul.f32 %v10333, %v10717
    %v10782 = vmul.f32 %v10334, %v10718
    %v10783 = vmul.f32 %v10335, %v10719
    %v10784 = vmul.f32 %v10336, %v10720
    %v10785 = vmul.f32 %v10337, %v10721
    %v10786 = vmul.f32 %v10338, %v10722
    %v10787 = vmul.f32 %v10339, %v10723
    %v10788 = vmul.f32 %v10340, %v10724
    %v10789 = vmul.f32 %v10341, %v10725
    %v10790 = vmul.f32 %v10342, %v10726
    %v10791 = vmul.f32 %v10343, %v10727
    %v10792 = vmul.f32 %v10344, %v10728
    %v10793 = vmul.f32 %v10345, %v10729
    %v10794 = vmul.f32 %v10346, %v10730
    %v10795 = vmul.f32 %v10347, %v10731
    %v10796 = vmul.f32 %v10348, %v10732
    %v10797 = vmul.f32 %v10349, %v10733
    %v10798 = vmul.f32 %v10350, %v10734
    %v10799 = vmul.f32 %v10351, %v10735
    %v10800 = vmul.f32 %v10352, %v10736
    %v10801 = vmul.f32 %v10353, %v10737
    %v10802 = vmul.f32 %v10354, %v10738
    %v10803 = vmul.f32 %v10355, %v10739
    %v10804 = vmul.f32 %v10356, %v10740
    %v10805 = vmul.f32 %v10357, %v10741
    %v10806 = vmul.f32 %v10358, %v10742
    %v10807 = vmul.f32 %v10359, %v10743
    %v10808 = vmul.f32 %v10360, %v10744
    %v10809 = vmul.f32 %v10361, %v10745
    %v10810 = vmul.f32 %v10362, %v10746
    %v10811 = vmul.f32 %v10363, %v10747
    %v10812 = vmul.f32 %v10364, %v10748
    %v10813 = vmul.f32 %v10365, %v10749
    %v10814 = vmul.f32 %v10366, %v10750
    %v10815 = vmul.f32 %v10367, %v10751
    %v10816 = vmul.f32 %v10368, %v10752
    %v10817 = vmul.f32 %v10369, %v10753
    %v10818 = vmul.f32 %v10370, %v10754
    %v10819 = vmul.f32 %v10371, %v10755
    %v10820 = vpack.c.bf16 %v10757, %v10756
    %v10821 = vpack.c.bf16 %v10759, %v10758
    %v10822 = vpack.c.bf16 %v10761, %v10760
    %v10823 = vpack.c.bf16 %v10763, %v10762
    %v10824 = vpack.c.bf16 %v10765, %v10764
    %v10825 = vpack.c.bf16 %v10767, %v10766
    %v10826 = vpack.c.bf16 %v10769, %v10768
    %v10827 = vpack.c.bf16 %v10771, %v10770
    %v10828 = vpack.c.bf16 %v10773, %v10772
    %v10829 = vpack.c.bf16 %v10775, %v10774
    %v10830 = vpack.c.bf16 %v10777, %v10776
    %v10831 = vpack.c.bf16 %v10779, %v10778
    %v10832 = vpack.c.bf16 %v10781, %v10780
    %v10833 = vpack.c.bf16 %v10783, %v10782
    %v10834 = vpack.c.bf16 %v10785, %v10784
    %v10835 = vpack.c.bf16 %v10787, %v10786
    %v10836 = vpack.c.bf16 %v10789, %v10788
    %v10837 = vpack.c.bf16 %v10791, %v10790
    %v10838 = vpack.c.bf16 %v10793, %v10792
    %v10839 = vpack.c.bf16 %v10795, %v10794
    %v10840 = vpack.c.bf16 %v10797, %v10796
    %v10841 = vpack.c.bf16 %v10799, %v10798
    %v10842 = vpack.c.bf16 %v10801, %v10800
    %v10843 = vpack.c.bf16 %v10803, %v10802
    %v10844 = vpack.c.bf16 %v10805, %v10804
    %v10845 = vpack.c.bf16 %v10807, %v10806
    %v10846 = vpack.c.bf16 %v10809, %v10808
    %v10847 = vpack.c.bf16 %v10811, %v10810
    %v10848 = vpack.c.bf16 %v10813, %v10812
    %v10849 = vpack.c.bf16 %v10815, %v10814
    %v10850 = vpack.c.bf16 %v10817, %v10816
    %v10851 = vpack.c.bf16 %v10819, %v10818
    %v10852 = vld [vmem:[#allocation10] sm:$0xff]
    %v10853 = vld [vmem:[#allocation10 + $0x8] sm:$0xff]
    %v10854 = vld [vmem:[#allocation10 + $0x10] sm:$0xff]
    %v10855 = vld [vmem:[#allocation10 + $0x18] sm:$0xff]
    %v10856 = vld [vmem:[#allocation10 + $0x20] sm:$0xff]
    %v10857 = vld [vmem:[#allocation10 + $0x28] sm:$0xff]
    %v10858 = vld [vmem:[#allocation10 + $0x30] sm:$0xff]
    %v10859 = vld [vmem:[#allocation10 + $0x38] sm:$0xff]
    %v10860 = vld [vmem:[#allocation10 + $0x40] sm:$0xff]
    %v10861 = vld [vmem:[#allocation10 + $0x48] sm:$0xff]
    %v10862 = vld [vmem:[#allocation10 + $0x50] sm:$0xff]
    %v10863 = vld [vmem:[#allocation10 + $0x58] sm:$0xff]
    %v10864 = vld [vmem:[#allocation10 + $0x60] sm:$0xff]
    %v10865 = vld [vmem:[#allocation10 + $0x68] sm:$0xff]
    %v10866 = vld [vmem:[#allocation10 + $0x70] sm:$0xff]
    %v10867 = vld [vmem:[#allocation10 + $0x78] sm:$0xff]
    %v10868 = vld [vmem:[#allocation10 + $0x80] sm:$0xff]
    %v10869 = vld [vmem:[#allocation10 + $0x88] sm:$0xff]
    %v10870 = vld [vmem:[#allocation10 + $0x90] sm:$0xff]
    %v10871 = vld [vmem:[#allocation10 + $0x98] sm:$0xff]
    %v10872 = vld [vmem:[#allocation10 + $0xa0] sm:$0xff]
    %v10873 = vld [vmem:[#allocation10 + $0xa8] sm:$0xff]
    %v10874 = vld [vmem:[#allocation10 + $0xb0] sm:$0xff]
    %v10875 = vld [vmem:[#allocation10 + $0xb8] sm:$0xff]
    %v10876 = vld [vmem:[#allocation10 + $0xc0] sm:$0xff]
    %v10877 = vld [vmem:[#allocation10 + $0xc8] sm:$0xff]
    %v10878 = vld [vmem:[#allocation10 + $0xd0] sm:$0xff]
    %v10879 = vld [vmem:[#allocation10 + $0xd8] sm:$0xff]
    %v10880 = vld [vmem:[#allocation10 + $0xe0] sm:$0xff]
    %v10881 = vld [vmem:[#allocation10 + $0xe8] sm:$0xff]
    %v10882 = vld [vmem:[#allocation10 + $0xf0] sm:$0xff]
    %v10883 = vld [vmem:[#allocation10 + $0xf8] sm:$0xff]
    %v10884 = vld [vmem:[%s6] sm:$0xf]
    %v10886 = vlaneseq
    %v10887 = vshrl.u32 %v10886, 7
    %v10888 = vsub.s32 0, %v10887
    %v10889 = vrot.slane %v10884, %v10888
    %v10890 = vlaneseq
    %v10891 = vshrl.u32 %v10890, 7
    %v10892 = vsub.s32 1, %v10891
    %v10893 = vrot.slane %v10884, %v10892
    %v10894 = vlaneseq
    %v10895 = vshrl.u32 %v10894, 7
    %v10896 = vsub.s32 2, %v10895
    %v10897 = vrot.slane %v10884, %v10896
    %v10898 = vlaneseq
    %v10899 = vshrl.u32 %v10898, 7
    %v10900 = vsub.s32 3, %v10899
    %v10901 = vrot.slane %v10884, %v10900
    %v10938 = vunpack.c.l.b16 %v10852
    %v10939 = vunpack.c.h.b16 %v10852
    %v10940 = vunpack.c.l.b16 %v10853
    %v10941 = vunpack.c.h.b16 %v10853
    %v10942 = vunpack.c.l.b16 %v10854
    %v10943 = vunpack.c.h.b16 %v10854
    %v10944 = vunpack.c.l.b16 %v10855
    %v10945 = vunpack.c.h.b16 %v10855
    %v10946 = vunpack.c.l.b16 %v10856
    %v10947 = vunpack.c.h.b16 %v10856
    %v10948 = vunpack.c.l.b16 %v10857
    %v10949 = vunpack.c.h.b16 %v10857
    %v10950 = vunpack.c.l.b16 %v10858
    %v10951 = vunpack.c.h.b16 %v10858
    %v10952 = vunpack.c.l.b16 %v10859
    %v10953 = vunpack.c.h.b16 %v10859
    %v10954 = vunpack.c.l.b16 %v10860
    %v10955 = vunpack.c.h.b16 %v10860
    %v10956 = vunpack.c.l.b16 %v10861
    %v10957 = vunpack.c.h.b16 %v10861
    %v10958 = vunpack.c.l.b16 %v10862
    %v10959 = vunpack.c.h.b16 %v10862
    %v10960 = vunpack.c.l.b16 %v10863
    %v10961 = vunpack.c.h.b16 %v10863
    %v10962 = vunpack.c.l.b16 %v10864
    %v10963 = vunpack.c.h.b16 %v10864
    %v10964 = vunpack.c.l.b16 %v10865
    %v10965 = vunpack.c.h.b16 %v10865
    %v10966 = vunpack.c.l.b16 %v10866
    %v10967 = vunpack.c.h.b16 %v10866
    %v10968 = vunpack.c.l.b16 %v10867
    %v10969 = vunpack.c.h.b16 %v10867
    %v10970 = vunpack.c.l.b16 %v10868
    %v10971 = vunpack.c.h.b16 %v10868
    %v10972 = vunpack.c.l.b16 %v10869
    %v10973 = vunpack.c.h.b16 %v10869
    %v10974 = vunpack.c.l.b16 %v10870
    %v10975 = vunpack.c.h.b16 %v10870
    %v10976 = vunpack.c.l.b16 %v10871
    %v10977 = vunpack.c.h.b16 %v10871
    %v10978 = vunpack.c.l.b16 %v10872
    %v10979 = vunpack.c.h.b16 %v10872
    %v10980 = vunpack.c.l.b16 %v10873
    %v10981 = vunpack.c.h.b16 %v10873
    %v10982 = vunpack.c.l.b16 %v10874
    %v10983 = vunpack.c.h.b16 %v10874
    %v10984 = vunpack.c.l.b16 %v10875
    %v10985 = vunpack.c.h.b16 %v10875
    %v10986 = vunpack.c.l.b16 %v10876
    %v10987 = vunpack.c.h.b16 %v10876
    %v10988 = vunpack.c.l.b16 %v10877
    %v10989 = vunpack.c.h.b16 %v10877
    %v10990 = vunpack.c.l.b16 %v10878
    %v10991 = vunpack.c.h.b16 %v10878
    %v10992 = vunpack.c.l.b16 %v10879
    %v10993 = vunpack.c.h.b16 %v10879
    %v10994 = vunpack.c.l.b16 %v10880
    %v10995 = vunpack.c.h.b16 %v10880
    %v10996 = vunpack.c.l.b16 %v10881
    %v10997 = vunpack.c.h.b16 %v10881
    %v10998 = vunpack.c.l.b16 %v10882
    %v10999 = vunpack.c.h.b16 %v10882
    %v11000 = vunpack.c.l.b16 %v10883
    %v11001 = vunpack.c.h.b16 %v10883
    %v11002 = vpack.c.b16 %v10942, %v10938
    %v11003 = vpack.c.b16 %v10943, %v10939
    %v11004 = vpack.c.b16 %v10944, %v10940
    %v11005 = vpack.c.b16 %v10945, %v10941
    %v11006 = vpack.c.b16 %v10950, %v10946
    %v11007 = vpack.c.b16 %v10951, %v10947
    %v11008 = vpack.c.b16 %v10952, %v10948
    %v11009 = vpack.c.b16 %v10953, %v10949
    %v11010 = vpack.c.b16 %v10958, %v10954
    %v11011 = vpack.c.b16 %v10959, %v10955
    %v11012 = vpack.c.b16 %v10960, %v10956
    %v11013 = vpack.c.b16 %v10961, %v10957
    %v11014 = vpack.c.b16 %v10966, %v10962
    %v11015 = vpack.c.b16 %v10967, %v10963
    %v11016 = vpack.c.b16 %v10968, %v10964
    %v11017 = vpack.c.b16 %v10969, %v10965
    %v11018 = vpack.c.b16 %v10974, %v10970
    %v11019 = vpack.c.b16 %v10975, %v10971
    %v11020 = vpack.c.b16 %v10976, %v10972
    %v11021 = vpack.c.b16 %v10977, %v10973
    %v11022 = vpack.c.b16 %v10982, %v10978
    %v11023 = vpack.c.b16 %v10983, %v10979
    %v11024 = vpack.c.b16 %v10984, %v10980
    %v11025 = vpack.c.b16 %v10985, %v10981
    %v11026 = vpack.c.b16 %v10990, %v10986
    %v11027 = vpack.c.b16 %v10991, %v10987
    %v11028 = vpack.c.b16 %v10992, %v10988
    %v11029 = vpack.c.b16 %v10993, %v10989
    %v11030 = vpack.c.b16 %v10998, %v10994
    %v11031 = vpack.c.b16 %v10999, %v10995
    %v11032 = vpack.c.b16 %v11000, %v10996
    %v11033 = vpack.c.b16 %v11001, %v10997
    %11066 = vmatprep.subr.bf16.mxu0 %v11031
    %11067 = vmatpush1.bf16.msra.mxu0 %v11030
    %11068 = vmatprep.subr.bf16.mxu0 %v11027
    %11069 = vmatpush1.bf16.msra.mxu0 %v11026
    %11070 = vmatprep.subr.bf16.mxu0 %v11023
    %11071 = vmatpush1.bf16.msra.mxu0 %v11022
    %11072 = vmatprep.subr.bf16.mxu0 %v11019
    %11073 = vmatpush1.bf16.msra.mxu0 %v11018
    %11074 = vmatprep.subr.bf16.mxu0 %v11015
    %11075 = vmatpush1.bf16.msra.mxu0 %v11014
    %11076 = vmatprep.subr.bf16.mxu0 %v11011
    %11077 = vmatpush1.bf16.msra.mxu0 %v11010
    %11078 = vmatprep.subr.bf16.mxu0 %v11007
    %11079 = vmatpush1.bf16.msra.mxu0 %v11006
    %11080 = vmatprep.subr.bf16.mxu0 %v11003
    %11081 = vmatpush1.bf16.msra.mxu0 %v11002
    %11082 = vmatprep.subr.bf16.mxu0 0
    %11083 = vmatpush2.bf16.msra.mxu0 0
    %11084 = vmatprep.subr.bf16.mxu0 0
    %11085 = vmatpush2.bf16.msra.mxu0 0
    %11086 = vmatprep.subr.bf16.mxu0 0
    %11087 = vmatpush2.bf16.msra.mxu0 0
    %11088 = vmatprep.subr.bf16.mxu0 0
    %11089 = vmatpush2.bf16.msra.mxu0 0
    %11090 = vmatprep.subr.bf16.mxu0 0
    %11091 = vmatpush2.bf16.msra.mxu0 0
    %11092 = vmatprep.subr.bf16.mxu0 0
    %11093 = vmatpush2.bf16.msra.mxu0 0
    %11094 = vmatprep.subr.bf16.mxu0 0
    %11095 = vmatpush2.bf16.msra.mxu0 0
    %11096 = vmatprep.subr.bf16.mxu0 0
    %11097 = vmatpush2.bf16.msra.mxu0 0
    %11098 = vmatprep.mubr.bf16.mxu0 0
    %11099 = vmatmul.mubr.bf16.gmra.mxu0 %v10820
    %v11100 = vpop.f32.mrf.mxu0
    %v11101 = vadd.f32 %v10889, %v11100
    %v11102 = vpop.f32.mrf.mxu0
    %v11103 = vadd.f32 %v10893, %v11102
    %v11104 = vpop.f32.mrf.mxu0
    %v11105 = vadd.f32 %v10889, %v11104
    %v11106 = vpop.f32.mrf.mxu0
    %v11107 = vadd.f32 %v10893, %v11106
    %11108 = vmatprep.mubr.bf16.mxu0 0
    %11109 = vmatmul.mubr.bf16.gmra.mxu0 %v10821
    %v11110 = vpop.f32.mrf.mxu0
    %v11111 = vadd.f32 %v10889, %v11110
    %v11112 = vpop.f32.mrf.mxu0
    %v11113 = vadd.f32 %v10893, %v11112
    %v11114 = vpop.f32.mrf.mxu0
    %v11115 = vadd.f32 %v10889, %v11114
    %v11116 = vpop.f32.mrf.mxu0
    %v11117 = vadd.f32 %v10893, %v11116
    %11118 = vmatprep.mubr.bf16.mxu0 0
    %11119 = vmatmul.mubr.bf16.gmra.mxu0 %v10822
    %v11120 = vpop.f32.mrf.mxu0
    %v11121 = vadd.f32 %v10889, %v11120
    %v11122 = vpop.f32.mrf.mxu0
    %v11123 = vadd.f32 %v10893, %v11122
    %v11124 = vpop.f32.mrf.mxu0
    %v11125 = vadd.f32 %v10889, %v11124
    %v11126 = vpop.f32.mrf.mxu0
    %v11127 = vadd.f32 %v10893, %v11126
    %11128 = vmatprep.mubr.bf16.mxu0 0
    %11129 = vmatmul.mubr.bf16.gmra.mxu0 %v10823
    %v11130 = vpop.f32.mrf.mxu0
    %v11131 = vadd.f32 %v10889, %v11130
    %v11132 = vpop.f32.mrf.mxu0
    %v11133 = vadd.f32 %v10893, %v11132
    %v11134 = vpop.f32.mrf.mxu0
    %v11135 = vadd.f32 %v10889, %v11134
    %v11136 = vpop.f32.mrf.mxu0
    %v11137 = vadd.f32 %v10893, %v11136
    %11138 = vmatprep.mubr.bf16.mxu0 0
    %11139 = vmatmul.mubr.bf16.gmra.mxu0 %v10824
    %v11140 = vpop.f32.mrf.mxu0
    %v11141 = vadd.f32 %v10889, %v11140
    %v11142 = vpop.f32.mrf.mxu0
    %v11143 = vadd.f32 %v10893, %v11142
    %v11144 = vpop.f32.mrf.mxu0
    %v11145 = vadd.f32 %v10889, %v11144
    %v11146 = vpop.f32.mrf.mxu0
    %v11147 = vadd.f32 %v10893, %v11146
    %11148 = vmatprep.mubr.bf16.mxu0 0
    %11149 = vmatmul.mubr.bf16.gmra.mxu0 %v10825
    %v11150 = vpop.f32.mrf.mxu0
    %v11151 = vadd.f32 %v10889, %v11150
    %v11152 = vpop.f32.mrf.mxu0
    %v11153 = vadd.f32 %v10893, %v11152
    %v11154 = vpop.f32.mrf.mxu0
    %v11155 = vadd.f32 %v10889, %v11154
    %v11156 = vpop.f32.mrf.mxu0
    %v11157 = vadd.f32 %v10893, %v11156
    %11158 = vmatprep.mubr.bf16.mxu0 0
    %11159 = vmatmul.mubr.bf16.gmra.mxu0 %v10826
    %v11160 = vpop.f32.mrf.mxu0
    %v11161 = vadd.f32 %v10889, %v11160
    %v11162 = vpop.f32.mrf.mxu0
    %v11163 = vadd.f32 %v10893, %v11162
    %v11164 = vpop.f32.mrf.mxu0
    %v11165 = vadd.f32 %v10889, %v11164
    %v11166 = vpop.f32.mrf.mxu0
    %v11167 = vadd.f32 %v10893, %v11166
    %11168 = vmatprep.mubr.bf16.mxu0 0
    %11169 = vmatmul.mubr.bf16.gmra.mxu0 %v10827
    %v11170 = vpop.f32.mrf.mxu0
    %v11171 = vadd.f32 %v10889, %v11170
    %v11172 = vpop.f32.mrf.mxu0
    %v11173 = vadd.f32 %v10893, %v11172
    %v11174 = vpop.f32.mrf.mxu0
    %v11175 = vadd.f32 %v10889, %v11174
    %v11176 = vpop.f32.mrf.mxu0
    %v11177 = vadd.f32 %v10893, %v11176
    %11178 = vmatprep.mubr.bf16.mxu0 0
    %11179 = vmatmul.mubr.bf16.gmra.mxu0 %v10828
    %v11180 = vpop.f32.mrf.mxu0
    %v11181 = vadd.f32 %v10889, %v11180
    %v11182 = vpop.f32.mrf.mxu0
    %v11183 = vadd.f32 %v10893, %v11182
    %v11184 = vpop.f32.mrf.mxu0
    %v11185 = vadd.f32 %v10889, %v11184
    %v11186 = vpop.f32.mrf.mxu0
    %v11187 = vadd.f32 %v10893, %v11186
    %11188 = vmatprep.mubr.bf16.mxu0 0
    %11189 = vmatmul.mubr.bf16.gmra.mxu0 %v10829
    %v11190 = vpop.f32.mrf.mxu0
    %v11191 = vadd.f32 %v10889, %v11190
    %v11192 = vpop.f32.mrf.mxu0
    %v11193 = vadd.f32 %v10893, %v11192
    %v11194 = vpop.f32.mrf.mxu0
    %v11195 = vadd.f32 %v10889, %v11194
    %v11196 = vpop.f32.mrf.mxu0
    %v11197 = vadd.f32 %v10893, %v11196
    %11198 = vmatprep.mubr.bf16.mxu0 0
    %11199 = vmatmul.mubr.bf16.gmra.mxu0 %v10830
    %v11200 = vpop.f32.mrf.mxu0
    %v11201 = vadd.f32 %v10889, %v11200
    %v11202 = vpop.f32.mrf.mxu0
    %v11203 = vadd.f32 %v10893, %v11202
    %v11204 = vpop.f32.mrf.mxu0
    %v11205 = vadd.f32 %v10889, %v11204
    %v11206 = vpop.f32.mrf.mxu0
    %v11207 = vadd.f32 %v10893, %v11206
    %11208 = vmatprep.mubr.bf16.mxu0 0
    %11209 = vmatmul.mubr.bf16.gmra.mxu0 %v10831
    %v11210 = vpop.f32.mrf.mxu0
    %v11211 = vadd.f32 %v10889, %v11210
    %v11212 = vpop.f32.mrf.mxu0
    %v11213 = vadd.f32 %v10893, %v11212
    %v11214 = vpop.f32.mrf.mxu0
    %v11215 = vadd.f32 %v10889, %v11214
    %v11216 = vpop.f32.mrf.mxu0
    %v11217 = vadd.f32 %v10893, %v11216
    %11218 = vmatprep.mubr.bf16.mxu0 0
    %11219 = vmatmul.mubr.bf16.gmra.mxu0 %v10832
    %v11220 = vpop.f32.mrf.mxu0
    %v11221 = vadd.f32 %v10889, %v11220
    %v11222 = vpop.f32.mrf.mxu0
    %v11223 = vadd.f32 %v10893, %v11222
    %v11224 = vpop.f32.mrf.mxu0
    %v11225 = vadd.f32 %v10889, %v11224
    %v11226 = vpop.f32.mrf.mxu0
    %v11227 = vadd.f32 %v10893, %v11226
    %11228 = vmatprep.mubr.bf16.mxu0 0
    %11229 = vmatmul.mubr.bf16.gmra.mxu0 %v10833
    %v11230 = vpop.f32.mrf.mxu0
    %v11231 = vadd.f32 %v10889, %v11230
    %v11232 = vpop.f32.mrf.mxu0
    %v11233 = vadd.f32 %v10893, %v11232
    %v11234 = vpop.f32.mrf.mxu0
    %v11235 = vadd.f32 %v10889, %v11234
    %v11236 = vpop.f32.mrf.mxu0
    %v11237 = vadd.f32 %v10893, %v11236
    %11238 = vmatprep.mubr.bf16.mxu0 0
    %11239 = vmatmul.mubr.bf16.gmra.mxu0 %v10834
    %v11240 = vpop.f32.mrf.mxu0
    %v11241 = vadd.f32 %v10889, %v11240
    %v11242 = vpop.f32.mrf.mxu0
    %v11243 = vadd.f32 %v10893, %v11242
    %v11244 = vpop.f32.mrf.mxu0
    %v11245 = vadd.f32 %v10889, %v11244
    %v11246 = vpop.f32.mrf.mxu0
    %v11247 = vadd.f32 %v10893, %v11246
    %11248 = vmatprep.mubr.bf16.mxu0 0
    %11249 = vmatmul.mubr.bf16.gmra.mxu0 %v10835
    %v11250 = vpop.f32.mrf.mxu0
    %v11251 = vadd.f32 %v10889, %v11250
    %v11252 = vpop.f32.mrf.mxu0
    %v11253 = vadd.f32 %v10893, %v11252
    %v11254 = vpop.f32.mrf.mxu0
    %v11255 = vadd.f32 %v10889, %v11254
    %v11256 = vpop.f32.mrf.mxu0
    %v11257 = vadd.f32 %v10893, %v11256
    %11258 = vmatprep.mubr.bf16.mxu0 0
    %11259 = vmatmul.mubr.bf16.gmra.mxu0 %v10836
    %v11260 = vpop.f32.mrf.mxu0
    %v11261 = vadd.f32 %v10889, %v11260
    %v11262 = vpop.f32.mrf.mxu0
    %v11263 = vadd.f32 %v10893, %v11262
    %v11264 = vpop.f32.mrf.mxu0
    %v11265 = vadd.f32 %v10889, %v11264
    %v11266 = vpop.f32.mrf.mxu0
    %v11267 = vadd.f32 %v10893, %v11266
    %11268 = vmatprep.mubr.bf16.mxu0 0
    %11269 = vmatmul.mubr.bf16.gmra.mxu0 %v10837
    %v11270 = vpop.f32.mrf.mxu0
    %v11271 = vadd.f32 %v10889, %v11270
    %v11272 = vpop.f32.mrf.mxu0
    %v11273 = vadd.f32 %v10893, %v11272
    %v11274 = vpop.f32.mrf.mxu0
    %v11275 = vadd.f32 %v10889, %v11274
    %v11276 = vpop.f32.mrf.mxu0
    %v11277 = vadd.f32 %v10893, %v11276
    %11278 = vmatprep.mubr.bf16.mxu0 0
    %11279 = vmatmul.mubr.bf16.gmra.mxu0 %v10838
    %v11280 = vpop.f32.mrf.mxu0
    %v11281 = vadd.f32 %v10889, %v11280
    %v11282 = vpop.f32.mrf.mxu0
    %v11283 = vadd.f32 %v10893, %v11282
    %v11284 = vpop.f32.mrf.mxu0
    %v11285 = vadd.f32 %v10889, %v11284
    %v11286 = vpop.f32.mrf.mxu0
    %v11287 = vadd.f32 %v10893, %v11286
    %11288 = vmatprep.mubr.bf16.mxu0 0
    %11289 = vmatmul.mubr.bf16.gmra.mxu0 %v10839
    %v11290 = vpop.f32.mrf.mxu0
    %v11291 = vadd.f32 %v10889, %v11290
    %v11292 = vpop.f32.mrf.mxu0
    %v11293 = vadd.f32 %v10893, %v11292
    %v11294 = vpop.f32.mrf.mxu0
    %v11295 = vadd.f32 %v10889, %v11294
    %v11296 = vpop.f32.mrf.mxu0
    %v11297 = vadd.f32 %v10893, %v11296
    %11298 = vmatprep.mubr.bf16.mxu0 0
    %11299 = vmatmul.mubr.bf16.gmra.mxu0 %v10840
    %v11300 = vpop.f32.mrf.mxu0
    %v11301 = vadd.f32 %v10889, %v11300
    %v11302 = vpop.f32.mrf.mxu0
    %v11303 = vadd.f32 %v10893, %v11302
    %v11304 = vpop.f32.mrf.mxu0
    %v11305 = vadd.f32 %v10889, %v11304
    %v11306 = vpop.f32.mrf.mxu0
    %v11307 = vadd.f32 %v10893, %v11306
    %11308 = vmatprep.mubr.bf16.mxu0 0
    %11309 = vmatmul.mubr.bf16.gmra.mxu0 %v10841
    %v11310 = vpop.f32.mrf.mxu0
    %v11311 = vadd.f32 %v10889, %v11310
    %v11312 = vpop.f32.mrf.mxu0
    %v11313 = vadd.f32 %v10893, %v11312
    %v11314 = vpop.f32.mrf.mxu0
    %v11315 = vadd.f32 %v10889, %v11314
    %v11316 = vpop.f32.mrf.mxu0
    %v11317 = vadd.f32 %v10893, %v11316
    %11318 = vmatprep.mubr.bf16.mxu0 0
    %11319 = vmatmul.mubr.bf16.gmra.mxu0 %v10842
    %v11320 = vpop.f32.mrf.mxu0
    %v11321 = vadd.f32 %v10889, %v11320
    %v11322 = vpop.f32.mrf.mxu0
    %v11323 = vadd.f32 %v10893, %v11322
    %v11324 = vpop.f32.mrf.mxu0
    %v11325 = vadd.f32 %v10889, %v11324
    %v11326 = vpop.f32.mrf.mxu0
    %v11327 = vadd.f32 %v10893, %v11326
    %11328 = vmatprep.mubr.bf16.mxu0 0
    %11329 = vmatmul.mubr.bf16.gmra.mxu0 %v10843
    %v11330 = vpop.f32.mrf.mxu0
    %v11331 = vadd.f32 %v10889, %v11330
    %v11332 = vpop.f32.mrf.mxu0
    %v11333 = vadd.f32 %v10893, %v11332
    %v11334 = vpop.f32.mrf.mxu0
    %v11335 = vadd.f32 %v10889, %v11334
    %v11336 = vpop.f32.mrf.mxu0
    %v11337 = vadd.f32 %v10893, %v11336
    %11338 = vmatprep.mubr.bf16.mxu0 0
    %11339 = vmatmul.mubr.bf16.gmra.mxu0 %v10844
    %v11340 = vpop.f32.mrf.mxu0
    %v11341 = vadd.f32 %v10889, %v11340
    %v11342 = vpop.f32.mrf.mxu0
    %v11343 = vadd.f32 %v10893, %v11342
    %v11344 = vpop.f32.mrf.mxu0
    %v11345 = vadd.f32 %v10889, %v11344
    %v11346 = vpop.f32.mrf.mxu0
    %v11347 = vadd.f32 %v10893, %v11346
    %11348 = vmatprep.mubr.bf16.mxu0 0
    %11349 = vmatmul.mubr.bf16.gmra.mxu0 %v10845
    %v11350 = vpop.f32.mrf.mxu0
    %v11351 = vadd.f32 %v10889, %v11350
    %v11352 = vpop.f32.mrf.mxu0
    %v11353 = vadd.f32 %v10893, %v11352
    %v11354 = vpop.f32.mrf.mxu0
    %v11355 = vadd.f32 %v10889, %v11354
    %v11356 = vpop.f32.mrf.mxu0
    %v11357 = vadd.f32 %v10893, %v11356
    %11358 = vmatprep.mubr.bf16.mxu0 0
    %11359 = vmatmul.mubr.bf16.gmra.mxu0 %v10846
    %v11360 = vpop.f32.mrf.mxu0
    %v11361 = vadd.f32 %v10889, %v11360
    %v11362 = vpop.f32.mrf.mxu0
    %v11363 = vadd.f32 %v10893, %v11362
    %v11364 = vpop.f32.mrf.mxu0
    %v11365 = vadd.f32 %v10889, %v11364
    %v11366 = vpop.f32.mrf.mxu0
    %v11367 = vadd.f32 %v10893, %v11366
    %11368 = vmatprep.mubr.bf16.mxu0 0
    %11369 = vmatmul.mubr.bf16.gmra.mxu0 %v10847
    %v11370 = vpop.f32.mrf.mxu0
    %v11371 = vadd.f32 %v10889, %v11370
    %v11372 = vpop.f32.mrf.mxu0
    %v11373 = vadd.f32 %v10893, %v11372
    %v11374 = vpop.f32.mrf.mxu0
    %v11375 = vadd.f32 %v10889, %v11374
    %v11376 = vpop.f32.mrf.mxu0
    %v11377 = vadd.f32 %v10893, %v11376
    %11378 = vmatprep.mubr.bf16.mxu0 0
    %11379 = vmatmul.mubr.bf16.gmra.mxu0 %v10848
    %v11380 = vpop.f32.mrf.mxu0
    %v11381 = vadd.f32 %v10889, %v11380
    %v11382 = vpop.f32.mrf.mxu0
    %v11383 = vadd.f32 %v10893, %v11382
    %v11384 = vpop.f32.mrf.mxu0
    %v11385 = vadd.f32 %v10889, %v11384
    %v11386 = vpop.f32.mrf.mxu0
    %v11387 = vadd.f32 %v10893, %v11386
    %11388 = vmatprep.mubr.bf16.mxu0 0
    %11389 = vmatmul.mubr.bf16.gmra.mxu0 %v10849
    %v11390 = vpop.f32.mrf.mxu0
    %v11391 = vadd.f32 %v10889, %v11390
    %v11392 = vpop.f32.mrf.mxu0
    %v11393 = vadd.f32 %v10893, %v11392
    %v11394 = vpop.f32.mrf.mxu0
    %v11395 = vadd.f32 %v10889, %v11394
    %v11396 = vpop.f32.mrf.mxu0
    %v11397 = vadd.f32 %v10893, %v11396
    %11398 = vmatprep.mubr.bf16.mxu0 0
    %11399 = vmatmul.mubr.bf16.gmra.mxu0 %v10850
    %v11400 = vpop.f32.mrf.mxu0
    %v11401 = vadd.f32 %v10889, %v11400
    %v11402 = vpop.f32.mrf.mxu0
    %v11403 = vadd.f32 %v10893, %v11402
    %v11404 = vpop.f32.mrf.mxu0
    %v11405 = vadd.f32 %v10889, %v11404
    %v11406 = vpop.f32.mrf.mxu0
    %v11407 = vadd.f32 %v10893, %v11406
    %11408 = vmatprep.mubr.bf16.mxu0 0
    %11409 = vmatmul.mubr.bf16.gmra.mxu0 %v10851
    %v11410 = vpop.f32.mrf.mxu0
    %v11411 = vadd.f32 %v10889, %v11410
    %v11412 = vpop.f32.mrf.mxu0
    %v11413 = vadd.f32 %v10893, %v11412
    %v11414 = vpop.f32.mrf.mxu0
    %v11415 = vadd.f32 %v10889, %v11414
    %v11416 = vpop.f32.mrf.mxu0
    %v11417 = vadd.f32 %v10893, %v11416
    %11418 = vdwg.mxu0
    %11419 = vmatprep.subr.bf16.mxu0 %v11033
    %11420 = vmatpush1.bf16.msra.mxu0 %v11032
    %11421 = vmatprep.subr.bf16.mxu0 %v11029
    %11422 = vmatpush1.bf16.msra.mxu0 %v11028
    %11423 = vmatprep.subr.bf16.mxu0 %v11025
    %11424 = vmatpush1.bf16.msra.mxu0 %v11024
    %11425 = vmatprep.subr.bf16.mxu0 %v11021
    %11426 = vmatpush1.bf16.msra.mxu0 %v11020
    %11427 = vmatprep.subr.bf16.mxu0 %v11017
    %11428 = vmatpush1.bf16.msra.mxu0 %v11016
    %11429 = vmatprep.subr.bf16.mxu0 %v11013
    %11430 = vmatpush1.bf16.msra.mxu0 %v11012
    %11431 = vmatprep.subr.bf16.mxu0 %v11009
    %11432 = vmatpush1.bf16.msra.mxu0 %v11008
    %11433 = vmatprep.subr.bf16.mxu0 %v11005
    %11434 = vmatpush1.bf16.msra.mxu0 %v11004
    %11435 = vmatprep.subr.bf16.mxu0 0
    %11436 = vmatpush2.bf16.msra.mxu0 0
    %11437 = vmatprep.subr.bf16.mxu0 0
    %11438 = vmatpush2.bf16.msra.mxu0 0
    %11439 = vmatprep.subr.bf16.mxu0 0
    %11440 = vmatpush2.bf16.msra.mxu0 0
    %11441 = vmatprep.subr.bf16.mxu0 0
    %11442 = vmatpush2.bf16.msra.mxu0 0
    %11443 = vmatprep.subr.bf16.mxu0 0
    %11444 = vmatpush2.bf16.msra.mxu0 0
    %11445 = vmatprep.subr.bf16.mxu0 0
    %11446 = vmatpush2.bf16.msra.mxu0 0
    %11447 = vmatprep.subr.bf16.mxu0 0
    %11448 = vmatpush2.bf16.msra.mxu0 0
    %11449 = vmatprep.subr.bf16.mxu0 0
    %11450 = vmatpush2.bf16.msra.mxu0 0
    %11451 = vmatprep.mubr.bf16.mxu0 0
    %11452 = vmatmul.mubr.bf16.gmra.mxu0 %v10820
    %v11453 = vpop.f32.mrf.mxu0
    %v11454 = vadd.f32 %v10897, %v11453
    %v11455 = vpop.f32.mrf.mxu0
    %v11456 = vadd.f32 %v10901, %v11455
    %v11457 = vpop.f32.mrf.mxu0
    %v11458 = vadd.f32 %v10897, %v11457
    %v11459 = vpop.f32.mrf.mxu0
    %v11460 = vadd.f32 %v10901, %v11459
    %11461 = vmatprep.mubr.bf16.mxu0 0
    %11462 = vmatmul.mubr.bf16.gmra.mxu0 %v10821
    %v11463 = vpop.f32.mrf.mxu0
    %v11464 = vadd.f32 %v10897, %v11463
    %v11465 = vpop.f32.mrf.mxu0
    %v11466 = vadd.f32 %v10901, %v11465
    %v11467 = vpop.f32.mrf.mxu0
    %v11468 = vadd.f32 %v10897, %v11467
    %v11469 = vpop.f32.mrf.mxu0
    %v11470 = vadd.f32 %v10901, %v11469
    %11471 = vmatprep.mubr.bf16.mxu0 0
    %11472 = vmatmul.mubr.bf16.gmra.mxu0 %v10822
    %v11473 = vpop.f32.mrf.mxu0
    %v11474 = vadd.f32 %v10897, %v11473
    %v11475 = vpop.f32.mrf.mxu0
    %v11476 = vadd.f32 %v10901, %v11475
    %v11477 = vpop.f32.mrf.mxu0
    %v11478 = vadd.f32 %v10897, %v11477
    %v11479 = vpop.f32.mrf.mxu0
    %v11480 = vadd.f32 %v10901, %v11479
    %11481 = vmatprep.mubr.bf16.mxu0 0
    %11482 = vmatmul.mubr.bf16.gmra.mxu0 %v10823
    %v11483 = vpop.f32.mrf.mxu0
    %v11484 = vadd.f32 %v10897, %v11483
    %v11485 = vpop.f32.mrf.mxu0
    %v11486 = vadd.f32 %v10901, %v11485
    %v11487 = vpop.f32.mrf.mxu0
    %v11488 = vadd.f32 %v10897, %v11487
    %v11489 = vpop.f32.mrf.mxu0
    %v11490 = vadd.f32 %v10901, %v11489
    %11491 = vmatprep.mubr.bf16.mxu0 0
    %11492 = vmatmul.mubr.bf16.gmra.mxu0 %v10824
    %v11493 = vpop.f32.mrf.mxu0
    %v11494 = vadd.f32 %v10897, %v11493
    %v11495 = vpop.f32.mrf.mxu0
    %v11496 = vadd.f32 %v10901, %v11495
    %v11497 = vpop.f32.mrf.mxu0
    %v11498 = vadd.f32 %v10897, %v11497
    %v11499 = vpop.f32.mrf.mxu0
    %v11500 = vadd.f32 %v10901, %v11499
    %11501 = vmatprep.mubr.bf16.mxu0 0
    %11502 = vmatmul.mubr.bf16.gmra.mxu0 %v10825
    %v11503 = vpop.f32.mrf.mxu0
    %v11504 = vadd.f32 %v10897, %v11503
    %v11505 = vpop.f32.mrf.mxu0
    %v11506 = vadd.f32 %v10901, %v11505
    %v11507 = vpop.f32.mrf.mxu0
    %v11508 = vadd.f32 %v10897, %v11507
    %v11509 = vpop.f32.mrf.mxu0
    %v11510 = vadd.f32 %v10901, %v11509
    %11511 = vmatprep.mubr.bf16.mxu0 0
    %11512 = vmatmul.mubr.bf16.gmra.mxu0 %v10826
    %v11513 = vpop.f32.mrf.mxu0
    %v11514 = vadd.f32 %v10897, %v11513
    %v11515 = vpop.f32.mrf.mxu0
    %v11516 = vadd.f32 %v10901, %v11515
    %v11517 = vpop.f32.mrf.mxu0
    %v11518 = vadd.f32 %v10897, %v11517
    %v11519 = vpop.f32.mrf.mxu0
    %v11520 = vadd.f32 %v10901, %v11519
    %11521 = vmatprep.mubr.bf16.mxu0 0
    %11522 = vmatmul.mubr.bf16.gmra.mxu0 %v10827
    %v11523 = vpop.f32.mrf.mxu0
    %v11524 = vadd.f32 %v10897, %v11523
    %v11525 = vpop.f32.mrf.mxu0
    %v11526 = vadd.f32 %v10901, %v11525
    %v11527 = vpop.f32.mrf.mxu0
    %v11528 = vadd.f32 %v10897, %v11527
    %v11529 = vpop.f32.mrf.mxu0
    %v11530 = vadd.f32 %v10901, %v11529
    %11531 = vmatprep.mubr.bf16.mxu0 0
    %11532 = vmatmul.mubr.bf16.gmra.mxu0 %v10828
    %v11533 = vpop.f32.mrf.mxu0
    %v11534 = vadd.f32 %v10897, %v11533
    %v11535 = vpop.f32.mrf.mxu0
    %v11536 = vadd.f32 %v10901, %v11535
    %v11537 = vpop.f32.mrf.mxu0
    %v11538 = vadd.f32 %v10897, %v11537
    %v11539 = vpop.f32.mrf.mxu0
    %v11540 = vadd.f32 %v10901, %v11539
    %11541 = vmatprep.mubr.bf16.mxu0 0
    %11542 = vmatmul.mubr.bf16.gmra.mxu0 %v10829
    %v11543 = vpop.f32.mrf.mxu0
    %v11544 = vadd.f32 %v10897, %v11543
    %v11545 = vpop.f32.mrf.mxu0
    %v11546 = vadd.f32 %v10901, %v11545
    %v11547 = vpop.f32.mrf.mxu0
    %v11548 = vadd.f32 %v10897, %v11547
    %v11549 = vpop.f32.mrf.mxu0
    %v11550 = vadd.f32 %v10901, %v11549
    %11551 = vmatprep.mubr.bf16.mxu0 0
    %11552 = vmatmul.mubr.bf16.gmra.mxu0 %v10830
    %v11553 = vpop.f32.mrf.mxu0
    %v11554 = vadd.f32 %v10897, %v11553
    %v11555 = vpop.f32.mrf.mxu0
    %v11556 = vadd.f32 %v10901, %v11555
    %v11557 = vpop.f32.mrf.mxu0
    %v11558 = vadd.f32 %v10897, %v11557
    %v11559 = vpop.f32.mrf.mxu0
    %v11560 = vadd.f32 %v10901, %v11559
    %11561 = vmatprep.mubr.bf16.mxu0 0
    %11562 = vmatmul.mubr.bf16.gmra.mxu0 %v10831
    %v11563 = vpop.f32.mrf.mxu0
    %v11564 = vadd.f32 %v10897, %v11563
    %v11565 = vpop.f32.mrf.mxu0
    %v11566 = vadd.f32 %v10901, %v11565
    %v11567 = vpop.f32.mrf.mxu0
    %v11568 = vadd.f32 %v10897, %v11567
    %v11569 = vpop.f32.mrf.mxu0
    %v11570 = vadd.f32 %v10901, %v11569
    %11571 = vmatprep.mubr.bf16.mxu0 0
    %11572 = vmatmul.mubr.bf16.gmra.mxu0 %v10832
    %v11573 = vpop.f32.mrf.mxu0
    %v11574 = vadd.f32 %v10897, %v11573
    %v11575 = vpop.f32.mrf.mxu0
    %v11576 = vadd.f32 %v10901, %v11575
    %v11577 = vpop.f32.mrf.mxu0
    %v11578 = vadd.f32 %v10897, %v11577
    %v11579 = vpop.f32.mrf.mxu0
    %v11580 = vadd.f32 %v10901, %v11579
    %11581 = vmatprep.mubr.bf16.mxu0 0
    %11582 = vmatmul.mubr.bf16.gmra.mxu0 %v10833
    %v11583 = vpop.f32.mrf.mxu0
    %v11584 = vadd.f32 %v10897, %v11583
    %v11585 = vpop.f32.mrf.mxu0
    %v11586 = vadd.f32 %v10901, %v11585
    %v11587 = vpop.f32.mrf.mxu0
    %v11588 = vadd.f32 %v10897, %v11587
    %v11589 = vpop.f32.mrf.mxu0
    %v11590 = vadd.f32 %v10901, %v11589
    %11591 = vmatprep.mubr.bf16.mxu0 0
    %11592 = vmatmul.mubr.bf16.gmra.mxu0 %v10834
    %v11593 = vpop.f32.mrf.mxu0
    %v11594 = vadd.f32 %v10897, %v11593
    %v11595 = vpop.f32.mrf.mxu0
    %v11596 = vadd.f32 %v10901, %v11595
    %v11597 = vpop.f32.mrf.mxu0
    %v11598 = vadd.f32 %v10897, %v11597
    %v11599 = vpop.f32.mrf.mxu0
    %v11600 = vadd.f32 %v10901, %v11599
    %11601 = vmatprep.mubr.bf16.mxu0 0
    %11602 = vmatmul.mubr.bf16.gmra.mxu0 %v10835
    %v11603 = vpop.f32.mrf.mxu0
    %v11604 = vadd.f32 %v10897, %v11603
    %v11605 = vpop.f32.mrf.mxu0
    %v11606 = vadd.f32 %v10901, %v11605
    %v11607 = vpop.f32.mrf.mxu0
    %v11608 = vadd.f32 %v10897, %v11607
    %v11609 = vpop.f32.mrf.mxu0
    %v11610 = vadd.f32 %v10901, %v11609
    %11611 = vmatprep.mubr.bf16.mxu0 0
    %11612 = vmatmul.mubr.bf16.gmra.mxu0 %v10836
    %v11613 = vpop.f32.mrf.mxu0
    %v11614 = vadd.f32 %v10897, %v11613
    %v11615 = vpop.f32.mrf.mxu0
    %v11616 = vadd.f32 %v10901, %v11615
    %v11617 = vpop.f32.mrf.mxu0
    %v11618 = vadd.f32 %v10897, %v11617
    %v11619 = vpop.f32.mrf.mxu0
    %v11620 = vadd.f32 %v10901, %v11619
    %11621 = vmatprep.mubr.bf16.mxu0 0
    %11622 = vmatmul.mubr.bf16.gmra.mxu0 %v10837
    %v11623 = vpop.f32.mrf.mxu0
    %v11624 = vadd.f32 %v10897, %v11623
    %v11625 = vpop.f32.mrf.mxu0
    %v11626 = vadd.f32 %v10901, %v11625
    %v11627 = vpop.f32.mrf.mxu0
    %v11628 = vadd.f32 %v10897, %v11627
    %v11629 = vpop.f32.mrf.mxu0
    %v11630 = vadd.f32 %v10901, %v11629
    %11631 = vmatprep.mubr.bf16.mxu0 0
    %11632 = vmatmul.mubr.bf16.gmra.mxu0 %v10838
    %v11633 = vpop.f32.mrf.mxu0
    %v11634 = vadd.f32 %v10897, %v11633
    %v11635 = vpop.f32.mrf.mxu0
    %v11636 = vadd.f32 %v10901, %v11635
    %v11637 = vpop.f32.mrf.mxu0
    %v11638 = vadd.f32 %v10897, %v11637
    %v11639 = vpop.f32.mrf.mxu0
    %v11640 = vadd.f32 %v10901, %v11639
    %11641 = vmatprep.mubr.bf16.mxu0 0
    %11642 = vmatmul.mubr.bf16.gmra.mxu0 %v10839
    %v11643 = vpop.f32.mrf.mxu0
    %v11644 = vadd.f32 %v10897, %v11643
    %v11645 = vpop.f32.mrf.mxu0
    %v11646 = vadd.f32 %v10901, %v11645
    %v11647 = vpop.f32.mrf.mxu0
    %v11648 = vadd.f32 %v10897, %v11647
    %v11649 = vpop.f32.mrf.mxu0
    %v11650 = vadd.f32 %v10901, %v11649
    %11651 = vmatprep.mubr.bf16.mxu0 0
    %11652 = vmatmul.mubr.bf16.gmra.mxu0 %v10840
    %v11653 = vpop.f32.mrf.mxu0
    %v11654 = vadd.f32 %v10897, %v11653
    %v11655 = vpop.f32.mrf.mxu0
    %v11656 = vadd.f32 %v10901, %v11655
    %v11657 = vpop.f32.mrf.mxu0
    %v11658 = vadd.f32 %v10897, %v11657
    %v11659 = vpop.f32.mrf.mxu0
    %v11660 = vadd.f32 %v10901, %v11659
    %11661 = vmatprep.mubr.bf16.mxu0 0
    %11662 = vmatmul.mubr.bf16.gmra.mxu0 %v10841
    %v11663 = vpop.f32.mrf.mxu0
    %v11664 = vadd.f32 %v10897, %v11663
    %v11665 = vpop.f32.mrf.mxu0
    %v11666 = vadd.f32 %v10901, %v11665
    %v11667 = vpop.f32.mrf.mxu0
    %v11668 = vadd.f32 %v10897, %v11667
    %v11669 = vpop.f32.mrf.mxu0
    %v11670 = vadd.f32 %v10901, %v11669
    %11671 = vmatprep.mubr.bf16.mxu0 0
    %11672 = vmatmul.mubr.bf16.gmra.mxu0 %v10842
    %v11673 = vpop.f32.mrf.mxu0
    %v11674 = vadd.f32 %v10897, %v11673
    %v11675 = vpop.f32.mrf.mxu0
    %v11676 = vadd.f32 %v10901, %v11675
    %v11677 = vpop.f32.mrf.mxu0
    %v11678 = vadd.f32 %v10897, %v11677
    %v11679 = vpop.f32.mrf.mxu0
    %v11680 = vadd.f32 %v10901, %v11679
    %11681 = vmatprep.mubr.bf16.mxu0 0
    %11682 = vmatmul.mubr.bf16.gmra.mxu0 %v10843
    %v11683 = vpop.f32.mrf.mxu0
    %v11684 = vadd.f32 %v10897, %v11683
    %v11685 = vpop.f32.mrf.mxu0
    %v11686 = vadd.f32 %v10901, %v11685
    %v11687 = vpop.f32.mrf.mxu0
    %v11688 = vadd.f32 %v10897, %v11687
    %v11689 = vpop.f32.mrf.mxu0
    %v11690 = vadd.f32 %v10901, %v11689
    %11691 = vmatprep.mubr.bf16.mxu0 0
    %11692 = vmatmul.mubr.bf16.gmra.mxu0 %v10844
    %v11693 = vpop.f32.mrf.mxu0
    %v11694 = vadd.f32 %v10897, %v11693
    %v11695 = vpop.f32.mrf.mxu0
    %v11696 = vadd.f32 %v10901, %v11695
    %v11697 = vpop.f32.mrf.mxu0
    %v11698 = vadd.f32 %v10897, %v11697
    %v11699 = vpop.f32.mrf.mxu0
    %v11700 = vadd.f32 %v10901, %v11699
    %11701 = vmatprep.mubr.bf16.mxu0 0
    %11702 = vmatmul.mubr.bf16.gmra.mxu0 %v10845
    %v11703 = vpop.f32.mrf.mxu0
    %v11704 = vadd.f32 %v10897, %v11703
    %v11705 = vpop.f32.mrf.mxu0
    %v11706 = vadd.f32 %v10901, %v11705
    %v11707 = vpop.f32.mrf.mxu0
    %v11708 = vadd.f32 %v10897, %v11707
    %v11709 = vpop.f32.mrf.mxu0
    %v11710 = vadd.f32 %v10901, %v11709
    %11711 = vmatprep.mubr.bf16.mxu0 0
    %11712 = vmatmul.mubr.bf16.gmra.mxu0 %v10846
    %v11713 = vpop.f32.mrf.mxu0
    %v11714 = vadd.f32 %v10897, %v11713
    %v11715 = vpop.f32.mrf.mxu0
    %v11716 = vadd.f32 %v10901, %v11715
    %v11717 = vpop.f32.mrf.mxu0
    %v11718 = vadd.f32 %v10897, %v11717
    %v11719 = vpop.f32.mrf.mxu0
    %v11720 = vadd.f32 %v10901, %v11719
    %11721 = vmatprep.mubr.bf16.mxu0 0
    %11722 = vmatmul.mubr.bf16.gmra.mxu0 %v10847
    %v11723 = vpop.f32.mrf.mxu0
    %v11724 = vadd.f32 %v10897, %v11723
    %v11725 = vpop.f32.mrf.mxu0
    %v11726 = vadd.f32 %v10901, %v11725
    %v11727 = vpop.f32.mrf.mxu0
    %v11728 = vadd.f32 %v10897, %v11727
    %v11729 = vpop.f32.mrf.mxu0
    %v11730 = vadd.f32 %v10901, %v11729
    %11731 = vmatprep.mubr.bf16.mxu0 0
    %11732 = vmatmul.mubr.bf16.gmra.mxu0 %v10848
    %v11733 = vpop.f32.mrf.mxu0
    %v11734 = vadd.f32 %v10897, %v11733
    %v11735 = vpop.f32.mrf.mxu0
    %v11736 = vadd.f32 %v10901, %v11735
    %v11737 = vpop.f32.mrf.mxu0
    %v11738 = vadd.f32 %v10897, %v11737
    %v11739 = vpop.f32.mrf.mxu0
    %v11740 = vadd.f32 %v10901, %v11739
    %11741 = vmatprep.mubr.bf16.mxu0 0
    %11742 = vmatmul.mubr.bf16.gmra.mxu0 %v10849
    %v11743 = vpop.f32.mrf.mxu0
    %v11744 = vadd.f32 %v10897, %v11743
    %v11745 = vpop.f32.mrf.mxu0
    %v11746 = vadd.f32 %v10901, %v11745
    %v11747 = vpop.f32.mrf.mxu0
    %v11748 = vadd.f32 %v10897, %v11747
    %v11749 = vpop.f32.mrf.mxu0
    %v11750 = vadd.f32 %v10901, %v11749
    %11751 = vmatprep.mubr.bf16.mxu0 0
    %11752 = vmatmul.mubr.bf16.gmra.mxu0 %v10850
    %v11753 = vpop.f32.mrf.mxu0
    %v11754 = vadd.f32 %v10897, %v11753
    %v11755 = vpop.f32.mrf.mxu0
    %v11756 = vadd.f32 %v10901, %v11755
    %v11757 = vpop.f32.mrf.mxu0
    %v11758 = vadd.f32 %v10897, %v11757
    %v11759 = vpop.f32.mrf.mxu0
    %v11760 = vadd.f32 %v10901, %v11759
    %11761 = vmatprep.mubr.bf16.mxu0 0
    %11762 = vmatmul.mubr.bf16.gmra.mxu0 %v10851
    %v11763 = vpop.f32.mrf.mxu0
    %v11764 = vadd.f32 %v10897, %v11763
    %v11765 = vpop.f32.mrf.mxu0
    %v11766 = vadd.f32 %v10901, %v11765
    %v11767 = vpop.f32.mrf.mxu0
    %v11768 = vadd.f32 %v10897, %v11767
    %v11769 = vpop.f32.mrf.mxu0
    %v11770 = vadd.f32 %v10901, %v11769
    %11771 = vdwg.mxu0
    %v11772 = vmax.f32 %v11101, 0.0
    %v11773 = vmax.f32 %v11103, 0.0
    %v11774 = vmax.f32 %v11454, 0.0
    %v11775 = vmax.f32 %v11456, 0.0
    %v11776 = vmax.f32 %v11105, 0.0
    %v11777 = vmax.f32 %v11107, 0.0
    %v11778 = vmax.f32 %v11458, 0.0
    %v11779 = vmax.f32 %v11460, 0.0
    %v11780 = vmax.f32 %v11111, 0.0
    %v11781 = vmax.f32 %v11113, 0.0
    %v11782 = vmax.f32 %v11464, 0.0
    %v11783 = vmax.f32 %v11466, 0.0
    %v11784 = vmax.f32 %v11115, 0.0
    %v11785 = vmax.f32 %v11117, 0.0
    %v11786 = vmax.f32 %v11468, 0.0
    %v11787 = vmax.f32 %v11470, 0.0
    %v11788 = vmax.f32 %v11121, 0.0
    %v11789 = vmax.f32 %v11123, 0.0
    %v11790 = vmax.f32 %v11474, 0.0
    %v11791 = vmax.f32 %v11476, 0.0
    %v11792 = vmax.f32 %v11125, 0.0
    %v11793 = vmax.f32 %v11127, 0.0
    %v11794 = vmax.f32 %v11478, 0.0
    %v11795 = vmax.f32 %v11480, 0.0
    %v11796 = vmax.f32 %v11131, 0.0
    %v11797 = vmax.f32 %v11133, 0.0
    %v11798 = vmax.f32 %v11484, 0.0
    %v11799 = vmax.f32 %v11486, 0.0
    %v11800 = vmax.f32 %v11135, 0.0
    %v11801 = vmax.f32 %v11137, 0.0
    %v11802 = vmax.f32 %v11488, 0.0
    %v11803 = vmax.f32 %v11490, 0.0
    %v11804 = vmax.f32 %v11141, 0.0
    %v11805 = vmax.f32 %v11143, 0.0
    %v11806 = vmax.f32 %v11494, 0.0
    %v11807 = vmax.f32 %v11496, 0.0
    %v11808 = vmax.f32 %v11145, 0.0
    %v11809 = vmax.f32 %v11147, 0.0
    %v11810 = vmax.f32 %v11498, 0.0
    %v11811 = vmax.f32 %v11500, 0.0
    %v11812 = vmax.f32 %v11151, 0.0
    %v11813 = vmax.f32 %v11153, 0.0
    %v11814 = vmax.f32 %v11504, 0.0
    %v11815 = vmax.f32 %v11506, 0.0
    %v11816 = vmax.f32 %v11155, 0.0
    %v11817 = vmax.f32 %v11157, 0.0
    %v11818 = vmax.f32 %v11508, 0.0
    %v11819 = vmax.f32 %v11510, 0.0
    %v11820 = vmax.f32 %v11161, 0.0
    %v11821 = vmax.f32 %v11163, 0.0
    %v11822 = vmax.f32 %v11514, 0.0
    %v11823 = vmax.f32 %v11516, 0.0
    %v11824 = vmax.f32 %v11165, 0.0
    %v11825 = vmax.f32 %v11167, 0.0
    %v11826 = vmax.f32 %v11518, 0.0
    %v11827 = vmax.f32 %v11520, 0.0
    %v11828 = vmax.f32 %v11171, 0.0
    %v11829 = vmax.f32 %v11173, 0.0
    %v11830 = vmax.f32 %v11524, 0.0
    %v11831 = vmax.f32 %v11526, 0.0
    %v11832 = vmax.f32 %v11175, 0.0
    %v11833 = vmax.f32 %v11177, 0.0
    %v11834 = vmax.f32 %v11528, 0.0
    %v11835 = vmax.f32 %v11530, 0.0
    %v11836 = vmax.f32 %v11181, 0.0
    %v11837 = vmax.f32 %v11183, 0.0
    %v11838 = vmax.f32 %v11534, 0.0
    %v11839 = vmax.f32 %v11536, 0.0
    %v11840 = vmax.f32 %v11185, 0.0
    %v11841 = vmax.f32 %v11187, 0.0
    %v11842 = vmax.f32 %v11538, 0.0
    %v11843 = vmax.f32 %v11540, 0.0
    %v11844 = vmax.f32 %v11191, 0.0
    %v11845 = vmax.f32 %v11193, 0.0
    %v11846 = vmax.f32 %v11544, 0.0
    %v11847 = vmax.f32 %v11546, 0.0
    %v11848 = vmax.f32 %v11195, 0.0
    %v11849 = vmax.f32 %v11197, 0.0
    %v11850 = vmax.f32 %v11548, 0.0
    %v11851 = vmax.f32 %v11550, 0.0
    %v11852 = vmax.f32 %v11201, 0.0
    %v11853 = vmax.f32 %v11203, 0.0
    %v11854 = vmax.f32 %v11554, 0.0
    %v11855 = vmax.f32 %v11556, 0.0
    %v11856 = vmax.f32 %v11205, 0.0
    %v11857 = vmax.f32 %v11207, 0.0
    %v11858 = vmax.f32 %v11558, 0.0
    %v11859 = vmax.f32 %v11560, 0.0
    %v11860 = vmax.f32 %v11211, 0.0
    %v11861 = vmax.f32 %v11213, 0.0
    %v11862 = vmax.f32 %v11564, 0.0
    %v11863 = vmax.f32 %v11566, 0.0
    %v11864 = vmax.f32 %v11215, 0.0
    %v11865 = vmax.f32 %v11217, 0.0
    %v11866 = vmax.f32 %v11568, 0.0
    %v11867 = vmax.f32 %v11570, 0.0
    %v11868 = vmax.f32 %v11221, 0.0
    %v11869 = vmax.f32 %v11223, 0.0
    %v11870 = vmax.f32 %v11574, 0.0
    %v11871 = vmax.f32 %v11576, 0.0
    %v11872 = vmax.f32 %v11225, 0.0
    %v11873 = vmax.f32 %v11227, 0.0
    %v11874 = vmax.f32 %v11578, 0.0
    %v11875 = vmax.f32 %v11580, 0.0
    %v11876 = vmax.f32 %v11231, 0.0
    %v11877 = vmax.f32 %v11233, 0.0
    %v11878 = vmax.f32 %v11584, 0.0
    %v11879 = vmax.f32 %v11586, 0.0
    %v11880 = vmax.f32 %v11235, 0.0
    %v11881 = vmax.f32 %v11237, 0.0
    %v11882 = vmax.f32 %v11588, 0.0
    %v11883 = vmax.f32 %v11590, 0.0
    %v11884 = vmax.f32 %v11241, 0.0
    %v11885 = vmax.f32 %v11243, 0.0
    %v11886 = vmax.f32 %v11594, 0.0
    %v11887 = vmax.f32 %v11596, 0.0
    %v11888 = vmax.f32 %v11245, 0.0
    %v11889 = vmax.f32 %v11247, 0.0
    %v11890 = vmax.f32 %v11598, 0.0
    %v11891 = vmax.f32 %v11600, 0.0
    %v11892 = vmax.f32 %v11251, 0.0
    %v11893 = vmax.f32 %v11253, 0.0
    %v11894 = vmax.f32 %v11604, 0.0
    %v11895 = vmax.f32 %v11606, 0.0
    %v11896 = vmax.f32 %v11255, 0.0
    %v11897 = vmax.f32 %v11257, 0.0
    %v11898 = vmax.f32 %v11608, 0.0
    %v11899 = vmax.f32 %v11610, 0.0
    %v11900 = vmax.f32 %v11261, 0.0
    %v11901 = vmax.f32 %v11263, 0.0
    %v11902 = vmax.f32 %v11614, 0.0
    %v11903 = vmax.f32 %v11616, 0.0
    %v11904 = vmax.f32 %v11265, 0.0
    %v11905 = vmax.f32 %v11267, 0.0
    %v11906 = vmax.f32 %v11618, 0.0
    %v11907 = vmax.f32 %v11620, 0.0
    %v11908 = vmax.f32 %v11271, 0.0
    %v11909 = vmax.f32 %v11273, 0.0
    %v11910 = vmax.f32 %v11624, 0.0
    %v11911 = vmax.f32 %v11626, 0.0
    %v11912 = vmax.f32 %v11275, 0.0
    %v11913 = vmax.f32 %v11277, 0.0
    %v11914 = vmax.f32 %v11628, 0.0
    %v11915 = vmax.f32 %v11630, 0.0
    %v11916 = vmax.f32 %v11281, 0.0
    %v11917 = vmax.f32 %v11283, 0.0
    %v11918 = vmax.f32 %v11634, 0.0
    %v11919 = vmax.f32 %v11636, 0.0
    %v11920 = vmax.f32 %v11285, 0.0
    %v11921 = vmax.f32 %v11287, 0.0
    %v11922 = vmax.f32 %v11638, 0.0
    %v11923 = vmax.f32 %v11640, 0.0
    %v11924 = vmax.f32 %v11291, 0.0
    %v11925 = vmax.f32 %v11293, 0.0
    %v11926 = vmax.f32 %v11644, 0.0
    %v11927 = vmax.f32 %v11646, 0.0
    %v11928 = vmax.f32 %v11295, 0.0
    %v11929 = vmax.f32 %v11297, 0.0
    %v11930 = vmax.f32 %v11648, 0.0
    %v11931 = vmax.f32 %v11650, 0.0
    %v11932 = vmax.f32 %v11301, 0.0
    %v11933 = vmax.f32 %v11303, 0.0
    %v11934 = vmax.f32 %v11654, 0.0
    %v11935 = vmax.f32 %v11656, 0.0
    %v11936 = vmax.f32 %v11305, 0.0
    %v11937 = vmax.f32 %v11307, 0.0
    %v11938 = vmax.f32 %v11658, 0.0
    %v11939 = vmax.f32 %v11660, 0.0
    %v11940 = vmax.f32 %v11311, 0.0
    %v11941 = vmax.f32 %v11313, 0.0
    %v11942 = vmax.f32 %v11664, 0.0
    %v11943 = vmax.f32 %v11666, 0.0
    %v11944 = vmax.f32 %v11315, 0.0
    %v11945 = vmax.f32 %v11317, 0.0
    %v11946 = vmax.f32 %v11668, 0.0
    %v11947 = vmax.f32 %v11670, 0.0
    %v11948 = vmax.f32 %v11321, 0.0
    %v11949 = vmax.f32 %v11323, 0.0
    %v11950 = vmax.f32 %v11674, 0.0
    %v11951 = vmax.f32 %v11676, 0.0
    %v11952 = vmax.f32 %v11325, 0.0
    %v11953 = vmax.f32 %v11327, 0.0
    %v11954 = vmax.f32 %v11678, 0.0
    %v11955 = vmax.f32 %v11680, 0.0
    %v11956 = vmax.f32 %v11331, 0.0
    %v11957 = vmax.f32 %v11333, 0.0
    %v11958 = vmax.f32 %v11684, 0.0
    %v11959 = vmax.f32 %v11686, 0.0
    %v11960 = vmax.f32 %v11335, 0.0
    %v11961 = vmax.f32 %v11337, 0.0
    %v11962 = vmax.f32 %v11688, 0.0
    %v11963 = vmax.f32 %v11690, 0.0
    %v11964 = vmax.f32 %v11341, 0.0
    %v11965 = vmax.f32 %v11343, 0.0
    %v11966 = vmax.f32 %v11694, 0.0
    %v11967 = vmax.f32 %v11696, 0.0
    %v11968 = vmax.f32 %v11345, 0.0
    %v11969 = vmax.f32 %v11347, 0.0
    %v11970 = vmax.f32 %v11698, 0.0
    %v11971 = vmax.f32 %v11700, 0.0
    %v11972 = vmax.f32 %v11351, 0.0
    %v11973 = vmax.f32 %v11353, 0.0
    %v11974 = vmax.f32 %v11704, 0.0
    %v11975 = vmax.f32 %v11706, 0.0
    %v11976 = vmax.f32 %v11355, 0.0
    %v11977 = vmax.f32 %v11357, 0.0
    %v11978 = vmax.f32 %v11708, 0.0
    %v11979 = vmax.f32 %v11710, 0.0
    %v11980 = vmax.f32 %v11361, 0.0
    %v11981 = vmax.f32 %v11363, 0.0
    %v11982 = vmax.f32 %v11714, 0.0
    %v11983 = vmax.f32 %v11716, 0.0
    %v11984 = vmax.f32 %v11365, 0.0
    %v11985 = vmax.f32 %v11367, 0.0
    %v11986 = vmax.f32 %v11718, 0.0
    %v11987 = vmax.f32 %v11720, 0.0
    %v11988 = vmax.f32 %v11371, 0.0
    %v11989 = vmax.f32 %v11373, 0.0
    %v11990 = vmax.f32 %v11724, 0.0
    %v11991 = vmax.f32 %v11726, 0.0
    %v11992 = vmax.f32 %v11375, 0.0
    %v11993 = vmax.f32 %v11377, 0.0
    %v11994 = vmax.f32 %v11728, 0.0
    %v11995 = vmax.f32 %v11730, 0.0
    %v11996 = vmax.f32 %v11381, 0.0
    %v11997 = vmax.f32 %v11383, 0.0
    %v11998 = vmax.f32 %v11734, 0.0
    %v11999 = vmax.f32 %v11736, 0.0
    %v12000 = vmax.f32 %v11385, 0.0
    %v12001 = vmax.f32 %v11387, 0.0
    %v12002 = vmax.f32 %v11738, 0.0
    %v12003 = vmax.f32 %v11740, 0.0
    %v12004 = vmax.f32 %v11391, 0.0
    %v12005 = vmax.f32 %v11393, 0.0
    %v12006 = vmax.f32 %v11744, 0.0
    %v12007 = vmax.f32 %v11746, 0.0
    %v12008 = vmax.f32 %v11395, 0.0
    %v12009 = vmax.f32 %v11397, 0.0
    %v12010 = vmax.f32 %v11748, 0.0
    %v12011 = vmax.f32 %v11750, 0.0
    %v12012 = vmax.f32 %v11401, 0.0
    %v12013 = vmax.f32 %v11403, 0.0
    %v12014 = vmax.f32 %v11754, 0.0
    %v12015 = vmax.f32 %v11756, 0.0
    %v12016 = vmax.f32 %v11405, 0.0
    %v12017 = vmax.f32 %v11407, 0.0
    %v12018 = vmax.f32 %v11758, 0.0
    %v12019 = vmax.f32 %v11760, 0.0
    %v12020 = vmax.f32 %v11411, 0.0
    %v12021 = vmax.f32 %v11413, 0.0
    %v12022 = vmax.f32 %v11764, 0.0
    %v12023 = vmax.f32 %v11766, 0.0
    %v12024 = vmax.f32 %v11415, 0.0
    %v12025 = vmax.f32 %v11417, 0.0
    %v12026 = vmax.f32 %v11768, 0.0
    %v12027 = vmax.f32 %v11770, 0.0
    %v12028 = vpack.c.bf16 %v11776, %v11772
    %v12029 = vpack.c.bf16 %v11777, %v11773
    %v12030 = vpack.c.bf16 %v11778, %v11774
    %v12031 = vpack.c.bf16 %v11779, %v11775
    %v12032 = vpack.c.bf16 %v11784, %v11780
    %v12033 = vpack.c.bf16 %v11785, %v11781
    %v12034 = vpack.c.bf16 %v11786, %v11782
    %v12035 = vpack.c.bf16 %v11787, %v11783
    %v12036 = vpack.c.bf16 %v11792, %v11788
    %v12037 = vpack.c.bf16 %v11793, %v11789
    %v12038 = vpack.c.bf16 %v11794, %v11790
    %v12039 = vpack.c.bf16 %v11795, %v11791
    %v12040 = vpack.c.bf16 %v11800, %v11796
    %v12041 = vpack.c.bf16 %v11801, %v11797
    %v12042 = vpack.c.bf16 %v11802, %v11798
    %v12043 = vpack.c.bf16 %v11803, %v11799
    %v12044 = vpack.c.bf16 %v11808, %v11804
    %v12045 = vpack.c.bf16 %v11809, %v11805
    %v12046 = vpack.c.bf16 %v11810, %v11806
    %v12047 = vpack.c.bf16 %v11811, %v11807
    %v12048 = vpack.c.bf16 %v11816, %v11812
    %v12049 = vpack.c.bf16 %v11817, %v11813
    %v12050 = vpack.c.bf16 %v11818, %v11814
    %v12051 = vpack.c.bf16 %v11819, %v11815
    %v12052 = vpack.c.bf16 %v11824, %v11820
    %v12053 = vpack.c.bf16 %v11825, %v11821
    %v12054 = vpack.c.bf16 %v11826, %v11822
    %v12055 = vpack.c.bf16 %v11827, %v11823
    %v12056 = vpack.c.bf16 %v11832, %v11828
    %v12057 = vpack.c.bf16 %v11833, %v11829
    %v12058 = vpack.c.bf16 %v11834, %v11830
    %v12059 = vpack.c.bf16 %v11835, %v11831
    %v12060 = vpack.c.bf16 %v11840, %v11836
    %v12061 = vpack.c.bf16 %v11841, %v11837
    %v12062 = vpack.c.bf16 %v11842, %v11838
    %v12063 = vpack.c.bf16 %v11843, %v11839
    %v12064 = vpack.c.bf16 %v11848, %v11844
    %v12065 = vpack.c.bf16 %v11849, %v11845
    %v12066 = vpack.c.bf16 %v11850, %v11846
    %v12067 = vpack.c.bf16 %v11851, %v11847
    %v12068 = vpack.c.bf16 %v11856, %v11852
    %v12069 = vpack.c.bf16 %v11857, %v11853
    %v12070 = vpack.c.bf16 %v11858, %v11854
    %v12071 = vpack.c.bf16 %v11859, %v11855
    %v12072 = vpack.c.bf16 %v11864, %v11860
    %v12073 = vpack.c.bf16 %v11865, %v11861
    %v12074 = vpack.c.bf16 %v11866, %v11862
    %v12075 = vpack.c.bf16 %v11867, %v11863
    %v12076 = vpack.c.bf16 %v11872, %v11868
    %v12077 = vpack.c.bf16 %v11873, %v11869
    %v12078 = vpack.c.bf16 %v11874, %v11870
    %v12079 = vpack.c.bf16 %v11875, %v11871
    %v12080 = vpack.c.bf16 %v11880, %v11876
    %v12081 = vpack.c.bf16 %v11881, %v11877
    %v12082 = vpack.c.bf16 %v11882, %v11878
    %v12083 = vpack.c.bf16 %v11883, %v11879
    %v12084 = vpack.c.bf16 %v11888, %v11884
    %v12085 = vpack.c.bf16 %v11889, %v11885
    %v12086 = vpack.c.bf16 %v11890, %v11886
    %v12087 = vpack.c.bf16 %v11891, %v11887
    %v12088 = vpack.c.bf16 %v11896, %v11892
    %v12089 = vpack.c.bf16 %v11897, %v11893
    %v12090 = vpack.c.bf16 %v11898, %v11894
    %v12091 = vpack.c.bf16 %v11899, %v11895
    %v12092 = vpack.c.bf16 %v11904, %v11900
    %v12093 = vpack.c.bf16 %v11905, %v11901
    %v12094 = vpack.c.bf16 %v11906, %v11902
    %v12095 = vpack.c.bf16 %v11907, %v11903
    %v12096 = vpack.c.bf16 %v11912, %v11908
    %v12097 = vpack.c.bf16 %v11913, %v11909
    %v12098 = vpack.c.bf16 %v11914, %v11910
    %v12099 = vpack.c.bf16 %v11915, %v11911
    %v12100 = vpack.c.bf16 %v11920, %v11916
    %v12101 = vpack.c.bf16 %v11921, %v11917
    %v12102 = vpack.c.bf16 %v11922, %v11918
    %v12103 = vpack.c.bf16 %v11923, %v11919
    %v12104 = vpack.c.bf16 %v11928, %v11924
    %v12105 = vpack.c.bf16 %v11929, %v11925
    %v12106 = vpack.c.bf16 %v11930, %v11926
    %v12107 = vpack.c.bf16 %v11931, %v11927
    %v12108 = vpack.c.bf16 %v11936, %v11932
    %v12109 = vpack.c.bf16 %v11937, %v11933
    %v12110 = vpack.c.bf16 %v11938, %v11934
    %v12111 = vpack.c.bf16 %v11939, %v11935
    %v12112 = vpack.c.bf16 %v11944, %v11940
    %v12113 = vpack.c.bf16 %v11945, %v11941
    %v12114 = vpack.c.bf16 %v11946, %v11942
    %v12115 = vpack.c.bf16 %v11947, %v11943
    %v12116 = vpack.c.bf16 %v11952, %v11948
    %v12117 = vpack.c.bf16 %v11953, %v11949
    %v12118 = vpack.c.bf16 %v11954, %v11950
    %v12119 = vpack.c.bf16 %v11955, %v11951
    %v12120 = vpack.c.bf16 %v11960, %v11956
    %v12121 = vpack.c.bf16 %v11961, %v11957
    %v12122 = vpack.c.bf16 %v11962, %v11958
    %v12123 = vpack.c.bf16 %v11963, %v11959
    %v12124 = vpack.c.bf16 %v11968, %v11964
    %v12125 = vpack.c.bf16 %v11969, %v11965
    %v12126 = vpack.c.bf16 %v11970, %v11966
    %v12127 = vpack.c.bf16 %v11971, %v11967
    %v12128 = vpack.c.bf16 %v11976, %v11972
    %v12129 = vpack.c.bf16 %v11977, %v11973
    %v12130 = vpack.c.bf16 %v11978, %v11974
    %v12131 = vpack.c.bf16 %v11979, %v11975
    %v12132 = vpack.c.bf16 %v11984, %v11980
    %v12133 = vpack.c.bf16 %v11985, %v11981
    %v12134 = vpack.c.bf16 %v11986, %v11982
    %v12135 = vpack.c.bf16 %v11987, %v11983
    %v12136 = vpack.c.bf16 %v11992, %v11988
    %v12137 = vpack.c.bf16 %v11993, %v11989
    %v12138 = vpack.c.bf16 %v11994, %v11990
    %v12139 = vpack.c.bf16 %v11995, %v11991
    %v12140 = vpack.c.bf16 %v12000, %v11996
    %v12141 = vpack.c.bf16 %v12001, %v11997
    %v12142 = vpack.c.bf16 %v12002, %v11998
    %v12143 = vpack.c.bf16 %v12003, %v11999
    %v12144 = vpack.c.bf16 %v12008, %v12004
    %v12145 = vpack.c.bf16 %v12009, %v12005
    %v12146 = vpack.c.bf16 %v12010, %v12006
    %v12147 = vpack.c.bf16 %v12011, %v12007
    %v12148 = vpack.c.bf16 %v12016, %v12012
    %v12149 = vpack.c.bf16 %v12017, %v12013
    %v12150 = vpack.c.bf16 %v12018, %v12014
    %v12151 = vpack.c.bf16 %v12019, %v12015
    %v12152 = vpack.c.bf16 %v12024, %v12020
    %v12153 = vpack.c.bf16 %v12025, %v12021
    %v12154 = vpack.c.bf16 %v12026, %v12022
    %v12155 = vpack.c.bf16 %v12027, %v12023
    %v12156 = vld [vmem:[#allocation11] sm:$0xf]
    %v12157 = vld [vmem:[#allocation11 + $0x4] sm:$0xf]
    %v12158 = vld [vmem:[#allocation11 + $0x8] sm:$0xf]
    %v12159 = vld [vmem:[#allocation11 + $0xc] sm:$0xf]
    %v12160 = vld [vmem:[#allocation11 + $0x10] sm:$0xf]
    %v12161 = vld [vmem:[#allocation11 + $0x14] sm:$0xf]
    %v12162 = vld [vmem:[#allocation11 + $0x18] sm:$0xf]
    %v12163 = vld [vmem:[#allocation11 + $0x1c] sm:$0xf]
    %v12164 = vld [vmem:[#allocation11 + $0x20] sm:$0xf]
    %v12165 = vld [vmem:[#allocation11 + $0x24] sm:$0xf]
    %v12166 = vld [vmem:[#allocation11 + $0x28] sm:$0xf]
    %v12167 = vld [vmem:[#allocation11 + $0x2c] sm:$0xf]
    %v12168 = vld [vmem:[#allocation11 + $0x30] sm:$0xf]
    %v12169 = vld [vmem:[#allocation11 + $0x34] sm:$0xf]
    %v12170 = vld [vmem:[#allocation11 + $0x38] sm:$0xf]
    %v12171 = vld [vmem:[#allocation11 + $0x3c] sm:$0xf]
    %v12172 = vld [vmem:[#allocation11 + $0x40] sm:$0xf]
    %v12173 = vld [vmem:[#allocation11 + $0x44] sm:$0xf]
    %v12174 = vld [vmem:[#allocation11 + $0x48] sm:$0xf]
    %v12175 = vld [vmem:[#allocation11 + $0x4c] sm:$0xf]
    %v12176 = vld [vmem:[#allocation11 + $0x50] sm:$0xf]
    %v12177 = vld [vmem:[#allocation11 + $0x54] sm:$0xf]
    %v12178 = vld [vmem:[#allocation11 + $0x58] sm:$0xf]
    %v12179 = vld [vmem:[#allocation11 + $0x5c] sm:$0xf]
    %v12180 = vld [vmem:[#allocation11 + $0x60] sm:$0xf]
    %v12181 = vld [vmem:[#allocation11 + $0x64] sm:$0xf]
    %v12182 = vld [vmem:[#allocation11 + $0x68] sm:$0xf]
    %v12183 = vld [vmem:[#allocation11 + $0x6c] sm:$0xf]
    %v12184 = vld [vmem:[#allocation11 + $0x70] sm:$0xf]
    %v12185 = vld [vmem:[#allocation11 + $0x74] sm:$0xf]
    %v12186 = vld [vmem:[#allocation11 + $0x78] sm:$0xf]
    %v12187 = vld [vmem:[#allocation11 + $0x7c] sm:$0xf]
    %v12188 = vld [vmem:[#allocation11 + $0x80] sm:$0xf]
    %v12189 = vld [vmem:[#allocation11 + $0x84] sm:$0xf]
    %v12190 = vld [vmem:[#allocation11 + $0x88] sm:$0xf]
    %v12191 = vld [vmem:[#allocation11 + $0x8c] sm:$0xf]
    %v12192 = vld [vmem:[#allocation11 + $0x90] sm:$0xf]
    %v12193 = vld [vmem:[#allocation11 + $0x94] sm:$0xf]
    %v12194 = vld [vmem:[#allocation11 + $0x98] sm:$0xf]
    %v12195 = vld [vmem:[#allocation11 + $0x9c] sm:$0xf]
    %v12196 = vld [vmem:[#allocation11 + $0xa0] sm:$0xf]
    %v12197 = vld [vmem:[#allocation11 + $0xa4] sm:$0xf]
    %v12198 = vld [vmem:[#allocation11 + $0xa8] sm:$0xf]
    %v12199 = vld [vmem:[#allocation11 + $0xac] sm:$0xf]
    %v12200 = vld [vmem:[#allocation11 + $0xb0] sm:$0xf]
    %v12201 = vld [vmem:[#allocation11 + $0xb4] sm:$0xf]
    %v12202 = vld [vmem:[#allocation11 + $0xb8] sm:$0xf]
    %v12203 = vld [vmem:[#allocation11 + $0xbc] sm:$0xf]
    %v12204 = vld [vmem:[#allocation11 + $0xc0] sm:$0xf]
    %v12205 = vld [vmem:[#allocation11 + $0xc4] sm:$0xf]
    %v12206 = vld [vmem:[#allocation11 + $0xc8] sm:$0xf]
    %v12207 = vld [vmem:[#allocation11 + $0xcc] sm:$0xf]
    %v12208 = vld [vmem:[#allocation11 + $0xd0] sm:$0xf]
    %v12209 = vld [vmem:[#allocation11 + $0xd4] sm:$0xf]
    %v12210 = vld [vmem:[#allocation11 + $0xd8] sm:$0xf]
    %v12211 = vld [vmem:[#allocation11 + $0xdc] sm:$0xf]
    %v12212 = vld [vmem:[#allocation11 + $0xe0] sm:$0xf]
    %v12213 = vld [vmem:[#allocation11 + $0xe4] sm:$0xf]
    %v12214 = vld [vmem:[#allocation11 + $0xe8] sm:$0xf]
    %v12215 = vld [vmem:[#allocation11 + $0xec] sm:$0xf]
    %v12216 = vld [vmem:[#allocation11 + $0xf0] sm:$0xf]
    %v12217 = vld [vmem:[#allocation11 + $0xf4] sm:$0xf]
    %v12218 = vld [vmem:[#allocation11 + $0xf8] sm:$0xf]
    %v12219 = vld [vmem:[#allocation11 + $0xfc] sm:$0xf]
    %v12220 = vld [vmem:[%s8] sm:$0x1]
    %v12222 = vlaneseq
    %v12223 = vshrl.u32 %v12222, 7
    %v12224 = vsub.s32 0, %v12223
    %v12225 = vrot.slane %v12220, %v12224
    %v12291 = vunpack.c.l.b16 %v12156
    %v12292 = vunpack.c.l.b16 %v12157
    %v12293 = vunpack.c.l.b16 %v12158
    %v12294 = vunpack.c.l.b16 %v12159
    %v12295 = vunpack.c.l.b16 %v12160
    %v12296 = vunpack.c.l.b16 %v12161
    %v12297 = vunpack.c.l.b16 %v12162
    %v12298 = vunpack.c.l.b16 %v12163
    %v12299 = vunpack.c.l.b16 %v12164
    %v12300 = vunpack.c.l.b16 %v12165
    %v12301 = vunpack.c.l.b16 %v12166
    %v12302 = vunpack.c.l.b16 %v12167
    %v12303 = vunpack.c.l.b16 %v12168
    %v12304 = vunpack.c.l.b16 %v12169
    %v12305 = vunpack.c.l.b16 %v12170
    %v12306 = vunpack.c.l.b16 %v12171
    %v12307 = vunpack.c.l.b16 %v12172
    %v12308 = vunpack.c.l.b16 %v12173
    %v12309 = vunpack.c.l.b16 %v12174
    %v12310 = vunpack.c.l.b16 %v12175
    %v12311 = vunpack.c.l.b16 %v12176
    %v12312 = vunpack.c.l.b16 %v12177
    %v12313 = vunpack.c.l.b16 %v12178
    %v12314 = vunpack.c.l.b16 %v12179
    %v12315 = vunpack.c.l.b16 %v12180
    %v12316 = vunpack.c.l.b16 %v12181
    %v12317 = vunpack.c.l.b16 %v12182
    %v12318 = vunpack.c.l.b16 %v12183
    %v12319 = vunpack.c.l.b16 %v12184
    %v12320 = vunpack.c.l.b16 %v12185
    %v12321 = vunpack.c.l.b16 %v12186
    %v12322 = vunpack.c.l.b16 %v12187
    %v12323 = vunpack.c.l.b16 %v12188
    %v12324 = vunpack.c.l.b16 %v12189
    %v12325 = vunpack.c.l.b16 %v12190
    %v12326 = vunpack.c.l.b16 %v12191
    %v12327 = vunpack.c.l.b16 %v12192
    %v12328 = vunpack.c.l.b16 %v12193
    %v12329 = vunpack.c.l.b16 %v12194
    %v12330 = vunpack.c.l.b16 %v12195
    %v12331 = vunpack.c.l.b16 %v12196
    %v12332 = vunpack.c.l.b16 %v12197
    %v12333 = vunpack.c.l.b16 %v12198
    %v12334 = vunpack.c.l.b16 %v12199
    %v12335 = vunpack.c.l.b16 %v12200
    %v12336 = vunpack.c.l.b16 %v12201
    %v12337 = vunpack.c.l.b16 %v12202
    %v12338 = vunpack.c.l.b16 %v12203
    %v12339 = vunpack.c.l.b16 %v12204
    %v12340 = vunpack.c.l.b16 %v12205
    %v12341 = vunpack.c.l.b16 %v12206
    %v12342 = vunpack.c.l.b16 %v12207
    %v12343 = vunpack.c.l.b16 %v12208
    %v12344 = vunpack.c.l.b16 %v12209
    %v12345 = vunpack.c.l.b16 %v12210
    %v12346 = vunpack.c.l.b16 %v12211
    %v12347 = vunpack.c.l.b16 %v12212
    %v12348 = vunpack.c.l.b16 %v12213
    %v12349 = vunpack.c.l.b16 %v12214
    %v12350 = vunpack.c.l.b16 %v12215
    %v12351 = vunpack.c.l.b16 %v12216
    %v12352 = vunpack.c.l.b16 %v12217
    %v12353 = vunpack.c.l.b16 %v12218
    %v12354 = vunpack.c.l.b16 %v12219
    %v12355 = vpack.c.b16 %v12292, %v12291
    %v12356 = vpack.c.b16 %v12294, %v12293
    %v12357 = vpack.c.b16 %v12296, %v12295
    %v12358 = vpack.c.b16 %v12298, %v12297
    %v12359 = vpack.c.b16 %v12300, %v12299
    %v12360 = vpack.c.b16 %v12302, %v12301
    %v12361 = vpack.c.b16 %v12304, %v12303
    %v12362 = vpack.c.b16 %v12306, %v12305
    %v12363 = vpack.c.b16 %v12308, %v12307
    %v12364 = vpack.c.b16 %v12310, %v12309
    %v12365 = vpack.c.b16 %v12312, %v12311
    %v12366 = vpack.c.b16 %v12314, %v12313
    %v12367 = vpack.c.b16 %v12316, %v12315
    %v12368 = vpack.c.b16 %v12318, %v12317
    %v12369 = vpack.c.b16 %v12320, %v12319
    %v12370 = vpack.c.b16 %v12322, %v12321
    %v12371 = vpack.c.b16 %v12324, %v12323
    %v12372 = vpack.c.b16 %v12326, %v12325
    %v12373 = vpack.c.b16 %v12328, %v12327
    %v12374 = vpack.c.b16 %v12330, %v12329
    %v12375 = vpack.c.b16 %v12332, %v12331
    %v12376 = vpack.c.b16 %v12334, %v12333
    %v12377 = vpack.c.b16 %v12336, %v12335
    %v12378 = vpack.c.b16 %v12338, %v12337
    %v12379 = vpack.c.b16 %v12340, %v12339
    %v12380 = vpack.c.b16 %v12342, %v12341
    %v12381 = vpack.c.b16 %v12344, %v12343
    %v12382 = vpack.c.b16 %v12346, %v12345
    %v12383 = vpack.c.b16 %v12348, %v12347
    %v12384 = vpack.c.b16 %v12350, %v12349
    %v12385 = vpack.c.b16 %v12352, %v12351
    %v12386 = vpack.c.b16 %v12354, %v12353
    %12419 = vmatprep.subr.bf16.mxu0 0
    %12420 = vmatpush1.bf16.msra.mxu0 %v12362
    %12421 = vmatprep.subr.bf16.mxu0 0
    %12422 = vmatpush1.bf16.msra.mxu0 %v12361
    %12423 = vmatprep.subr.bf16.mxu0 0
    %12424 = vmatpush1.bf16.msra.mxu0 %v12360
    %12425 = vmatprep.subr.bf16.mxu0 0
    %12426 = vmatpush1.bf16.msra.mxu0 %v12359
    %12427 = vmatprep.subr.bf16.mxu0 0
    %12428 = vmatpush1.bf16.msra.mxu0 %v12358
    %12429 = vmatprep.subr.bf16.mxu0 0
    %12430 = vmatpush1.bf16.msra.mxu0 %v12357
    %12431 = vmatprep.subr.bf16.mxu0 0
    %12432 = vmatpush1.bf16.msra.mxu0 %v12356
    %12433 = vmatprep.subr.bf16.mxu0 0
    %12434 = vmatpush1.bf16.msra.mxu0 %v12355
    %12435 = vmatprep.subr.bf16.mxu0 0
    %12436 = vmatpush2.bf16.msra.mxu0 %v12370
    %12437 = vmatprep.subr.bf16.mxu0 0
    %12438 = vmatpush2.bf16.msra.mxu0 %v12369
    %12439 = vmatprep.subr.bf16.mxu0 0
    %12440 = vmatpush2.bf16.msra.mxu0 %v12368
    %12441 = vmatprep.subr.bf16.mxu0 0
    %12442 = vmatpush2.bf16.msra.mxu0 %v12367
    %12443 = vmatprep.subr.bf16.mxu0 0
    %12444 = vmatpush2.bf16.msra.mxu0 %v12366
    %12445 = vmatprep.subr.bf16.mxu0 0
    %12446 = vmatpush2.bf16.msra.mxu0 %v12365
    %12447 = vmatprep.subr.bf16.mxu0 0
    %12448 = vmatpush2.bf16.msra.mxu0 %v12364
    %12449 = vmatprep.subr.bf16.mxu0 0
    %12450 = vmatpush2.bf16.msra.mxu0 %v12363
    %12451 = vmatprep.mubr.bf16.mxu0 %v12029
    %12452 = vmatmul.mubr.bf16.gmra.mxu0 %v12028
    %v12453 = vpop.f32.mrf.mxu0
    %v12454 = vadd.f32 %v12225, %v12453
    %v12455 = vpop.f32.mrf.mxu0
    %v12456 = vpop.f32.mrf.mxu0
    %v12457 = vadd.f32 %v12225, %v12456
    %v12458 = vpop.f32.mrf.mxu0
    %12459 = vmatprep.mubr.bf16.mxu0 %v12033
    %12460 = vmatmul.mubr.bf16.gmra.mxu0 %v12032
    %v12461 = vpop.f32.mrf.mxu0
    %v12462 = vadd.f32 %v12225, %v12461
    %v12463 = vpop.f32.mrf.mxu0
    %v12464 = vpop.f32.mrf.mxu0
    %v12465 = vadd.f32 %v12225, %v12464
    %v12466 = vpop.f32.mrf.mxu0
    %12467 = vmatprep.mubr.bf16.mxu0 %v12037
    %12468 = vmatmul.mubr.bf16.gmra.mxu0 %v12036
    %v12469 = vpop.f32.mrf.mxu0
    %v12470 = vadd.f32 %v12225, %v12469
    %v12471 = vpop.f32.mrf.mxu0
    %v12472 = vpop.f32.mrf.mxu0
    %v12473 = vadd.f32 %v12225, %v12472
    %v12474 = vpop.f32.mrf.mxu0
    %12475 = vmatprep.mubr.bf16.mxu0 %v12041
    %12476 = vmatmul.mubr.bf16.gmra.mxu0 %v12040
    %v12477 = vpop.f32.mrf.mxu0
    %v12478 = vadd.f32 %v12225, %v12477
    %v12479 = vpop.f32.mrf.mxu0
    %v12480 = vpop.f32.mrf.mxu0
    %v12481 = vadd.f32 %v12225, %v12480
    %v12482 = vpop.f32.mrf.mxu0
    %12483 = vmatprep.mubr.bf16.mxu0 %v12045
    %12484 = vmatmul.mubr.bf16.gmra.mxu0 %v12044
    %v12485 = vpop.f32.mrf.mxu0
    %v12486 = vadd.f32 %v12225, %v12485
    %v12487 = vpop.f32.mrf.mxu0
    %v12488 = vpop.f32.mrf.mxu0
    %v12489 = vadd.f32 %v12225, %v12488
    %v12490 = vpop.f32.mrf.mxu0
    %12491 = vmatprep.mubr.bf16.mxu0 %v12049
    %12492 = vmatmul.mubr.bf16.gmra.mxu0 %v12048
    %v12493 = vpop.f32.mrf.mxu0
    %v12494 = vadd.f32 %v12225, %v12493
    %v12495 = vpop.f32.mrf.mxu0
    %v12496 = vpop.f32.mrf.mxu0
    %v12497 = vadd.f32 %v12225, %v12496
    %v12498 = vpop.f32.mrf.mxu0
    %12499 = vmatprep.mubr.bf16.mxu0 %v12053
    %12500 = vmatmul.mubr.bf16.gmra.mxu0 %v12052
    %v12501 = vpop.f32.mrf.mxu0
    %v12502 = vadd.f32 %v12225, %v12501
    %v12503 = vpop.f32.mrf.mxu0
    %v12504 = vpop.f32.mrf.mxu0
    %v12505 = vadd.f32 %v12225, %v12504
    %v12506 = vpop.f32.mrf.mxu0
    %12507 = vmatprep.mubr.bf16.mxu0 %v12057
    %12508 = vmatmul.mubr.bf16.gmra.mxu0 %v12056
    %v12509 = vpop.f32.mrf.mxu0
    %v12510 = vadd.f32 %v12225, %v12509
    %v12511 = vpop.f32.mrf.mxu0
    %v12512 = vpop.f32.mrf.mxu0
    %v12513 = vadd.f32 %v12225, %v12512
    %v12514 = vpop.f32.mrf.mxu0
    %12515 = vmatprep.mubr.bf16.mxu0 %v12061
    %12516 = vmatmul.mubr.bf16.gmra.mxu0 %v12060
    %v12517 = vpop.f32.mrf.mxu0
    %v12518 = vadd.f32 %v12225, %v12517
    %v12519 = vpop.f32.mrf.mxu0
    %v12520 = vpop.f32.mrf.mxu0
    %v12521 = vadd.f32 %v12225, %v12520
    %v12522 = vpop.f32.mrf.mxu0
    %12523 = vmatprep.mubr.bf16.mxu0 %v12065
    %12524 = vmatmul.mubr.bf16.gmra.mxu0 %v12064
    %v12525 = vpop.f32.mrf.mxu0
    %v12526 = vadd.f32 %v12225, %v12525
    %v12527 = vpop.f32.mrf.mxu0
    %v12528 = vpop.f32.mrf.mxu0
    %v12529 = vadd.f32 %v12225, %v12528
    %v12530 = vpop.f32.mrf.mxu0
    %12531 = vmatprep.mubr.bf16.mxu0 %v12069
    %12532 = vmatmul.mubr.bf16.gmra.mxu0 %v12068
    %v12533 = vpop.f32.mrf.mxu0
    %v12534 = vadd.f32 %v12225, %v12533
    %v12535 = vpop.f32.mrf.mxu0
    %v12536 = vpop.f32.mrf.mxu0
    %v12537 = vadd.f32 %v12225, %v12536
    %v12538 = vpop.f32.mrf.mxu0
    %12539 = vmatprep.mubr.bf16.mxu0 %v12073
    %12540 = vmatmul.mubr.bf16.gmra.mxu0 %v12072
    %v12541 = vpop.f32.mrf.mxu0
    %v12542 = vadd.f32 %v12225, %v12541
    %v12543 = vpop.f32.mrf.mxu0
    %v12544 = vpop.f32.mrf.mxu0
    %v12545 = vadd.f32 %v12225, %v12544
    %v12546 = vpop.f32.mrf.mxu0
    %12547 = vmatprep.mubr.bf16.mxu0 %v12077
    %12548 = vmatmul.mubr.bf16.gmra.mxu0 %v12076
    %v12549 = vpop.f32.mrf.mxu0
    %v12550 = vadd.f32 %v12225, %v12549
    %v12551 = vpop.f32.mrf.mxu0
    %v12552 = vpop.f32.mrf.mxu0
    %v12553 = vadd.f32 %v12225, %v12552
    %v12554 = vpop.f32.mrf.mxu0
    %12555 = vmatprep.mubr.bf16.mxu0 %v12081
    %12556 = vmatmul.mubr.bf16.gmra.mxu0 %v12080
    %v12557 = vpop.f32.mrf.mxu0
    %v12558 = vadd.f32 %v12225, %v12557
    %v12559 = vpop.f32.mrf.mxu0
    %v12560 = vpop.f32.mrf.mxu0
    %v12561 = vadd.f32 %v12225, %v12560
    %v12562 = vpop.f32.mrf.mxu0
    %12563 = vmatprep.mubr.bf16.mxu0 %v12085
    %12564 = vmatmul.mubr.bf16.gmra.mxu0 %v12084
    %v12565 = vpop.f32.mrf.mxu0
    %v12566 = vadd.f32 %v12225, %v12565
    %v12567 = vpop.f32.mrf.mxu0
    %v12568 = vpop.f32.mrf.mxu0
    %v12569 = vadd.f32 %v12225, %v12568
    %v12570 = vpop.f32.mrf.mxu0
    %12571 = vmatprep.mubr.bf16.mxu0 %v12089
    %12572 = vmatmul.mubr.bf16.gmra.mxu0 %v12088
    %v12573 = vpop.f32.mrf.mxu0
    %v12574 = vadd.f32 %v12225, %v12573
    %v12575 = vpop.f32.mrf.mxu0
    %v12576 = vpop.f32.mrf.mxu0
    %v12577 = vadd.f32 %v12225, %v12576
    %v12578 = vpop.f32.mrf.mxu0
    %12579 = vmatprep.mubr.bf16.mxu0 %v12093
    %12580 = vmatmul.mubr.bf16.gmra.mxu0 %v12092
    %v12581 = vpop.f32.mrf.mxu0
    %v12582 = vadd.f32 %v12225, %v12581
    %v12583 = vpop.f32.mrf.mxu0
    %v12584 = vpop.f32.mrf.mxu0
    %v12585 = vadd.f32 %v12225, %v12584
    %v12586 = vpop.f32.mrf.mxu0
    %12587 = vmatprep.mubr.bf16.mxu0 %v12097
    %12588 = vmatmul.mubr.bf16.gmra.mxu0 %v12096
    %v12589 = vpop.f32.mrf.mxu0
    %v12590 = vadd.f32 %v12225, %v12589
    %v12591 = vpop.f32.mrf.mxu0
    %v12592 = vpop.f32.mrf.mxu0
    %v12593 = vadd.f32 %v12225, %v12592
    %v12594 = vpop.f32.mrf.mxu0
    %12595 = vmatprep.mubr.bf16.mxu0 %v12101
    %12596 = vmatmul.mubr.bf16.gmra.mxu0 %v12100
    %v12597 = vpop.f32.mrf.mxu0
    %v12598 = vadd.f32 %v12225, %v12597
    %v12599 = vpop.f32.mrf.mxu0
    %v12600 = vpop.f32.mrf.mxu0
    %v12601 = vadd.f32 %v12225, %v12600
    %v12602 = vpop.f32.mrf.mxu0
    %12603 = vmatprep.mubr.bf16.mxu0 %v12105
    %12604 = vmatmul.mubr.bf16.gmra.mxu0 %v12104
    %v12605 = vpop.f32.mrf.mxu0
    %v12606 = vadd.f32 %v12225, %v12605
    %v12607 = vpop.f32.mrf.mxu0
    %v12608 = vpop.f32.mrf.mxu0
    %v12609 = vadd.f32 %v12225, %v12608
    %v12610 = vpop.f32.mrf.mxu0
    %12611 = vmatprep.mubr.bf16.mxu0 %v12109
    %12612 = vmatmul.mubr.bf16.gmra.mxu0 %v12108
    %v12613 = vpop.f32.mrf.mxu0
    %v12614 = vadd.f32 %v12225, %v12613
    %v12615 = vpop.f32.mrf.mxu0
    %v12616 = vpop.f32.mrf.mxu0
    %v12617 = vadd.f32 %v12225, %v12616
    %v12618 = vpop.f32.mrf.mxu0
    %12619 = vmatprep.mubr.bf16.mxu0 %v12113
    %12620 = vmatmul.mubr.bf16.gmra.mxu0 %v12112
    %v12621 = vpop.f32.mrf.mxu0
    %v12622 = vadd.f32 %v12225, %v12621
    %v12623 = vpop.f32.mrf.mxu0
    %v12624 = vpop.f32.mrf.mxu0
    %v12625 = vadd.f32 %v12225, %v12624
    %v12626 = vpop.f32.mrf.mxu0
    %12627 = vmatprep.mubr.bf16.mxu0 %v12117
    %12628 = vmatmul.mubr.bf16.gmra.mxu0 %v12116
    %v12629 = vpop.f32.mrf.mxu0
    %v12630 = vadd.f32 %v12225, %v12629
    %v12631 = vpop.f32.mrf.mxu0
    %v12632 = vpop.f32.mrf.mxu0
    %v12633 = vadd.f32 %v12225, %v12632
    %v12634 = vpop.f32.mrf.mxu0
    %12635 = vmatprep.mubr.bf16.mxu0 %v12121
    %12636 = vmatmul.mubr.bf16.gmra.mxu0 %v12120
    %v12637 = vpop.f32.mrf.mxu0
    %v12638 = vadd.f32 %v12225, %v12637
    %v12639 = vpop.f32.mrf.mxu0
    %v12640 = vpop.f32.mrf.mxu0
    %v12641 = vadd.f32 %v12225, %v12640
    %v12642 = vpop.f32.mrf.mxu0
    %12643 = vmatprep.mubr.bf16.mxu0 %v12125
    %12644 = vmatmul.mubr.bf16.gmra.mxu0 %v12124
    %v12645 = vpop.f32.mrf.mxu0
    %v12646 = vadd.f32 %v12225, %v12645
    %v12647 = vpop.f32.mrf.mxu0
    %v12648 = vpop.f32.mrf.mxu0
    %v12649 = vadd.f32 %v12225, %v12648
    %v12650 = vpop.f32.mrf.mxu0
    %12651 = vmatprep.mubr.bf16.mxu0 %v12129
    %12652 = vmatmul.mubr.bf16.gmra.mxu0 %v12128
    %v12653 = vpop.f32.mrf.mxu0
    %v12654 = vadd.f32 %v12225, %v12653
    %v12655 = vpop.f32.mrf.mxu0
    %v12656 = vpop.f32.mrf.mxu0
    %v12657 = vadd.f32 %v12225, %v12656
    %v12658 = vpop.f32.mrf.mxu0
    %12659 = vmatprep.mubr.bf16.mxu0 %v12133
    %12660 = vmatmul.mubr.bf16.gmra.mxu0 %v12132
    %v12661 = vpop.f32.mrf.mxu0
    %v12662 = vadd.f32 %v12225, %v12661
    %v12663 = vpop.f32.mrf.mxu0
    %v12664 = vpop.f32.mrf.mxu0
    %v12665 = vadd.f32 %v12225, %v12664
    %v12666 = vpop.f32.mrf.mxu0
    %12667 = vmatprep.mubr.bf16.mxu0 %v12137
    %12668 = vmatmul.mubr.bf16.gmra.mxu0 %v12136
    %v12669 = vpop.f32.mrf.mxu0
    %v12670 = vadd.f32 %v12225, %v12669
    %v12671 = vpop.f32.mrf.mxu0
    %v12672 = vpop.f32.mrf.mxu0
    %v12673 = vadd.f32 %v12225, %v12672
    %v12674 = vpop.f32.mrf.mxu0
    %12675 = vmatprep.mubr.bf16.mxu0 %v12141
    %12676 = vmatmul.mubr.bf16.gmra.mxu0 %v12140
    %v12677 = vpop.f32.mrf.mxu0
    %v12678 = vadd.f32 %v12225, %v12677
    %v12679 = vpop.f32.mrf.mxu0
    %v12680 = vpop.f32.mrf.mxu0
    %v12681 = vadd.f32 %v12225, %v12680
    %v12682 = vpop.f32.mrf.mxu0
    %12683 = vmatprep.mubr.bf16.mxu0 %v12145
    %12684 = vmatmul.mubr.bf16.gmra.mxu0 %v12144
    %v12685 = vpop.f32.mrf.mxu0
    %v12686 = vadd.f32 %v12225, %v12685
    %v12687 = vpop.f32.mrf.mxu0
    %v12688 = vpop.f32.mrf.mxu0
    %v12689 = vadd.f32 %v12225, %v12688
    %v12690 = vpop.f32.mrf.mxu0
    %12691 = vmatprep.mubr.bf16.mxu0 %v12149
    %12692 = vmatmul.mubr.bf16.gmra.mxu0 %v12148
    %v12693 = vpop.f32.mrf.mxu0
    %v12694 = vadd.f32 %v12225, %v12693
    %v12695 = vpop.f32.mrf.mxu0
    %v12696 = vpop.f32.mrf.mxu0
    %v12697 = vadd.f32 %v12225, %v12696
    %v12698 = vpop.f32.mrf.mxu0
    %12699 = vmatprep.mubr.bf16.mxu0 %v12153
    %12700 = vmatmul.mubr.bf16.gmra.mxu0 %v12152
    %v12701 = vpop.f32.mrf.mxu0
    %v12702 = vadd.f32 %v12225, %v12701
    %v12703 = vpop.f32.mrf.mxu0
    %v12704 = vpop.f32.mrf.mxu0
    %v12705 = vadd.f32 %v12225, %v12704
    %v12706 = vpop.f32.mrf.mxu0
    %12707 = vdwg.mxu0
    %12708 = vmatprep.subr.bf16.mxu0 0
    %12709 = vmatpush1.bf16.msra.mxu0 %v12378
    %12710 = vmatprep.subr.bf16.mxu0 0
    %12711 = vmatpush1.bf16.msra.mxu0 %v12377
    %12712 = vmatprep.subr.bf16.mxu0 0
    %12713 = vmatpush1.bf16.msra.mxu0 %v12376
    %12714 = vmatprep.subr.bf16.mxu0 0
    %12715 = vmatpush1.bf16.msra.mxu0 %v12375
    %12716 = vmatprep.subr.bf16.mxu0 0
    %12717 = vmatpush1.bf16.msra.mxu0 %v12374
    %12718 = vmatprep.subr.bf16.mxu0 0
    %12719 = vmatpush1.bf16.msra.mxu0 %v12373
    %12720 = vmatprep.subr.bf16.mxu0 0
    %12721 = vmatpush1.bf16.msra.mxu0 %v12372
    %12722 = vmatprep.subr.bf16.mxu0 0
    %12723 = vmatpush1.bf16.msra.mxu0 %v12371
    %12724 = vmatprep.subr.bf16.mxu0 0
    %12725 = vmatpush2.bf16.msra.mxu0 %v12386
    %12726 = vmatprep.subr.bf16.mxu0 0
    %12727 = vmatpush2.bf16.msra.mxu0 %v12385
    %12728 = vmatprep.subr.bf16.mxu0 0
    %12729 = vmatpush2.bf16.msra.mxu0 %v12384
    %12730 = vmatprep.subr.bf16.mxu0 0
    %12731 = vmatpush2.bf16.msra.mxu0 %v12383
    %12732 = vmatprep.subr.bf16.mxu0 0
    %12733 = vmatpush2.bf16.msra.mxu0 %v12382
    %12734 = vmatprep.subr.bf16.mxu0 0
    %12735 = vmatpush2.bf16.msra.mxu0 %v12381
    %12736 = vmatprep.subr.bf16.mxu0 0
    %12737 = vmatpush2.bf16.msra.mxu0 %v12380
    %12738 = vmatprep.subr.bf16.mxu0 0
    %12739 = vmatpush2.bf16.msra.mxu0 %v12379
    %12740 = vmatprep.mubr.bf16.mxu0 %v12031
    %12741 = vmatmul.mubr.bf16.gmra.mxu0 %v12030
    %v12742 = vpop.f32.mrf.mxu0
    %v12743 = vadd.f32 %v12454, %v12742
    %v12744 = vpop.f32.mrf.mxu0
    %v12745 = vpop.f32.mrf.mxu0
    %v12746 = vadd.f32 %v12457, %v12745
    %v12747 = vpop.f32.mrf.mxu0
    %12748 = vmatprep.mubr.bf16.mxu0 %v12035
    %12749 = vmatmul.mubr.bf16.gmra.mxu0 %v12034
    %v12750 = vpop.f32.mrf.mxu0
    %v12751 = vadd.f32 %v12462, %v12750
    %v12752 = vpop.f32.mrf.mxu0
    %v12753 = vpop.f32.mrf.mxu0
    %v12754 = vadd.f32 %v12465, %v12753
    %v12755 = vpop.f32.mrf.mxu0
    %12756 = vmatprep.mubr.bf16.mxu0 %v12039
    %12757 = vmatmul.mubr.bf16.gmra.mxu0 %v12038
    %v12758 = vpop.f32.mrf.mxu0
    %v12759 = vadd.f32 %v12470, %v12758
    %v12760 = vpop.f32.mrf.mxu0
    %v12761 = vpop.f32.mrf.mxu0
    %v12762 = vadd.f32 %v12473, %v12761
    %v12763 = vpop.f32.mrf.mxu0
    %12764 = vmatprep.mubr.bf16.mxu0 %v12043
    %12765 = vmatmul.mubr.bf16.gmra.mxu0 %v12042
    %v12766 = vpop.f32.mrf.mxu0
    %v12767 = vadd.f32 %v12478, %v12766
    %v12768 = vpop.f32.mrf.mxu0
    %v12769 = vpop.f32.mrf.mxu0
    %v12770 = vadd.f32 %v12481, %v12769
    %v12771 = vpop.f32.mrf.mxu0
    %12772 = vmatprep.mubr.bf16.mxu0 %v12047
    %12773 = vmatmul.mubr.bf16.gmra.mxu0 %v12046
    %v12774 = vpop.f32.mrf.mxu0
    %v12775 = vadd.f32 %v12486, %v12774
    %v12776 = vpop.f32.mrf.mxu0
    %v12777 = vpop.f32.mrf.mxu0
    %v12778 = vadd.f32 %v12489, %v12777
    %v12779 = vpop.f32.mrf.mxu0
    %12780 = vmatprep.mubr.bf16.mxu0 %v12051
    %12781 = vmatmul.mubr.bf16.gmra.mxu0 %v12050
    %v12782 = vpop.f32.mrf.mxu0
    %v12783 = vadd.f32 %v12494, %v12782
    %v12784 = vpop.f32.mrf.mxu0
    %v12785 = vpop.f32.mrf.mxu0
    %v12786 = vadd.f32 %v12497, %v12785
    %v12787 = vpop.f32.mrf.mxu0
    %12788 = vmatprep.mubr.bf16.mxu0 %v12055
    %12789 = vmatmul.mubr.bf16.gmra.mxu0 %v12054
    %v12790 = vpop.f32.mrf.mxu0
    %v12791 = vadd.f32 %v12502, %v12790
    %v12792 = vpop.f32.mrf.mxu0
    %v12793 = vpop.f32.mrf.mxu0
    %v12794 = vadd.f32 %v12505, %v12793
    %v12795 = vpop.f32.mrf.mxu0
    %12796 = vmatprep.mubr.bf16.mxu0 %v12059
    %12797 = vmatmul.mubr.bf16.gmra.mxu0 %v12058
    %v12798 = vpop.f32.mrf.mxu0
    %v12799 = vadd.f32 %v12510, %v12798
    %v12800 = vpop.f32.mrf.mxu0
    %v12801 = vpop.f32.mrf.mxu0
    %v12802 = vadd.f32 %v12513, %v12801
    %v12803 = vpop.f32.mrf.mxu0
    %12804 = vmatprep.mubr.bf16.mxu0 %v12063
    %12805 = vmatmul.mubr.bf16.gmra.mxu0 %v12062
    %v12806 = vpop.f32.mrf.mxu0
    %v12807 = vadd.f32 %v12518, %v12806
    %v12808 = vpop.f32.mrf.mxu0
    %v12809 = vpop.f32.mrf.mxu0
    %v12810 = vadd.f32 %v12521, %v12809
    %v12811 = vpop.f32.mrf.mxu0
    %12812 = vmatprep.mubr.bf16.mxu0 %v12067
    %12813 = vmatmul.mubr.bf16.gmra.mxu0 %v12066
    %v12814 = vpop.f32.mrf.mxu0
    %v12815 = vadd.f32 %v12526, %v12814
    %v12816 = vpop.f32.mrf.mxu0
    %v12817 = vpop.f32.mrf.mxu0
    %v12818 = vadd.f32 %v12529, %v12817
    %v12819 = vpop.f32.mrf.mxu0
    %12820 = vmatprep.mubr.bf16.mxu0 %v12071
    %12821 = vmatmul.mubr.bf16.gmra.mxu0 %v12070
    %v12822 = vpop.f32.mrf.mxu0
    %v12823 = vadd.f32 %v12534, %v12822
    %v12824 = vpop.f32.mrf.mxu0
    %v12825 = vpop.f32.mrf.mxu0
    %v12826 = vadd.f32 %v12537, %v12825
    %v12827 = vpop.f32.mrf.mxu0
    %12828 = vmatprep.mubr.bf16.mxu0 %v12075
    %12829 = vmatmul.mubr.bf16.gmra.mxu0 %v12074
    %v12830 = vpop.f32.mrf.mxu0
    %v12831 = vadd.f32 %v12542, %v12830
    %v12832 = vpop.f32.mrf.mxu0
    %v12833 = vpop.f32.mrf.mxu0
    %v12834 = vadd.f32 %v12545, %v12833
    %v12835 = vpop.f32.mrf.mxu0
    %12836 = vmatprep.mubr.bf16.mxu0 %v12079
    %12837 = vmatmul.mubr.bf16.gmra.mxu0 %v12078
    %v12838 = vpop.f32.mrf.mxu0
    %v12839 = vadd.f32 %v12550, %v12838
    %v12840 = vpop.f32.mrf.mxu0
    %v12841 = vpop.f32.mrf.mxu0
    %v12842 = vadd.f32 %v12553, %v12841
    %v12843 = vpop.f32.mrf.mxu0
    %12844 = vmatprep.mubr.bf16.mxu0 %v12083
    %12845 = vmatmul.mubr.bf16.gmra.mxu0 %v12082
    %v12846 = vpop.f32.mrf.mxu0
    %v12847 = vadd.f32 %v12558, %v12846
    %v12848 = vpop.f32.mrf.mxu0
    %v12849 = vpop.f32.mrf.mxu0
    %v12850 = vadd.f32 %v12561, %v12849
    %v12851 = vpop.f32.mrf.mxu0
    %12852 = vmatprep.mubr.bf16.mxu0 %v12087
    %12853 = vmatmul.mubr.bf16.gmra.mxu0 %v12086
    %v12854 = vpop.f32.mrf.mxu0
    %v12855 = vadd.f32 %v12566, %v12854
    %v12856 = vpop.f32.mrf.mxu0
    %v12857 = vpop.f32.mrf.mxu0
    %v12858 = vadd.f32 %v12569, %v12857
    %v12859 = vpop.f32.mrf.mxu0
    %12860 = vmatprep.mubr.bf16.mxu0 %v12091
    %12861 = vmatmul.mubr.bf16.gmra.mxu0 %v12090
    %v12862 = vpop.f32.mrf.mxu0
    %v12863 = vadd.f32 %v12574, %v12862
    %v12864 = vpop.f32.mrf.mxu0
    %v12865 = vpop.f32.mrf.mxu0
    %v12866 = vadd.f32 %v12577, %v12865
    %v12867 = vpop.f32.mrf.mxu0
    %12868 = vmatprep.mubr.bf16.mxu0 %v12095
    %12869 = vmatmul.mubr.bf16.gmra.mxu0 %v12094
    %v12870 = vpop.f32.mrf.mxu0
    %v12871 = vadd.f32 %v12582, %v12870
    %v12872 = vpop.f32.mrf.mxu0
    %v12873 = vpop.f32.mrf.mxu0
    %v12874 = vadd.f32 %v12585, %v12873
    %v12875 = vpop.f32.mrf.mxu0
    %12876 = vmatprep.mubr.bf16.mxu0 %v12099
    %12877 = vmatmul.mubr.bf16.gmra.mxu0 %v12098
    %v12878 = vpop.f32.mrf.mxu0
    %v12879 = vadd.f32 %v12590, %v12878
    %v12880 = vpop.f32.mrf.mxu0
    %v12881 = vpop.f32.mrf.mxu0
    %v12882 = vadd.f32 %v12593, %v12881
    %v12883 = vpop.f32.mrf.mxu0
    %12884 = vmatprep.mubr.bf16.mxu0 %v12103
    %12885 = vmatmul.mubr.bf16.gmra.mxu0 %v12102
    %v12886 = vpop.f32.mrf.mxu0
    %v12887 = vadd.f32 %v12598, %v12886
    %v12888 = vpop.f32.mrf.mxu0
    %v12889 = vpop.f32.mrf.mxu0
    %v12890 = vadd.f32 %v12601, %v12889
    %v12891 = vpop.f32.mrf.mxu0
    %12892 = vmatprep.mubr.bf16.mxu0 %v12107
    %12893 = vmatmul.mubr.bf16.gmra.mxu0 %v12106
    %v12894 = vpop.f32.mrf.mxu0
    %v12895 = vadd.f32 %v12606, %v12894
    %v12896 = vpop.f32.mrf.mxu0
    %v12897 = vpop.f32.mrf.mxu0
    %v12898 = vadd.f32 %v12609, %v12897
    %v12899 = vpop.f32.mrf.mxu0
    %12900 = vmatprep.mubr.bf16.mxu0 %v12111
    %12901 = vmatmul.mubr.bf16.gmra.mxu0 %v12110
    %v12902 = vpop.f32.mrf.mxu0
    %v12903 = vadd.f32 %v12614, %v12902
    %v12904 = vpop.f32.mrf.mxu0
    %v12905 = vpop.f32.mrf.mxu0
    %v12906 = vadd.f32 %v12617, %v12905
    %v12907 = vpop.f32.mrf.mxu0
    %12908 = vmatprep.mubr.bf16.mxu0 %v12115
    %12909 = vmatmul.mubr.bf16.gmra.mxu0 %v12114
    %v12910 = vpop.f32.mrf.mxu0
    %v12911 = vadd.f32 %v12622, %v12910
    %v12912 = vpop.f32.mrf.mxu0
    %v12913 = vpop.f32.mrf.mxu0
    %v12914 = vadd.f32 %v12625, %v12913
    %v12915 = vpop.f32.mrf.mxu0
    %12916 = vmatprep.mubr.bf16.mxu0 %v12119
    %12917 = vmatmul.mubr.bf16.gmra.mxu0 %v12118
    %v12918 = vpop.f32.mrf.mxu0
    %v12919 = vadd.f32 %v12630, %v12918
    %v12920 = vpop.f32.mrf.mxu0
    %v12921 = vpop.f32.mrf.mxu0
    %v12922 = vadd.f32 %v12633, %v12921
    %v12923 = vpop.f32.mrf.mxu0
    %12924 = vmatprep.mubr.bf16.mxu0 %v12123
    %12925 = vmatmul.mubr.bf16.gmra.mxu0 %v12122
    %v12926 = vpop.f32.mrf.mxu0
    %v12927 = vadd.f32 %v12638, %v12926
    %v12928 = vpop.f32.mrf.mxu0
    %v12929 = vpop.f32.mrf.mxu0
    %v12930 = vadd.f32 %v12641, %v12929
    %v12931 = vpop.f32.mrf.mxu0
    %12932 = vmatprep.mubr.bf16.mxu0 %v12127
    %12933 = vmatmul.mubr.bf16.gmra.mxu0 %v12126
    %v12934 = vpop.f32.mrf.mxu0
    %v12935 = vadd.f32 %v12646, %v12934
    %v12936 = vpop.f32.mrf.mxu0
    %v12937 = vpop.f32.mrf.mxu0
    %v12938 = vadd.f32 %v12649, %v12937
    %v12939 = vpop.f32.mrf.mxu0
    %12940 = vmatprep.mubr.bf16.mxu0 %v12131
    %12941 = vmatmul.mubr.bf16.gmra.mxu0 %v12130
    %v12942 = vpop.f32.mrf.mxu0
    %v12943 = vadd.f32 %v12654, %v12942
    %v12944 = vpop.f32.mrf.mxu0
    %v12945 = vpop.f32.mrf.mxu0
    %v12946 = vadd.f32 %v12657, %v12945
    %v12947 = vpop.f32.mrf.mxu0
    %12948 = vmatprep.mubr.bf16.mxu0 %v12135
    %12949 = vmatmul.mubr.bf16.gmra.mxu0 %v12134
    %v12950 = vpop.f32.mrf.mxu0
    %v12951 = vadd.f32 %v12662, %v12950
    %v12952 = vpop.f32.mrf.mxu0
    %v12953 = vpop.f32.mrf.mxu0
    %v12954 = vadd.f32 %v12665, %v12953
    %v12955 = vpop.f32.mrf.mxu0
    %12956 = vmatprep.mubr.bf16.mxu0 %v12139
    %12957 = vmatmul.mubr.bf16.gmra.mxu0 %v12138
    %v12958 = vpop.f32.mrf.mxu0
    %v12959 = vadd.f32 %v12670, %v12958
    %v12960 = vpop.f32.mrf.mxu0
    %v12961 = vpop.f32.mrf.mxu0
    %v12962 = vadd.f32 %v12673, %v12961
    %v12963 = vpop.f32.mrf.mxu0
    %12964 = vmatprep.mubr.bf16.mxu0 %v12143
    %12965 = vmatmul.mubr.bf16.gmra.mxu0 %v12142
    %v12966 = vpop.f32.mrf.mxu0
    %v12967 = vadd.f32 %v12678, %v12966
    %v12968 = vpop.f32.mrf.mxu0
    %v12969 = vpop.f32.mrf.mxu0
    %v12970 = vadd.f32 %v12681, %v12969
    %v12971 = vpop.f32.mrf.mxu0
    %12972 = vmatprep.mubr.bf16.mxu0 %v12147
    %12973 = vmatmul.mubr.bf16.gmra.mxu0 %v12146
    %v12974 = vpop.f32.mrf.mxu0
    %v12975 = vadd.f32 %v12686, %v12974
    %v12976 = vpop.f32.mrf.mxu0
    %v12977 = vpop.f32.mrf.mxu0
    %v12978 = vadd.f32 %v12689, %v12977
    %v12979 = vpop.f32.mrf.mxu0
    %12980 = vmatprep.mubr.bf16.mxu0 %v12151
    %12981 = vmatmul.mubr.bf16.gmra.mxu0 %v12150
    %v12982 = vpop.f32.mrf.mxu0
    %v12983 = vadd.f32 %v12694, %v12982
    %v12984 = vpop.f32.mrf.mxu0
    %v12985 = vpop.f32.mrf.mxu0
    %v12986 = vadd.f32 %v12697, %v12985
    %v12987 = vpop.f32.mrf.mxu0
    %12988 = vmatprep.mubr.bf16.mxu0 %v12155
    %12989 = vmatmul.mubr.bf16.gmra.mxu0 %v12154
    %v12990 = vpop.f32.mrf.mxu0
    %v12991 = vadd.f32 %v12702, %v12990
    %v12992 = vpop.f32.mrf.mxu0
    %v12993 = vpop.f32.mrf.mxu0
    %v12994 = vadd.f32 %v12705, %v12993
    %v12995 = vpop.f32.mrf.mxu0
    %12996 = vdwg.mxu0
    %v12997 = vadd.f32 %v10052, %v12743
    %v12998 = vadd.f32 %v10053, %v12746
    %v12999 = vadd.f32 %v10054, %v12751
    %v13000 = vadd.f32 %v10055, %v12754
    %v13001 = vadd.f32 %v10056, %v12759
    %v13002 = vadd.f32 %v10057, %v12762
    %v13003 = vadd.f32 %v10058, %v12767
    %v13004 = vadd.f32 %v10059, %v12770
    %v13005 = vadd.f32 %v10060, %v12775
    %v13006 = vadd.f32 %v10061, %v12778
    %v13007 = vadd.f32 %v10062, %v12783
    %v13008 = vadd.f32 %v10063, %v12786
    %v13009 = vadd.f32 %v10064, %v12791
    %v13010 = vadd.f32 %v10065, %v12794
    %v13011 = vadd.f32 %v10066, %v12799
    %v13012 = vadd.f32 %v10067, %v12802
    %v13013 = vadd.f32 %v10068, %v12807
    %v13014 = vadd.f32 %v10069, %v12810
    %v13015 = vadd.f32 %v10070, %v12815
    %v13016 = vadd.f32 %v10071, %v12818
    %v13017 = vadd.f32 %v10072, %v12823
    %v13018 = vadd.f32 %v10073, %v12826
    %v13019 = vadd.f32 %v10074, %v12831
    %v13020 = vadd.f32 %v10075, %v12834
    %v13021 = vadd.f32 %v10076, %v12839
    %v13022 = vadd.f32 %v10077, %v12842
    %v13023 = vadd.f32 %v10078, %v12847
    %v13024 = vadd.f32 %v10079, %v12850
    %v13025 = vadd.f32 %v10080, %v12855
    %v13026 = vadd.f32 %v10081, %v12858
    %v13027 = vadd.f32 %v10082, %v12863
    %v13028 = vadd.f32 %v10083, %v12866
    %v13029 = vadd.f32 %v10084, %v12871
    %v13030 = vadd.f32 %v10085, %v12874
    %v13031 = vadd.f32 %v10086, %v12879
    %v13032 = vadd.f32 %v10087, %v12882
    %v13033 = vadd.f32 %v10088, %v12887
    %v13034 = vadd.f32 %v10089, %v12890
    %v13035 = vadd.f32 %v10090, %v12895
    %v13036 = vadd.f32 %v10091, %v12898
    %v13037 = vadd.f32 %v10092, %v12903
    %v13038 = vadd.f32 %v10093, %v12906
    %v13039 = vadd.f32 %v10094, %v12911
    %v13040 = vadd.f32 %v10095, %v12914
    %v13041 = vadd.f32 %v10096, %v12919
    %v13042 = vadd.f32 %v10097, %v12922
    %v13043 = vadd.f32 %v10098, %v12927
    %v13044 = vadd.f32 %v10099, %v12930
    %v13045 = vadd.f32 %v10100, %v12935
    %v13046 = vadd.f32 %v10101, %v12938
    %v13047 = vadd.f32 %v10102, %v12943
    %v13048 = vadd.f32 %v10103, %v12946
    %v13049 = vadd.f32 %v10104, %v12951
    %v13050 = vadd.f32 %v10105, %v12954
    %v13051 = vadd.f32 %v10106, %v12959
    %v13052 = vadd.f32 %v10107, %v12962
    %v13053 = vadd.f32 %v10108, %v12967
    %v13054 = vadd.f32 %v10109, %v12970
    %v13055 = vadd.f32 %v10110, %v12975
    %v13056 = vadd.f32 %v10111, %v12978
    %v13057 = vadd.f32 %v10112, %v12983
    %v13058 = vadd.f32 %v10113, %v12986
    %v13059 = vadd.f32 %v10114, %v12991
    %v13060 = vadd.f32 %v10115, %v12994
    %13061 = vst [vmem:[#allocation13] sm:$0xff] %v12997
    %13062 = vst [vmem:[#allocation13 + $0x8] sm:$0xff] %v12998
    %13063 = vst [vmem:[#allocation13 + $0x10] sm:$0xff] %v12999
    %13064 = vst [vmem:[#allocation13 + $0x18] sm:$0xff] %v13000
    %13065 = vst [vmem:[#allocation13 + $0x20] sm:$0xff] %v13001
    %13066 = vst [vmem:[#allocation13 + $0x28] sm:$0xff] %v13002
    %13067 = vst [vmem:[#allocation13 + $0x30] sm:$0xff] %v13003
    %13068 = vst [vmem:[#allocation13 + $0x38] sm:$0xff] %v13004
    %13069 = vst [vmem:[#allocation13 + $0x40] sm:$0xff] %v13005
    %13070 = vst [vmem:[#allocation13 + $0x48] sm:$0xff] %v13006
    %13071 = vst [vmem:[#allocation13 + $0x50] sm:$0xff] %v13007
    %13072 = vst [vmem:[#allocation13 + $0x58] sm:$0xff] %v13008
    %13073 = vst [vmem:[#allocation13 + $0x60] sm:$0xff] %v13009
    %13074 = vst [vmem:[#allocation13 + $0x68] sm:$0xff] %v13010
    %13075 = vst [vmem:[#allocation13 + $0x70] sm:$0xff] %v13011
    %13076 = vst [vmem:[#allocation13 + $0x78] sm:$0xff] %v13012
    %13077 = vst [vmem:[#allocation13 + $0x80] sm:$0xff] %v13013
    %13078 = vst [vmem:[#allocation13 + $0x88] sm:$0xff] %v13014
    %13079 = vst [vmem:[#allocation13 + $0x90] sm:$0xff] %v13015
    %13080 = vst [vmem:[#allocation13 + $0x98] sm:$0xff] %v13016
    %13081 = vst [vmem:[#allocation13 + $0xa0] sm:$0xff] %v13017
    %13082 = vst [vmem:[#allocation13 + $0xa8] sm:$0xff] %v13018
    %13083 = vst [vmem:[#allocation13 + $0xb0] sm:$0xff] %v13019
    %13084 = vst [vmem:[#allocation13 + $0xb8] sm:$0xff] %v13020
    %13085 = vst [vmem:[#allocation13 + $0xc0] sm:$0xff] %v13021
    %13086 = vst [vmem:[#allocation13 + $0xc8] sm:$0xff] %v13022
    %13087 = vst [vmem:[#allocation13 + $0xd0] sm:$0xff] %v13023
    %13088 = vst [vmem:[#allocation13 + $0xd8] sm:$0xff] %v13024
    %13089 = vst [vmem:[#allocation13 + $0xe0] sm:$0xff] %v13025
    %13090 = vst [vmem:[#allocation13 + $0xe8] sm:$0xff] %v13026
    %13091 = vst [vmem:[#allocation13 + $0xf0] sm:$0xff] %v13027
    %13092 = vst [vmem:[#allocation13 + $0xf8] sm:$0xff] %v13028
    %13093 = vst [vmem:[#allocation13 + $0x100] sm:$0xff] %v13029
    %13094 = vst [vmem:[#allocation13 + $0x108] sm:$0xff] %v13030
    %13095 = vst [vmem:[#allocation13 + $0x110] sm:$0xff] %v13031
    %13096 = vst [vmem:[#allocation13 + $0x118] sm:$0xff] %v13032
    %13097 = vst [vmem:[#allocation13 + $0x120] sm:$0xff] %v13033
    %13098 = vst [vmem:[#allocation13 + $0x128] sm:$0xff] %v13034
    %13099 = vst [vmem:[#allocation13 + $0x130] sm:$0xff] %v13035
    %13100 = vst [vmem:[#allocation13 + $0x138] sm:$0xff] %v13036
    %13101 = vst [vmem:[#allocation13 + $0x140] sm:$0xff] %v13037
    %13102 = vst [vmem:[#allocation13 + $0x148] sm:$0xff] %v13038
    %13103 = vst [vmem:[#allocation13 + $0x150] sm:$0xff] %v13039
    %13104 = vst [vmem:[#allocation13 + $0x158] sm:$0xff] %v13040
    %13105 = vst [vmem:[#allocation13 + $0x160] sm:$0xff] %v13041
    %13106 = vst [vmem:[#allocation13 + $0x168] sm:$0xff] %v13042
    %13107 = vst [vmem:[#allocation13 + $0x170] sm:$0xff] %v13043
    %13108 = vst [vmem:[#allocation13 + $0x178] sm:$0xff] %v13044
    %13109 = vst [vmem:[#allocation13 + $0x180] sm:$0xff] %v13045
    %13110 = vst [vmem:[#allocation13 + $0x188] sm:$0xff] %v13046
    %13111 = vst [vmem:[#allocation13 + $0x190] sm:$0xff] %v13047
    %13112 = vst [vmem:[#allocation13 + $0x198] sm:$0xff] %v13048
    %13113 = vst [vmem:[#allocation13 + $0x1a0] sm:$0xff] %v13049
    %13114 = vst [vmem:[#allocation13 + $0x1a8] sm:$0xff] %v13050
    %13115 = vst [vmem:[#allocation13 + $0x1b0] sm:$0xff] %v13051
    %13116 = vst [vmem:[#allocation13 + $0x1b8] sm:$0xff] %v13052
    %13117 = vst [vmem:[#allocation13 + $0x1c0] sm:$0xff] %v13053
    %13118 = vst [vmem:[#allocation13 + $0x1c8] sm:$0xff] %v13054
    %13119 = vst [vmem:[#allocation13 + $0x1d0] sm:$0xff] %v13055
    %13120 = vst [vmem:[#allocation13 + $0x1d8] sm:$0xff] %v13056
    %13121 = vst [vmem:[#allocation13 + $0x1e0] sm:$0xff] %v13057
    %13122 = vst [vmem:[#allocation13 + $0x1e8] sm:$0xff] %v13058
    %13123 = vst [vmem:[#allocation13 + $0x1f0] sm:$0xff] %v13059
    %13124 = vst [vmem:[#allocation13 + $0x1f8] sm:$0xff] %v13060
    // Predicated region
    $region62: #{tpu_custom_call.1} parent=1 // pred_check
      _
    $region63: #{tpu_custom_call.1} parent=1 // pred_check_branch
      %13126 = sbr.rel (0) target = $region65
    $region64: #{tpu_custom_call.1} parent=1 // pred_region
      %s13128 = ssub.s32 8192, 8192
      %13129 = vsyncadd [#allocation4], %s13128
      %s13130 = sshll.u32 [#allocation13], 4
      %s13131 = int_to_ptr.vmem [resolvable:$true] %s13130
      %13136 = dma.vmem_to_hbm [thread:$0]  %s13131, 8192, %s9, [#allocation4], 128, 128, 8
    $region65: #{tpu_custom_call.1} parent=1 // pred_fallthru
      _
    // Predicated region
    $region66: #{tpu_custom_call.1} parent=1 // pred_check
      _
    $region67: #{tpu_custom_call.1} parent=1 // pred_check_branch
      %13138 = sbr.rel (0) target = $region69
    $region68: #{tpu_custom_call.1} parent=1 // pred_region
      %13139 = dma.done [#allocation4], 8192
    $region69: #{tpu_custom_call.1} parent=1 // pred_fallthru
      _
    %13140 = vsyncpa [#allocation3], 1
    %13141 = vsyncpa [#allocation6], 1
    %13142 = vsyncpa [#allocation9], 1
    %13143 = vsyncpa [#allocation12], 1
    %13144 = vsyncpa [#allocation4], 1

</llo_original>
